<compile_context>
chip_gen: v7x
topology: tpu7x:2x2x1
jax: 0.10.0
libtpu: 0.0.40
codegen_flags: <defaults>
</compile_context>

<pallas_src>
import functools

import jax
import jax.numpy as jnp
from jax.experimental import pallas as pl
from jax.experimental.pallas import tpu as pltpu


# ---------------------------------------------------------------------------
# VMEM limit per TPU generation
# ---------------------------------------------------------------------------
@functools.lru_cache(maxsize=None)
def _vmem_limit_bytes():
    default = 48 * 1024 * 1024          # safe on every generation
    try:
        cap = int(pltpu.get_tpu_info().vmem_capacity_bytes)
        if cap > 0:
            # 64 MiB on 128-MiB parts (v5e/v6e), ~44 MiB on 64-MiB parts (v7x)
            return min(64 * 1024 * 1024, (cap * 7) // 10)
    except Exception:
        pass
    return default


def _pick_tile(dim, target, quantum):
    """Largest tile <= target that divides dim and is a multiple of quantum."""
    if dim <= target:
        return dim
    t = (min(target, dim) // quantum) * quantum
    while t >= quantum:
        if dim % t == 0:
            return t
        t -= quantum
    raise ValueError(f"no aligned tile for dim={dim} "
                     f"(target={target}, quantum={quantum}); pad the operand")


# ---------------------------------------------------------------------------
# Generic fused matmul (+bias, +ReLU) kernels (used by conv1 and the FC head)
# ---------------------------------------------------------------------------
def _mm_single_kernel(a_ref, w_ref, b_ref, o_ref, *, relu, add_bias):
    """Whole K reduction in one step: no scratch accumulator needed."""
    out = jnp.dot(a_ref[...], w_ref[...], preferred_element_type=jnp.float32)
    if add_bias:
        out = out + b_ref[...]
    if relu:
        out = jnp.maximum(out, 0.0)
    o_ref[...] = out.reshape(o_ref.shape).astype(o_ref.dtype)


def _mm_multi_kernel(a_ref, w_ref, b_ref, o_ref, acc_ref, *, relu, add_bias):
    """K-tiled reduction with an f32 VMEM accumulator (program_id(1) = K)."""
    @pl.when(pl.program_id(1) == 0)
    def _():
        acc_ref[...] = jnp.zeros_like(acc_ref)

    acc_ref[...] += jnp.dot(a_ref[...], w_ref[...],
                            preferred_element_type=jnp.float32)

    @pl.when(pl.program_id(1) == pl.num_programs(1) - 1)
    def _():
        out = acc_ref[...]
        if add_bias:
            out = out + b_ref[...]
        if relu:
            out = jnp.maximum(out, 0.0)
        o_ref[...] = out.reshape(o_ref.shape).astype(o_ref.dtype)


def matmul_bias(a, w, b, *, relu, out_dtype,
                tm_target=1024, tk_target=4096, split_k=1):
    """a: (M, K) @ w: (K, N) + b: (N,) -> (M, N).

    bf16 operands, f32 accumulation.  split_k > 1 splits the K reduction
    across a leading "parallel" grid axis (one partial per slot, summed in
    XLA) so v7x's two TensorCores both stream the weight matrix.
    """
    M, K = a.shape
    K2, N = w.shape
    assert K == K2, (K, K2)

    a = a.astype(jnp.bfloat16)
    w = w.astype(jnp.bfloat16)
    b2 = b.reshape(1, N).astype(jnp.float32)
    vmem = _vmem_limit_bytes()
    cost = pl.CostEstimate(
        flops=2 * M * K * N,
        transcendentals=0,
        bytes_accessed=(M * K + K * N) * 2 + N * 4
        + split_k * M * N * jnp.dtype(out_dtype).itemsize,
    )

    if split_k == 1:
        tm = _pick_tile(M, tm_target, 8)
        tk = _pick_tile(K, tk_target, 128)
        m_steps, k_steps = M // tm, K // tk
        if k_steps == 1:
            return pl.pallas_call(
                functools.partial(_mm_single_kernel, relu=relu, add_bias=True),
                out_shape=jax.ShapeDtypeStruct((M, N), out_dtype),
                grid_spec=pltpu.PrefetchScalarGridSpec(
                    num_scalar_prefetch=0,
                    grid=(m_steps,),
                    in_specs=[
                        pl.BlockSpec((tm, K), lambda i: (i, 0)),
                        pl.BlockSpec((K, N), lambda i: (0, 0)),
                        pl.BlockSpec((1, N), lambda i: (0, 0)),
                    ],
                    out_specs=pl.BlockSpec((tm, N), lambda i: (i, 0)),
                ),
                compiler_params=pltpu.CompilerParams(
                    dimension_semantics=("parallel",),
                    vmem_limit_bytes=vmem),
                cost_estimate=cost,
            )(a, w, b2)
        return pl.pallas_call(
            functools.partial(_mm_multi_kernel, relu=relu, add_bias=True),
            out_shape=jax.ShapeDtypeStruct((M, N), out_dtype),
            grid_spec=pltpu.PrefetchScalarGridSpec(
                num_scalar_prefetch=0,
                grid=(m_steps, k_steps),
                in_specs=[
                    pl.BlockSpec((tm, tk), lambda i, k: (i, k)),
                    pl.BlockSpec((tk, N), lambda i, k: (k, 0)),
                    pl.BlockSpec((1, N), lambda i, k: (0, 0)),
                ],
                out_specs=pl.BlockSpec((tm, N), lambda i, k: (i, 0)),
                scratch_shapes=[pltpu.VMEM((tm, N), jnp.float32)],
            ),
            compiler_params=pltpu.CompilerParams(
                dimension_semantics=("parallel", "arbitrary"),
                vmem_limit_bytes=vmem),
            cost_estimate=cost,
        )(a, w, b2)

    # ---- split_k > 1: partial K sums, one per "parallel" grid slot ----
    assert K % split_k == 0 and (K // split_k) % 128 == 0, (K, split_k)
    Kh = K // split_k
    tk = _pick_tile(Kh, tk_target, 128)
    k_steps = Kh // tk

    if k_steps == 1:
        kern = functools.partial(_mm_single_kernel, relu=False, add_bias=False)
        grid = (split_k,)
        in_specs = [
            pl.BlockSpec((M, tk), lambda s: (0, s)),
            pl.BlockSpec((tk, N), lambda s: (s, 0)),
            pl.BlockSpec((1, N), lambda s: (0, 0)),
        ]
        out_specs = pl.BlockSpec((1, M, N), lambda s: (s, 0, 0))
        scratch = []
        dims = ("parallel",)
    else:
        kern = functools.partial(_mm_multi_kernel, relu=False, add_bias=False)
        grid = (split_k, k_steps)
        in_specs = [
            pl.BlockSpec((M, tk), lambda s, k: (0, s * k_steps + k)),
            pl.BlockSpec((tk, N), lambda s, k: (s * k_steps + k, 0)),
            pl.BlockSpec((1, N), lambda s, k: (0, 0)),
        ]
        out_specs = pl.BlockSpec((1, M, N), lambda s, k: (s, 0, 0))
        scratch = [pltpu.VMEM((M, N), jnp.float32)]
        dims = ("parallel", "arbitrary")

    partials = pl.pallas_call(
        kern,
        out_shape=jax.ShapeDtypeStruct((split_k, M, N), jnp.float32),
        grid_spec=pltpu.PrefetchScalarGridSpec(
            num_scalar_prefetch=0,
            grid=grid,
            in_specs=in_specs,
            out_specs=out_specs,
            scratch_shapes=scratch,
        ),
        compiler_params=pltpu.CompilerParams(
            dimension_semantics=dims, vmem_limit_bytes=vmem),
        cost_estimate=cost,
    )(a, w, b2)

    out = partials.sum(axis=0) + b2       # tiny (M, N) combine in XLA
    if relu:
        out = jnp.maximum(out, 0.0)
    return out.astype(out_dtype)


# ---------------------------------------------------------------------------
# Conv2d(k=4, s=2, p=1) + ReLU via space-to-depth + 4 shifted in-VMEM matmuls
# ---------------------------------------------------------------------------
def _conv4x4s2_kernel(z_ref, w_ref, b_ref, o_ref, *, ho, wo):
    # z_ref: (1, ho+1, wo+1, 4*Cin)  padded + space-to-depth'd input (bf16)
    # w_ref: (4, 4*Cin, Cout)        per-shift sub-weights (bf16)
    # b_ref: (1, Cout) f32; o_ref: (1, ho*wo, Cout) bf16
    z = z_ref[0]                                      # (ho+1, wo+1, 4*Cin)
    acc = None
    for idx, (di, dj) in enumerate(((0, 0), (0, 1), (1, 0), (1, 1))):
        sub = z[di:di + ho, dj:dj + wo, :]            # (ho, wo, 4*Cin)
        sub = sub.reshape(ho * wo, sub.shape[-1])
        d = jnp.dot(sub, w_ref[idx], preferred_element_type=jnp.float32)
        acc = d if acc is None else acc + d
    out = jnp.maximum(acc + b_ref[...], 0.0)
    o_ref[0] = out.astype(o_ref.dtype)


def conv4x4s2_relu(x, w_sub, bias):
    """x: (N, H, W, Cin) bf16, w_sub: (4, 4*Cin, Cout), bias: (Cout,)
    -> (N, H/2, W/2, Cout) bf16.  No im2col duplication: pad + space-to-depth
    is a pure layout transform; the 4 shifted matmuls happen inside the
    kernel against the same VMEM-resident block."""
    n, h, w, cin = x.shape
    cout = w_sub.shape[-1]
    ho, wo = h // 2, w // 2
    hb, wb = ho + 1, wo + 1

    xp = jnp.pad(x, ((0, 0), (1, 1), (1, 1), (0, 0)))          # (N, H+2, W+2, Cin)
    z = xp.reshape(n, hb, 2, wb, 2, cin).transpose(0, 1, 3, 2, 4, 5)
    z = z.reshape(n, hb, wb, 4 * cin).astype(jnp.bfloat16)
    b2 = bias.reshape(1, cout).astype(jnp.float32)

    cost = pl.CostEstimate(
        flops=2 * n * ho * wo * 16 * cin * cout,
        transcendentals=0,
        bytes_accessed=z.size * 2 + w_sub.size * 2 + cout * 4
        + n * ho * wo * cout * 2,
    )

    out = pl.pallas_call(
        functools.partial(_conv4x4s2_kernel, ho=ho, wo=wo),
        out_shape=jax.ShapeDtypeStruct((n, ho * wo, cout), jnp.bfloat16),
        grid_spec=pltpu.PrefetchScalarGridSpec(
            num_scalar_prefetch=0,
            grid=(n,),
            in_specs=[
                pl.BlockSpec((1, hb, wb, 4 * cin), lambda i: (i, 0, 0, 0)),
                pl.BlockSpec((4, 4 * cin, cout), lambda i: (0, 0, 0)),
                pl.BlockSpec((1, cout), lambda i: (0, 0)),
            ],
            out_specs=pl.BlockSpec((1, ho * wo, cout), lambda i: (i, 0, 0)),
        ),
        compiler_params=pltpu.CompilerParams(
            dimension_semantics=("parallel",),
            vmem_limit_bytes=_vmem_limit_bytes()),
        cost_estimate=cost,
    )(z, w_sub.astype(jnp.bfloat16), b2)
    return out.reshape(n, ho, wo, cout)


# ---------------------------------------------------------------------------
# conv1 only: cheap 16-column channels-last im2col (Cin=1)
# ---------------------------------------------------------------------------
def im2col_nhwc(x, k=4, s=2, p=1):
    """x: (N, H, W, C) -> patches (N*Ho*Wo, k*k*C), feature order (kh, kw, c)."""
    N, H, W, C = x.shape
    xp = jnp.pad(x, ((0, 0), (p, p), (p, p), (0, 0)))
    Ho = (H + 2 * p - k) // s + 1
    Wo = (W + 2 * p - k) // s + 1
    cols = []
    for i in range(k):
        for j in range(k):
            cols.append(xp[:, i:i + s * Ho:s, j:j + s * Wo:s, :])
    patches = jnp.concatenate(cols, axis=-1)          # (N, Ho, Wo, k*k*C)
    return patches.reshape(N * Ho * Wo, k * k * C), Ho, Wo


# ---------------------------------------------------------------------------
# Parameters: generate PyTorch-layout weights, then re-lay-out ONCE for TPU
# ---------------------------------------------------------------------------
def init_encoder_params_torch_layout(key, in_channels=1, latent_dim=64,
                                     flattened_dim=8192):
    """Synthetic weights in PyTorch layouts (uniform(-1/sqrt(fan_in)))."""
    def uniform(k, shape, fan_in):
        bound = 1.0 / jnp.sqrt(jnp.float32(fan_in))
        return jax.random.uniform(k, shape, jnp.float32, -bound, bound)

    ks = jax.random.split(key, 10)
    p = {}
    p["w1"] = uniform(ks[0], (32, in_channels, 4, 4), in_channels * 16)
    p["b1"] = uniform(ks[1], (32,), in_channels * 16)
    p["w2"] = uniform(ks[2], (64, 32, 4, 4), 32 * 16)
    p["b2"] = uniform(ks[3], (64,), 32 * 16)
    p["w3"] = uniform(ks[4], (128, 64, 4, 4), 64 * 16)
    p["b3"] = uniform(ks[5], (128,), 64 * 16)
    p["fc_mu_w"] = uniform(ks[6], (latent_dim, flattened_dim), flattened_dim)
    p["fc_mu_b"] = uniform(ks[7], (latent_dim,), flattened_dim)
    p["fc_logvar_w"] = uniform(ks[8], (latent_dim, flattened_dim), flattened_dim)
    p["fc_logvar_b"] = uniform(ks[9], (latent_dim,), flattened_dim)
    return p


def prepare_params(raw, *, h8, w8, c_last=128):
    """One-time (outside jit) re-layout of PyTorch weights for the kernels."""
    def conv1_mat(w):  # (Cout, Cin, 4, 4) -> (16*Cin, Cout), rows (kh, kw, ci)
        cout = w.shape[0]
        return w.transpose(2, 3, 1, 0).reshape(-1, cout).astype(jnp.bfloat16)

    def conv_s2d(w):   # (Cout, Cin, 4, 4) -> (4, 4*Cin, Cout)
        cout, cin = w.shape[:2]
        w6 = w.reshape(cout, cin, 2, 2, 2, 2)   # (co, ci, di, p, dj, q)
        w6 = w6.transpose(2, 4, 3, 5, 1, 0)     # (di, dj, p, q, ci, co)
        return w6.reshape(4, 4 * cin, cout).astype(jnp.bfloat16)

    def fc_nhwc(w):    # (latent, C*H8*W8) NCHW-flatten cols -> (H8*W8*C, latent)
        latent = w.shape[0]
        w = w.reshape(latent, c_last, h8, w8).transpose(2, 3, 1, 0)
        return w.reshape(h8 * w8 * c_last, latent)

    return {
        "c1_w": conv1_mat(raw["w1"]), "c1_b": raw["b1"].astype(jnp.float32),
        "c2_w": conv_s2d(raw["w2"]),  "c2_b": raw["b2"].astype(jnp.float32),
        "c3_w": conv_s2d(raw["w3"]),  "c3_b": raw["b3"].astype(jnp.float32),
        # Fused FC heads: (flattened_dim, 2*latent) -> 128-lane-dense output.
        "fc_w": jnp.concatenate(
            [fc_nhwc(raw["fc_mu_w"]), fc_nhwc(raw["fc_logvar_w"])],
            axis=1).astype(jnp.bfloat16),
        "fc_b": jnp.concatenate(
            [raw["fc_mu_b"], raw["fc_logvar_b"]]).astype(jnp.float32),
    }


# ---------------------------------------------------------------------------
# Encoder forward
# ---------------------------------------------------------------------------
@jax.jit
def encoder_forward(params, x):
    """x: (N, C, H, W) f32 -> (mu, logvar), each (N, latent_dim) f32."""
    n = x.shape[0]
    # Single boundary transpose to NHWC + bf16 cast; channels-last after that.
    h = jnp.transpose(x, (0, 2, 3, 1)).astype(jnp.bfloat16)

    # conv1 (Cin=1): 16-column im2col + single-step fused matmul+bias+ReLU.
    patches, ho, wo = im2col_nhwc(h)
    h = matmul_bias(patches, params["c1_w"], params["c1_b"], relu=True,
                    out_dtype=jnp.bfloat16, tm_target=8192, tk_target=16384)
    h = h.reshape(n, ho, wo, 32)

    # conv2 / conv3: space-to-depth + in-kernel 4-shift matmul conv (no im2col).
    h = conv4x4s2_relu(h, params["c2_w"], params["c2_b"])   # (N, H/4, W/4, 64)
    h = conv4x4s2_relu(h, params["c3_w"], params["c3_b"])   # (N, H/8, W/8, 128)

    h = h.reshape(n, -1)  # NHWC flatten; FC weights were permuted to match.
    heads = matmul_bias(h, params["fc_w"], params["fc_b"], relu=False,
                        out_dtype=jnp.float32, tk_target=16384, split_k=2)
    latent = heads.shape[1] // 2
    return heads[:, :latent], heads[:, latent:]


# ---------------------------------------------------------------------------
# Pure-JAX f32 reference (PyTorch semantics) for a correctness check
# ---------------------------------------------------------------------------
def encoder_reference_f32(raw, x):
    h = x
    for wk, bk in (("w1", "b1"), ("w2", "b2"), ("w3", "b3")):
        h = jax.lax.conv_general_dilated(
            h, raw[wk], window_strides=(2, 2), padding=((1, 1), (1, 1)),
            dimension_numbers=("NCHW", "OIHW", "NCHW"))
        h = jnp.maximum(h + raw[bk].reshape(1, -1, 1, 1), 0.0)
    h = h.reshape(h.shape[0], -1)                      # nn.Flatten on NCHW
    mu = h @ raw["fc_mu_w"].T + raw["fc_mu_b"]
    logvar = h @ raw["fc_logvar_w"].T + raw["fc_logvar_b"]
    return mu, logvar


if __name__ == "__main__":
    key = jax.random.PRNGKey(0)
    k_param, k_x = jax.random.split(key)

    batch, in_channels, H, W = 2, 1, 64, 64
    latent_dim = 64
    h8, w8 = H // 8, W // 8
    flattened_dim = 128 * h8 * w8  # 8192 at this test size

    raw = init_encoder_params_torch_layout(k_param, in_channels, latent_dim,
                                           flattened_dim)
    params = prepare_params(raw, h8=h8, w8=w8, c_last=128)
    x = jax.random.normal(k_x, (batch, in_channels, H, W), jnp.float32)

    mu, logvar = encoder_forward(params, x)
    jax.block_until_ready((mu, logvar))

    assert mu.shape == (batch, latent_dim), mu.shape
    assert logvar.shape == (batch, latent_dim), logvar.shape
    assert bool(jnp.all(jnp.isfinite(mu))) and bool(jnp.all(jnp.isfinite(logvar)))

    # Numerical check vs. f32 XLA reference (bf16 matmuls -> loose tolerance).
    mu_ref, logvar_ref = encoder_reference_f32(raw, x)
    assert float(jnp.max(jnp.abs(mu - mu_ref))) < 2e-2
    assert float(jnp.max(jnp.abs(logvar - logvar_ref))) < 2e-2

    print("KERNEL_OK")
</pallas_src>

<mosaic_0001>
module attributes {stable_mosaic.version = 11 : i64} {
  func.func @_mm_single_kernel(%arg0: i32, %arg1: memref<2048x16xbf16, #tpu.memory_space<vmem>>, %arg2: memref<16x32xbf16, #tpu.memory_space<vmem>>, %arg3: memref<1x32xf32, #tpu.memory_space<vmem>>, %arg4: memref<2048x32xbf16, #tpu.memory_space<vmem>>) attributes {dimension_semantics = [#tpu.dimension_semantics<parallel>], iteration_bounds = array<i64: 1>, scalar_prefetch = 0 : i64, scratch_operands = 0 : i64, tpu.core_type = #tpu.core_type<tc>, window_params = [{transform_indices = @transform_0, window_bounds = array<i64: 2048, 16>}, {pipeline_mode = #tpu.pipeline_mode<synchronous>, transform_indices = @transform_1, window_bounds = array<i64: 16, 32>}, {pipeline_mode = #tpu.pipeline_mode<synchronous>, transform_indices = @transform_2, window_bounds = array<i64: 1, 32>}, {transform_indices = @transform_3, window_bounds = array<i64: 2048, 32>}]} {
    %c0 = arith.constant 0 : index
    %c0_0 = arith.constant 0 : index
    %0 = vector.load %arg1[%c0, %c0_0] : memref<2048x16xbf16, #tpu.memory_space<vmem>>, vector<2048x16xbf16>
    %c0_1 = arith.constant 0 : index
    %c0_2 = arith.constant 0 : index
    %1 = vector.load %arg2[%c0_1, %c0_2] : memref<16x32xbf16, #tpu.memory_space<vmem>>, vector<16x32xbf16>
    %cst = arith.constant dense<0.000000e+00> : vector<2048x32xf32>
    %2 = tpu.matmul %0, %1, %cst {dimension_numbers = #tpu.dot_dimension_numbers<[1], [0], [0], [1], [0, 0, 1, 1], [], []>} : vector<2048x16xbf16>, vector<16x32xbf16>, vector<2048x32xf32> -> vector<2048x32xf32>
    %c0_3 = arith.constant 0 : index
    %c0_4 = arith.constant 0 : index
    %3 = vector.load %arg3[%c0_3, %c0_4] : memref<1x32xf32, #tpu.memory_space<vmem>>, vector<1x32xf32>
    %4 = vector.broadcast %3 : vector<1x32xf32> to vector<2048x32xf32>
    %5 = arith.addf %2, %4 : vector<2048x32xf32>
    %cst_5 = arith.constant 0.000000e+00 : f32
    %6 = vector.broadcast %cst_5 : f32 to vector<2048x32xf32>
    %7 = arith.maximumf %5, %6 : vector<2048x32xf32>
    %8 = arith.truncf %7 : vector<2048x32xf32> to vector<2048x32xbf16>
    %c0_6 = arith.constant 0 : index
    %c0_7 = arith.constant 0 : index
    %9 = vector.load %arg4[%c0_6, %c0_7] : memref<2048x32xbf16, #tpu.memory_space<vmem>>, vector<2048x32xbf16>
    tpu.vector_store %arg4[%c0_6, %c0_7], %8 {strides = array<i32>} : memref<2048x32xbf16, #tpu.memory_space<vmem>>, vector<2048x32xbf16>,
    return
  }
  func.func @transform_0(%arg0: i32) -> (i32, i32) {
    %c0_i32 = arith.constant 0 : i32
    %c0_i32_0 = arith.constant 0 : i32
    return %arg0, %c0_i32 : i32, i32
  }
  func.func @transform_1(%arg0: i32) -> (i32, i32) {
    %c0_i32 = arith.constant 0 : i32
    %c0_i32_0 = arith.constant 0 : i32
    %c0_i32_1 = arith.constant 0 : i32
    return %c0_i32, %c0_i32_0 : i32, i32
  }
  func.func @transform_2(%arg0: i32) -> (i32, i32) {
    %c0_i32 = arith.constant 0 : i32
    %c0_i32_0 = arith.constant 0 : i32
    %c0_i32_1 = arith.constant 0 : i32
    return %c0_i32, %c0_i32_0 : i32, i32
  }
  func.func @transform_3(%arg0: i32) -> (i32, i32) {
    %c0_i32 = arith.constant 0 : i32
    %c0_i32_0 = arith.constant 0 : i32
    return %arg0, %c0_i32 : i32, i32
  }
}

module attributes {stable_mosaic.version = 11 : i64} {
  func.func @_conv4x4s2_kernel(%arg0: i32, %arg1: memref<1x17x17x128xbf16, #tpu.memory_space<vmem>>, %arg2: memref<4x128x64xbf16, #tpu.memory_space<vmem>>, %arg3: memref<1x64xf32, #tpu.memory_space<vmem>>, %arg4: memref<1x256x64xbf16, #tpu.memory_space<vmem>>) attributes {dimension_semantics = [#tpu.dimension_semantics<parallel>], iteration_bounds = array<i64: 2>, scalar_prefetch = 0 : i64, scratch_operands = 0 : i64, tpu.core_type = #tpu.core_type<tc>, window_params = [{transform_indices = @transform_0, window_bounds = array<i64: 1, 17, 17, 128>}, {pipeline_mode = #tpu.pipeline_mode<synchronous>, transform_indices = @transform_1, window_bounds = array<i64: 4, 128, 64>}, {pipeline_mode = #tpu.pipeline_mode<synchronous>, transform_indices = @transform_2, window_bounds = array<i64: 1, 64>}, {transform_indices = @transform_3, window_bounds = array<i64: 1, 256, 64>}]} {
    %c0 = arith.constant 0 : index
    %c0_0 = arith.constant 0 : index
    %c0_1 = arith.constant 0 : index
    %c0_2 = arith.constant 0 : index
    %0 = vector.load %arg1[%c0, %c0_0, %c0_1, %c0_2] : memref<1x17x17x128xbf16, #tpu.memory_space<vmem>>, vector<1x17x17x128xbf16>
    %1 = vector.shape_cast %0 : vector<1x17x17x128xbf16> to vector<17x17x128xbf16>
    %2 = vector.extract_strided_slice %1 {offsets = [0, 0, 0], sizes = [16, 16, 128], strides = [1, 1, 1]} : vector<17x17x128xbf16> to vector<16x16x128xbf16>
    %3 = vector.shape_cast %2 : vector<16x16x128xbf16> to vector<256x128xbf16>
    %c0_3 = arith.constant 0 : index
    %c0_4 = arith.constant 0 : index
    %c0_5 = arith.constant 0 : index
    %4 = vector.load %arg2[%c0_3, %c0_4, %c0_5] : memref<4x128x64xbf16, #tpu.memory_space<vmem>>, vector<1x128x64xbf16>
    %5 = vector.shape_cast %4 : vector<1x128x64xbf16> to vector<128x64xbf16>
    %cst = arith.constant dense<0.000000e+00> : vector<256x64xf32>
    %6 = tpu.matmul %3, %5, %cst {dimension_numbers = #tpu.dot_dimension_numbers<[1], [0], [0], [1], [0, 0, 1, 1], [], []>} : vector<256x128xbf16>, vector<128x64xbf16>, vector<256x64xf32> -> vector<256x64xf32>
    %7 = vector.extract_strided_slice %1 {offsets = [0, 1, 0], sizes = [16, 16, 128], strides = [1, 1, 1]} : vector<17x17x128xbf16> to vector<16x16x128xbf16>
    %8 = vector.shape_cast %7 : vector<16x16x128xbf16> to vector<256x128xbf16>
    %c1 = arith.constant 1 : index
    %c0_6 = arith.constant 0 : index
    %c0_7 = arith.constant 0 : index
    %9 = vector.load %arg2[%c1, %c0_6, %c0_7] : memref<4x128x64xbf16, #tpu.memory_space<vmem>>, vector<1x128x64xbf16>
    %10 = vector.shape_cast %9 : vector<1x128x64xbf16> to vector<128x64xbf16>
    %cst_8 = arith.constant dense<0.000000e+00> : vector<256x64xf32>
    %11 = tpu.matmul %8, %10, %cst_8 {dimension_numbers = #tpu.dot_dimension_numbers<[1], [0], [0], [1], [0, 0, 1, 1], [], []>} : vector<256x128xbf16>, vector<128x64xbf16>, vector<256x64xf32> -> vector<256x64xf32>
    %12 = arith.addf %6, %11 : vector<256x64xf32>
    %13 = vector.extract_strided_slice %1 {offsets = [1, 0, 0], sizes = [16, 16, 128], strides = [1, 1, 1]} : vector<17x17x128xbf16> to vector<16x16x128xbf16>
    %14 = vector.shape_cast %13 : vector<16x16x128xbf16> to vector<256x128xbf16>
    %c2 = arith.constant 2 : index
    %c0_9 = arith.constant 0 : index
    %c0_10 = arith.constant 0 : index
    %15 = vector.load %arg2[%c2, %c0_9, %c0_10] : memref<4x128x64xbf16, #tpu.memory_space<vmem>>, vector<1x128x64xbf16>
    %16 = vector.shape_cast %15 : vector<1x128x64xbf16> to vector<128x64xbf16>
    %cst_11 = arith.constant dense<0.000000e+00> : vector<256x64xf32>
    %17 = tpu.matmul %14, %16, %cst_11 {dimension_numbers = #tpu.dot_dimension_numbers<[1], [0], [0], [1], [0, 0, 1, 1], [], []>} : vector<256x128xbf16>, vector<128x64xbf16>, vector<256x64xf32> -> vector<256x64xf32>
    %18 = arith.addf %12, %17 : vector<256x64xf32>
    %19 = vector.extract_strided_slice %1 {offsets = [1, 1, 0], sizes = [16, 16, 128], strides = [1, 1, 1]} : vector<17x17x128xbf16> to vector<16x16x128xbf16>
    %20 = vector.shape_cast %19 : vector<16x16x128xbf16> to vector<256x128xbf16>
    %c3 = arith.constant 3 : index
    %c0_12 = arith.constant 0 : index
    %c0_13 = arith.constant 0 : index
    %21 = vector.load %arg2[%c3, %c0_12, %c0_13] : memref<4x128x64xbf16, #tpu.memory_space<vmem>>, vector<1x128x64xbf16>
    %22 = vector.shape_cast %21 : vector<1x128x64xbf16> to vector<128x64xbf16>
    %cst_14 = arith.constant dense<0.000000e+00> : vector<256x64xf32>
    %23 = tpu.matmul %20, %22, %cst_14 {dimension_numbers = #tpu.dot_dimension_numbers<[1], [0], [0], [1], [0, 0, 1, 1], [], []>} : vector<256x128xbf16>, vector<128x64xbf16>, vector<256x64xf32> -> vector<256x64xf32>
    %24 = arith.addf %18, %23 : vector<256x64xf32>
    %c0_15 = arith.constant 0 : index
    %c0_16 = arith.constant 0 : index
    %25 = vector.load %arg3[%c0_15, %c0_16] : memref<1x64xf32, #tpu.memory_space<vmem>>, vector<1x64xf32>
    %26 = vector.broadcast %25 : vector<1x64xf32> to vector<256x64xf32>
    %27 = arith.addf %24, %26 : vector<256x64xf32>
    %cst_17 = arith.constant 0.000000e+00 : f32
    %28 = vector.broadcast %cst_17 : f32 to vector<256x64xf32>
    %29 = arith.maximumf %27, %28 : vector<256x64xf32>
    %30 = arith.truncf %29 : vector<256x64xf32> to vector<256x64xbf16>
    %c0_18 = arith.constant 0 : index
    %c0_19 = arith.constant 0 : index
    %c0_20 = arith.constant 0 : index
    %31 = vector.load %arg4[%c0_18, %c0_19, %c0_20] : memref<1x256x64xbf16, #tpu.memory_space<vmem>>, vector<1x256x64xbf16>
    %32 = vector.shape_cast %31 : vector<1x256x64xbf16> to vector<256x64xbf16>
    %33 = vector.shape_cast %30 : vector<256x64xbf16> to vector<1x256x64xbf16>
    tpu.vector_store %arg4[%c0_18, %c0_19, %c0_20], %33 {strides = array<i32>} : memref<1x256x64xbf16, #tpu.memory_space<vmem>>, vector<1x256x64xbf16>,
    return
  }
  func.func @transform_0(%arg0: i32) -> (i32, i32, i32, i32) {
    %c0_i32 = arith.constant 0 : i32
    %c0_i32_0 = arith.constant 0 : i32
    %c0_i32_1 = arith.constant 0 : i32
    %c0_i32_2 = arith.constant 0 : i32
    return %arg0, %c0_i32, %c0_i32_0, %c0_i32_1 : i32, i32, i32, i32
  }
  func.func @transform_1(%arg0: i32) -> (i32, i32, i32) {
    %c0_i32 = arith.constant 0 : i32
    %c0_i32_0 = arith.constant 0 : i32
    %c0_i32_1 = arith.constant 0 : i32
    %c0_i32_2 = arith.constant 0 : i32
    return %c0_i32, %c0_i32_0, %c0_i32_1 : i32, i32, i32
  }
  func.func @transform_2(%arg0: i32) -> (i32, i32) {
    %c0_i32 = arith.constant 0 : i32
    %c0_i32_0 = arith.constant 0 : i32
    %c0_i32_1 = arith.constant 0 : i32
    return %c0_i32, %c0_i32_0 : i32, i32
  }
  func.func @transform_3(%arg0: i32) -> (i32, i32, i32) {
    %c0_i32 = arith.constant 0 : i32
    %c0_i32_0 = arith.constant 0 : i32
    %c0_i32_1 = arith.constant 0 : i32
    return %arg0, %c0_i32, %c0_i32_0 : i32, i32, i32
  }
}

module attributes {stable_mosaic.version = 11 : i64} {
  func.func @_conv4x4s2_kernel(%arg0: i32, %arg1: memref<1x9x9x256xbf16, #tpu.memory_space<vmem>>, %arg2: memref<4x256x128xbf16, #tpu.memory_space<vmem>>, %arg3: memref<1x128xf32, #tpu.memory_space<vmem>>, %arg4: memref<1x64x128xbf16, #tpu.memory_space<vmem>>) attributes {dimension_semantics = [#tpu.dimension_semantics<parallel>], iteration_bounds = array<i64: 2>, scalar_prefetch = 0 : i64, scratch_operands = 0 : i64, tpu.core_type = #tpu.core_type<tc>, window_params = [{transform_indices = @transform_0, window_bounds = array<i64: 1, 9, 9, 256>}, {pipeline_mode = #tpu.pipeline_mode<synchronous>, transform_indices = @transform_1, window_bounds = array<i64: 4, 256, 128>}, {pipeline_mode = #tpu.pipeline_mode<synchronous>, transform_indices = @transform_2, window_bounds = array<i64: 1, 128>}, {transform_indices = @transform_3, window_bounds = array<i64: 1, 64, 128>}]} {
    %c0 = arith.constant 0 : index
    %c0_0 = arith.constant 0 : index
    %c0_1 = arith.constant 0 : index
    %c0_2 = arith.constant 0 : index
    %0 = vector.load %arg1[%c0, %c0_0, %c0_1, %c0_2] : memref<1x9x9x256xbf16, #tpu.memory_space<vmem>>, vector<1x9x9x256xbf16>
    %1 = vector.shape_cast %0 : vector<1x9x9x256xbf16> to vector<9x9x256xbf16>
    %2 = vector.extract_strided_slice %1 {offsets = [0, 0, 0], sizes = [8, 8, 256], strides = [1, 1, 1]} : vector<9x9x256xbf16> to vector<8x8x256xbf16>
    %3 = vector.shape_cast %2 : vector<8x8x256xbf16> to vector<64x256xbf16>
    %c0_3 = arith.constant 0 : index
    %c0_4 = arith.constant 0 : index
    %c0_5 = arith.constant 0 : index
    %4 = vector.load %arg2[%c0_3, %c0_4, %c0_5] : memref<4x256x128xbf16, #tpu.memory_space<vmem>>, vector<1x256x128xbf16>
    %5 = vector.shape_cast %4 : vector<1x256x128xbf16> to vector<256x128xbf16>
    %cst = arith.constant dense<0.000000e+00> : vector<64x128xf32>
    %6 = tpu.matmul %3, %5, %cst {dimension_numbers = #tpu.dot_dimension_numbers<[1], [0], [0], [1], [0, 0, 1, 1], [], []>} : vector<64x256xbf16>, vector<256x128xbf16>, vector<64x128xf32> -> vector<64x128xf32>
    %7 = vector.extract_strided_slice %1 {offsets = [0, 1, 0], sizes = [8, 8, 256], strides = [1, 1, 1]} : vector<9x9x256xbf16> to vector<8x8x256xbf16>
    %8 = vector.shape_cast %7 : vector<8x8x256xbf16> to vector<64x256xbf16>
    %c1 = arith.constant 1 : index
    %c0_6 = arith.constant 0 : index
    %c0_7 = arith.constant 0 : index
    %9 = vector.load %arg2[%c1, %c0_6, %c0_7] : memref<4x256x128xbf16, #tpu.memory_space<vmem>>, vector<1x256x128xbf16>
    %10 = vector.shape_cast %9 : vector<1x256x128xbf16> to vector<256x128xbf16>
    %cst_8 = arith.constant dense<0.000000e+00> : vector<64x128xf32>
    %11 = tpu.matmul %8, %10, %cst_8 {dimension_numbers = #tpu.dot_dimension_numbers<[1], [0], [0], [1], [0, 0, 1, 1], [], []>} : vector<64x256xbf16>, vector<256x128xbf16>, vector<64x128xf32> -> vector<64x128xf32>
    %12 = arith.addf %6, %11 : vector<64x128xf32>
    %13 = vector.extract_strided_slice %1 {offsets = [1, 0, 0], sizes = [8, 8, 256], strides = [1, 1, 1]} : vector<9x9x256xbf16> to vector<8x8x256xbf16>
    %14 = vector.shape_cast %13 : vector<8x8x256xbf16> to vector<64x256xbf16>
    %c2 = arith.constant 2 : index
    %c0_9 = arith.constant 0 : index
    %c0_10 = arith.constant 0 : index
    %15 = vector.load %arg2[%c2, %c0_9, %c0_10] : memref<4x256x128xbf16, #tpu.memory_space<vmem>>, vector<1x256x128xbf16>
    %16 = vector.shape_cast %15 : vector<1x256x128xbf16> to vector<256x128xbf16>
    %cst_11 = arith.constant dense<0.000000e+00> : vector<64x128xf32>
    %17 = tpu.matmul %14, %16, %cst_11 {dimension_numbers = #tpu.dot_dimension_numbers<[1], [0], [0], [1], [0, 0, 1, 1], [], []>} : vector<64x256xbf16>, vector<256x128xbf16>, vector<64x128xf32> -> vector<64x128xf32>
    %18 = arith.addf %12, %17 : vector<64x128xf32>
    %19 = vector.extract_strided_slice %1 {offsets = [1, 1, 0], sizes = [8, 8, 256], strides = [1, 1, 1]} : vector<9x9x256xbf16> to vector<8x8x256xbf16>
    %20 = vector.shape_cast %19 : vector<8x8x256xbf16> to vector<64x256xbf16>
    %c3 = arith.constant 3 : index
    %c0_12 = arith.constant 0 : index
    %c0_13 = arith.constant 0 : index
    %21 = vector.load %arg2[%c3, %c0_12, %c0_13] : memref<4x256x128xbf16, #tpu.memory_space<vmem>>, vector<1x256x128xbf16>
    %22 = vector.shape_cast %21 : vector<1x256x128xbf16> to vector<256x128xbf16>
    %cst_14 = arith.constant dense<0.000000e+00> : vector<64x128xf32>
    %23 = tpu.matmul %20, %22, %cst_14 {dimension_numbers = #tpu.dot_dimension_numbers<[1], [0], [0], [1], [0, 0, 1, 1], [], []>} : vector<64x256xbf16>, vector<256x128xbf16>, vector<64x128xf32> -> vector<64x128xf32>
    %24 = arith.addf %18, %23 : vector<64x128xf32>
    %c0_15 = arith.constant 0 : index
    %c0_16 = arith.constant 0 : index
    %25 = vector.load %arg3[%c0_15, %c0_16] : memref<1x128xf32, #tpu.memory_space<vmem>>, vector<1x128xf32>
    %26 = vector.broadcast %25 : vector<1x128xf32> to vector<64x128xf32>
    %27 = arith.addf %24, %26 : vector<64x128xf32>
    %cst_17 = arith.constant 0.000000e+00 : f32
    %28 = vector.broadcast %cst_17 : f32 to vector<64x128xf32>
    %29 = arith.maximumf %27, %28 : vector<64x128xf32>
    %30 = arith.truncf %29 : vector<64x128xf32> to vector<64x128xbf16>
    %c0_18 = arith.constant 0 : index
    %c0_19 = arith.constant 0 : index
    %c0_20 = arith.constant 0 : index
    %31 = vector.load %arg4[%c0_18, %c0_19, %c0_20] : memref<1x64x128xbf16, #tpu.memory_space<vmem>>, vector<1x64x128xbf16>
    %32 = vector.shape_cast %31 : vector<1x64x128xbf16> to vector<64x128xbf16>
    %33 = vector.shape_cast %30 : vector<64x128xbf16> to vector<1x64x128xbf16>
    tpu.vector_store %arg4[%c0_18, %c0_19, %c0_20], %33 {strides = array<i32>} : memref<1x64x128xbf16, #tpu.memory_space<vmem>>, vector<1x64x128xbf16>,
    return
  }
  func.func @transform_0(%arg0: i32) -> (i32, i32, i32, i32) {
    %c0_i32 = arith.constant 0 : i32
    %c0_i32_0 = arith.constant 0 : i32
    %c0_i32_1 = arith.constant 0 : i32
    %c0_i32_2 = arith.constant 0 : i32
    return %arg0, %c0_i32, %c0_i32_0, %c0_i32_1 : i32, i32, i32, i32
  }
  func.func @transform_1(%arg0: i32) -> (i32, i32, i32) {
    %c0_i32 = arith.constant 0 : i32
    %c0_i32_0 = arith.constant 0 : i32
    %c0_i32_1 = arith.constant 0 : i32
    %c0_i32_2 = arith.constant 0 : i32
    return %c0_i32, %c0_i32_0, %c0_i32_1 : i32, i32, i32
  }
  func.func @transform_2(%arg0: i32) -> (i32, i32) {
    %c0_i32 = arith.constant 0 : i32
    %c0_i32_0 = arith.constant 0 : i32
    %c0_i32_1 = arith.constant 0 : i32
    return %c0_i32, %c0_i32_0 : i32, i32
  }
  func.func @transform_3(%arg0: i32) -> (i32, i32, i32) {
    %c0_i32 = arith.constant 0 : i32
    %c0_i32_0 = arith.constant 0 : i32
    %c0_i32_1 = arith.constant 0 : i32
    return %arg0, %c0_i32, %c0_i32_0 : i32, i32, i32
  }
}

module attributes {stable_mosaic.version = 11 : i64} {
  func.func @_mm_single_kernel(%arg0: i32, %arg1: memref<2x4096xbf16, #tpu.memory_space<vmem>>, %arg2: memref<4096x128xbf16, #tpu.memory_space<vmem>>, %arg3: memref<1x128xf32, #tpu.memory_space<vmem>>, %arg4: memref<1x2x128xf32, #tpu.memory_space<vmem>>) attributes {dimension_semantics = [#tpu.dimension_semantics<parallel>], iteration_bounds = array<i64: 2>, scalar_prefetch = 0 : i64, scratch_operands = 0 : i64, tpu.core_type = #tpu.core_type<tc>, window_params = [{transform_indices = @transform_0, window_bounds = array<i64: 2, 4096>}, {transform_indices = @transform_1, window_bounds = array<i64: 4096, 128>}, {pipeline_mode = #tpu.pipeline_mode<synchronous>, transform_indices = @transform_2, window_bounds = array<i64: 1, 128>}, {transform_indices = @transform_3, window_bounds = array<i64: 1, 2, 128>}]} {
    %c0 = arith.constant 0 : index
    %c0_0 = arith.constant 0 : index
    %0 = vector.load %arg1[%c0, %c0_0] : memref<2x4096xbf16, #tpu.memory_space<vmem>>, vector<2x4096xbf16>
    %c0_1 = arith.constant 0 : index
    %c0_2 = arith.constant 0 : index
    %1 = vector.load %arg2[%c0_1, %c0_2] : memref<4096x128xbf16, #tpu.memory_space<vmem>>, vector<4096x128xbf16>
    %cst = arith.constant dense<0.000000e+00> : vector<2x128xf32>
    %2 = tpu.matmul %0, %1, %cst {dimension_numbers = #tpu.dot_dimension_numbers<[1], [0], [0], [1], [0, 0, 1, 1], [], []>} : vector<2x4096xbf16>, vector<4096x128xbf16>, vector<2x128xf32> -> vector<2x128xf32>
    %3 = vector.shape_cast %2 : vector<2x128xf32> to vector<1x2x128xf32>
    %c0_3 = arith.constant 0 : index
    %c0_4 = arith.constant 0 : index
    %c0_5 = arith.constant 0 : index
    %4 = vector.load %arg4[%c0_3, %c0_4, %c0_5] : memref<1x2x128xf32, #tpu.memory_space<vmem>>, vector<1x2x128xf32>
    tpu.vector_store %arg4[%c0_3, %c0_4, %c0_5], %3 {strides = array<i32>} : memref<1x2x128xf32, #tpu.memory_space<vmem>>, vector<1x2x128xf32>,
    return
  }
  func.func @transform_0(%arg0: i32) -> (i32, i32) {
    %c0_i32 = arith.constant 0 : i32
    %c0_i32_0 = arith.constant 0 : i32
    return %c0_i32, %arg0 : i32, i32
  }
  func.func @transform_1(%arg0: i32) -> (i32, i32) {
    %c0_i32 = arith.constant 0 : i32
    %c0_i32_0 = arith.constant 0 : i32
    return %arg0, %c0_i32 : i32, i32
  }
  func.func @transform_2(%arg0: i32) -> (i32, i32) {
    %c0_i32 = arith.constant 0 : i32
    %c0_i32_0 = arith.constant 0 : i32
    %c0_i32_1 = arith.constant 0 : i32
    return %c0_i32, %c0_i32_0 : i32, i32
  }
  func.func @transform_3(%arg0: i32) -> (i32, i32, i32) {
    %c0_i32 = arith.constant 0 : i32
    %c0_i32_0 = arith.constant 0 : i32
    %c0_i32_1 = arith.constant 0 : i32
    return %arg0, %c0_i32, %c0_i32_0 : i32, i32, i32
  }
}

</mosaic_0001>

<llo_original>
// kernel: encoder_forward.4
$region0: #{encoder_forward.4}
  #allocation0 [shape = 'u32[]', space=smem, size = 0x4, offset = 0x4, fixed_abs, tag = 'smem constant byte address 0x4 - core index']
  #allocation1 [shape = 'u32[144,128]{1,0:T(1,128)}', space=vmem, size = 0x12000, scoped, tag = 'internal scratch']
  %s0 = inlined_call_operand.vmem [shape: bf16[2048,16], index: 0, kind: input, shape index: {}]
  %s1 = inlined_call_operand.hbm [shape: bf16[16,32], index: 1, kind: input, shape index: {}]
  %s2 = inlined_call_operand.hbm [shape: f32[1,32], index: 2, kind: input, shape index: {}]
  %s3 = inlined_call_operand.vmem [shape: bf16[2048,32], index: 3, kind: output, shape index: {}]
  %s4 = sld [smem:[#allocation0]]
  $region30: #{encoder_forward.4} parent=0
    _
  %s6 = ssub.s32 1, %s4
  %s7 = scalar_select 0, %s6, %s4
  $region1: #{encoder_forward.4} parent=0
    #allocation2 [shape = 'u8[4096]{0}', space=vmem, size = 0x1000, scoped, tag = 'input window, operand 1, single buffered']
    #allocation3 [shape = 's32[1]{0}', space=sflag, size = 0x4, scoped, tag = 'scoped memory for encoder_forward.4']
    #allocation4 [shape = 'u8[512]{0}', space=vmem, size = 0x400, scoped, tag = 'input window, operand 2, single buffered']
    #allocation5 [shape = 's32[1]{0}', space=sflag, size = 0x4, scoped, tag = 'scoped memory for encoder_forward.4']
    %8 = vsyncpa [#allocation3], 0
    %9 = vsyncpa [#allocation5], 0
    // Predicated region
    $region2: #{encoder_forward.4} parent=1 // pred_check
      _
    $region3: #{encoder_forward.4} parent=1 // pred_check_branch
      %11 = sbr.rel (0) target = $region5
    $region4: #{encoder_forward.4} parent=1 // pred_region
      _
    $region5: #{encoder_forward.4} parent=1 // pred_fallthru
      _
    // Predicated region
    $region6: #{encoder_forward.4} parent=1 // pred_check
      _
    $region7: #{encoder_forward.4} parent=1 // pred_check_branch
      %13 = sbr.rel (0) target = $region9
    $region8: #{encoder_forward.4} parent=1 // pred_region
      %s15 = ssub.s32 128, 128
      %16 = vsyncadd [#allocation3], %s15
      %s17 = sshll.u32 [#allocation2], 4
      %s18 = int_to_ptr.vmem [resolvable:$true] %s17
      %23 = dma.hbm_to_vmem [thread:$0]  %s1, 128, %s18, [#allocation3], 64, 64, 4
    $region9: #{encoder_forward.4} parent=1 // pred_fallthru
      _
    // Predicated region
    $region10: #{encoder_forward.4} parent=1 // pred_check
      _
    $region11: #{encoder_forward.4} parent=1 // pred_check_branch
      %25 = sbr.rel (0) target = $region13
    $region12: #{encoder_forward.4} parent=1 // pred_region
      %s27 = ssub.s32 16, 16
      %28 = vsyncadd [#allocation5], %s27
      %s30 = sshll.u32 [#allocation4], 4
      %s31 = int_to_ptr.vmem [resolvable:$true] %s30
      %33 = dma.hbm_to_vmem [thread:$0]  %s2, 16, %s31, [#allocation5]
    $region13: #{encoder_forward.4} parent=1 // pred_fallthru
      _
    // Predicated region
    $region14: #{encoder_forward.4} parent=1 // pred_check
      _
    $region15: #{encoder_forward.4} parent=1 // pred_check_branch
      %35 = sbr.rel (0) target = $region17
    $region16: #{encoder_forward.4} parent=1 // pred_region
      %36 = dma.done [#allocation3], 128
    $region17: #{encoder_forward.4} parent=1 // pred_fallthru
      _
    // Predicated region
    $region18: #{encoder_forward.4} parent=1 // pred_check
      _
    $region19: #{encoder_forward.4} parent=1 // pred_check_branch
      %38 = sbr.rel (0) target = $region21
    $region20: #{encoder_forward.4} parent=1 // pred_region
      %39 = dma.done [#allocation5], 16
    $region21: #{encoder_forward.4} parent=1 // pred_fallthru
      _
    %v41 = vld [vmem:[%s0] sm:$0xf]
    %v42 = vld [vmem:[%s0 + $0x4] sm:$0xf]
    %v43 = vld [vmem:[%s0 + $0x8] sm:$0xf]
    %v44 = vld [vmem:[%s0 + $0xc] sm:$0xf]
    %v45 = vld [vmem:[%s0 + $0x10] sm:$0xf]
    %v46 = vld [vmem:[%s0 + $0x14] sm:$0xf]
    %v47 = vld [vmem:[%s0 + $0x18] sm:$0xf]
    %v48 = vld [vmem:[%s0 + $0x1c] sm:$0xf]
    %v49 = vld [vmem:[%s0 + $0x20] sm:$0xf]
    %v50 = vld [vmem:[%s0 + $0x24] sm:$0xf]
    %v51 = vld [vmem:[%s0 + $0x28] sm:$0xf]
    %v52 = vld [vmem:[%s0 + $0x2c] sm:$0xf]
    %v53 = vld [vmem:[%s0 + $0x30] sm:$0xf]
    %v54 = vld [vmem:[%s0 + $0x34] sm:$0xf]
    %v55 = vld [vmem:[%s0 + $0x38] sm:$0xf]
    %v56 = vld [vmem:[%s0 + $0x3c] sm:$0xf]
    %v57 = vld [vmem:[%s0 + $0x40] sm:$0xf]
    %v58 = vld [vmem:[%s0 + $0x44] sm:$0xf]
    %v59 = vld [vmem:[%s0 + $0x48] sm:$0xf]
    %v60 = vld [vmem:[%s0 + $0x4c] sm:$0xf]
    %v61 = vld [vmem:[%s0 + $0x50] sm:$0xf]
    %v62 = vld [vmem:[%s0 + $0x54] sm:$0xf]
    %v63 = vld [vmem:[%s0 + $0x58] sm:$0xf]
    %v64 = vld [vmem:[%s0 + $0x5c] sm:$0xf]
    %v65 = vld [vmem:[%s0 + $0x60] sm:$0xf]
    %v66 = vld [vmem:[%s0 + $0x64] sm:$0xf]
    %v67 = vld [vmem:[%s0 + $0x68] sm:$0xf]
    %v68 = vld [vmem:[%s0 + $0x6c] sm:$0xf]
    %v69 = vld [vmem:[%s0 + $0x70] sm:$0xf]
    %v70 = vld [vmem:[%s0 + $0x74] sm:$0xf]
    %v71 = vld [vmem:[%s0 + $0x78] sm:$0xf]
    %v72 = vld [vmem:[%s0 + $0x7c] sm:$0xf]
    %v73 = vld [vmem:[%s0 + $0x80] sm:$0xf]
    %v74 = vld [vmem:[%s0 + $0x84] sm:$0xf]
    %v75 = vld [vmem:[%s0 + $0x88] sm:$0xf]
    %v76 = vld [vmem:[%s0 + $0x8c] sm:$0xf]
    %v77 = vld [vmem:[%s0 + $0x90] sm:$0xf]
    %v78 = vld [vmem:[%s0 + $0x94] sm:$0xf]
    %v79 = vld [vmem:[%s0 + $0x98] sm:$0xf]
    %v80 = vld [vmem:[%s0 + $0x9c] sm:$0xf]
    %v81 = vld [vmem:[%s0 + $0xa0] sm:$0xf]
    %v82 = vld [vmem:[%s0 + $0xa4] sm:$0xf]
    %v83 = vld [vmem:[%s0 + $0xa8] sm:$0xf]
    %v84 = vld [vmem:[%s0 + $0xac] sm:$0xf]
    %v85 = vld [vmem:[%s0 + $0xb0] sm:$0xf]
    %v86 = vld [vmem:[%s0 + $0xb4] sm:$0xf]
    %v87 = vld [vmem:[%s0 + $0xb8] sm:$0xf]
    %v88 = vld [vmem:[%s0 + $0xbc] sm:$0xf]
    %v89 = vld [vmem:[%s0 + $0xc0] sm:$0xf]
    %v90 = vld [vmem:[%s0 + $0xc4] sm:$0xf]
    %v91 = vld [vmem:[%s0 + $0xc8] sm:$0xf]
    %v92 = vld [vmem:[%s0 + $0xcc] sm:$0xf]
    %v93 = vld [vmem:[%s0 + $0xd0] sm:$0xf]
    %v94 = vld [vmem:[%s0 + $0xd4] sm:$0xf]
    %v95 = vld [vmem:[%s0 + $0xd8] sm:$0xf]
    %v96 = vld [vmem:[%s0 + $0xdc] sm:$0xf]
    %v97 = vld [vmem:[%s0 + $0xe0] sm:$0xf]
    %v98 = vld [vmem:[%s0 + $0xe4] sm:$0xf]
    %v99 = vld [vmem:[%s0 + $0xe8] sm:$0xf]
    %v100 = vld [vmem:[%s0 + $0xec] sm:$0xf]
    %v101 = vld [vmem:[%s0 + $0xf0] sm:$0xf]
    %v102 = vld [vmem:[%s0 + $0xf4] sm:$0xf]
    %v103 = vld [vmem:[%s0 + $0xf8] sm:$0xf]
    %v104 = vld [vmem:[%s0 + $0xfc] sm:$0xf]
    %v105 = vld [vmem:[%s0 + $0x100] sm:$0xf]
    %v106 = vld [vmem:[%s0 + $0x104] sm:$0xf]
    %v107 = vld [vmem:[%s0 + $0x108] sm:$0xf]
    %v108 = vld [vmem:[%s0 + $0x10c] sm:$0xf]
    %v109 = vld [vmem:[%s0 + $0x110] sm:$0xf]
    %v110 = vld [vmem:[%s0 + $0x114] sm:$0xf]
    %v111 = vld [vmem:[%s0 + $0x118] sm:$0xf]
    %v112 = vld [vmem:[%s0 + $0x11c] sm:$0xf]
    %v113 = vld [vmem:[%s0 + $0x120] sm:$0xf]
    %v114 = vld [vmem:[%s0 + $0x124] sm:$0xf]
    %v115 = vld [vmem:[%s0 + $0x128] sm:$0xf]
    %v116 = vld [vmem:[%s0 + $0x12c] sm:$0xf]
    %v117 = vld [vmem:[%s0 + $0x130] sm:$0xf]
    %v118 = vld [vmem:[%s0 + $0x134] sm:$0xf]
    %v119 = vld [vmem:[%s0 + $0x138] sm:$0xf]
    %v120 = vld [vmem:[%s0 + $0x13c] sm:$0xf]
    %v121 = vld [vmem:[%s0 + $0x140] sm:$0xf]
    %v122 = vld [vmem:[%s0 + $0x144] sm:$0xf]
    %v123 = vld [vmem:[%s0 + $0x148] sm:$0xf]
    %v124 = vld [vmem:[%s0 + $0x14c] sm:$0xf]
    %v125 = vld [vmem:[%s0 + $0x150] sm:$0xf]
    %v126 = vld [vmem:[%s0 + $0x154] sm:$0xf]
    %v127 = vld [vmem:[%s0 + $0x158] sm:$0xf]
    %v128 = vld [vmem:[%s0 + $0x15c] sm:$0xf]
    %v129 = vld [vmem:[%s0 + $0x160] sm:$0xf]
    %v130 = vld [vmem:[%s0 + $0x164] sm:$0xf]
    %v131 = vld [vmem:[%s0 + $0x168] sm:$0xf]
    %v132 = vld [vmem:[%s0 + $0x16c] sm:$0xf]
    %v133 = vld [vmem:[%s0 + $0x170] sm:$0xf]
    %v134 = vld [vmem:[%s0 + $0x174] sm:$0xf]
    %v135 = vld [vmem:[%s0 + $0x178] sm:$0xf]
    %v136 = vld [vmem:[%s0 + $0x17c] sm:$0xf]
    %v137 = vld [vmem:[%s0 + $0x180] sm:$0xf]
    %v138 = vld [vmem:[%s0 + $0x184] sm:$0xf]
    %v139 = vld [vmem:[%s0 + $0x188] sm:$0xf]
    %v140 = vld [vmem:[%s0 + $0x18c] sm:$0xf]
    %v141 = vld [vmem:[%s0 + $0x190] sm:$0xf]
    %v142 = vld [vmem:[%s0 + $0x194] sm:$0xf]
    %v143 = vld [vmem:[%s0 + $0x198] sm:$0xf]
    %v144 = vld [vmem:[%s0 + $0x19c] sm:$0xf]
    %v145 = vld [vmem:[%s0 + $0x1a0] sm:$0xf]
    %v146 = vld [vmem:[%s0 + $0x1a4] sm:$0xf]
    %v147 = vld [vmem:[%s0 + $0x1a8] sm:$0xf]
    %v148 = vld [vmem:[%s0 + $0x1ac] sm:$0xf]
    %v149 = vld [vmem:[%s0 + $0x1b0] sm:$0xf]
    %v150 = vld [vmem:[%s0 + $0x1b4] sm:$0xf]
    %v151 = vld [vmem:[%s0 + $0x1b8] sm:$0xf]
    %v152 = vld [vmem:[%s0 + $0x1bc] sm:$0xf]
    %v153 = vld [vmem:[%s0 + $0x1c0] sm:$0xf]
    %v154 = vld [vmem:[%s0 + $0x1c4] sm:$0xf]
    %v155 = vld [vmem:[%s0 + $0x1c8] sm:$0xf]
    %v156 = vld [vmem:[%s0 + $0x1cc] sm:$0xf]
    %v157 = vld [vmem:[%s0 + $0x1d0] sm:$0xf]
    %v158 = vld [vmem:[%s0 + $0x1d4] sm:$0xf]
    %v159 = vld [vmem:[%s0 + $0x1d8] sm:$0xf]
    %v160 = vld [vmem:[%s0 + $0x1dc] sm:$0xf]
    %v161 = vld [vmem:[%s0 + $0x1e0] sm:$0xf]
    %v162 = vld [vmem:[%s0 + $0x1e4] sm:$0xf]
    %v163 = vld [vmem:[%s0 + $0x1e8] sm:$0xf]
    %v164 = vld [vmem:[%s0 + $0x1ec] sm:$0xf]
    %v165 = vld [vmem:[%s0 + $0x1f0] sm:$0xf]
    %v166 = vld [vmem:[%s0 + $0x1f4] sm:$0xf]
    %v167 = vld [vmem:[%s0 + $0x1f8] sm:$0xf]
    %v168 = vld [vmem:[%s0 + $0x1fc] sm:$0xf]
    %v169 = vld [vmem:[%s0 + $0x200] sm:$0xf]
    %v170 = vld [vmem:[%s0 + $0x204] sm:$0xf]
    %v171 = vld [vmem:[%s0 + $0x208] sm:$0xf]
    %v172 = vld [vmem:[%s0 + $0x20c] sm:$0xf]
    %v173 = vld [vmem:[%s0 + $0x210] sm:$0xf]
    %v174 = vld [vmem:[%s0 + $0x214] sm:$0xf]
    %v175 = vld [vmem:[%s0 + $0x218] sm:$0xf]
    %v176 = vld [vmem:[%s0 + $0x21c] sm:$0xf]
    %v177 = vld [vmem:[%s0 + $0x220] sm:$0xf]
    %v178 = vld [vmem:[%s0 + $0x224] sm:$0xf]
    %v179 = vld [vmem:[%s0 + $0x228] sm:$0xf]
    %v180 = vld [vmem:[%s0 + $0x22c] sm:$0xf]
    %v181 = vld [vmem:[%s0 + $0x230] sm:$0xf]
    %v182 = vld [vmem:[%s0 + $0x234] sm:$0xf]
    %v183 = vld [vmem:[%s0 + $0x238] sm:$0xf]
    %v184 = vld [vmem:[%s0 + $0x23c] sm:$0xf]
    %v185 = vld [vmem:[%s0 + $0x240] sm:$0xf]
    %v186 = vld [vmem:[%s0 + $0x244] sm:$0xf]
    %v187 = vld [vmem:[%s0 + $0x248] sm:$0xf]
    %v188 = vld [vmem:[%s0 + $0x24c] sm:$0xf]
    %v189 = vld [vmem:[%s0 + $0x250] sm:$0xf]
    %v190 = vld [vmem:[%s0 + $0x254] sm:$0xf]
    %v191 = vld [vmem:[%s0 + $0x258] sm:$0xf]
    %v192 = vld [vmem:[%s0 + $0x25c] sm:$0xf]
    %v193 = vld [vmem:[%s0 + $0x260] sm:$0xf]
    %v194 = vld [vmem:[%s0 + $0x264] sm:$0xf]
    %v195 = vld [vmem:[%s0 + $0x268] sm:$0xf]
    %v196 = vld [vmem:[%s0 + $0x26c] sm:$0xf]
    %v197 = vld [vmem:[%s0 + $0x270] sm:$0xf]
    %v198 = vld [vmem:[%s0 + $0x274] sm:$0xf]
    %v199 = vld [vmem:[%s0 + $0x278] sm:$0xf]
    %v200 = vld [vmem:[%s0 + $0x27c] sm:$0xf]
    %v201 = vld [vmem:[%s0 + $0x280] sm:$0xf]
    %v202 = vld [vmem:[%s0 + $0x284] sm:$0xf]
    %v203 = vld [vmem:[%s0 + $0x288] sm:$0xf]
    %v204 = vld [vmem:[%s0 + $0x28c] sm:$0xf]
    %v205 = vld [vmem:[%s0 + $0x290] sm:$0xf]
    %v206 = vld [vmem:[%s0 + $0x294] sm:$0xf]
    %v207 = vld [vmem:[%s0 + $0x298] sm:$0xf]
    %v208 = vld [vmem:[%s0 + $0x29c] sm:$0xf]
    %v209 = vld [vmem:[%s0 + $0x2a0] sm:$0xf]
    %v210 = vld [vmem:[%s0 + $0x2a4] sm:$0xf]
    %v211 = vld [vmem:[%s0 + $0x2a8] sm:$0xf]
    %v212 = vld [vmem:[%s0 + $0x2ac] sm:$0xf]
    %v213 = vld [vmem:[%s0 + $0x2b0] sm:$0xf]
    %v214 = vld [vmem:[%s0 + $0x2b4] sm:$0xf]
    %v215 = vld [vmem:[%s0 + $0x2b8] sm:$0xf]
    %v216 = vld [vmem:[%s0 + $0x2bc] sm:$0xf]
    %v217 = vld [vmem:[%s0 + $0x2c0] sm:$0xf]
    %v218 = vld [vmem:[%s0 + $0x2c4] sm:$0xf]
    %v219 = vld [vmem:[%s0 + $0x2c8] sm:$0xf]
    %v220 = vld [vmem:[%s0 + $0x2cc] sm:$0xf]
    %v221 = vld [vmem:[%s0 + $0x2d0] sm:$0xf]
    %v222 = vld [vmem:[%s0 + $0x2d4] sm:$0xf]
    %v223 = vld [vmem:[%s0 + $0x2d8] sm:$0xf]
    %v224 = vld [vmem:[%s0 + $0x2dc] sm:$0xf]
    %v225 = vld [vmem:[%s0 + $0x2e0] sm:$0xf]
    %v226 = vld [vmem:[%s0 + $0x2e4] sm:$0xf]
    %v227 = vld [vmem:[%s0 + $0x2e8] sm:$0xf]
    %v228 = vld [vmem:[%s0 + $0x2ec] sm:$0xf]
    %v229 = vld [vmem:[%s0 + $0x2f0] sm:$0xf]
    %v230 = vld [vmem:[%s0 + $0x2f4] sm:$0xf]
    %v231 = vld [vmem:[%s0 + $0x2f8] sm:$0xf]
    %v232 = vld [vmem:[%s0 + $0x2fc] sm:$0xf]
    %v233 = vld [vmem:[%s0 + $0x300] sm:$0xf]
    %v234 = vld [vmem:[%s0 + $0x304] sm:$0xf]
    %v235 = vld [vmem:[%s0 + $0x308] sm:$0xf]
    %v236 = vld [vmem:[%s0 + $0x30c] sm:$0xf]
    %v237 = vld [vmem:[%s0 + $0x310] sm:$0xf]
    %v238 = vld [vmem:[%s0 + $0x314] sm:$0xf]
    %v239 = vld [vmem:[%s0 + $0x318] sm:$0xf]
    %v240 = vld [vmem:[%s0 + $0x31c] sm:$0xf]
    %v241 = vld [vmem:[%s0 + $0x320] sm:$0xf]
    %v242 = vld [vmem:[%s0 + $0x324] sm:$0xf]
    %v243 = vld [vmem:[%s0 + $0x328] sm:$0xf]
    %v244 = vld [vmem:[%s0 + $0x32c] sm:$0xf]
    %v245 = vld [vmem:[%s0 + $0x330] sm:$0xf]
    %v246 = vld [vmem:[%s0 + $0x334] sm:$0xf]
    %v247 = vld [vmem:[%s0 + $0x338] sm:$0xf]
    %v248 = vld [vmem:[%s0 + $0x33c] sm:$0xf]
    %v249 = vld [vmem:[%s0 + $0x340] sm:$0xf]
    %v250 = vld [vmem:[%s0 + $0x344] sm:$0xf]
    %v251 = vld [vmem:[%s0 + $0x348] sm:$0xf]
    %v252 = vld [vmem:[%s0 + $0x34c] sm:$0xf]
    %v253 = vld [vmem:[%s0 + $0x350] sm:$0xf]
    %v254 = vld [vmem:[%s0 + $0x354] sm:$0xf]
    %v255 = vld [vmem:[%s0 + $0x358] sm:$0xf]
    %v256 = vld [vmem:[%s0 + $0x35c] sm:$0xf]
    %v257 = vld [vmem:[%s0 + $0x360] sm:$0xf]
    %v258 = vld [vmem:[%s0 + $0x364] sm:$0xf]
    %v259 = vld [vmem:[%s0 + $0x368] sm:$0xf]
    %v260 = vld [vmem:[%s0 + $0x36c] sm:$0xf]
    %v261 = vld [vmem:[%s0 + $0x370] sm:$0xf]
    %v262 = vld [vmem:[%s0 + $0x374] sm:$0xf]
    %v263 = vld [vmem:[%s0 + $0x378] sm:$0xf]
    %v264 = vld [vmem:[%s0 + $0x37c] sm:$0xf]
    %v265 = vld [vmem:[%s0 + $0x380] sm:$0xf]
    %v266 = vld [vmem:[%s0 + $0x384] sm:$0xf]
    %v267 = vld [vmem:[%s0 + $0x388] sm:$0xf]
    %v268 = vld [vmem:[%s0 + $0x38c] sm:$0xf]
    %v269 = vld [vmem:[%s0 + $0x390] sm:$0xf]
    %v270 = vld [vmem:[%s0 + $0x394] sm:$0xf]
    %v271 = vld [vmem:[%s0 + $0x398] sm:$0xf]
    %v272 = vld [vmem:[%s0 + $0x39c] sm:$0xf]
    %v273 = vld [vmem:[%s0 + $0x3a0] sm:$0xf]
    %v274 = vld [vmem:[%s0 + $0x3a4] sm:$0xf]
    %v275 = vld [vmem:[%s0 + $0x3a8] sm:$0xf]
    %v276 = vld [vmem:[%s0 + $0x3ac] sm:$0xf]
    %v277 = vld [vmem:[%s0 + $0x3b0] sm:$0xf]
    %v278 = vld [vmem:[%s0 + $0x3b4] sm:$0xf]
    %v279 = vld [vmem:[%s0 + $0x3b8] sm:$0xf]
    %v280 = vld [vmem:[%s0 + $0x3bc] sm:$0xf]
    %v281 = vld [vmem:[%s0 + $0x3c0] sm:$0xf]
    %v282 = vld [vmem:[%s0 + $0x3c4] sm:$0xf]
    %v283 = vld [vmem:[%s0 + $0x3c8] sm:$0xf]
    %v284 = vld [vmem:[%s0 + $0x3cc] sm:$0xf]
    %v285 = vld [vmem:[%s0 + $0x3d0] sm:$0xf]
    %v286 = vld [vmem:[%s0 + $0x3d4] sm:$0xf]
    %v287 = vld [vmem:[%s0 + $0x3d8] sm:$0xf]
    %v288 = vld [vmem:[%s0 + $0x3dc] sm:$0xf]
    %v289 = vld [vmem:[%s0 + $0x3e0] sm:$0xf]
    %v290 = vld [vmem:[%s0 + $0x3e4] sm:$0xf]
    %v291 = vld [vmem:[%s0 + $0x3e8] sm:$0xf]
    %v292 = vld [vmem:[%s0 + $0x3ec] sm:$0xf]
    %v293 = vld [vmem:[%s0 + $0x3f0] sm:$0xf]
    %v294 = vld [vmem:[%s0 + $0x3f4] sm:$0xf]
    %v295 = vld [vmem:[%s0 + $0x3f8] sm:$0xf]
    %v296 = vld [vmem:[%s0 + $0x3fc] sm:$0xf]
    %v297 = vld [vmem:[#allocation2] sm:$0xf]
    %v298 = vld [vmem:[#allocation2 + $0x4] sm:$0xf]
    %v299 = vld [vmem:[#allocation4] sm:$0x1]
    %v301 = vlaneseq
    %v302 = vshrl.u32 %v301, 7
    %v303 = vsub.s32 0, %v302
    %v304 = vrot.slane %v299, %v303
    %v562 = vunpack.c.l.b16 %v41
    %v563 = vunpack.c.l.b16 %v42
    %v564 = vunpack.c.l.b16 %v43
    %v565 = vunpack.c.l.b16 %v44
    %v566 = vunpack.c.l.b16 %v45
    %v567 = vunpack.c.l.b16 %v46
    %v568 = vunpack.c.l.b16 %v47
    %v569 = vunpack.c.l.b16 %v48
    %v570 = vunpack.c.l.b16 %v49
    %v571 = vunpack.c.l.b16 %v50
    %v572 = vunpack.c.l.b16 %v51
    %v573 = vunpack.c.l.b16 %v52
    %v574 = vunpack.c.l.b16 %v53
    %v575 = vunpack.c.l.b16 %v54
    %v576 = vunpack.c.l.b16 %v55
    %v577 = vunpack.c.l.b16 %v56
    %v578 = vunpack.c.l.b16 %v57
    %v579 = vunpack.c.l.b16 %v58
    %v580 = vunpack.c.l.b16 %v59
    %v581 = vunpack.c.l.b16 %v60
    %v582 = vunpack.c.l.b16 %v61
    %v583 = vunpack.c.l.b16 %v62
    %v584 = vunpack.c.l.b16 %v63
    %v585 = vunpack.c.l.b16 %v64
    %v586 = vunpack.c.l.b16 %v65
    %v587 = vunpack.c.l.b16 %v66
    %v588 = vunpack.c.l.b16 %v67
    %v589 = vunpack.c.l.b16 %v68
    %v590 = vunpack.c.l.b16 %v69
    %v591 = vunpack.c.l.b16 %v70
    %v592 = vunpack.c.l.b16 %v71
    %v593 = vunpack.c.l.b16 %v72
    %v594 = vunpack.c.l.b16 %v73
    %v595 = vunpack.c.l.b16 %v74
    %v596 = vunpack.c.l.b16 %v75
    %v597 = vunpack.c.l.b16 %v76
    %v598 = vunpack.c.l.b16 %v77
    %v599 = vunpack.c.l.b16 %v78
    %v600 = vunpack.c.l.b16 %v79
    %v601 = vunpack.c.l.b16 %v80
    %v602 = vunpack.c.l.b16 %v81
    %v603 = vunpack.c.l.b16 %v82
    %v604 = vunpack.c.l.b16 %v83
    %v605 = vunpack.c.l.b16 %v84
    %v606 = vunpack.c.l.b16 %v85
    %v607 = vunpack.c.l.b16 %v86
    %v608 = vunpack.c.l.b16 %v87
    %v609 = vunpack.c.l.b16 %v88
    %v610 = vunpack.c.l.b16 %v89
    %v611 = vunpack.c.l.b16 %v90
    %v612 = vunpack.c.l.b16 %v91
    %v613 = vunpack.c.l.b16 %v92
    %v614 = vunpack.c.l.b16 %v93
    %v615 = vunpack.c.l.b16 %v94
    %v616 = vunpack.c.l.b16 %v95
    %v617 = vunpack.c.l.b16 %v96
    %v618 = vunpack.c.l.b16 %v97
    %v619 = vunpack.c.l.b16 %v98
    %v620 = vunpack.c.l.b16 %v99
    %v621 = vunpack.c.l.b16 %v100
    %v622 = vunpack.c.l.b16 %v101
    %v623 = vunpack.c.l.b16 %v102
    %v624 = vunpack.c.l.b16 %v103
    %v625 = vunpack.c.l.b16 %v104
    %v626 = vunpack.c.l.b16 %v105
    %v627 = vunpack.c.l.b16 %v106
    %v628 = vunpack.c.l.b16 %v107
    %v629 = vunpack.c.l.b16 %v108
    %v630 = vunpack.c.l.b16 %v109
    %v631 = vunpack.c.l.b16 %v110
    %v632 = vunpack.c.l.b16 %v111
    %v633 = vunpack.c.l.b16 %v112
    %v634 = vunpack.c.l.b16 %v113
    %v635 = vunpack.c.l.b16 %v114
    %v636 = vunpack.c.l.b16 %v115
    %v637 = vunpack.c.l.b16 %v116
    %v638 = vunpack.c.l.b16 %v117
    %v639 = vunpack.c.l.b16 %v118
    %v640 = vunpack.c.l.b16 %v119
    %v641 = vunpack.c.l.b16 %v120
    %v642 = vunpack.c.l.b16 %v121
    %v643 = vunpack.c.l.b16 %v122
    %v644 = vunpack.c.l.b16 %v123
    %v645 = vunpack.c.l.b16 %v124
    %v646 = vunpack.c.l.b16 %v125
    %v647 = vunpack.c.l.b16 %v126
    %v648 = vunpack.c.l.b16 %v127
    %v649 = vunpack.c.l.b16 %v128
    %v650 = vunpack.c.l.b16 %v129
    %v651 = vunpack.c.l.b16 %v130
    %v652 = vunpack.c.l.b16 %v131
    %v653 = vunpack.c.l.b16 %v132
    %v654 = vunpack.c.l.b16 %v133
    %v655 = vunpack.c.l.b16 %v134
    %v656 = vunpack.c.l.b16 %v135
    %v657 = vunpack.c.l.b16 %v136
    %v658 = vunpack.c.l.b16 %v137
    %v659 = vunpack.c.l.b16 %v138
    %v660 = vunpack.c.l.b16 %v139
    %v661 = vunpack.c.l.b16 %v140
    %v662 = vunpack.c.l.b16 %v141
    %v663 = vunpack.c.l.b16 %v142
    %v664 = vunpack.c.l.b16 %v143
    %v665 = vunpack.c.l.b16 %v144
    %v666 = vunpack.c.l.b16 %v145
    %v667 = vunpack.c.l.b16 %v146
    %v668 = vunpack.c.l.b16 %v147
    %v669 = vunpack.c.l.b16 %v148
    %v670 = vunpack.c.l.b16 %v149
    %v671 = vunpack.c.l.b16 %v150
    %v672 = vunpack.c.l.b16 %v151
    %v673 = vunpack.c.l.b16 %v152
    %v674 = vunpack.c.l.b16 %v153
    %v675 = vunpack.c.l.b16 %v154
    %v676 = vunpack.c.l.b16 %v155
    %v677 = vunpack.c.l.b16 %v156
    %v678 = vunpack.c.l.b16 %v157
    %v679 = vunpack.c.l.b16 %v158
    %v680 = vunpack.c.l.b16 %v159
    %v681 = vunpack.c.l.b16 %v160
    %v682 = vunpack.c.l.b16 %v161
    %v683 = vunpack.c.l.b16 %v162
    %v684 = vunpack.c.l.b16 %v163
    %v685 = vunpack.c.l.b16 %v164
    %v686 = vunpack.c.l.b16 %v165
    %v687 = vunpack.c.l.b16 %v166
    %v688 = vunpack.c.l.b16 %v167
    %v689 = vunpack.c.l.b16 %v168
    %v690 = vunpack.c.l.b16 %v169
    %v691 = vunpack.c.l.b16 %v170
    %v692 = vunpack.c.l.b16 %v171
    %v693 = vunpack.c.l.b16 %v172
    %v694 = vunpack.c.l.b16 %v173
    %v695 = vunpack.c.l.b16 %v174
    %v696 = vunpack.c.l.b16 %v175
    %v697 = vunpack.c.l.b16 %v176
    %v698 = vunpack.c.l.b16 %v177
    %v699 = vunpack.c.l.b16 %v178
    %v700 = vunpack.c.l.b16 %v179
    %v701 = vunpack.c.l.b16 %v180
    %v702 = vunpack.c.l.b16 %v181
    %v703 = vunpack.c.l.b16 %v182
    %v704 = vunpack.c.l.b16 %v183
    %v705 = vunpack.c.l.b16 %v184
    %v706 = vunpack.c.l.b16 %v185
    %v707 = vunpack.c.l.b16 %v186
    %v708 = vunpack.c.l.b16 %v187
    %v709 = vunpack.c.l.b16 %v188
    %v710 = vunpack.c.l.b16 %v189
    %v711 = vunpack.c.l.b16 %v190
    %v712 = vunpack.c.l.b16 %v191
    %v713 = vunpack.c.l.b16 %v192
    %v714 = vunpack.c.l.b16 %v193
    %v715 = vunpack.c.l.b16 %v194
    %v716 = vunpack.c.l.b16 %v195
    %v717 = vunpack.c.l.b16 %v196
    %v718 = vunpack.c.l.b16 %v197
    %v719 = vunpack.c.l.b16 %v198
    %v720 = vunpack.c.l.b16 %v199
    %v721 = vunpack.c.l.b16 %v200
    %v722 = vunpack.c.l.b16 %v201
    %v723 = vunpack.c.l.b16 %v202
    %v724 = vunpack.c.l.b16 %v203
    %v725 = vunpack.c.l.b16 %v204
    %v726 = vunpack.c.l.b16 %v205
    %v727 = vunpack.c.l.b16 %v206
    %v728 = vunpack.c.l.b16 %v207
    %v729 = vunpack.c.l.b16 %v208
    %v730 = vunpack.c.l.b16 %v209
    %v731 = vunpack.c.l.b16 %v210
    %v732 = vunpack.c.l.b16 %v211
    %v733 = vunpack.c.l.b16 %v212
    %v734 = vunpack.c.l.b16 %v213
    %v735 = vunpack.c.l.b16 %v214
    %v736 = vunpack.c.l.b16 %v215
    %v737 = vunpack.c.l.b16 %v216
    %v738 = vunpack.c.l.b16 %v217
    %v739 = vunpack.c.l.b16 %v218
    %v740 = vunpack.c.l.b16 %v219
    %v741 = vunpack.c.l.b16 %v220
    %v742 = vunpack.c.l.b16 %v221
    %v743 = vunpack.c.l.b16 %v222
    %v744 = vunpack.c.l.b16 %v223
    %v745 = vunpack.c.l.b16 %v224
    %v746 = vunpack.c.l.b16 %v225
    %v747 = vunpack.c.l.b16 %v226
    %v748 = vunpack.c.l.b16 %v227
    %v749 = vunpack.c.l.b16 %v228
    %v750 = vunpack.c.l.b16 %v229
    %v751 = vunpack.c.l.b16 %v230
    %v752 = vunpack.c.l.b16 %v231
    %v753 = vunpack.c.l.b16 %v232
    %v754 = vunpack.c.l.b16 %v233
    %v755 = vunpack.c.l.b16 %v234
    %v756 = vunpack.c.l.b16 %v235
    %v757 = vunpack.c.l.b16 %v236
    %v758 = vunpack.c.l.b16 %v237
    %v759 = vunpack.c.l.b16 %v238
    %v760 = vunpack.c.l.b16 %v239
    %v761 = vunpack.c.l.b16 %v240
    %v762 = vunpack.c.l.b16 %v241
    %v763 = vunpack.c.l.b16 %v242
    %v764 = vunpack.c.l.b16 %v243
    %v765 = vunpack.c.l.b16 %v244
    %v766 = vunpack.c.l.b16 %v245
    %v767 = vunpack.c.l.b16 %v246
    %v768 = vunpack.c.l.b16 %v247
    %v769 = vunpack.c.l.b16 %v248
    %v770 = vunpack.c.l.b16 %v249
    %v771 = vunpack.c.l.b16 %v250
    %v772 = vunpack.c.l.b16 %v251
    %v773 = vunpack.c.l.b16 %v252
    %v774 = vunpack.c.l.b16 %v253
    %v775 = vunpack.c.l.b16 %v254
    %v776 = vunpack.c.l.b16 %v255
    %v777 = vunpack.c.l.b16 %v256
    %v778 = vunpack.c.l.b16 %v257
    %v779 = vunpack.c.l.b16 %v258
    %v780 = vunpack.c.l.b16 %v259
    %v781 = vunpack.c.l.b16 %v260
    %v782 = vunpack.c.l.b16 %v261
    %v783 = vunpack.c.l.b16 %v262
    %v784 = vunpack.c.l.b16 %v263
    %v785 = vunpack.c.l.b16 %v264
    %v786 = vunpack.c.l.b16 %v265
    %v787 = vunpack.c.l.b16 %v266
    %v788 = vunpack.c.l.b16 %v267
    %v789 = vunpack.c.l.b16 %v268
    %v790 = vunpack.c.l.b16 %v269
    %v791 = vunpack.c.l.b16 %v270
    %v792 = vunpack.c.l.b16 %v271
    %v793 = vunpack.c.l.b16 %v272
    %v794 = vunpack.c.l.b16 %v273
    %v795 = vunpack.c.l.b16 %v274
    %v796 = vunpack.c.l.b16 %v275
    %v797 = vunpack.c.l.b16 %v276
    %v798 = vunpack.c.l.b16 %v277
    %v799 = vunpack.c.l.b16 %v278
    %v800 = vunpack.c.l.b16 %v279
    %v801 = vunpack.c.l.b16 %v280
    %v802 = vunpack.c.l.b16 %v281
    %v803 = vunpack.c.l.b16 %v282
    %v804 = vunpack.c.l.b16 %v283
    %v805 = vunpack.c.l.b16 %v284
    %v806 = vunpack.c.l.b16 %v285
    %v807 = vunpack.c.l.b16 %v286
    %v808 = vunpack.c.l.b16 %v287
    %v809 = vunpack.c.l.b16 %v288
    %v810 = vunpack.c.l.b16 %v289
    %v811 = vunpack.c.l.b16 %v290
    %v812 = vunpack.c.l.b16 %v291
    %v813 = vunpack.c.l.b16 %v292
    %v814 = vunpack.c.l.b16 %v293
    %v815 = vunpack.c.l.b16 %v294
    %v816 = vunpack.c.l.b16 %v295
    %v817 = vunpack.c.l.b16 %v296
    %v818 = vpack.c.b16 %v563, %v562
    %v819 = vpack.c.b16 %v565, %v564
    %v820 = vpack.c.b16 %v567, %v566
    %v821 = vpack.c.b16 %v569, %v568
    %v822 = vpack.c.b16 %v571, %v570
    %v823 = vpack.c.b16 %v573, %v572
    %v824 = vpack.c.b16 %v575, %v574
    %v825 = vpack.c.b16 %v577, %v576
    %v826 = vpack.c.b16 %v579, %v578
    %v827 = vpack.c.b16 %v581, %v580
    %v828 = vpack.c.b16 %v583, %v582
    %v829 = vpack.c.b16 %v585, %v584
    %v830 = vpack.c.b16 %v587, %v586
    %v831 = vpack.c.b16 %v589, %v588
    %v832 = vpack.c.b16 %v591, %v590
    %v833 = vpack.c.b16 %v593, %v592
    %v834 = vpack.c.b16 %v595, %v594
    %v835 = vpack.c.b16 %v597, %v596
    %v836 = vpack.c.b16 %v599, %v598
    %v837 = vpack.c.b16 %v601, %v600
    %v838 = vpack.c.b16 %v603, %v602
    %v839 = vpack.c.b16 %v605, %v604
    %v840 = vpack.c.b16 %v607, %v606
    %v841 = vpack.c.b16 %v609, %v608
    %v842 = vpack.c.b16 %v611, %v610
    %v843 = vpack.c.b16 %v613, %v612
    %v844 = vpack.c.b16 %v615, %v614
    %v845 = vpack.c.b16 %v617, %v616
    %v846 = vpack.c.b16 %v619, %v618
    %v847 = vpack.c.b16 %v621, %v620
    %v848 = vpack.c.b16 %v623, %v622
    %v849 = vpack.c.b16 %v625, %v624
    %v850 = vpack.c.b16 %v627, %v626
    %v851 = vpack.c.b16 %v629, %v628
    %v852 = vpack.c.b16 %v631, %v630
    %v853 = vpack.c.b16 %v633, %v632
    %v854 = vpack.c.b16 %v635, %v634
    %v855 = vpack.c.b16 %v637, %v636
    %v856 = vpack.c.b16 %v639, %v638
    %v857 = vpack.c.b16 %v641, %v640
    %v858 = vpack.c.b16 %v643, %v642
    %v859 = vpack.c.b16 %v645, %v644
    %v860 = vpack.c.b16 %v647, %v646
    %v861 = vpack.c.b16 %v649, %v648
    %v862 = vpack.c.b16 %v651, %v650
    %v863 = vpack.c.b16 %v653, %v652
    %v864 = vpack.c.b16 %v655, %v654
    %v865 = vpack.c.b16 %v657, %v656
    %v866 = vpack.c.b16 %v659, %v658
    %v867 = vpack.c.b16 %v661, %v660
    %v868 = vpack.c.b16 %v663, %v662
    %v869 = vpack.c.b16 %v665, %v664
    %v870 = vpack.c.b16 %v667, %v666
    %v871 = vpack.c.b16 %v669, %v668
    %v872 = vpack.c.b16 %v671, %v670
    %v873 = vpack.c.b16 %v673, %v672
    %v874 = vpack.c.b16 %v675, %v674
    %v875 = vpack.c.b16 %v677, %v676
    %v876 = vpack.c.b16 %v679, %v678
    %v877 = vpack.c.b16 %v681, %v680
    %v878 = vpack.c.b16 %v683, %v682
    %v879 = vpack.c.b16 %v685, %v684
    %v880 = vpack.c.b16 %v687, %v686
    %v881 = vpack.c.b16 %v689, %v688
    %v882 = vpack.c.b16 %v691, %v690
    %v883 = vpack.c.b16 %v693, %v692
    %v884 = vpack.c.b16 %v695, %v694
    %v885 = vpack.c.b16 %v697, %v696
    %v886 = vpack.c.b16 %v699, %v698
    %v887 = vpack.c.b16 %v701, %v700
    %v888 = vpack.c.b16 %v703, %v702
    %v889 = vpack.c.b16 %v705, %v704
    %v890 = vpack.c.b16 %v707, %v706
    %v891 = vpack.c.b16 %v709, %v708
    %v892 = vpack.c.b16 %v711, %v710
    %v893 = vpack.c.b16 %v713, %v712
    %v894 = vpack.c.b16 %v715, %v714
    %v895 = vpack.c.b16 %v717, %v716
    %v896 = vpack.c.b16 %v719, %v718
    %v897 = vpack.c.b16 %v721, %v720
    %v898 = vpack.c.b16 %v723, %v722
    %v899 = vpack.c.b16 %v725, %v724
    %v900 = vpack.c.b16 %v727, %v726
    %v901 = vpack.c.b16 %v729, %v728
    %v902 = vpack.c.b16 %v731, %v730
    %v903 = vpack.c.b16 %v733, %v732
    %v904 = vpack.c.b16 %v735, %v734
    %v905 = vpack.c.b16 %v737, %v736
    %v906 = vpack.c.b16 %v739, %v738
    %v907 = vpack.c.b16 %v741, %v740
    %v908 = vpack.c.b16 %v743, %v742
    %v909 = vpack.c.b16 %v745, %v744
    %v910 = vpack.c.b16 %v747, %v746
    %v911 = vpack.c.b16 %v749, %v748
    %v912 = vpack.c.b16 %v751, %v750
    %v913 = vpack.c.b16 %v753, %v752
    %v914 = vpack.c.b16 %v755, %v754
    %v915 = vpack.c.b16 %v757, %v756
    %v916 = vpack.c.b16 %v759, %v758
    %v917 = vpack.c.b16 %v761, %v760
    %v918 = vpack.c.b16 %v763, %v762
    %v919 = vpack.c.b16 %v765, %v764
    %v920 = vpack.c.b16 %v767, %v766
    %v921 = vpack.c.b16 %v769, %v768
    %v922 = vpack.c.b16 %v771, %v770
    %v923 = vpack.c.b16 %v773, %v772
    %v924 = vpack.c.b16 %v775, %v774
    %v925 = vpack.c.b16 %v777, %v776
    %v926 = vpack.c.b16 %v779, %v778
    %v927 = vpack.c.b16 %v781, %v780
    %v928 = vpack.c.b16 %v783, %v782
    %v929 = vpack.c.b16 %v785, %v784
    %v930 = vpack.c.b16 %v787, %v786
    %v931 = vpack.c.b16 %v789, %v788
    %v932 = vpack.c.b16 %v791, %v790
    %v933 = vpack.c.b16 %v793, %v792
    %v934 = vpack.c.b16 %v795, %v794
    %v935 = vpack.c.b16 %v797, %v796
    %v936 = vpack.c.b16 %v799, %v798
    %v937 = vpack.c.b16 %v801, %v800
    %v938 = vpack.c.b16 %v803, %v802
    %v939 = vpack.c.b16 %v805, %v804
    %v940 = vpack.c.b16 %v807, %v806
    %v941 = vpack.c.b16 %v809, %v808
    %v942 = vpack.c.b16 %v811, %v810
    %v943 = vpack.c.b16 %v813, %v812
    %v944 = vpack.c.b16 %v815, %v814
    %v945 = vpack.c.b16 %v817, %v816
    %v948 = vunpack.c.l.b16 %v297
    %v949 = vunpack.c.l.b16 %v298
    %v950 = vpack.c.b16 %v949, %v948
    %vm952 = vcmask 130048
    %v954 = vsel %vm952, %v818, 0
    %v957 = vsel %vm952, %v819, 0
    %v960 = vsel %vm952, %v820, 0
    %v963 = vsel %vm952, %v821, 0
    %v966 = vsel %vm952, %v822, 0
    %v969 = vsel %vm952, %v823, 0
    %v972 = vsel %vm952, %v824, 0
    %v975 = vsel %vm952, %v825, 0
    %v978 = vsel %vm952, %v826, 0
    %v981 = vsel %vm952, %v827, 0
    %v984 = vsel %vm952, %v828, 0
    %v987 = vsel %vm952, %v829, 0
    %v990 = vsel %vm952, %v830, 0
    %v993 = vsel %vm952, %v831, 0
    %v996 = vsel %vm952, %v832, 0
    %v999 = vsel %vm952, %v833, 0
    %v1002 = vsel %vm952, %v834, 0
    %v1005 = vsel %vm952, %v835, 0
    %v1008 = vsel %vm952, %v836, 0
    %v1011 = vsel %vm952, %v837, 0
    %v1014 = vsel %vm952, %v838, 0
    %v1017 = vsel %vm952, %v839, 0
    %v1020 = vsel %vm952, %v840, 0
    %v1023 = vsel %vm952, %v841, 0
    %v1026 = vsel %vm952, %v842, 0
    %v1029 = vsel %vm952, %v843, 0
    %v1032 = vsel %vm952, %v844, 0
    %v1035 = vsel %vm952, %v845, 0
    %v1038 = vsel %vm952, %v846, 0
    %v1041 = vsel %vm952, %v847, 0
    %v1044 = vsel %vm952, %v848, 0
    %v1047 = vsel %vm952, %v849, 0
    %v1050 = vsel %vm952, %v850, 0
    %v1053 = vsel %vm952, %v851, 0
    %v1056 = vsel %vm952, %v852, 0
    %v1059 = vsel %vm952, %v853, 0
    %v1062 = vsel %vm952, %v854, 0
    %v1065 = vsel %vm952, %v855, 0
    %v1068 = vsel %vm952, %v856, 0
    %v1071 = vsel %vm952, %v857, 0
    %v1074 = vsel %vm952, %v858, 0
    %v1077 = vsel %vm952, %v859, 0
    %v1080 = vsel %vm952, %v860, 0
    %v1083 = vsel %vm952, %v861, 0
    %v1086 = vsel %vm952, %v862, 0
    %v1089 = vsel %vm952, %v863, 0
    %v1092 = vsel %vm952, %v864, 0
    %v1095 = vsel %vm952, %v865, 0
    %v1098 = vsel %vm952, %v866, 0
    %v1101 = vsel %vm952, %v867, 0
    %v1104 = vsel %vm952, %v868, 0
    %v1107 = vsel %vm952, %v869, 0
    %v1110 = vsel %vm952, %v870, 0
    %v1113 = vsel %vm952, %v871, 0
    %v1116 = vsel %vm952, %v872, 0
    %v1119 = vsel %vm952, %v873, 0
    %v1122 = vsel %vm952, %v874, 0
    %v1125 = vsel %vm952, %v875, 0
    %v1128 = vsel %vm952, %v876, 0
    %v1131 = vsel %vm952, %v877, 0
    %v1134 = vsel %vm952, %v878, 0
    %v1137 = vsel %vm952, %v879, 0
    %v1140 = vsel %vm952, %v880, 0
    %v1143 = vsel %vm952, %v881, 0
    %v1146 = vsel %vm952, %v882, 0
    %v1149 = vsel %vm952, %v883, 0
    %v1152 = vsel %vm952, %v884, 0
    %v1155 = vsel %vm952, %v885, 0
    %v1158 = vsel %vm952, %v886, 0
    %v1161 = vsel %vm952, %v887, 0
    %v1164 = vsel %vm952, %v888, 0
    %v1167 = vsel %vm952, %v889, 0
    %v1170 = vsel %vm952, %v890, 0
    %v1173 = vsel %vm952, %v891, 0
    %v1176 = vsel %vm952, %v892, 0
    %v1179 = vsel %vm952, %v893, 0
    %v1182 = vsel %vm952, %v894, 0
    %v1185 = vsel %vm952, %v895, 0
    %v1188 = vsel %vm952, %v896, 0
    %v1191 = vsel %vm952, %v897, 0
    %v1194 = vsel %vm952, %v898, 0
    %v1197 = vsel %vm952, %v899, 0
    %v1200 = vsel %vm952, %v900, 0
    %v1203 = vsel %vm952, %v901, 0
    %v1206 = vsel %vm952, %v902, 0
    %v1209 = vsel %vm952, %v903, 0
    %v1212 = vsel %vm952, %v904, 0
    %v1215 = vsel %vm952, %v905, 0
    %v1218 = vsel %vm952, %v906, 0
    %v1221 = vsel %vm952, %v907, 0
    %v1224 = vsel %vm952, %v908, 0
    %v1227 = vsel %vm952, %v909, 0
    %v1230 = vsel %vm952, %v910, 0
    %v1233 = vsel %vm952, %v911, 0
    %v1236 = vsel %vm952, %v912, 0
    %v1239 = vsel %vm952, %v913, 0
    %v1242 = vsel %vm952, %v914, 0
    %v1245 = vsel %vm952, %v915, 0
    %v1248 = vsel %vm952, %v916, 0
    %v1251 = vsel %vm952, %v917, 0
    %v1254 = vsel %vm952, %v918, 0
    %v1257 = vsel %vm952, %v919, 0
    %v1260 = vsel %vm952, %v920, 0
    %v1263 = vsel %vm952, %v921, 0
    %v1266 = vsel %vm952, %v922, 0
    %v1269 = vsel %vm952, %v923, 0
    %v1272 = vsel %vm952, %v924, 0
    %v1275 = vsel %vm952, %v925, 0
    %v1278 = vsel %vm952, %v926, 0
    %v1281 = vsel %vm952, %v927, 0
    %v1284 = vsel %vm952, %v928, 0
    %v1287 = vsel %vm952, %v929, 0
    %v1290 = vsel %vm952, %v930, 0
    %v1293 = vsel %vm952, %v931, 0
    %v1296 = vsel %vm952, %v932, 0
    %v1299 = vsel %vm952, %v933, 0
    %v1302 = vsel %vm952, %v934, 0
    %v1305 = vsel %vm952, %v935, 0
    %v1308 = vsel %vm952, %v936, 0
    %v1311 = vsel %vm952, %v937, 0
    %v1314 = vsel %vm952, %v938, 0
    %v1317 = vsel %vm952, %v939, 0
    %v1320 = vsel %vm952, %v940, 0
    %v1323 = vsel %vm952, %v941, 0
    %v1326 = vsel %vm952, %v942, 0
    %v1329 = vsel %vm952, %v943, 0
    %v1332 = vsel %vm952, %v944, 0
    %v1335 = vsel %vm952, %v945, 0
    %1337 = vmatprep.subr.bf16.mxu0 0
    %1338 = vmatpush1.bf16.msra.mxu0 %v950
    %1339 = vmatprep.subr.bf16.mxu0 0
    %1340 = vmatpush1.bf16.msra.mxu0 0
    %1341 = vmatprep.subr.bf16.mxu0 0
    %1342 = vmatpush1.bf16.msra.mxu0 0
    %1343 = vmatprep.subr.bf16.mxu0 0
    %1344 = vmatpush1.bf16.msra.mxu0 0
    %1345 = vmatprep.subr.bf16.mxu0 0
    %1346 = vmatpush1.bf16.msra.mxu0 0
    %1347 = vmatprep.subr.bf16.mxu0 0
    %1348 = vmatpush1.bf16.msra.mxu0 0
    %1349 = vmatprep.subr.bf16.mxu0 0
    %1350 = vmatpush1.bf16.msra.mxu0 0
    %1351 = vmatprep.subr.bf16.mxu0 0
    %1352 = vmatpush1.bf16.msra.mxu0 0
    %1353 = vmatprep.subr.bf16.mxu0 0
    %1354 = vmatpush1.bf16.msra.mxu0 0
    %1355 = vmatprep.subr.bf16.mxu0 0
    %1356 = vmatpush1.bf16.msra.mxu0 0
    %1357 = vmatprep.subr.bf16.mxu0 0
    %1358 = vmatpush1.bf16.msra.mxu0 0
    %1359 = vmatprep.subr.bf16.mxu0 0
    %1360 = vmatpush1.bf16.msra.mxu0 0
    %1361 = vmatprep.subr.bf16.mxu0 0
    %1362 = vmatpush1.bf16.msra.mxu0 0
    %1363 = vmatprep.subr.bf16.mxu0 0
    %1364 = vmatpush1.bf16.msra.mxu0 0
    %1365 = vmatprep.subr.bf16.mxu0 0
    %1366 = vmatpush1.bf16.msra.mxu0 0
    %1367 = vmatprep.subr.bf16.mxu0 0
    %1368 = vmatpush1.bf16.msra.mxu0 0
    %1369 = vmatprep.mubr.bf16.mxu0 0
    %1370 = vmatmul.mubr.bf16.gmra.mrb[0].mxu0 %v954
    %v1371 = vpop.f32.mrb[0].mxu0
    %v1372 = vadd.f32 %v304, %v1371
    %v1373 = vpop.f32.mrb[0].mxu0
    %v1374 = vpop.f32.mrb[0].mxu0
    %v1375 = vadd.f32 %v304, %v1374
    %v1376 = vpop.f32.mrb[0].mxu0
    %1377 = vmatprep.mubr.bf16.mxu0 0
    %1378 = vmatmul.mubr.bf16.gmra.mrb[0].mxu0 %v957
    %v1379 = vpop.f32.mrb[0].mxu0
    %v1380 = vadd.f32 %v304, %v1379
    %v1381 = vpop.f32.mrb[0].mxu0
    %v1382 = vpop.f32.mrb[0].mxu0
    %v1383 = vadd.f32 %v304, %v1382
    %v1384 = vpop.f32.mrb[0].mxu0
    %1385 = vmatprep.mubr.bf16.mxu0 0
    %1386 = vmatmul.mubr.bf16.gmra.mrb[0].mxu0 %v960
    %v1387 = vpop.f32.mrb[0].mxu0
    %v1388 = vadd.f32 %v304, %v1387
    %v1389 = vpop.f32.mrb[0].mxu0
    %v1390 = vpop.f32.mrb[0].mxu0
    %v1391 = vadd.f32 %v304, %v1390
    %v1392 = vpop.f32.mrb[0].mxu0
    %1393 = vmatprep.mubr.bf16.mxu0 0
    %1394 = vmatmul.mubr.bf16.gmra.mrb[0].mxu0 %v963
    %v1395 = vpop.f32.mrb[0].mxu0
    %v1396 = vadd.f32 %v304, %v1395
    %v1397 = vpop.f32.mrb[0].mxu0
    %v1398 = vpop.f32.mrb[0].mxu0
    %v1399 = vadd.f32 %v304, %v1398
    %v1400 = vpop.f32.mrb[0].mxu0
    %1401 = vmatprep.mubr.bf16.mxu0 0
    %1402 = vmatmul.mubr.bf16.gmra.mrb[0].mxu0 %v966
    %v1403 = vpop.f32.mrb[0].mxu0
    %v1404 = vadd.f32 %v304, %v1403
    %v1405 = vpop.f32.mrb[0].mxu0
    %v1406 = vpop.f32.mrb[0].mxu0
    %v1407 = vadd.f32 %v304, %v1406
    %v1408 = vpop.f32.mrb[0].mxu0
    %1409 = vmatprep.mubr.bf16.mxu0 0
    %1410 = vmatmul.mubr.bf16.gmra.mrb[0].mxu0 %v969
    %v1411 = vpop.f32.mrb[0].mxu0
    %v1412 = vadd.f32 %v304, %v1411
    %v1413 = vpop.f32.mrb[0].mxu0
    %v1414 = vpop.f32.mrb[0].mxu0
    %v1415 = vadd.f32 %v304, %v1414
    %v1416 = vpop.f32.mrb[0].mxu0
    %1417 = vmatprep.mubr.bf16.mxu0 0
    %1418 = vmatmul.mubr.bf16.gmra.mrb[0].mxu0 %v972
    %v1419 = vpop.f32.mrb[0].mxu0
    %v1420 = vadd.f32 %v304, %v1419
    %v1421 = vpop.f32.mrb[0].mxu0
    %v1422 = vpop.f32.mrb[0].mxu0
    %v1423 = vadd.f32 %v304, %v1422
    %v1424 = vpop.f32.mrb[0].mxu0
    %1425 = vmatprep.mubr.bf16.mxu0 0
    %1426 = vmatmul.mubr.bf16.gmra.mrb[0].mxu0 %v975
    %v1427 = vpop.f32.mrb[0].mxu0
    %v1428 = vadd.f32 %v304, %v1427
    %v1429 = vpop.f32.mrb[0].mxu0
    %v1430 = vpop.f32.mrb[0].mxu0
    %v1431 = vadd.f32 %v304, %v1430
    %v1432 = vpop.f32.mrb[0].mxu0
    %1433 = vmatprep.mubr.bf16.mxu0 0
    %1434 = vmatmul.mubr.bf16.gmra.mrb[0].mxu0 %v978
    %v1435 = vpop.f32.mrb[0].mxu0
    %v1436 = vadd.f32 %v304, %v1435
    %v1437 = vpop.f32.mrb[0].mxu0
    %v1438 = vpop.f32.mrb[0].mxu0
    %v1439 = vadd.f32 %v304, %v1438
    %v1440 = vpop.f32.mrb[0].mxu0
    %1441 = vmatprep.mubr.bf16.mxu0 0
    %1442 = vmatmul.mubr.bf16.gmra.mrb[0].mxu0 %v981
    %v1443 = vpop.f32.mrb[0].mxu0
    %v1444 = vadd.f32 %v304, %v1443
    %v1445 = vpop.f32.mrb[0].mxu0
    %v1446 = vpop.f32.mrb[0].mxu0
    %v1447 = vadd.f32 %v304, %v1446
    %v1448 = vpop.f32.mrb[0].mxu0
    %1449 = vmatprep.mubr.bf16.mxu0 0
    %1450 = vmatmul.mubr.bf16.gmra.mrb[0].mxu0 %v984
    %v1451 = vpop.f32.mrb[0].mxu0
    %v1452 = vadd.f32 %v304, %v1451
    %v1453 = vpop.f32.mrb[0].mxu0
    %v1454 = vpop.f32.mrb[0].mxu0
    %v1455 = vadd.f32 %v304, %v1454
    %v1456 = vpop.f32.mrb[0].mxu0
    %1457 = vmatprep.mubr.bf16.mxu0 0
    %1458 = vmatmul.mubr.bf16.gmra.mrb[0].mxu0 %v987
    %v1459 = vpop.f32.mrb[0].mxu0
    %v1460 = vadd.f32 %v304, %v1459
    %v1461 = vpop.f32.mrb[0].mxu0
    %v1462 = vpop.f32.mrb[0].mxu0
    %v1463 = vadd.f32 %v304, %v1462
    %v1464 = vpop.f32.mrb[0].mxu0
    %1465 = vmatprep.mubr.bf16.mxu0 0
    %1466 = vmatmul.mubr.bf16.gmra.mrb[0].mxu0 %v990
    %v1467 = vpop.f32.mrb[0].mxu0
    %v1468 = vadd.f32 %v304, %v1467
    %v1469 = vpop.f32.mrb[0].mxu0
    %v1470 = vpop.f32.mrb[0].mxu0
    %v1471 = vadd.f32 %v304, %v1470
    %v1472 = vpop.f32.mrb[0].mxu0
    %1473 = vmatprep.mubr.bf16.mxu0 0
    %1474 = vmatmul.mubr.bf16.gmra.mrb[0].mxu0 %v993
    %v1475 = vpop.f32.mrb[0].mxu0
    %v1476 = vadd.f32 %v304, %v1475
    %v1477 = vpop.f32.mrb[0].mxu0
    %v1478 = vpop.f32.mrb[0].mxu0
    %v1479 = vadd.f32 %v304, %v1478
    %v1480 = vpop.f32.mrb[0].mxu0
    %1481 = vmatprep.mubr.bf16.mxu0 0
    %1482 = vmatmul.mubr.bf16.gmra.mrb[0].mxu0 %v996
    %v1483 = vpop.f32.mrb[0].mxu0
    %v1484 = vadd.f32 %v304, %v1483
    %v1485 = vpop.f32.mrb[0].mxu0
    %v1486 = vpop.f32.mrb[0].mxu0
    %v1487 = vadd.f32 %v304, %v1486
    %v1488 = vpop.f32.mrb[0].mxu0
    %1489 = vmatprep.mubr.bf16.mxu0 0
    %1490 = vmatmul.mubr.bf16.gmra.mrb[0].mxu0 %v999
    %v1491 = vpop.f32.mrb[0].mxu0
    %v1492 = vadd.f32 %v304, %v1491
    %v1493 = vpop.f32.mrb[0].mxu0
    %v1494 = vpop.f32.mrb[0].mxu0
    %v1495 = vadd.f32 %v304, %v1494
    %v1496 = vpop.f32.mrb[0].mxu0
    %1497 = vmatprep.mubr.bf16.mxu0 0
    %1498 = vmatmul.mubr.bf16.gmra.mrb[0].mxu0 %v1002
    %v1499 = vpop.f32.mrb[0].mxu0
    %v1500 = vadd.f32 %v304, %v1499
    %v1501 = vpop.f32.mrb[0].mxu0
    %v1502 = vpop.f32.mrb[0].mxu0
    %v1503 = vadd.f32 %v304, %v1502
    %v1504 = vpop.f32.mrb[0].mxu0
    %1505 = vmatprep.mubr.bf16.mxu0 0
    %1506 = vmatmul.mubr.bf16.gmra.mrb[0].mxu0 %v1005
    %v1507 = vpop.f32.mrb[0].mxu0
    %v1508 = vadd.f32 %v304, %v1507
    %v1509 = vpop.f32.mrb[0].mxu0
    %v1510 = vpop.f32.mrb[0].mxu0
    %v1511 = vadd.f32 %v304, %v1510
    %v1512 = vpop.f32.mrb[0].mxu0
    %1513 = vmatprep.mubr.bf16.mxu0 0
    %1514 = vmatmul.mubr.bf16.gmra.mrb[0].mxu0 %v1008
    %v1515 = vpop.f32.mrb[0].mxu0
    %v1516 = vadd.f32 %v304, %v1515
    %v1517 = vpop.f32.mrb[0].mxu0
    %v1518 = vpop.f32.mrb[0].mxu0
    %v1519 = vadd.f32 %v304, %v1518
    %v1520 = vpop.f32.mrb[0].mxu0
    %1521 = vmatprep.mubr.bf16.mxu0 0
    %1522 = vmatmul.mubr.bf16.gmra.mrb[0].mxu0 %v1011
    %v1523 = vpop.f32.mrb[0].mxu0
    %v1524 = vadd.f32 %v304, %v1523
    %v1525 = vpop.f32.mrb[0].mxu0
    %v1526 = vpop.f32.mrb[0].mxu0
    %v1527 = vadd.f32 %v304, %v1526
    %v1528 = vpop.f32.mrb[0].mxu0
    %1529 = vmatprep.mubr.bf16.mxu0 0
    %1530 = vmatmul.mubr.bf16.gmra.mrb[0].mxu0 %v1014
    %v1531 = vpop.f32.mrb[0].mxu0
    %v1532 = vadd.f32 %v304, %v1531
    %v1533 = vpop.f32.mrb[0].mxu0
    %v1534 = vpop.f32.mrb[0].mxu0
    %v1535 = vadd.f32 %v304, %v1534
    %v1536 = vpop.f32.mrb[0].mxu0
    %1537 = vmatprep.mubr.bf16.mxu0 0
    %1538 = vmatmul.mubr.bf16.gmra.mrb[0].mxu0 %v1017
    %v1539 = vpop.f32.mrb[0].mxu0
    %v1540 = vadd.f32 %v304, %v1539
    %v1541 = vpop.f32.mrb[0].mxu0
    %v1542 = vpop.f32.mrb[0].mxu0
    %v1543 = vadd.f32 %v304, %v1542
    %v1544 = vpop.f32.mrb[0].mxu0
    %1545 = vmatprep.mubr.bf16.mxu0 0
    %1546 = vmatmul.mubr.bf16.gmra.mrb[0].mxu0 %v1020
    %v1547 = vpop.f32.mrb[0].mxu0
    %v1548 = vadd.f32 %v304, %v1547
    %v1549 = vpop.f32.mrb[0].mxu0
    %v1550 = vpop.f32.mrb[0].mxu0
    %v1551 = vadd.f32 %v304, %v1550
    %v1552 = vpop.f32.mrb[0].mxu0
    %1553 = vmatprep.mubr.bf16.mxu0 0
    %1554 = vmatmul.mubr.bf16.gmra.mrb[0].mxu0 %v1023
    %v1555 = vpop.f32.mrb[0].mxu0
    %v1556 = vadd.f32 %v304, %v1555
    %v1557 = vpop.f32.mrb[0].mxu0
    %v1558 = vpop.f32.mrb[0].mxu0
    %v1559 = vadd.f32 %v304, %v1558
    %v1560 = vpop.f32.mrb[0].mxu0
    %1561 = vmatprep.mubr.bf16.mxu0 0
    %1562 = vmatmul.mubr.bf16.gmra.mrb[0].mxu0 %v1026
    %v1563 = vpop.f32.mrb[0].mxu0
    %v1564 = vadd.f32 %v304, %v1563
    %v1565 = vpop.f32.mrb[0].mxu0
    %v1566 = vpop.f32.mrb[0].mxu0
    %v1567 = vadd.f32 %v304, %v1566
    %v1568 = vpop.f32.mrb[0].mxu0
    %1569 = vmatprep.mubr.bf16.mxu0 0
    %1570 = vmatmul.mubr.bf16.gmra.mrb[0].mxu0 %v1029
    %v1571 = vpop.f32.mrb[0].mxu0
    %v1572 = vadd.f32 %v304, %v1571
    %v1573 = vpop.f32.mrb[0].mxu0
    %v1574 = vpop.f32.mrb[0].mxu0
    %v1575 = vadd.f32 %v304, %v1574
    %v1576 = vpop.f32.mrb[0].mxu0
    %1577 = vmatprep.mubr.bf16.mxu0 0
    %1578 = vmatmul.mubr.bf16.gmra.mrb[0].mxu0 %v1032
    %v1579 = vpop.f32.mrb[0].mxu0
    %v1580 = vadd.f32 %v304, %v1579
    %v1581 = vpop.f32.mrb[0].mxu0
    %v1582 = vpop.f32.mrb[0].mxu0
    %v1583 = vadd.f32 %v304, %v1582
    %v1584 = vpop.f32.mrb[0].mxu0
    %1585 = vmatprep.mubr.bf16.mxu0 0
    %1586 = vmatmul.mubr.bf16.gmra.mrb[0].mxu0 %v1035
    %v1587 = vpop.f32.mrb[0].mxu0
    %v1588 = vadd.f32 %v304, %v1587
    %v1589 = vpop.f32.mrb[0].mxu0
    %v1590 = vpop.f32.mrb[0].mxu0
    %v1591 = vadd.f32 %v304, %v1590
    %v1592 = vpop.f32.mrb[0].mxu0
    %1593 = vmatprep.mubr.bf16.mxu0 0
    %1594 = vmatmul.mubr.bf16.gmra.mrb[0].mxu0 %v1038
    %v1595 = vpop.f32.mrb[0].mxu0
    %v1596 = vadd.f32 %v304, %v1595
    %v1597 = vpop.f32.mrb[0].mxu0
    %v1598 = vpop.f32.mrb[0].mxu0
    %v1599 = vadd.f32 %v304, %v1598
    %v1600 = vpop.f32.mrb[0].mxu0
    %1601 = vmatprep.mubr.bf16.mxu0 0
    %1602 = vmatmul.mubr.bf16.gmra.mrb[0].mxu0 %v1041
    %v1603 = vpop.f32.mrb[0].mxu0
    %v1604 = vadd.f32 %v304, %v1603
    %v1605 = vpop.f32.mrb[0].mxu0
    %v1606 = vpop.f32.mrb[0].mxu0
    %v1607 = vadd.f32 %v304, %v1606
    %v1608 = vpop.f32.mrb[0].mxu0
    %1609 = vmatprep.mubr.bf16.mxu0 0
    %1610 = vmatmul.mubr.bf16.gmra.mrb[0].mxu0 %v1044
    %v1611 = vpop.f32.mrb[0].mxu0
    %v1612 = vadd.f32 %v304, %v1611
    %v1613 = vpop.f32.mrb[0].mxu0
    %v1614 = vpop.f32.mrb[0].mxu0
    %v1615 = vadd.f32 %v304, %v1614
    %v1616 = vpop.f32.mrb[0].mxu0
    %1617 = vmatprep.mubr.bf16.mxu0 0
    %1618 = vmatmul.mubr.bf16.gmra.mrb[0].mxu0 %v1047
    %v1619 = vpop.f32.mrb[0].mxu0
    %v1620 = vadd.f32 %v304, %v1619
    %v1621 = vpop.f32.mrb[0].mxu0
    %v1622 = vpop.f32.mrb[0].mxu0
    %v1623 = vadd.f32 %v304, %v1622
    %v1624 = vpop.f32.mrb[0].mxu0
    %1625 = vmatprep.mubr.bf16.mxu0 0
    %1626 = vmatmul.mubr.bf16.gmra.mrb[0].mxu0 %v1050
    %v1627 = vpop.f32.mrb[0].mxu0
    %v1628 = vadd.f32 %v304, %v1627
    %v1629 = vpop.f32.mrb[0].mxu0
    %v1630 = vpop.f32.mrb[0].mxu0
    %v1631 = vadd.f32 %v304, %v1630
    %v1632 = vpop.f32.mrb[0].mxu0
    %1633 = vmatprep.mubr.bf16.mxu0 0
    %1634 = vmatmul.mubr.bf16.gmra.mrb[0].mxu0 %v1053
    %v1635 = vpop.f32.mrb[0].mxu0
    %v1636 = vadd.f32 %v304, %v1635
    %v1637 = vpop.f32.mrb[0].mxu0
    %v1638 = vpop.f32.mrb[0].mxu0
    %v1639 = vadd.f32 %v304, %v1638
    %v1640 = vpop.f32.mrb[0].mxu0
    %1641 = vmatprep.mubr.bf16.mxu0 0
    %1642 = vmatmul.mubr.bf16.gmra.mrb[0].mxu0 %v1056
    %v1643 = vpop.f32.mrb[0].mxu0
    %v1644 = vadd.f32 %v304, %v1643
    %v1645 = vpop.f32.mrb[0].mxu0
    %v1646 = vpop.f32.mrb[0].mxu0
    %v1647 = vadd.f32 %v304, %v1646
    %v1648 = vpop.f32.mrb[0].mxu0
    %1649 = vmatprep.mubr.bf16.mxu0 0
    %1650 = vmatmul.mubr.bf16.gmra.mrb[0].mxu0 %v1059
    %v1651 = vpop.f32.mrb[0].mxu0
    %v1652 = vadd.f32 %v304, %v1651
    %v1653 = vpop.f32.mrb[0].mxu0
    %v1654 = vpop.f32.mrb[0].mxu0
    %v1655 = vadd.f32 %v304, %v1654
    %v1656 = vpop.f32.mrb[0].mxu0
    %1657 = vmatprep.mubr.bf16.mxu0 0
    %1658 = vmatmul.mubr.bf16.gmra.mrb[0].mxu0 %v1062
    %v1659 = vpop.f32.mrb[0].mxu0
    %v1660 = vadd.f32 %v304, %v1659
    %v1661 = vpop.f32.mrb[0].mxu0
    %v1662 = vpop.f32.mrb[0].mxu0
    %v1663 = vadd.f32 %v304, %v1662
    %v1664 = vpop.f32.mrb[0].mxu0
    %1665 = vmatprep.mubr.bf16.mxu0 0
    %1666 = vmatmul.mubr.bf16.gmra.mrb[0].mxu0 %v1065
    %v1667 = vpop.f32.mrb[0].mxu0
    %v1668 = vadd.f32 %v304, %v1667
    %v1669 = vpop.f32.mrb[0].mxu0
    %v1670 = vpop.f32.mrb[0].mxu0
    %v1671 = vadd.f32 %v304, %v1670
    %v1672 = vpop.f32.mrb[0].mxu0
    %1673 = vmatprep.mubr.bf16.mxu0 0
    %1674 = vmatmul.mubr.bf16.gmra.mrb[0].mxu0 %v1068
    %v1675 = vpop.f32.mrb[0].mxu0
    %v1676 = vadd.f32 %v304, %v1675
    %v1677 = vpop.f32.mrb[0].mxu0
    %v1678 = vpop.f32.mrb[0].mxu0
    %v1679 = vadd.f32 %v304, %v1678
    %v1680 = vpop.f32.mrb[0].mxu0
    %1681 = vmatprep.mubr.bf16.mxu0 0
    %1682 = vmatmul.mubr.bf16.gmra.mrb[0].mxu0 %v1071
    %v1683 = vpop.f32.mrb[0].mxu0
    %v1684 = vadd.f32 %v304, %v1683
    %v1685 = vpop.f32.mrb[0].mxu0
    %v1686 = vpop.f32.mrb[0].mxu0
    %v1687 = vadd.f32 %v304, %v1686
    %v1688 = vpop.f32.mrb[0].mxu0
    %1689 = vmatprep.mubr.bf16.mxu0 0
    %1690 = vmatmul.mubr.bf16.gmra.mrb[0].mxu0 %v1074
    %v1691 = vpop.f32.mrb[0].mxu0
    %v1692 = vadd.f32 %v304, %v1691
    %v1693 = vpop.f32.mrb[0].mxu0
    %v1694 = vpop.f32.mrb[0].mxu0
    %v1695 = vadd.f32 %v304, %v1694
    %v1696 = vpop.f32.mrb[0].mxu0
    %1697 = vmatprep.mubr.bf16.mxu0 0
    %1698 = vmatmul.mubr.bf16.gmra.mrb[0].mxu0 %v1077
    %v1699 = vpop.f32.mrb[0].mxu0
    %v1700 = vadd.f32 %v304, %v1699
    %v1701 = vpop.f32.mrb[0].mxu0
    %v1702 = vpop.f32.mrb[0].mxu0
    %v1703 = vadd.f32 %v304, %v1702
    %v1704 = vpop.f32.mrb[0].mxu0
    %1705 = vmatprep.mubr.bf16.mxu0 0
    %1706 = vmatmul.mubr.bf16.gmra.mrb[0].mxu0 %v1080
    %v1707 = vpop.f32.mrb[0].mxu0
    %v1708 = vadd.f32 %v304, %v1707
    %v1709 = vpop.f32.mrb[0].mxu0
    %v1710 = vpop.f32.mrb[0].mxu0
    %v1711 = vadd.f32 %v304, %v1710
    %v1712 = vpop.f32.mrb[0].mxu0
    %1713 = vmatprep.mubr.bf16.mxu0 0
    %1714 = vmatmul.mubr.bf16.gmra.mrb[0].mxu0 %v1083
    %v1715 = vpop.f32.mrb[0].mxu0
    %v1716 = vadd.f32 %v304, %v1715
    %v1717 = vpop.f32.mrb[0].mxu0
    %v1718 = vpop.f32.mrb[0].mxu0
    %v1719 = vadd.f32 %v304, %v1718
    %v1720 = vpop.f32.mrb[0].mxu0
    %1721 = vmatprep.mubr.bf16.mxu0 0
    %1722 = vmatmul.mubr.bf16.gmra.mrb[0].mxu0 %v1086
    %v1723 = vpop.f32.mrb[0].mxu0
    %v1724 = vadd.f32 %v304, %v1723
    %v1725 = vpop.f32.mrb[0].mxu0
    %v1726 = vpop.f32.mrb[0].mxu0
    %v1727 = vadd.f32 %v304, %v1726
    %v1728 = vpop.f32.mrb[0].mxu0
    %1729 = vmatprep.mubr.bf16.mxu0 0
    %1730 = vmatmul.mubr.bf16.gmra.mrb[0].mxu0 %v1089
    %v1731 = vpop.f32.mrb[0].mxu0
    %v1732 = vadd.f32 %v304, %v1731
    %v1733 = vpop.f32.mrb[0].mxu0
    %v1734 = vpop.f32.mrb[0].mxu0
    %v1735 = vadd.f32 %v304, %v1734
    %v1736 = vpop.f32.mrb[0].mxu0
    %1737 = vmatprep.mubr.bf16.mxu0 0
    %1738 = vmatmul.mubr.bf16.gmra.mrb[0].mxu0 %v1092
    %v1739 = vpop.f32.mrb[0].mxu0
    %v1740 = vadd.f32 %v304, %v1739
    %v1741 = vpop.f32.mrb[0].mxu0
    %v1742 = vpop.f32.mrb[0].mxu0
    %v1743 = vadd.f32 %v304, %v1742
    %v1744 = vpop.f32.mrb[0].mxu0
    %1745 = vmatprep.mubr.bf16.mxu0 0
    %1746 = vmatmul.mubr.bf16.gmra.mrb[0].mxu0 %v1095
    %v1747 = vpop.f32.mrb[0].mxu0
    %v1748 = vadd.f32 %v304, %v1747
    %v1749 = vpop.f32.mrb[0].mxu0
    %v1750 = vpop.f32.mrb[0].mxu0
    %v1751 = vadd.f32 %v304, %v1750
    %v1752 = vpop.f32.mrb[0].mxu0
    %1753 = vmatprep.mubr.bf16.mxu0 0
    %1754 = vmatmul.mubr.bf16.gmra.mrb[0].mxu0 %v1098
    %v1755 = vpop.f32.mrb[0].mxu0
    %v1756 = vadd.f32 %v304, %v1755
    %v1757 = vpop.f32.mrb[0].mxu0
    %v1758 = vpop.f32.mrb[0].mxu0
    %v1759 = vadd.f32 %v304, %v1758
    %v1760 = vpop.f32.mrb[0].mxu0
    %1761 = vmatprep.mubr.bf16.mxu0 0
    %1762 = vmatmul.mubr.bf16.gmra.mrb[0].mxu0 %v1101
    %v1763 = vpop.f32.mrb[0].mxu0
    %v1764 = vadd.f32 %v304, %v1763
    %v1765 = vpop.f32.mrb[0].mxu0
    %v1766 = vpop.f32.mrb[0].mxu0
    %v1767 = vadd.f32 %v304, %v1766
    %v1768 = vpop.f32.mrb[0].mxu0
    %1769 = vmatprep.mubr.bf16.mxu0 0
    %1770 = vmatmul.mubr.bf16.gmra.mrb[0].mxu0 %v1104
    %v1771 = vpop.f32.mrb[0].mxu0
    %v1772 = vadd.f32 %v304, %v1771
    %v1773 = vpop.f32.mrb[0].mxu0
    %v1774 = vpop.f32.mrb[0].mxu0
    %v1775 = vadd.f32 %v304, %v1774
    %v1776 = vpop.f32.mrb[0].mxu0
    %1777 = vmatprep.mubr.bf16.mxu0 0
    %1778 = vmatmul.mubr.bf16.gmra.mrb[0].mxu0 %v1107
    %v1779 = vpop.f32.mrb[0].mxu0
    %v1780 = vadd.f32 %v304, %v1779
    %v1781 = vpop.f32.mrb[0].mxu0
    %v1782 = vpop.f32.mrb[0].mxu0
    %v1783 = vadd.f32 %v304, %v1782
    %v1784 = vpop.f32.mrb[0].mxu0
    %1785 = vmatprep.mubr.bf16.mxu0 0
    %1786 = vmatmul.mubr.bf16.gmra.mrb[0].mxu0 %v1110
    %v1787 = vpop.f32.mrb[0].mxu0
    %v1788 = vadd.f32 %v304, %v1787
    %v1789 = vpop.f32.mrb[0].mxu0
    %v1790 = vpop.f32.mrb[0].mxu0
    %v1791 = vadd.f32 %v304, %v1790
    %v1792 = vpop.f32.mrb[0].mxu0
    %1793 = vmatprep.mubr.bf16.mxu0 0
    %1794 = vmatmul.mubr.bf16.gmra.mrb[0].mxu0 %v1113
    %v1795 = vpop.f32.mrb[0].mxu0
    %v1796 = vadd.f32 %v304, %v1795
    %v1797 = vpop.f32.mrb[0].mxu0
    %v1798 = vpop.f32.mrb[0].mxu0
    %v1799 = vadd.f32 %v304, %v1798
    %v1800 = vpop.f32.mrb[0].mxu0
    %1801 = vmatprep.mubr.bf16.mxu0 0
    %1802 = vmatmul.mubr.bf16.gmra.mrb[0].mxu0 %v1116
    %v1803 = vpop.f32.mrb[0].mxu0
    %v1804 = vadd.f32 %v304, %v1803
    %v1805 = vpop.f32.mrb[0].mxu0
    %v1806 = vpop.f32.mrb[0].mxu0
    %v1807 = vadd.f32 %v304, %v1806
    %v1808 = vpop.f32.mrb[0].mxu0
    %1809 = vmatprep.mubr.bf16.mxu0 0
    %1810 = vmatmul.mubr.bf16.gmra.mrb[0].mxu0 %v1119
    %v1811 = vpop.f32.mrb[0].mxu0
    %v1812 = vadd.f32 %v304, %v1811
    %v1813 = vpop.f32.mrb[0].mxu0
    %v1814 = vpop.f32.mrb[0].mxu0
    %v1815 = vadd.f32 %v304, %v1814
    %v1816 = vpop.f32.mrb[0].mxu0
    %1817 = vmatprep.mubr.bf16.mxu0 0
    %1818 = vmatmul.mubr.bf16.gmra.mrb[0].mxu0 %v1122
    %v1819 = vpop.f32.mrb[0].mxu0
    %v1820 = vadd.f32 %v304, %v1819
    %v1821 = vpop.f32.mrb[0].mxu0
    %v1822 = vpop.f32.mrb[0].mxu0
    %v1823 = vadd.f32 %v304, %v1822
    %v1824 = vpop.f32.mrb[0].mxu0
    %1825 = vmatprep.mubr.bf16.mxu0 0
    %1826 = vmatmul.mubr.bf16.gmra.mrb[0].mxu0 %v1125
    %v1827 = vpop.f32.mrb[0].mxu0
    %v1828 = vadd.f32 %v304, %v1827
    %v1829 = vpop.f32.mrb[0].mxu0
    %v1830 = vpop.f32.mrb[0].mxu0
    %v1831 = vadd.f32 %v304, %v1830
    %v1832 = vpop.f32.mrb[0].mxu0
    %1833 = vmatprep.mubr.bf16.mxu0 0
    %1834 = vmatmul.mubr.bf16.gmra.mrb[0].mxu0 %v1128
    %v1835 = vpop.f32.mrb[0].mxu0
    %v1836 = vadd.f32 %v304, %v1835
    %v1837 = vpop.f32.mrb[0].mxu0
    %v1838 = vpop.f32.mrb[0].mxu0
    %v1839 = vadd.f32 %v304, %v1838
    %v1840 = vpop.f32.mrb[0].mxu0
    %1841 = vmatprep.mubr.bf16.mxu0 0
    %1842 = vmatmul.mubr.bf16.gmra.mrb[0].mxu0 %v1131
    %v1843 = vpop.f32.mrb[0].mxu0
    %v1844 = vadd.f32 %v304, %v1843
    %v1845 = vpop.f32.mrb[0].mxu0
    %v1846 = vpop.f32.mrb[0].mxu0
    %v1847 = vadd.f32 %v304, %v1846
    %v1848 = vpop.f32.mrb[0].mxu0
    %1849 = vmatprep.mubr.bf16.mxu0 0
    %1850 = vmatmul.mubr.bf16.gmra.mrb[0].mxu0 %v1134
    %v1851 = vpop.f32.mrb[0].mxu0
    %v1852 = vadd.f32 %v304, %v1851
    %v1853 = vpop.f32.mrb[0].mxu0
    %v1854 = vpop.f32.mrb[0].mxu0
    %v1855 = vadd.f32 %v304, %v1854
    %v1856 = vpop.f32.mrb[0].mxu0
    %1857 = vmatprep.mubr.bf16.mxu0 0
    %1858 = vmatmul.mubr.bf16.gmra.mrb[0].mxu0 %v1137
    %v1859 = vpop.f32.mrb[0].mxu0
    %v1860 = vadd.f32 %v304, %v1859
    %v1861 = vpop.f32.mrb[0].mxu0
    %v1862 = vpop.f32.mrb[0].mxu0
    %v1863 = vadd.f32 %v304, %v1862
    %v1864 = vpop.f32.mrb[0].mxu0
    %1865 = vmatprep.mubr.bf16.mxu0 0
    %1866 = vmatmul.mubr.bf16.gmra.mrb[0].mxu0 %v1140
    %v1867 = vpop.f32.mrb[0].mxu0
    %v1868 = vadd.f32 %v304, %v1867
    %v1869 = vpop.f32.mrb[0].mxu0
    %v1870 = vpop.f32.mrb[0].mxu0
    %v1871 = vadd.f32 %v304, %v1870
    %v1872 = vpop.f32.mrb[0].mxu0
    %1873 = vmatprep.mubr.bf16.mxu0 0
    %1874 = vmatmul.mubr.bf16.gmra.mrb[0].mxu0 %v1143
    %v1875 = vpop.f32.mrb[0].mxu0
    %v1876 = vadd.f32 %v304, %v1875
    %v1877 = vpop.f32.mrb[0].mxu0
    %v1878 = vpop.f32.mrb[0].mxu0
    %v1879 = vadd.f32 %v304, %v1878
    %v1880 = vpop.f32.mrb[0].mxu0
    %1881 = vmatprep.mubr.bf16.mxu0 0
    %1882 = vmatmul.mubr.bf16.gmra.mrb[0].mxu0 %v1146
    %v1883 = vpop.f32.mrb[0].mxu0
    %v1884 = vadd.f32 %v304, %v1883
    %v1885 = vpop.f32.mrb[0].mxu0
    %v1886 = vpop.f32.mrb[0].mxu0
    %v1887 = vadd.f32 %v304, %v1886
    %v1888 = vpop.f32.mrb[0].mxu0
    %1889 = vmatprep.mubr.bf16.mxu0 0
    %1890 = vmatmul.mubr.bf16.gmra.mrb[0].mxu0 %v1149
    %v1891 = vpop.f32.mrb[0].mxu0
    %v1892 = vadd.f32 %v304, %v1891
    %v1893 = vpop.f32.mrb[0].mxu0
    %v1894 = vpop.f32.mrb[0].mxu0
    %v1895 = vadd.f32 %v304, %v1894
    %v1896 = vpop.f32.mrb[0].mxu0
    %1897 = vmatprep.mubr.bf16.mxu0 0
    %1898 = vmatmul.mubr.bf16.gmra.mrb[0].mxu0 %v1152
    %v1899 = vpop.f32.mrb[0].mxu0
    %v1900 = vadd.f32 %v304, %v1899
    %v1901 = vpop.f32.mrb[0].mxu0
    %v1902 = vpop.f32.mrb[0].mxu0
    %v1903 = vadd.f32 %v304, %v1902
    %v1904 = vpop.f32.mrb[0].mxu0
    %1905 = vmatprep.mubr.bf16.mxu0 0
    %1906 = vmatmul.mubr.bf16.gmra.mrb[0].mxu0 %v1155
    %v1907 = vpop.f32.mrb[0].mxu0
    %v1908 = vadd.f32 %v304, %v1907
    %v1909 = vpop.f32.mrb[0].mxu0
    %v1910 = vpop.f32.mrb[0].mxu0
    %v1911 = vadd.f32 %v304, %v1910
    %v1912 = vpop.f32.mrb[0].mxu0
    %1913 = vmatprep.mubr.bf16.mxu0 0
    %1914 = vmatmul.mubr.bf16.gmra.mrb[0].mxu0 %v1158
    %v1915 = vpop.f32.mrb[0].mxu0
    %v1916 = vadd.f32 %v304, %v1915
    %v1917 = vpop.f32.mrb[0].mxu0
    %v1918 = vpop.f32.mrb[0].mxu0
    %v1919 = vadd.f32 %v304, %v1918
    %v1920 = vpop.f32.mrb[0].mxu0
    %1921 = vmatprep.mubr.bf16.mxu0 0
    %1922 = vmatmul.mubr.bf16.gmra.mrb[0].mxu0 %v1161
    %v1923 = vpop.f32.mrb[0].mxu0
    %v1924 = vadd.f32 %v304, %v1923
    %v1925 = vpop.f32.mrb[0].mxu0
    %v1926 = vpop.f32.mrb[0].mxu0
    %v1927 = vadd.f32 %v304, %v1926
    %v1928 = vpop.f32.mrb[0].mxu0
    %1929 = vmatprep.mubr.bf16.mxu0 0
    %1930 = vmatmul.mubr.bf16.gmra.mrb[0].mxu0 %v1164
    %v1931 = vpop.f32.mrb[0].mxu0
    %v1932 = vadd.f32 %v304, %v1931
    %v1933 = vpop.f32.mrb[0].mxu0
    %v1934 = vpop.f32.mrb[0].mxu0
    %v1935 = vadd.f32 %v304, %v1934
    %v1936 = vpop.f32.mrb[0].mxu0
    %1937 = vmatprep.mubr.bf16.mxu0 0
    %1938 = vmatmul.mubr.bf16.gmra.mrb[0].mxu0 %v1167
    %v1939 = vpop.f32.mrb[0].mxu0
    %v1940 = vadd.f32 %v304, %v1939
    %v1941 = vpop.f32.mrb[0].mxu0
    %v1942 = vpop.f32.mrb[0].mxu0
    %v1943 = vadd.f32 %v304, %v1942
    %v1944 = vpop.f32.mrb[0].mxu0
    %1945 = vmatprep.mubr.bf16.mxu0 0
    %1946 = vmatmul.mubr.bf16.gmra.mrb[0].mxu0 %v1170
    %v1947 = vpop.f32.mrb[0].mxu0
    %v1948 = vadd.f32 %v304, %v1947
    %v1949 = vpop.f32.mrb[0].mxu0
    %v1950 = vpop.f32.mrb[0].mxu0
    %v1951 = vadd.f32 %v304, %v1950
    %v1952 = vpop.f32.mrb[0].mxu0
    %1953 = vmatprep.mubr.bf16.mxu0 0
    %1954 = vmatmul.mubr.bf16.gmra.mrb[0].mxu0 %v1173
    %v1955 = vpop.f32.mrb[0].mxu0
    %v1956 = vadd.f32 %v304, %v1955
    %v1957 = vpop.f32.mrb[0].mxu0
    %v1958 = vpop.f32.mrb[0].mxu0
    %v1959 = vadd.f32 %v304, %v1958
    %v1960 = vpop.f32.mrb[0].mxu0
    %1961 = vmatprep.mubr.bf16.mxu0 0
    %1962 = vmatmul.mubr.bf16.gmra.mrb[0].mxu0 %v1176
    %v1963 = vpop.f32.mrb[0].mxu0
    %v1964 = vadd.f32 %v304, %v1963
    %v1965 = vpop.f32.mrb[0].mxu0
    %v1966 = vpop.f32.mrb[0].mxu0
    %v1967 = vadd.f32 %v304, %v1966
    %v1968 = vpop.f32.mrb[0].mxu0
    %1969 = vmatprep.mubr.bf16.mxu0 0
    %1970 = vmatmul.mubr.bf16.gmra.mrb[0].mxu0 %v1179
    %v1971 = vpop.f32.mrb[0].mxu0
    %v1972 = vadd.f32 %v304, %v1971
    %v1973 = vpop.f32.mrb[0].mxu0
    %v1974 = vpop.f32.mrb[0].mxu0
    %v1975 = vadd.f32 %v304, %v1974
    %v1976 = vpop.f32.mrb[0].mxu0
    %1977 = vmatprep.mubr.bf16.mxu0 0
    %1978 = vmatmul.mubr.bf16.gmra.mrb[0].mxu0 %v1182
    %v1979 = vpop.f32.mrb[0].mxu0
    %v1980 = vadd.f32 %v304, %v1979
    %v1981 = vpop.f32.mrb[0].mxu0
    %v1982 = vpop.f32.mrb[0].mxu0
    %v1983 = vadd.f32 %v304, %v1982
    %v1984 = vpop.f32.mrb[0].mxu0
    %1985 = vmatprep.mubr.bf16.mxu0 0
    %1986 = vmatmul.mubr.bf16.gmra.mrb[0].mxu0 %v1185
    %v1987 = vpop.f32.mrb[0].mxu0
    %v1988 = vadd.f32 %v304, %v1987
    %v1989 = vpop.f32.mrb[0].mxu0
    %v1990 = vpop.f32.mrb[0].mxu0
    %v1991 = vadd.f32 %v304, %v1990
    %v1992 = vpop.f32.mrb[0].mxu0
    %1993 = vmatprep.mubr.bf16.mxu0 0
    %1994 = vmatmul.mubr.bf16.gmra.mrb[0].mxu0 %v1188
    %v1995 = vpop.f32.mrb[0].mxu0
    %v1996 = vadd.f32 %v304, %v1995
    %v1997 = vpop.f32.mrb[0].mxu0
    %v1998 = vpop.f32.mrb[0].mxu0
    %v1999 = vadd.f32 %v304, %v1998
    %v2000 = vpop.f32.mrb[0].mxu0
    %2001 = vmatprep.mubr.bf16.mxu0 0
    %2002 = vmatmul.mubr.bf16.gmra.mrb[0].mxu0 %v1191
    %v2003 = vpop.f32.mrb[0].mxu0
    %v2004 = vadd.f32 %v304, %v2003
    %v2005 = vpop.f32.mrb[0].mxu0
    %v2006 = vpop.f32.mrb[0].mxu0
    %v2007 = vadd.f32 %v304, %v2006
    %v2008 = vpop.f32.mrb[0].mxu0
    %2009 = vmatprep.mubr.bf16.mxu0 0
    %2010 = vmatmul.mubr.bf16.gmra.mrb[0].mxu0 %v1194
    %v2011 = vpop.f32.mrb[0].mxu0
    %v2012 = vadd.f32 %v304, %v2011
    %v2013 = vpop.f32.mrb[0].mxu0
    %v2014 = vpop.f32.mrb[0].mxu0
    %v2015 = vadd.f32 %v304, %v2014
    %v2016 = vpop.f32.mrb[0].mxu0
    %2017 = vmatprep.mubr.bf16.mxu0 0
    %2018 = vmatmul.mubr.bf16.gmra.mrb[0].mxu0 %v1197
    %v2019 = vpop.f32.mrb[0].mxu0
    %v2020 = vadd.f32 %v304, %v2019
    %v2021 = vpop.f32.mrb[0].mxu0
    %v2022 = vpop.f32.mrb[0].mxu0
    %v2023 = vadd.f32 %v304, %v2022
    %v2024 = vpop.f32.mrb[0].mxu0
    %2025 = vmatprep.mubr.bf16.mxu0 0
    %2026 = vmatmul.mubr.bf16.gmra.mrb[0].mxu0 %v1200
    %v2027 = vpop.f32.mrb[0].mxu0
    %v2028 = vadd.f32 %v304, %v2027
    %v2029 = vpop.f32.mrb[0].mxu0
    %v2030 = vpop.f32.mrb[0].mxu0
    %v2031 = vadd.f32 %v304, %v2030
    %v2032 = vpop.f32.mrb[0].mxu0
    %2033 = vmatprep.mubr.bf16.mxu0 0
    %2034 = vmatmul.mubr.bf16.gmra.mrb[0].mxu0 %v1203
    %v2035 = vpop.f32.mrb[0].mxu0
    %v2036 = vadd.f32 %v304, %v2035
    %v2037 = vpop.f32.mrb[0].mxu0
    %v2038 = vpop.f32.mrb[0].mxu0
    %v2039 = vadd.f32 %v304, %v2038
    %v2040 = vpop.f32.mrb[0].mxu0
    %2041 = vmatprep.mubr.bf16.mxu0 0
    %2042 = vmatmul.mubr.bf16.gmra.mrb[0].mxu0 %v1206
    %v2043 = vpop.f32.mrb[0].mxu0
    %v2044 = vadd.f32 %v304, %v2043
    %v2045 = vpop.f32.mrb[0].mxu0
    %v2046 = vpop.f32.mrb[0].mxu0
    %v2047 = vadd.f32 %v304, %v2046
    %v2048 = vpop.f32.mrb[0].mxu0
    %2049 = vmatprep.mubr.bf16.mxu0 0
    %2050 = vmatmul.mubr.bf16.gmra.mrb[0].mxu0 %v1209
    %v2051 = vpop.f32.mrb[0].mxu0
    %v2052 = vadd.f32 %v304, %v2051
    %v2053 = vpop.f32.mrb[0].mxu0
    %v2054 = vpop.f32.mrb[0].mxu0
    %v2055 = vadd.f32 %v304, %v2054
    %v2056 = vpop.f32.mrb[0].mxu0
    %2057 = vmatprep.mubr.bf16.mxu0 0
    %2058 = vmatmul.mubr.bf16.gmra.mrb[0].mxu0 %v1212
    %v2059 = vpop.f32.mrb[0].mxu0
    %v2060 = vadd.f32 %v304, %v2059
    %v2061 = vpop.f32.mrb[0].mxu0
    %v2062 = vpop.f32.mrb[0].mxu0
    %v2063 = vadd.f32 %v304, %v2062
    %v2064 = vpop.f32.mrb[0].mxu0
    %2065 = vmatprep.mubr.bf16.mxu0 0
    %2066 = vmatmul.mubr.bf16.gmra.mrb[0].mxu0 %v1215
    %v2067 = vpop.f32.mrb[0].mxu0
    %v2068 = vadd.f32 %v304, %v2067
    %v2069 = vpop.f32.mrb[0].mxu0
    %v2070 = vpop.f32.mrb[0].mxu0
    %v2071 = vadd.f32 %v304, %v2070
    %v2072 = vpop.f32.mrb[0].mxu0
    %2073 = vmatprep.mubr.bf16.mxu0 0
    %2074 = vmatmul.mubr.bf16.gmra.mrb[0].mxu0 %v1218
    %v2075 = vpop.f32.mrb[0].mxu0
    %v2076 = vadd.f32 %v304, %v2075
    %v2077 = vpop.f32.mrb[0].mxu0
    %v2078 = vpop.f32.mrb[0].mxu0
    %v2079 = vadd.f32 %v304, %v2078
    %v2080 = vpop.f32.mrb[0].mxu0
    %2081 = vmatprep.mubr.bf16.mxu0 0
    %2082 = vmatmul.mubr.bf16.gmra.mrb[0].mxu0 %v1221
    %v2083 = vpop.f32.mrb[0].mxu0
    %v2084 = vadd.f32 %v304, %v2083
    %v2085 = vpop.f32.mrb[0].mxu0
    %v2086 = vpop.f32.mrb[0].mxu0
    %v2087 = vadd.f32 %v304, %v2086
    %v2088 = vpop.f32.mrb[0].mxu0
    %2089 = vmatprep.mubr.bf16.mxu0 0
    %2090 = vmatmul.mubr.bf16.gmra.mrb[0].mxu0 %v1224
    %v2091 = vpop.f32.mrb[0].mxu0
    %v2092 = vadd.f32 %v304, %v2091
    %v2093 = vpop.f32.mrb[0].mxu0
    %v2094 = vpop.f32.mrb[0].mxu0
    %v2095 = vadd.f32 %v304, %v2094
    %v2096 = vpop.f32.mrb[0].mxu0
    %2097 = vmatprep.mubr.bf16.mxu0 0
    %2098 = vmatmul.mubr.bf16.gmra.mrb[0].mxu0 %v1227
    %v2099 = vpop.f32.mrb[0].mxu0
    %v2100 = vadd.f32 %v304, %v2099
    %v2101 = vpop.f32.mrb[0].mxu0
    %v2102 = vpop.f32.mrb[0].mxu0
    %v2103 = vadd.f32 %v304, %v2102
    %v2104 = vpop.f32.mrb[0].mxu0
    %2105 = vmatprep.mubr.bf16.mxu0 0
    %2106 = vmatmul.mubr.bf16.gmra.mrb[0].mxu0 %v1230
    %v2107 = vpop.f32.mrb[0].mxu0
    %v2108 = vadd.f32 %v304, %v2107
    %v2109 = vpop.f32.mrb[0].mxu0
    %v2110 = vpop.f32.mrb[0].mxu0
    %v2111 = vadd.f32 %v304, %v2110
    %v2112 = vpop.f32.mrb[0].mxu0
    %2113 = vmatprep.mubr.bf16.mxu0 0
    %2114 = vmatmul.mubr.bf16.gmra.mrb[0].mxu0 %v1233
    %v2115 = vpop.f32.mrb[0].mxu0
    %v2116 = vadd.f32 %v304, %v2115
    %v2117 = vpop.f32.mrb[0].mxu0
    %v2118 = vpop.f32.mrb[0].mxu0
    %v2119 = vadd.f32 %v304, %v2118
    %v2120 = vpop.f32.mrb[0].mxu0
    %2121 = vmatprep.mubr.bf16.mxu0 0
    %2122 = vmatmul.mubr.bf16.gmra.mrb[0].mxu0 %v1236
    %v2123 = vpop.f32.mrb[0].mxu0
    %v2124 = vadd.f32 %v304, %v2123
    %v2125 = vpop.f32.mrb[0].mxu0
    %v2126 = vpop.f32.mrb[0].mxu0
    %v2127 = vadd.f32 %v304, %v2126
    %v2128 = vpop.f32.mrb[0].mxu0
    %2129 = vmatprep.mubr.bf16.mxu0 0
    %2130 = vmatmul.mubr.bf16.gmra.mrb[0].mxu0 %v1239
    %v2131 = vpop.f32.mrb[0].mxu0
    %v2132 = vadd.f32 %v304, %v2131
    %v2133 = vpop.f32.mrb[0].mxu0
    %v2134 = vpop.f32.mrb[0].mxu0
    %v2135 = vadd.f32 %v304, %v2134
    %v2136 = vpop.f32.mrb[0].mxu0
    %2137 = vmatprep.mubr.bf16.mxu0 0
    %2138 = vmatmul.mubr.bf16.gmra.mrb[0].mxu0 %v1242
    %v2139 = vpop.f32.mrb[0].mxu0
    %v2140 = vadd.f32 %v304, %v2139
    %v2141 = vpop.f32.mrb[0].mxu0
    %v2142 = vpop.f32.mrb[0].mxu0
    %v2143 = vadd.f32 %v304, %v2142
    %v2144 = vpop.f32.mrb[0].mxu0
    %2145 = vmatprep.mubr.bf16.mxu0 0
    %2146 = vmatmul.mubr.bf16.gmra.mrb[0].mxu0 %v1245
    %v2147 = vpop.f32.mrb[0].mxu0
    %v2148 = vadd.f32 %v304, %v2147
    %v2149 = vpop.f32.mrb[0].mxu0
    %v2150 = vpop.f32.mrb[0].mxu0
    %v2151 = vadd.f32 %v304, %v2150
    %v2152 = vpop.f32.mrb[0].mxu0
    %2153 = vmatprep.mubr.bf16.mxu0 0
    %2154 = vmatmul.mubr.bf16.gmra.mrb[0].mxu0 %v1248
    %v2155 = vpop.f32.mrb[0].mxu0
    %v2156 = vadd.f32 %v304, %v2155
    %v2157 = vpop.f32.mrb[0].mxu0
    %v2158 = vpop.f32.mrb[0].mxu0
    %v2159 = vadd.f32 %v304, %v2158
    %v2160 = vpop.f32.mrb[0].mxu0
    %2161 = vmatprep.mubr.bf16.mxu0 0
    %2162 = vmatmul.mubr.bf16.gmra.mrb[0].mxu0 %v1251
    %v2163 = vpop.f32.mrb[0].mxu0
    %v2164 = vadd.f32 %v304, %v2163
    %v2165 = vpop.f32.mrb[0].mxu0
    %v2166 = vpop.f32.mrb[0].mxu0
    %v2167 = vadd.f32 %v304, %v2166
    %v2168 = vpop.f32.mrb[0].mxu0
    %2169 = vmatprep.mubr.bf16.mxu0 0
    %2170 = vmatmul.mubr.bf16.gmra.mrb[0].mxu0 %v1254
    %v2171 = vpop.f32.mrb[0].mxu0
    %v2172 = vadd.f32 %v304, %v2171
    %v2173 = vpop.f32.mrb[0].mxu0
    %v2174 = vpop.f32.mrb[0].mxu0
    %v2175 = vadd.f32 %v304, %v2174
    %v2176 = vpop.f32.mrb[0].mxu0
    %2177 = vmatprep.mubr.bf16.mxu0 0
    %2178 = vmatmul.mubr.bf16.gmra.mrb[0].mxu0 %v1257
    %v2179 = vpop.f32.mrb[0].mxu0
    %v2180 = vadd.f32 %v304, %v2179
    %v2181 = vpop.f32.mrb[0].mxu0
    %v2182 = vpop.f32.mrb[0].mxu0
    %v2183 = vadd.f32 %v304, %v2182
    %v2184 = vpop.f32.mrb[0].mxu0
    %2185 = vmatprep.mubr.bf16.mxu0 0
    %2186 = vmatmul.mubr.bf16.gmra.mrb[0].mxu0 %v1260
    %v2187 = vpop.f32.mrb[0].mxu0
    %v2188 = vadd.f32 %v304, %v2187
    %v2189 = vpop.f32.mrb[0].mxu0
    %v2190 = vpop.f32.mrb[0].mxu0
    %v2191 = vadd.f32 %v304, %v2190
    %v2192 = vpop.f32.mrb[0].mxu0
    %2193 = vmatprep.mubr.bf16.mxu0 0
    %2194 = vmatmul.mubr.bf16.gmra.mrb[0].mxu0 %v1263
    %v2195 = vpop.f32.mrb[0].mxu0
    %v2196 = vadd.f32 %v304, %v2195
    %v2197 = vpop.f32.mrb[0].mxu0
    %v2198 = vpop.f32.mrb[0].mxu0
    %v2199 = vadd.f32 %v304, %v2198
    %v2200 = vpop.f32.mrb[0].mxu0
    %2201 = vmatprep.mubr.bf16.mxu0 0
    %2202 = vmatmul.mubr.bf16.gmra.mrb[0].mxu0 %v1266
    %v2203 = vpop.f32.mrb[0].mxu0
    %v2204 = vadd.f32 %v304, %v2203
    %v2205 = vpop.f32.mrb[0].mxu0
    %v2206 = vpop.f32.mrb[0].mxu0
    %v2207 = vadd.f32 %v304, %v2206
    %v2208 = vpop.f32.mrb[0].mxu0
    %2209 = vmatprep.mubr.bf16.mxu0 0
    %2210 = vmatmul.mubr.bf16.gmra.mrb[0].mxu0 %v1269
    %v2211 = vpop.f32.mrb[0].mxu0
    %v2212 = vadd.f32 %v304, %v2211
    %v2213 = vpop.f32.mrb[0].mxu0
    %v2214 = vpop.f32.mrb[0].mxu0
    %v2215 = vadd.f32 %v304, %v2214
    %v2216 = vpop.f32.mrb[0].mxu0
    %2217 = vmatprep.mubr.bf16.mxu0 0
    %2218 = vmatmul.mubr.bf16.gmra.mrb[0].mxu0 %v1272
    %v2219 = vpop.f32.mrb[0].mxu0
    %v2220 = vadd.f32 %v304, %v2219
    %v2221 = vpop.f32.mrb[0].mxu0
    %v2222 = vpop.f32.mrb[0].mxu0
    %v2223 = vadd.f32 %v304, %v2222
    %v2224 = vpop.f32.mrb[0].mxu0
    %2225 = vmatprep.mubr.bf16.mxu0 0
    %2226 = vmatmul.mubr.bf16.gmra.mrb[0].mxu0 %v1275
    %v2227 = vpop.f32.mrb[0].mxu0
    %v2228 = vadd.f32 %v304, %v2227
    %v2229 = vpop.f32.mrb[0].mxu0
    %v2230 = vpop.f32.mrb[0].mxu0
    %v2231 = vadd.f32 %v304, %v2230
    %v2232 = vpop.f32.mrb[0].mxu0
    %2233 = vmatprep.mubr.bf16.mxu0 0
    %2234 = vmatmul.mubr.bf16.gmra.mrb[0].mxu0 %v1278
    %v2235 = vpop.f32.mrb[0].mxu0
    %v2236 = vadd.f32 %v304, %v2235
    %v2237 = vpop.f32.mrb[0].mxu0
    %v2238 = vpop.f32.mrb[0].mxu0
    %v2239 = vadd.f32 %v304, %v2238
    %v2240 = vpop.f32.mrb[0].mxu0
    %2241 = vmatprep.mubr.bf16.mxu0 0
    %2242 = vmatmul.mubr.bf16.gmra.mrb[0].mxu0 %v1281
    %v2243 = vpop.f32.mrb[0].mxu0
    %v2244 = vadd.f32 %v304, %v2243
    %v2245 = vpop.f32.mrb[0].mxu0
    %v2246 = vpop.f32.mrb[0].mxu0
    %v2247 = vadd.f32 %v304, %v2246
    %v2248 = vpop.f32.mrb[0].mxu0
    %2249 = vmatprep.mubr.bf16.mxu0 0
    %2250 = vmatmul.mubr.bf16.gmra.mrb[0].mxu0 %v1284
    %v2251 = vpop.f32.mrb[0].mxu0
    %v2252 = vadd.f32 %v304, %v2251
    %v2253 = vpop.f32.mrb[0].mxu0
    %v2254 = vpop.f32.mrb[0].mxu0
    %v2255 = vadd.f32 %v304, %v2254
    %v2256 = vpop.f32.mrb[0].mxu0
    %2257 = vmatprep.mubr.bf16.mxu0 0
    %2258 = vmatmul.mubr.bf16.gmra.mrb[0].mxu0 %v1287
    %v2259 = vpop.f32.mrb[0].mxu0
    %v2260 = vadd.f32 %v304, %v2259
    %v2261 = vpop.f32.mrb[0].mxu0
    %v2262 = vpop.f32.mrb[0].mxu0
    %v2263 = vadd.f32 %v304, %v2262
    %v2264 = vpop.f32.mrb[0].mxu0
    %2265 = vmatprep.mubr.bf16.mxu0 0
    %2266 = vmatmul.mubr.bf16.gmra.mrb[0].mxu0 %v1290
    %v2267 = vpop.f32.mrb[0].mxu0
    %v2268 = vadd.f32 %v304, %v2267
    %v2269 = vpop.f32.mrb[0].mxu0
    %v2270 = vpop.f32.mrb[0].mxu0
    %v2271 = vadd.f32 %v304, %v2270
    %v2272 = vpop.f32.mrb[0].mxu0
    %2273 = vmatprep.mubr.bf16.mxu0 0
    %2274 = vmatmul.mubr.bf16.gmra.mrb[0].mxu0 %v1293
    %v2275 = vpop.f32.mrb[0].mxu0
    %v2276 = vadd.f32 %v304, %v2275
    %v2277 = vpop.f32.mrb[0].mxu0
    %v2278 = vpop.f32.mrb[0].mxu0
    %v2279 = vadd.f32 %v304, %v2278
    %v2280 = vpop.f32.mrb[0].mxu0
    %2281 = vmatprep.mubr.bf16.mxu0 0
    %2282 = vmatmul.mubr.bf16.gmra.mrb[0].mxu0 %v1296
    %v2283 = vpop.f32.mrb[0].mxu0
    %v2284 = vadd.f32 %v304, %v2283
    %v2285 = vpop.f32.mrb[0].mxu0
    %v2286 = vpop.f32.mrb[0].mxu0
    %v2287 = vadd.f32 %v304, %v2286
    %v2288 = vpop.f32.mrb[0].mxu0
    %2289 = vmatprep.mubr.bf16.mxu0 0
    %2290 = vmatmul.mubr.bf16.gmra.mrb[0].mxu0 %v1299
    %v2291 = vpop.f32.mrb[0].mxu0
    %v2292 = vadd.f32 %v304, %v2291
    %v2293 = vpop.f32.mrb[0].mxu0
    %v2294 = vpop.f32.mrb[0].mxu0
    %v2295 = vadd.f32 %v304, %v2294
    %v2296 = vpop.f32.mrb[0].mxu0
    %2297 = vmatprep.mubr.bf16.mxu0 0
    %2298 = vmatmul.mubr.bf16.gmra.mrb[0].mxu0 %v1302
    %v2299 = vpop.f32.mrb[0].mxu0
    %v2300 = vadd.f32 %v304, %v2299
    %v2301 = vpop.f32.mrb[0].mxu0
    %v2302 = vpop.f32.mrb[0].mxu0
    %v2303 = vadd.f32 %v304, %v2302
    %v2304 = vpop.f32.mrb[0].mxu0
    %2305 = vmatprep.mubr.bf16.mxu0 0
    %2306 = vmatmul.mubr.bf16.gmra.mrb[0].mxu0 %v1305
    %v2307 = vpop.f32.mrb[0].mxu0
    %v2308 = vadd.f32 %v304, %v2307
    %v2309 = vpop.f32.mrb[0].mxu0
    %v2310 = vpop.f32.mrb[0].mxu0
    %v2311 = vadd.f32 %v304, %v2310
    %v2312 = vpop.f32.mrb[0].mxu0
    %2313 = vmatprep.mubr.bf16.mxu0 0
    %2314 = vmatmul.mubr.bf16.gmra.mrb[0].mxu0 %v1308
    %v2315 = vpop.f32.mrb[0].mxu0
    %v2316 = vadd.f32 %v304, %v2315
    %v2317 = vpop.f32.mrb[0].mxu0
    %v2318 = vpop.f32.mrb[0].mxu0
    %v2319 = vadd.f32 %v304, %v2318
    %v2320 = vpop.f32.mrb[0].mxu0
    %2321 = vmatprep.mubr.bf16.mxu0 0
    %2322 = vmatmul.mubr.bf16.gmra.mrb[0].mxu0 %v1311
    %v2323 = vpop.f32.mrb[0].mxu0
    %v2324 = vadd.f32 %v304, %v2323
    %v2325 = vpop.f32.mrb[0].mxu0
    %v2326 = vpop.f32.mrb[0].mxu0
    %v2327 = vadd.f32 %v304, %v2326
    %v2328 = vpop.f32.mrb[0].mxu0
    %2329 = vmatprep.mubr.bf16.mxu0 0
    %2330 = vmatmul.mubr.bf16.gmra.mrb[0].mxu0 %v1314
    %v2331 = vpop.f32.mrb[0].mxu0
    %v2332 = vadd.f32 %v304, %v2331
    %v2333 = vpop.f32.mrb[0].mxu0
    %v2334 = vpop.f32.mrb[0].mxu0
    %v2335 = vadd.f32 %v304, %v2334
    %v2336 = vpop.f32.mrb[0].mxu0
    %2337 = vmatprep.mubr.bf16.mxu0 0
    %2338 = vmatmul.mubr.bf16.gmra.mrb[0].mxu0 %v1317
    %v2339 = vpop.f32.mrb[0].mxu0
    %v2340 = vadd.f32 %v304, %v2339
    %v2341 = vpop.f32.mrb[0].mxu0
    %v2342 = vpop.f32.mrb[0].mxu0
    %v2343 = vadd.f32 %v304, %v2342
    %v2344 = vpop.f32.mrb[0].mxu0
    %2345 = vmatprep.mubr.bf16.mxu0 0
    %2346 = vmatmul.mubr.bf16.gmra.mrb[0].mxu0 %v1320
    %v2347 = vpop.f32.mrb[0].mxu0
    %v2348 = vadd.f32 %v304, %v2347
    %v2349 = vpop.f32.mrb[0].mxu0
    %v2350 = vpop.f32.mrb[0].mxu0
    %v2351 = vadd.f32 %v304, %v2350
    %v2352 = vpop.f32.mrb[0].mxu0
    %2353 = vmatprep.mubr.bf16.mxu0 0
    %2354 = vmatmul.mubr.bf16.gmra.mrb[0].mxu0 %v1323
    %v2355 = vpop.f32.mrb[0].mxu0
    %v2356 = vadd.f32 %v304, %v2355
    %v2357 = vpop.f32.mrb[0].mxu0
    %v2358 = vpop.f32.mrb[0].mxu0
    %v2359 = vadd.f32 %v304, %v2358
    %v2360 = vpop.f32.mrb[0].mxu0
    %2361 = vmatprep.mubr.bf16.mxu0 0
    %2362 = vmatmul.mubr.bf16.gmra.mrb[0].mxu0 %v1326
    %v2363 = vpop.f32.mrb[0].mxu0
    %v2364 = vadd.f32 %v304, %v2363
    %v2365 = vpop.f32.mrb[0].mxu0
    %v2366 = vpop.f32.mrb[0].mxu0
    %v2367 = vadd.f32 %v304, %v2366
    %v2368 = vpop.f32.mrb[0].mxu0
    %2369 = vmatprep.mubr.bf16.mxu0 0
    %2370 = vmatmul.mubr.bf16.gmra.mrb[0].mxu0 %v1329
    %v2371 = vpop.f32.mrb[0].mxu0
    %v2372 = vadd.f32 %v304, %v2371
    %v2373 = vpop.f32.mrb[0].mxu0
    %v2374 = vpop.f32.mrb[0].mxu0
    %v2375 = vadd.f32 %v304, %v2374
    %v2376 = vpop.f32.mrb[0].mxu0
    %2377 = vmatprep.mubr.bf16.mxu0 0
    %2378 = vmatmul.mubr.bf16.gmra.mrb[0].mxu0 %v1332
    %v2379 = vpop.f32.mrb[0].mxu0
    %v2380 = vadd.f32 %v304, %v2379
    %v2381 = vpop.f32.mrb[0].mxu0
    %v2382 = vpop.f32.mrb[0].mxu0
    %v2383 = vadd.f32 %v304, %v2382
    %v2384 = vpop.f32.mrb[0].mxu0
    %2385 = vmatprep.mubr.bf16.mxu0 0
    %2386 = vmatmul.mubr.bf16.gmra.mrb[0].mxu0 %v1335
    %v2387 = vpop.f32.mrb[0].mxu0
    %v2388 = vadd.f32 %v304, %v2387
    %v2389 = vpop.f32.mrb[0].mxu0
    %v2390 = vpop.f32.mrb[0].mxu0
    %v2391 = vadd.f32 %v304, %v2390
    %v2392 = vpop.f32.mrb[0].mxu0
    %2393 = vdwg.mxu0
    %v2394 = vmax.f32 %v1372, 0.0
    %v2395 = vmax.f32 %v1375, 0.0
    %v2396 = vmax.f32 %v1380, 0.0
    %v2397 = vmax.f32 %v1383, 0.0
    %v2398 = vmax.f32 %v1388, 0.0
    %v2399 = vmax.f32 %v1391, 0.0
    %v2400 = vmax.f32 %v1396, 0.0
    %v2401 = vmax.f32 %v1399, 0.0
    %v2402 = vmax.f32 %v1404, 0.0
    %v2403 = vmax.f32 %v1407, 0.0
    %v2404 = vmax.f32 %v1412, 0.0
    %v2405 = vmax.f32 %v1415, 0.0
    %v2406 = vmax.f32 %v1420, 0.0
    %v2407 = vmax.f32 %v1423, 0.0
    %v2408 = vmax.f32 %v1428, 0.0
    %v2409 = vmax.f32 %v1431, 0.0
    %v2410 = vmax.f32 %v1436, 0.0
    %v2411 = vmax.f32 %v1439, 0.0
    %v2412 = vmax.f32 %v1444, 0.0
    %v2413 = vmax.f32 %v1447, 0.0
    %v2414 = vmax.f32 %v1452, 0.0
    %v2415 = vmax.f32 %v1455, 0.0
    %v2416 = vmax.f32 %v1460, 0.0
    %v2417 = vmax.f32 %v1463, 0.0
    %v2418 = vmax.f32 %v1468, 0.0
    %v2419 = vmax.f32 %v1471, 0.0
    %v2420 = vmax.f32 %v1476, 0.0
    %v2421 = vmax.f32 %v1479, 0.0
    %v2422 = vmax.f32 %v1484, 0.0
    %v2423 = vmax.f32 %v1487, 0.0
    %v2424 = vmax.f32 %v1492, 0.0
    %v2425 = vmax.f32 %v1495, 0.0
    %v2426 = vmax.f32 %v1500, 0.0
    %v2427 = vmax.f32 %v1503, 0.0
    %v2428 = vmax.f32 %v1508, 0.0
    %v2429 = vmax.f32 %v1511, 0.0
    %v2430 = vmax.f32 %v1516, 0.0
    %v2431 = vmax.f32 %v1519, 0.0
    %v2432 = vmax.f32 %v1524, 0.0
    %v2433 = vmax.f32 %v1527, 0.0
    %v2434 = vmax.f32 %v1532, 0.0
    %v2435 = vmax.f32 %v1535, 0.0
    %v2436 = vmax.f32 %v1540, 0.0
    %v2437 = vmax.f32 %v1543, 0.0
    %v2438 = vmax.f32 %v1548, 0.0
    %v2439 = vmax.f32 %v1551, 0.0
    %v2440 = vmax.f32 %v1556, 0.0
    %v2441 = vmax.f32 %v1559, 0.0
    %v2442 = vmax.f32 %v1564, 0.0
    %v2443 = vmax.f32 %v1567, 0.0
    %v2444 = vmax.f32 %v1572, 0.0
    %v2445 = vmax.f32 %v1575, 0.0
    %v2446 = vmax.f32 %v1580, 0.0
    %v2447 = vmax.f32 %v1583, 0.0
    %v2448 = vmax.f32 %v1588, 0.0
    %v2449 = vmax.f32 %v1591, 0.0
    %v2450 = vmax.f32 %v1596, 0.0
    %v2451 = vmax.f32 %v1599, 0.0
    %v2452 = vmax.f32 %v1604, 0.0
    %v2453 = vmax.f32 %v1607, 0.0
    %v2454 = vmax.f32 %v1612, 0.0
    %v2455 = vmax.f32 %v1615, 0.0
    %v2456 = vmax.f32 %v1620, 0.0
    %v2457 = vmax.f32 %v1623, 0.0
    %v2458 = vmax.f32 %v1628, 0.0
    %v2459 = vmax.f32 %v1631, 0.0
    %v2460 = vmax.f32 %v1636, 0.0
    %v2461 = vmax.f32 %v1639, 0.0
    %v2462 = vmax.f32 %v1644, 0.0
    %v2463 = vmax.f32 %v1647, 0.0
    %v2464 = vmax.f32 %v1652, 0.0
    %v2465 = vmax.f32 %v1655, 0.0
    %v2466 = vmax.f32 %v1660, 0.0
    %v2467 = vmax.f32 %v1663, 0.0
    %v2468 = vmax.f32 %v1668, 0.0
    %v2469 = vmax.f32 %v1671, 0.0
    %v2470 = vmax.f32 %v1676, 0.0
    %v2471 = vmax.f32 %v1679, 0.0
    %v2472 = vmax.f32 %v1684, 0.0
    %v2473 = vmax.f32 %v1687, 0.0
    %v2474 = vmax.f32 %v1692, 0.0
    %v2475 = vmax.f32 %v1695, 0.0
    %v2476 = vmax.f32 %v1700, 0.0
    %v2477 = vmax.f32 %v1703, 0.0
    %v2478 = vmax.f32 %v1708, 0.0
    %v2479 = vmax.f32 %v1711, 0.0
    %v2480 = vmax.f32 %v1716, 0.0
    %v2481 = vmax.f32 %v1719, 0.0
    %v2482 = vmax.f32 %v1724, 0.0
    %v2483 = vmax.f32 %v1727, 0.0
    %v2484 = vmax.f32 %v1732, 0.0
    %v2485 = vmax.f32 %v1735, 0.0
    %v2486 = vmax.f32 %v1740, 0.0
    %v2487 = vmax.f32 %v1743, 0.0
    %v2488 = vmax.f32 %v1748, 0.0
    %v2489 = vmax.f32 %v1751, 0.0
    %v2490 = vmax.f32 %v1756, 0.0
    %v2491 = vmax.f32 %v1759, 0.0
    %v2492 = vmax.f32 %v1764, 0.0
    %v2493 = vmax.f32 %v1767, 0.0
    %v2494 = vmax.f32 %v1772, 0.0
    %v2495 = vmax.f32 %v1775, 0.0
    %v2496 = vmax.f32 %v1780, 0.0
    %v2497 = vmax.f32 %v1783, 0.0
    %v2498 = vmax.f32 %v1788, 0.0
    %v2499 = vmax.f32 %v1791, 0.0
    %v2500 = vmax.f32 %v1796, 0.0
    %v2501 = vmax.f32 %v1799, 0.0
    %v2502 = vmax.f32 %v1804, 0.0
    %v2503 = vmax.f32 %v1807, 0.0
    %v2504 = vmax.f32 %v1812, 0.0
    %v2505 = vmax.f32 %v1815, 0.0
    %v2506 = vmax.f32 %v1820, 0.0
    %v2507 = vmax.f32 %v1823, 0.0
    %v2508 = vmax.f32 %v1828, 0.0
    %v2509 = vmax.f32 %v1831, 0.0
    %v2510 = vmax.f32 %v1836, 0.0
    %v2511 = vmax.f32 %v1839, 0.0
    %v2512 = vmax.f32 %v1844, 0.0
    %v2513 = vmax.f32 %v1847, 0.0
    %v2514 = vmax.f32 %v1852, 0.0
    %v2515 = vmax.f32 %v1855, 0.0
    %v2516 = vmax.f32 %v1860, 0.0
    %v2517 = vmax.f32 %v1863, 0.0
    %v2518 = vmax.f32 %v1868, 0.0
    %v2519 = vmax.f32 %v1871, 0.0
    %v2520 = vmax.f32 %v1876, 0.0
    %v2521 = vmax.f32 %v1879, 0.0
    %v2522 = vmax.f32 %v1884, 0.0
    %v2523 = vmax.f32 %v1887, 0.0
    %v2524 = vmax.f32 %v1892, 0.0
    %v2525 = vmax.f32 %v1895, 0.0
    %v2526 = vmax.f32 %v1900, 0.0
    %v2527 = vmax.f32 %v1903, 0.0
    %v2528 = vmax.f32 %v1908, 0.0
    %v2529 = vmax.f32 %v1911, 0.0
    %v2530 = vmax.f32 %v1916, 0.0
    %v2531 = vmax.f32 %v1919, 0.0
    %v2532 = vmax.f32 %v1924, 0.0
    %v2533 = vmax.f32 %v1927, 0.0
    %v2534 = vmax.f32 %v1932, 0.0
    %v2535 = vmax.f32 %v1935, 0.0
    %v2536 = vmax.f32 %v1940, 0.0
    %v2537 = vmax.f32 %v1943, 0.0
    %v2538 = vmax.f32 %v1948, 0.0
    %v2539 = vmax.f32 %v1951, 0.0
    %v2540 = vmax.f32 %v1956, 0.0
    %v2541 = vmax.f32 %v1959, 0.0
    %v2542 = vmax.f32 %v1964, 0.0
    %v2543 = vmax.f32 %v1967, 0.0
    %v2544 = vmax.f32 %v1972, 0.0
    %v2545 = vmax.f32 %v1975, 0.0
    %v2546 = vmax.f32 %v1980, 0.0
    %v2547 = vmax.f32 %v1983, 0.0
    %v2548 = vmax.f32 %v1988, 0.0
    %v2549 = vmax.f32 %v1991, 0.0
    %v2550 = vmax.f32 %v1996, 0.0
    %v2551 = vmax.f32 %v1999, 0.0
    %v2552 = vmax.f32 %v2004, 0.0
    %v2553 = vmax.f32 %v2007, 0.0
    %v2554 = vmax.f32 %v2012, 0.0
    %v2555 = vmax.f32 %v2015, 0.0
    %v2556 = vmax.f32 %v2020, 0.0
    %v2557 = vmax.f32 %v2023, 0.0
    %v2558 = vmax.f32 %v2028, 0.0
    %v2559 = vmax.f32 %v2031, 0.0
    %v2560 = vmax.f32 %v2036, 0.0
    %v2561 = vmax.f32 %v2039, 0.0
    %v2562 = vmax.f32 %v2044, 0.0
    %v2563 = vmax.f32 %v2047, 0.0
    %v2564 = vmax.f32 %v2052, 0.0
    %v2565 = vmax.f32 %v2055, 0.0
    %v2566 = vmax.f32 %v2060, 0.0
    %v2567 = vmax.f32 %v2063, 0.0
    %v2568 = vmax.f32 %v2068, 0.0
    %v2569 = vmax.f32 %v2071, 0.0
    %v2570 = vmax.f32 %v2076, 0.0
    %v2571 = vmax.f32 %v2079, 0.0
    %v2572 = vmax.f32 %v2084, 0.0
    %v2573 = vmax.f32 %v2087, 0.0
    %v2574 = vmax.f32 %v2092, 0.0
    %v2575 = vmax.f32 %v2095, 0.0
    %v2576 = vmax.f32 %v2100, 0.0
    %v2577 = vmax.f32 %v2103, 0.0
    %v2578 = vmax.f32 %v2108, 0.0
    %v2579 = vmax.f32 %v2111, 0.0
    %v2580 = vmax.f32 %v2116, 0.0
    %v2581 = vmax.f32 %v2119, 0.0
    %v2582 = vmax.f32 %v2124, 0.0
    %v2583 = vmax.f32 %v2127, 0.0
    %v2584 = vmax.f32 %v2132, 0.0
    %v2585 = vmax.f32 %v2135, 0.0
    %v2586 = vmax.f32 %v2140, 0.0
    %v2587 = vmax.f32 %v2143, 0.0
    %v2588 = vmax.f32 %v2148, 0.0
    %v2589 = vmax.f32 %v2151, 0.0
    %v2590 = vmax.f32 %v2156, 0.0
    %v2591 = vmax.f32 %v2159, 0.0
    %v2592 = vmax.f32 %v2164, 0.0
    %v2593 = vmax.f32 %v2167, 0.0
    %v2594 = vmax.f32 %v2172, 0.0
    %v2595 = vmax.f32 %v2175, 0.0
    %v2596 = vmax.f32 %v2180, 0.0
    %v2597 = vmax.f32 %v2183, 0.0
    %v2598 = vmax.f32 %v2188, 0.0
    %v2599 = vmax.f32 %v2191, 0.0
    %v2600 = vmax.f32 %v2196, 0.0
    %v2601 = vmax.f32 %v2199, 0.0
    %v2602 = vmax.f32 %v2204, 0.0
    %v2603 = vmax.f32 %v2207, 0.0
    %v2604 = vmax.f32 %v2212, 0.0
    %v2605 = vmax.f32 %v2215, 0.0
    %v2606 = vmax.f32 %v2220, 0.0
    %v2607 = vmax.f32 %v2223, 0.0
    %v2608 = vmax.f32 %v2228, 0.0
    %v2609 = vmax.f32 %v2231, 0.0
    %v2610 = vmax.f32 %v2236, 0.0
    %v2611 = vmax.f32 %v2239, 0.0
    %v2612 = vmax.f32 %v2244, 0.0
    %v2613 = vmax.f32 %v2247, 0.0
    %v2614 = vmax.f32 %v2252, 0.0
    %v2615 = vmax.f32 %v2255, 0.0
    %v2616 = vmax.f32 %v2260, 0.0
    %v2617 = vmax.f32 %v2263, 0.0
    %v2618 = vmax.f32 %v2268, 0.0
    %v2619 = vmax.f32 %v2271, 0.0
    %v2620 = vmax.f32 %v2276, 0.0
    %v2621 = vmax.f32 %v2279, 0.0
    %v2622 = vmax.f32 %v2284, 0.0
    %v2623 = vmax.f32 %v2287, 0.0
    %v2624 = vmax.f32 %v2292, 0.0
    %v2625 = vmax.f32 %v2295, 0.0
    %v2626 = vmax.f32 %v2300, 0.0
    %v2627 = vmax.f32 %v2303, 0.0
    %v2628 = vmax.f32 %v2308, 0.0
    %v2629 = vmax.f32 %v2311, 0.0
    %v2630 = vmax.f32 %v2316, 0.0
    %v2631 = vmax.f32 %v2319, 0.0
    %v2632 = vmax.f32 %v2324, 0.0
    %v2633 = vmax.f32 %v2327, 0.0
    %v2634 = vmax.f32 %v2332, 0.0
    %v2635 = vmax.f32 %v2335, 0.0
    %v2636 = vmax.f32 %v2340, 0.0
    %v2637 = vmax.f32 %v2343, 0.0
    %v2638 = vmax.f32 %v2348, 0.0
    %v2639 = vmax.f32 %v2351, 0.0
    %v2640 = vmax.f32 %v2356, 0.0
    %v2641 = vmax.f32 %v2359, 0.0
    %v2642 = vmax.f32 %v2364, 0.0
    %v2643 = vmax.f32 %v2367, 0.0
    %v2644 = vmax.f32 %v2372, 0.0
    %v2645 = vmax.f32 %v2375, 0.0
    %v2646 = vmax.f32 %v2380, 0.0
    %v2647 = vmax.f32 %v2383, 0.0
    %v2648 = vmax.f32 %v2388, 0.0
    %v2649 = vmax.f32 %v2391, 0.0
    %v2650 = vpack.c.bf16 %v2395, %v2394
    %v2651 = vpack.c.bf16 %v2397, %v2396
    %v2652 = vpack.c.bf16 %v2399, %v2398
    %v2653 = vpack.c.bf16 %v2401, %v2400
    %v2654 = vpack.c.bf16 %v2403, %v2402
    %v2655 = vpack.c.bf16 %v2405, %v2404
    %v2656 = vpack.c.bf16 %v2407, %v2406
    %v2657 = vpack.c.bf16 %v2409, %v2408
    %v2658 = vpack.c.bf16 %v2411, %v2410
    %v2659 = vpack.c.bf16 %v2413, %v2412
    %v2660 = vpack.c.bf16 %v2415, %v2414
    %v2661 = vpack.c.bf16 %v2417, %v2416
    %v2662 = vpack.c.bf16 %v2419, %v2418
    %v2663 = vpack.c.bf16 %v2421, %v2420
    %v2664 = vpack.c.bf16 %v2423, %v2422
    %v2665 = vpack.c.bf16 %v2425, %v2424
    %v2666 = vpack.c.bf16 %v2427, %v2426
    %v2667 = vpack.c.bf16 %v2429, %v2428
    %v2668 = vpack.c.bf16 %v2431, %v2430
    %v2669 = vpack.c.bf16 %v2433, %v2432
    %v2670 = vpack.c.bf16 %v2435, %v2434
    %v2671 = vpack.c.bf16 %v2437, %v2436
    %v2672 = vpack.c.bf16 %v2439, %v2438
    %v2673 = vpack.c.bf16 %v2441, %v2440
    %v2674 = vpack.c.bf16 %v2443, %v2442
    %v2675 = vpack.c.bf16 %v2445, %v2444
    %v2676 = vpack.c.bf16 %v2447, %v2446
    %v2677 = vpack.c.bf16 %v2449, %v2448
    %v2678 = vpack.c.bf16 %v2451, %v2450
    %v2679 = vpack.c.bf16 %v2453, %v2452
    %v2680 = vpack.c.bf16 %v2455, %v2454
    %v2681 = vpack.c.bf16 %v2457, %v2456
    %v2682 = vpack.c.bf16 %v2459, %v2458
    %v2683 = vpack.c.bf16 %v2461, %v2460
    %v2684 = vpack.c.bf16 %v2463, %v2462
    %v2685 = vpack.c.bf16 %v2465, %v2464
    %v2686 = vpack.c.bf16 %v2467, %v2466
    %v2687 = vpack.c.bf16 %v2469, %v2468
    %v2688 = vpack.c.bf16 %v2471, %v2470
    %v2689 = vpack.c.bf16 %v2473, %v2472
    %v2690 = vpack.c.bf16 %v2475, %v2474
    %v2691 = vpack.c.bf16 %v2477, %v2476
    %v2692 = vpack.c.bf16 %v2479, %v2478
    %v2693 = vpack.c.bf16 %v2481, %v2480
    %v2694 = vpack.c.bf16 %v2483, %v2482
    %v2695 = vpack.c.bf16 %v2485, %v2484
    %v2696 = vpack.c.bf16 %v2487, %v2486
    %v2697 = vpack.c.bf16 %v2489, %v2488
    %v2698 = vpack.c.bf16 %v2491, %v2490
    %v2699 = vpack.c.bf16 %v2493, %v2492
    %v2700 = vpack.c.bf16 %v2495, %v2494
    %v2701 = vpack.c.bf16 %v2497, %v2496
    %v2702 = vpack.c.bf16 %v2499, %v2498
    %v2703 = vpack.c.bf16 %v2501, %v2500
    %v2704 = vpack.c.bf16 %v2503, %v2502
    %v2705 = vpack.c.bf16 %v2505, %v2504
    %v2706 = vpack.c.bf16 %v2507, %v2506
    %v2707 = vpack.c.bf16 %v2509, %v2508
    %v2708 = vpack.c.bf16 %v2511, %v2510
    %v2709 = vpack.c.bf16 %v2513, %v2512
    %v2710 = vpack.c.bf16 %v2515, %v2514
    %v2711 = vpack.c.bf16 %v2517, %v2516
    %v2712 = vpack.c.bf16 %v2519, %v2518
    %v2713 = vpack.c.bf16 %v2521, %v2520
    %v2714 = vpack.c.bf16 %v2523, %v2522
    %v2715 = vpack.c.bf16 %v2525, %v2524
    %v2716 = vpack.c.bf16 %v2527, %v2526
    %v2717 = vpack.c.bf16 %v2529, %v2528
    %v2718 = vpack.c.bf16 %v2531, %v2530
    %v2719 = vpack.c.bf16 %v2533, %v2532
    %v2720 = vpack.c.bf16 %v2535, %v2534
    %v2721 = vpack.c.bf16 %v2537, %v2536
    %v2722 = vpack.c.bf16 %v2539, %v2538
    %v2723 = vpack.c.bf16 %v2541, %v2540
    %v2724 = vpack.c.bf16 %v2543, %v2542
    %v2725 = vpack.c.bf16 %v2545, %v2544
    %v2726 = vpack.c.bf16 %v2547, %v2546
    %v2727 = vpack.c.bf16 %v2549, %v2548
    %v2728 = vpack.c.bf16 %v2551, %v2550
    %v2729 = vpack.c.bf16 %v2553, %v2552
    %v2730 = vpack.c.bf16 %v2555, %v2554
    %v2731 = vpack.c.bf16 %v2557, %v2556
    %v2732 = vpack.c.bf16 %v2559, %v2558
    %v2733 = vpack.c.bf16 %v2561, %v2560
    %v2734 = vpack.c.bf16 %v2563, %v2562
    %v2735 = vpack.c.bf16 %v2565, %v2564
    %v2736 = vpack.c.bf16 %v2567, %v2566
    %v2737 = vpack.c.bf16 %v2569, %v2568
    %v2738 = vpack.c.bf16 %v2571, %v2570
    %v2739 = vpack.c.bf16 %v2573, %v2572
    %v2740 = vpack.c.bf16 %v2575, %v2574
    %v2741 = vpack.c.bf16 %v2577, %v2576
    %v2742 = vpack.c.bf16 %v2579, %v2578
    %v2743 = vpack.c.bf16 %v2581, %v2580
    %v2744 = vpack.c.bf16 %v2583, %v2582
    %v2745 = vpack.c.bf16 %v2585, %v2584
    %v2746 = vpack.c.bf16 %v2587, %v2586
    %v2747 = vpack.c.bf16 %v2589, %v2588
    %v2748 = vpack.c.bf16 %v2591, %v2590
    %v2749 = vpack.c.bf16 %v2593, %v2592
    %v2750 = vpack.c.bf16 %v2595, %v2594
    %v2751 = vpack.c.bf16 %v2597, %v2596
    %v2752 = vpack.c.bf16 %v2599, %v2598
    %v2753 = vpack.c.bf16 %v2601, %v2600
    %v2754 = vpack.c.bf16 %v2603, %v2602
    %v2755 = vpack.c.bf16 %v2605, %v2604
    %v2756 = vpack.c.bf16 %v2607, %v2606
    %v2757 = vpack.c.bf16 %v2609, %v2608
    %v2758 = vpack.c.bf16 %v2611, %v2610
    %v2759 = vpack.c.bf16 %v2613, %v2612
    %v2760 = vpack.c.bf16 %v2615, %v2614
    %v2761 = vpack.c.bf16 %v2617, %v2616
    %v2762 = vpack.c.bf16 %v2619, %v2618
    %v2763 = vpack.c.bf16 %v2621, %v2620
    %v2764 = vpack.c.bf16 %v2623, %v2622
    %v2765 = vpack.c.bf16 %v2625, %v2624
    %v2766 = vpack.c.bf16 %v2627, %v2626
    %v2767 = vpack.c.bf16 %v2629, %v2628
    %v2768 = vpack.c.bf16 %v2631, %v2630
    %v2769 = vpack.c.bf16 %v2633, %v2632
    %v2770 = vpack.c.bf16 %v2635, %v2634
    %v2771 = vpack.c.bf16 %v2637, %v2636
    %v2772 = vpack.c.bf16 %v2639, %v2638
    %v2773 = vpack.c.bf16 %v2641, %v2640
    %v2774 = vpack.c.bf16 %v2643, %v2642
    %v2775 = vpack.c.bf16 %v2645, %v2644
    %v2776 = vpack.c.bf16 %v2647, %v2646
    %v2777 = vpack.c.bf16 %v2649, %v2648
    %v2906 = vunpack.c.l.b16 %v2650
    %v2907 = vunpack.c.h.b16 %v2650
    %v2908 = vunpack.c.l.b16 %v2651
    %v2909 = vunpack.c.h.b16 %v2651
    %v2910 = vunpack.c.l.b16 %v2652
    %v2911 = vunpack.c.h.b16 %v2652
    %v2912 = vunpack.c.l.b16 %v2653
    %v2913 = vunpack.c.h.b16 %v2653
    %v2914 = vunpack.c.l.b16 %v2654
    %v2915 = vunpack.c.h.b16 %v2654
    %v2916 = vunpack.c.l.b16 %v2655
    %v2917 = vunpack.c.h.b16 %v2655
    %v2918 = vunpack.c.l.b16 %v2656
    %v2919 = vunpack.c.h.b16 %v2656
    %v2920 = vunpack.c.l.b16 %v2657
    %v2921 = vunpack.c.h.b16 %v2657
    %v2922 = vunpack.c.l.b16 %v2658
    %v2923 = vunpack.c.h.b16 %v2658
    %v2924 = vunpack.c.l.b16 %v2659
    %v2925 = vunpack.c.h.b16 %v2659
    %v2926 = vunpack.c.l.b16 %v2660
    %v2927 = vunpack.c.h.b16 %v2660
    %v2928 = vunpack.c.l.b16 %v2661
    %v2929 = vunpack.c.h.b16 %v2661
    %v2930 = vunpack.c.l.b16 %v2662
    %v2931 = vunpack.c.h.b16 %v2662
    %v2932 = vunpack.c.l.b16 %v2663
    %v2933 = vunpack.c.h.b16 %v2663
    %v2934 = vunpack.c.l.b16 %v2664
    %v2935 = vunpack.c.h.b16 %v2664
    %v2936 = vunpack.c.l.b16 %v2665
    %v2937 = vunpack.c.h.b16 %v2665
    %v2938 = vunpack.c.l.b16 %v2666
    %v2939 = vunpack.c.h.b16 %v2666
    %v2940 = vunpack.c.l.b16 %v2667
    %v2941 = vunpack.c.h.b16 %v2667
    %v2942 = vunpack.c.l.b16 %v2668
    %v2943 = vunpack.c.h.b16 %v2668
    %v2944 = vunpack.c.l.b16 %v2669
    %v2945 = vunpack.c.h.b16 %v2669
    %v2946 = vunpack.c.l.b16 %v2670
    %v2947 = vunpack.c.h.b16 %v2670
    %v2948 = vunpack.c.l.b16 %v2671
    %v2949 = vunpack.c.h.b16 %v2671
    %v2950 = vunpack.c.l.b16 %v2672
    %v2951 = vunpack.c.h.b16 %v2672
    %v2952 = vunpack.c.l.b16 %v2673
    %v2953 = vunpack.c.h.b16 %v2673
    %v2954 = vunpack.c.l.b16 %v2674
    %v2955 = vunpack.c.h.b16 %v2674
    %v2956 = vunpack.c.l.b16 %v2675
    %v2957 = vunpack.c.h.b16 %v2675
    %v2958 = vunpack.c.l.b16 %v2676
    %v2959 = vunpack.c.h.b16 %v2676
    %v2960 = vunpack.c.l.b16 %v2677
    %v2961 = vunpack.c.h.b16 %v2677
    %v2962 = vunpack.c.l.b16 %v2678
    %v2963 = vunpack.c.h.b16 %v2678
    %v2964 = vunpack.c.l.b16 %v2679
    %v2965 = vunpack.c.h.b16 %v2679
    %v2966 = vunpack.c.l.b16 %v2680
    %v2967 = vunpack.c.h.b16 %v2680
    %v2968 = vunpack.c.l.b16 %v2681
    %v2969 = vunpack.c.h.b16 %v2681
    %v2970 = vunpack.c.l.b16 %v2682
    %v2971 = vunpack.c.h.b16 %v2682
    %v2972 = vunpack.c.l.b16 %v2683
    %v2973 = vunpack.c.h.b16 %v2683
    %v2974 = vunpack.c.l.b16 %v2684
    %v2975 = vunpack.c.h.b16 %v2684
    %v2976 = vunpack.c.l.b16 %v2685
    %v2977 = vunpack.c.h.b16 %v2685
    %v2978 = vunpack.c.l.b16 %v2686
    %v2979 = vunpack.c.h.b16 %v2686
    %v2980 = vunpack.c.l.b16 %v2687
    %v2981 = vunpack.c.h.b16 %v2687
    %v2982 = vunpack.c.l.b16 %v2688
    %v2983 = vunpack.c.h.b16 %v2688
    %v2984 = vunpack.c.l.b16 %v2689
    %v2985 = vunpack.c.h.b16 %v2689
    %v2986 = vunpack.c.l.b16 %v2690
    %v2987 = vunpack.c.h.b16 %v2690
    %v2988 = vunpack.c.l.b16 %v2691
    %v2989 = vunpack.c.h.b16 %v2691
    %v2990 = vunpack.c.l.b16 %v2692
    %v2991 = vunpack.c.h.b16 %v2692
    %v2992 = vunpack.c.l.b16 %v2693
    %v2993 = vunpack.c.h.b16 %v2693
    %v2994 = vunpack.c.l.b16 %v2694
    %v2995 = vunpack.c.h.b16 %v2694
    %v2996 = vunpack.c.l.b16 %v2695
    %v2997 = vunpack.c.h.b16 %v2695
    %v2998 = vunpack.c.l.b16 %v2696
    %v2999 = vunpack.c.h.b16 %v2696
    %v3000 = vunpack.c.l.b16 %v2697
    %v3001 = vunpack.c.h.b16 %v2697
    %v3002 = vunpack.c.l.b16 %v2698
    %v3003 = vunpack.c.h.b16 %v2698
    %v3004 = vunpack.c.l.b16 %v2699
    %v3005 = vunpack.c.h.b16 %v2699
    %v3006 = vunpack.c.l.b16 %v2700
    %v3007 = vunpack.c.h.b16 %v2700
    %v3008 = vunpack.c.l.b16 %v2701
    %v3009 = vunpack.c.h.b16 %v2701
    %v3010 = vunpack.c.l.b16 %v2702
    %v3011 = vunpack.c.h.b16 %v2702
    %v3012 = vunpack.c.l.b16 %v2703
    %v3013 = vunpack.c.h.b16 %v2703
    %v3014 = vunpack.c.l.b16 %v2704
    %v3015 = vunpack.c.h.b16 %v2704
    %v3016 = vunpack.c.l.b16 %v2705
    %v3017 = vunpack.c.h.b16 %v2705
    %v3018 = vunpack.c.l.b16 %v2706
    %v3019 = vunpack.c.h.b16 %v2706
    %v3020 = vunpack.c.l.b16 %v2707
    %v3021 = vunpack.c.h.b16 %v2707
    %v3022 = vunpack.c.l.b16 %v2708
    %v3023 = vunpack.c.h.b16 %v2708
    %v3024 = vunpack.c.l.b16 %v2709
    %v3025 = vunpack.c.h.b16 %v2709
    %v3026 = vunpack.c.l.b16 %v2710
    %v3027 = vunpack.c.h.b16 %v2710
    %v3028 = vunpack.c.l.b16 %v2711
    %v3029 = vunpack.c.h.b16 %v2711
    %v3030 = vunpack.c.l.b16 %v2712
    %v3031 = vunpack.c.h.b16 %v2712
    %v3032 = vunpack.c.l.b16 %v2713
    %v3033 = vunpack.c.h.b16 %v2713
    %v3034 = vunpack.c.l.b16 %v2714
    %v3035 = vunpack.c.h.b16 %v2714
    %v3036 = vunpack.c.l.b16 %v2715
    %v3037 = vunpack.c.h.b16 %v2715
    %v3038 = vunpack.c.l.b16 %v2716
    %v3039 = vunpack.c.h.b16 %v2716
    %v3040 = vunpack.c.l.b16 %v2717
    %v3041 = vunpack.c.h.b16 %v2717
    %v3042 = vunpack.c.l.b16 %v2718
    %v3043 = vunpack.c.h.b16 %v2718
    %v3044 = vunpack.c.l.b16 %v2719
    %v3045 = vunpack.c.h.b16 %v2719
    %v3046 = vunpack.c.l.b16 %v2720
    %v3047 = vunpack.c.h.b16 %v2720
    %v3048 = vunpack.c.l.b16 %v2721
    %v3049 = vunpack.c.h.b16 %v2721
    %v3050 = vunpack.c.l.b16 %v2722
    %v3051 = vunpack.c.h.b16 %v2722
    %v3052 = vunpack.c.l.b16 %v2723
    %v3053 = vunpack.c.h.b16 %v2723
    %v3054 = vunpack.c.l.b16 %v2724
    %v3055 = vunpack.c.h.b16 %v2724
    %v3056 = vunpack.c.l.b16 %v2725
    %v3057 = vunpack.c.h.b16 %v2725
    %v3058 = vunpack.c.l.b16 %v2726
    %v3059 = vunpack.c.h.b16 %v2726
    %v3060 = vunpack.c.l.b16 %v2727
    %v3061 = vunpack.c.h.b16 %v2727
    %v3062 = vunpack.c.l.b16 %v2728
    %v3063 = vunpack.c.h.b16 %v2728
    %v3064 = vunpack.c.l.b16 %v2729
    %v3065 = vunpack.c.h.b16 %v2729
    %v3066 = vunpack.c.l.b16 %v2730
    %v3067 = vunpack.c.h.b16 %v2730
    %v3068 = vunpack.c.l.b16 %v2731
    %v3069 = vunpack.c.h.b16 %v2731
    %v3070 = vunpack.c.l.b16 %v2732
    %v3071 = vunpack.c.h.b16 %v2732
    %v3072 = vunpack.c.l.b16 %v2733
    %v3073 = vunpack.c.h.b16 %v2733
    %v3074 = vunpack.c.l.b16 %v2734
    %v3075 = vunpack.c.h.b16 %v2734
    %v3076 = vunpack.c.l.b16 %v2735
    %v3077 = vunpack.c.h.b16 %v2735
    %v3078 = vunpack.c.l.b16 %v2736
    %v3079 = vunpack.c.h.b16 %v2736
    %v3080 = vunpack.c.l.b16 %v2737
    %v3081 = vunpack.c.h.b16 %v2737
    %v3082 = vunpack.c.l.b16 %v2738
    %v3083 = vunpack.c.h.b16 %v2738
    %v3084 = vunpack.c.l.b16 %v2739
    %v3085 = vunpack.c.h.b16 %v2739
    %v3086 = vunpack.c.l.b16 %v2740
    %v3087 = vunpack.c.h.b16 %v2740
    %v3088 = vunpack.c.l.b16 %v2741
    %v3089 = vunpack.c.h.b16 %v2741
    %v3090 = vunpack.c.l.b16 %v2742
    %v3091 = vunpack.c.h.b16 %v2742
    %v3092 = vunpack.c.l.b16 %v2743
    %v3093 = vunpack.c.h.b16 %v2743
    %v3094 = vunpack.c.l.b16 %v2744
    %v3095 = vunpack.c.h.b16 %v2744
    %v3096 = vunpack.c.l.b16 %v2745
    %v3097 = vunpack.c.h.b16 %v2745
    %v3098 = vunpack.c.l.b16 %v2746
    %v3099 = vunpack.c.h.b16 %v2746
    %v3100 = vunpack.c.l.b16 %v2747
    %v3101 = vunpack.c.h.b16 %v2747
    %v3102 = vunpack.c.l.b16 %v2748
    %v3103 = vunpack.c.h.b16 %v2748
    %v3104 = vunpack.c.l.b16 %v2749
    %v3105 = vunpack.c.h.b16 %v2749
    %v3106 = vunpack.c.l.b16 %v2750
    %v3107 = vunpack.c.h.b16 %v2750
    %v3108 = vunpack.c.l.b16 %v2751
    %v3109 = vunpack.c.h.b16 %v2751
    %v3110 = vunpack.c.l.b16 %v2752
    %v3111 = vunpack.c.h.b16 %v2752
    %v3112 = vunpack.c.l.b16 %v2753
    %v3113 = vunpack.c.h.b16 %v2753
    %v3114 = vunpack.c.l.b16 %v2754
    %v3115 = vunpack.c.h.b16 %v2754
    %v3116 = vunpack.c.l.b16 %v2755
    %v3117 = vunpack.c.h.b16 %v2755
    %v3118 = vunpack.c.l.b16 %v2756
    %v3119 = vunpack.c.h.b16 %v2756
    %v3120 = vunpack.c.l.b16 %v2757
    %v3121 = vunpack.c.h.b16 %v2757
    %v3122 = vunpack.c.l.b16 %v2758
    %v3123 = vunpack.c.h.b16 %v2758
    %v3124 = vunpack.c.l.b16 %v2759
    %v3125 = vunpack.c.h.b16 %v2759
    %v3126 = vunpack.c.l.b16 %v2760
    %v3127 = vunpack.c.h.b16 %v2760
    %v3128 = vunpack.c.l.b16 %v2761
    %v3129 = vunpack.c.h.b16 %v2761
    %v3130 = vunpack.c.l.b16 %v2762
    %v3131 = vunpack.c.h.b16 %v2762
    %v3132 = vunpack.c.l.b16 %v2763
    %v3133 = vunpack.c.h.b16 %v2763
    %v3134 = vunpack.c.l.b16 %v2764
    %v3135 = vunpack.c.h.b16 %v2764
    %v3136 = vunpack.c.l.b16 %v2765
    %v3137 = vunpack.c.h.b16 %v2765
    %v3138 = vunpack.c.l.b16 %v2766
    %v3139 = vunpack.c.h.b16 %v2766
    %v3140 = vunpack.c.l.b16 %v2767
    %v3141 = vunpack.c.h.b16 %v2767
    %v3142 = vunpack.c.l.b16 %v2768
    %v3143 = vunpack.c.h.b16 %v2768
    %v3144 = vunpack.c.l.b16 %v2769
    %v3145 = vunpack.c.h.b16 %v2769
    %v3146 = vunpack.c.l.b16 %v2770
    %v3147 = vunpack.c.h.b16 %v2770
    %v3148 = vunpack.c.l.b16 %v2771
    %v3149 = vunpack.c.h.b16 %v2771
    %v3150 = vunpack.c.l.b16 %v2772
    %v3151 = vunpack.c.h.b16 %v2772
    %v3152 = vunpack.c.l.b16 %v2773
    %v3153 = vunpack.c.h.b16 %v2773
    %v3154 = vunpack.c.l.b16 %v2774
    %v3155 = vunpack.c.h.b16 %v2774
    %v3156 = vunpack.c.l.b16 %v2775
    %v3157 = vunpack.c.h.b16 %v2775
    %v3158 = vunpack.c.l.b16 %v2776
    %v3159 = vunpack.c.h.b16 %v2776
    %v3160 = vunpack.c.l.b16 %v2777
    %v3161 = vunpack.c.h.b16 %v2777
    %v3162 = vpack.c.b16 %v2906, %v2906
    %v3163 = vpack.c.b16 %v2907, %v2907
    %v3164 = vpack.c.b16 %v2908, %v2908
    %v3165 = vpack.c.b16 %v2909, %v2909
    %v3166 = vpack.c.b16 %v2910, %v2910
    %v3167 = vpack.c.b16 %v2911, %v2911
    %v3168 = vpack.c.b16 %v2912, %v2912
    %v3169 = vpack.c.b16 %v2913, %v2913
    %v3170 = vpack.c.b16 %v2914, %v2914
    %v3171 = vpack.c.b16 %v2915, %v2915
    %v3172 = vpack.c.b16 %v2916, %v2916
    %v3173 = vpack.c.b16 %v2917, %v2917
    %v3174 = vpack.c.b16 %v2918, %v2918
    %v3175 = vpack.c.b16 %v2919, %v2919
    %v3176 = vpack.c.b16 %v2920, %v2920
    %v3177 = vpack.c.b16 %v2921, %v2921
    %v3178 = vpack.c.b16 %v2922, %v2922
    %v3179 = vpack.c.b16 %v2923, %v2923
    %v3180 = vpack.c.b16 %v2924, %v2924
    %v3181 = vpack.c.b16 %v2925, %v2925
    %v3182 = vpack.c.b16 %v2926, %v2926
    %v3183 = vpack.c.b16 %v2927, %v2927
    %v3184 = vpack.c.b16 %v2928, %v2928
    %v3185 = vpack.c.b16 %v2929, %v2929
    %v3186 = vpack.c.b16 %v2930, %v2930
    %v3187 = vpack.c.b16 %v2931, %v2931
    %v3188 = vpack.c.b16 %v2932, %v2932
    %v3189 = vpack.c.b16 %v2933, %v2933
    %v3190 = vpack.c.b16 %v2934, %v2934
    %v3191 = vpack.c.b16 %v2935, %v2935
    %v3192 = vpack.c.b16 %v2936, %v2936
    %v3193 = vpack.c.b16 %v2937, %v2937
    %v3194 = vpack.c.b16 %v2938, %v2938
    %v3195 = vpack.c.b16 %v2939, %v2939
    %v3196 = vpack.c.b16 %v2940, %v2940
    %v3197 = vpack.c.b16 %v2941, %v2941
    %v3198 = vpack.c.b16 %v2942, %v2942
    %v3199 = vpack.c.b16 %v2943, %v2943
    %v3200 = vpack.c.b16 %v2944, %v2944
    %v3201 = vpack.c.b16 %v2945, %v2945
    %v3202 = vpack.c.b16 %v2946, %v2946
    %v3203 = vpack.c.b16 %v2947, %v2947
    %v3204 = vpack.c.b16 %v2948, %v2948
    %v3205 = vpack.c.b16 %v2949, %v2949
    %v3206 = vpack.c.b16 %v2950, %v2950
    %v3207 = vpack.c.b16 %v2951, %v2951
    %v3208 = vpack.c.b16 %v2952, %v2952
    %v3209 = vpack.c.b16 %v2953, %v2953
    %v3210 = vpack.c.b16 %v2954, %v2954
    %v3211 = vpack.c.b16 %v2955, %v2955
    %v3212 = vpack.c.b16 %v2956, %v2956
    %v3213 = vpack.c.b16 %v2957, %v2957
    %v3214 = vpack.c.b16 %v2958, %v2958
    %v3215 = vpack.c.b16 %v2959, %v2959
    %v3216 = vpack.c.b16 %v2960, %v2960
    %v3217 = vpack.c.b16 %v2961, %v2961
    %v3218 = vpack.c.b16 %v2962, %v2962
    %v3219 = vpack.c.b16 %v2963, %v2963
    %v3220 = vpack.c.b16 %v2964, %v2964
    %v3221 = vpack.c.b16 %v2965, %v2965
    %v3222 = vpack.c.b16 %v2966, %v2966
    %v3223 = vpack.c.b16 %v2967, %v2967
    %v3224 = vpack.c.b16 %v2968, %v2968
    %v3225 = vpack.c.b16 %v2969, %v2969
    %v3226 = vpack.c.b16 %v2970, %v2970
    %v3227 = vpack.c.b16 %v2971, %v2971
    %v3228 = vpack.c.b16 %v2972, %v2972
    %v3229 = vpack.c.b16 %v2973, %v2973
    %v3230 = vpack.c.b16 %v2974, %v2974
    %v3231 = vpack.c.b16 %v2975, %v2975
    %v3232 = vpack.c.b16 %v2976, %v2976
    %v3233 = vpack.c.b16 %v2977, %v2977
    %v3234 = vpack.c.b16 %v2978, %v2978
    %v3235 = vpack.c.b16 %v2979, %v2979
    %v3236 = vpack.c.b16 %v2980, %v2980
    %v3237 = vpack.c.b16 %v2981, %v2981
    %v3238 = vpack.c.b16 %v2982, %v2982
    %v3239 = vpack.c.b16 %v2983, %v2983
    %v3240 = vpack.c.b16 %v2984, %v2984
    %v3241 = vpack.c.b16 %v2985, %v2985
    %v3242 = vpack.c.b16 %v2986, %v2986
    %v3243 = vpack.c.b16 %v2987, %v2987
    %v3244 = vpack.c.b16 %v2988, %v2988
    %v3245 = vpack.c.b16 %v2989, %v2989
    %v3246 = vpack.c.b16 %v2990, %v2990
    %v3247 = vpack.c.b16 %v2991, %v2991
    %v3248 = vpack.c.b16 %v2992, %v2992
    %v3249 = vpack.c.b16 %v2993, %v2993
    %v3250 = vpack.c.b16 %v2994, %v2994
    %v3251 = vpack.c.b16 %v2995, %v2995
    %v3252 = vpack.c.b16 %v2996, %v2996
    %v3253 = vpack.c.b16 %v2997, %v2997
    %v3254 = vpack.c.b16 %v2998, %v2998
    %v3255 = vpack.c.b16 %v2999, %v2999
    %v3256 = vpack.c.b16 %v3000, %v3000
    %v3257 = vpack.c.b16 %v3001, %v3001
    %v3258 = vpack.c.b16 %v3002, %v3002
    %v3259 = vpack.c.b16 %v3003, %v3003
    %v3260 = vpack.c.b16 %v3004, %v3004
    %v3261 = vpack.c.b16 %v3005, %v3005
    %v3262 = vpack.c.b16 %v3006, %v3006
    %v3263 = vpack.c.b16 %v3007, %v3007
    %v3264 = vpack.c.b16 %v3008, %v3008
    %v3265 = vpack.c.b16 %v3009, %v3009
    %v3266 = vpack.c.b16 %v3010, %v3010
    %v3267 = vpack.c.b16 %v3011, %v3011
    %v3268 = vpack.c.b16 %v3012, %v3012
    %v3269 = vpack.c.b16 %v3013, %v3013
    %v3270 = vpack.c.b16 %v3014, %v3014
    %v3271 = vpack.c.b16 %v3015, %v3015
    %v3272 = vpack.c.b16 %v3016, %v3016
    %v3273 = vpack.c.b16 %v3017, %v3017
    %v3274 = vpack.c.b16 %v3018, %v3018
    %v3275 = vpack.c.b16 %v3019, %v3019
    %v3276 = vpack.c.b16 %v3020, %v3020
    %v3277 = vpack.c.b16 %v3021, %v3021
    %v3278 = vpack.c.b16 %v3022, %v3022
    %v3279 = vpack.c.b16 %v3023, %v3023
    %v3280 = vpack.c.b16 %v3024, %v3024
    %v3281 = vpack.c.b16 %v3025, %v3025
    %v3282 = vpack.c.b16 %v3026, %v3026
    %v3283 = vpack.c.b16 %v3027, %v3027
    %v3284 = vpack.c.b16 %v3028, %v3028
    %v3285 = vpack.c.b16 %v3029, %v3029
    %v3286 = vpack.c.b16 %v3030, %v3030
    %v3287 = vpack.c.b16 %v3031, %v3031
    %v3288 = vpack.c.b16 %v3032, %v3032
    %v3289 = vpack.c.b16 %v3033, %v3033
    %v3290 = vpack.c.b16 %v3034, %v3034
    %v3291 = vpack.c.b16 %v3035, %v3035
    %v3292 = vpack.c.b16 %v3036, %v3036
    %v3293 = vpack.c.b16 %v3037, %v3037
    %v3294 = vpack.c.b16 %v3038, %v3038
    %v3295 = vpack.c.b16 %v3039, %v3039
    %v3296 = vpack.c.b16 %v3040, %v3040
    %v3297 = vpack.c.b16 %v3041, %v3041
    %v3298 = vpack.c.b16 %v3042, %v3042
    %v3299 = vpack.c.b16 %v3043, %v3043
    %v3300 = vpack.c.b16 %v3044, %v3044
    %v3301 = vpack.c.b16 %v3045, %v3045
    %v3302 = vpack.c.b16 %v3046, %v3046
    %v3303 = vpack.c.b16 %v3047, %v3047
    %v3304 = vpack.c.b16 %v3048, %v3048
    %v3305 = vpack.c.b16 %v3049, %v3049
    %v3306 = vpack.c.b16 %v3050, %v3050
    %v3307 = vpack.c.b16 %v3051, %v3051
    %v3308 = vpack.c.b16 %v3052, %v3052
    %v3309 = vpack.c.b16 %v3053, %v3053
    %v3310 = vpack.c.b16 %v3054, %v3054
    %v3311 = vpack.c.b16 %v3055, %v3055
    %v3312 = vpack.c.b16 %v3056, %v3056
    %v3313 = vpack.c.b16 %v3057, %v3057
    %v3314 = vpack.c.b16 %v3058, %v3058
    %v3315 = vpack.c.b16 %v3059, %v3059
    %v3316 = vpack.c.b16 %v3060, %v3060
    %v3317 = vpack.c.b16 %v3061, %v3061
    %v3318 = vpack.c.b16 %v3062, %v3062
    %v3319 = vpack.c.b16 %v3063, %v3063
    %v3320 = vpack.c.b16 %v3064, %v3064
    %v3321 = vpack.c.b16 %v3065, %v3065
    %v3322 = vpack.c.b16 %v3066, %v3066
    %v3323 = vpack.c.b16 %v3067, %v3067
    %v3324 = vpack.c.b16 %v3068, %v3068
    %v3325 = vpack.c.b16 %v3069, %v3069
    %v3326 = vpack.c.b16 %v3070, %v3070
    %v3327 = vpack.c.b16 %v3071, %v3071
    %v3328 = vpack.c.b16 %v3072, %v3072
    %v3329 = vpack.c.b16 %v3073, %v3073
    %v3330 = vpack.c.b16 %v3074, %v3074
    %v3331 = vpack.c.b16 %v3075, %v3075
    %v3332 = vpack.c.b16 %v3076, %v3076
    %v3333 = vpack.c.b16 %v3077, %v3077
    %v3334 = vpack.c.b16 %v3078, %v3078
    %v3335 = vpack.c.b16 %v3079, %v3079
    %v3336 = vpack.c.b16 %v3080, %v3080
    %v3337 = vpack.c.b16 %v3081, %v3081
    %v3338 = vpack.c.b16 %v3082, %v3082
    %v3339 = vpack.c.b16 %v3083, %v3083
    %v3340 = vpack.c.b16 %v3084, %v3084
    %v3341 = vpack.c.b16 %v3085, %v3085
    %v3342 = vpack.c.b16 %v3086, %v3086
    %v3343 = vpack.c.b16 %v3087, %v3087
    %v3344 = vpack.c.b16 %v3088, %v3088
    %v3345 = vpack.c.b16 %v3089, %v3089
    %v3346 = vpack.c.b16 %v3090, %v3090
    %v3347 = vpack.c.b16 %v3091, %v3091
    %v3348 = vpack.c.b16 %v3092, %v3092
    %v3349 = vpack.c.b16 %v3093, %v3093
    %v3350 = vpack.c.b16 %v3094, %v3094
    %v3351 = vpack.c.b16 %v3095, %v3095
    %v3352 = vpack.c.b16 %v3096, %v3096
    %v3353 = vpack.c.b16 %v3097, %v3097
    %v3354 = vpack.c.b16 %v3098, %v3098
    %v3355 = vpack.c.b16 %v3099, %v3099
    %v3356 = vpack.c.b16 %v3100, %v3100
    %v3357 = vpack.c.b16 %v3101, %v3101
    %v3358 = vpack.c.b16 %v3102, %v3102
    %v3359 = vpack.c.b16 %v3103, %v3103
    %v3360 = vpack.c.b16 %v3104, %v3104
    %v3361 = vpack.c.b16 %v3105, %v3105
    %v3362 = vpack.c.b16 %v3106, %v3106
    %v3363 = vpack.c.b16 %v3107, %v3107
    %v3364 = vpack.c.b16 %v3108, %v3108
    %v3365 = vpack.c.b16 %v3109, %v3109
    %v3366 = vpack.c.b16 %v3110, %v3110
    %v3367 = vpack.c.b16 %v3111, %v3111
    %v3368 = vpack.c.b16 %v3112, %v3112
    %v3369 = vpack.c.b16 %v3113, %v3113
    %v3370 = vpack.c.b16 %v3114, %v3114
    %v3371 = vpack.c.b16 %v3115, %v3115
    %v3372 = vpack.c.b16 %v3116, %v3116
    %v3373 = vpack.c.b16 %v3117, %v3117
    %v3374 = vpack.c.b16 %v3118, %v3118
    %v3375 = vpack.c.b16 %v3119, %v3119
    %v3376 = vpack.c.b16 %v3120, %v3120
    %v3377 = vpack.c.b16 %v3121, %v3121
    %v3378 = vpack.c.b16 %v3122, %v3122
    %v3379 = vpack.c.b16 %v3123, %v3123
    %v3380 = vpack.c.b16 %v3124, %v3124
    %v3381 = vpack.c.b16 %v3125, %v3125
    %v3382 = vpack.c.b16 %v3126, %v3126
    %v3383 = vpack.c.b16 %v3127, %v3127
    %v3384 = vpack.c.b16 %v3128, %v3128
    %v3385 = vpack.c.b16 %v3129, %v3129
    %v3386 = vpack.c.b16 %v3130, %v3130
    %v3387 = vpack.c.b16 %v3131, %v3131
    %v3388 = vpack.c.b16 %v3132, %v3132
    %v3389 = vpack.c.b16 %v3133, %v3133
    %v3390 = vpack.c.b16 %v3134, %v3134
    %v3391 = vpack.c.b16 %v3135, %v3135
    %v3392 = vpack.c.b16 %v3136, %v3136
    %v3393 = vpack.c.b16 %v3137, %v3137
    %v3394 = vpack.c.b16 %v3138, %v3138
    %v3395 = vpack.c.b16 %v3139, %v3139
    %v3396 = vpack.c.b16 %v3140, %v3140
    %v3397 = vpack.c.b16 %v3141, %v3141
    %v3398 = vpack.c.b16 %v3142, %v3142
    %v3399 = vpack.c.b16 %v3143, %v3143
    %v3400 = vpack.c.b16 %v3144, %v3144
    %v3401 = vpack.c.b16 %v3145, %v3145
    %v3402 = vpack.c.b16 %v3146, %v3146
    %v3403 = vpack.c.b16 %v3147, %v3147
    %v3404 = vpack.c.b16 %v3148, %v3148
    %v3405 = vpack.c.b16 %v3149, %v3149
    %v3406 = vpack.c.b16 %v3150, %v3150
    %v3407 = vpack.c.b16 %v3151, %v3151
    %v3408 = vpack.c.b16 %v3152, %v3152
    %v3409 = vpack.c.b16 %v3153, %v3153
    %v3410 = vpack.c.b16 %v3154, %v3154
    %v3411 = vpack.c.b16 %v3155, %v3155
    %v3412 = vpack.c.b16 %v3156, %v3156
    %v3413 = vpack.c.b16 %v3157, %v3157
    %v3414 = vpack.c.b16 %v3158, %v3158
    %v3415 = vpack.c.b16 %v3159, %v3159
    %v3416 = vpack.c.b16 %v3160, %v3160
    %v3417 = vpack.c.b16 %v3161, %v3161
    %vm3674 = vcmask 257024
    %3675 = vst.msk [vmem:[%s3] sm:$0xf] %vm3674, %v3162
    %3676 = vst.msk [vmem:[%s3 + $0x4] sm:$0xf] %vm3674, %v3163
    %3677 = vst.msk [vmem:[%s3 + $0x8] sm:$0xf] %vm3674, %v3164
    %3678 = vst.msk [vmem:[%s3 + $0xc] sm:$0xf] %vm3674, %v3165
    %3679 = vst.msk [vmem:[%s3 + $0x10] sm:$0xf] %vm3674, %v3166
    %3680 = vst.msk [vmem:[%s3 + $0x14] sm:$0xf] %vm3674, %v3167
    %3681 = vst.msk [vmem:[%s3 + $0x18] sm:$0xf] %vm3674, %v3168
    %3682 = vst.msk [vmem:[%s3 + $0x1c] sm:$0xf] %vm3674, %v3169
    %3683 = vst.msk [vmem:[%s3 + $0x20] sm:$0xf] %vm3674, %v3170
    %3684 = vst.msk [vmem:[%s3 + $0x24] sm:$0xf] %vm3674, %v3171
    %3685 = vst.msk [vmem:[%s3 + $0x28] sm:$0xf] %vm3674, %v3172
    %3686 = vst.msk [vmem:[%s3 + $0x2c] sm:$0xf] %vm3674, %v3173
    %3687 = vst.msk [vmem:[%s3 + $0x30] sm:$0xf] %vm3674, %v3174
    %3688 = vst.msk [vmem:[%s3 + $0x34] sm:$0xf] %vm3674, %v3175
    %3689 = vst.msk [vmem:[%s3 + $0x38] sm:$0xf] %vm3674, %v3176
    %3690 = vst.msk [vmem:[%s3 + $0x3c] sm:$0xf] %vm3674, %v3177
    %3691 = vst.msk [vmem:[%s3 + $0x40] sm:$0xf] %vm3674, %v3178
    %3692 = vst.msk [vmem:[%s3 + $0x44] sm:$0xf] %vm3674, %v3179
    %3693 = vst.msk [vmem:[%s3 + $0x48] sm:$0xf] %vm3674, %v3180
    %3694 = vst.msk [vmem:[%s3 + $0x4c] sm:$0xf] %vm3674, %v3181
    %3695 = vst.msk [vmem:[%s3 + $0x50] sm:$0xf] %vm3674, %v3182
    %3696 = vst.msk [vmem:[%s3 + $0x54] sm:$0xf] %vm3674, %v3183
    %3697 = vst.msk [vmem:[%s3 + $0x58] sm:$0xf] %vm3674, %v3184
    %3698 = vst.msk [vmem:[%s3 + $0x5c] sm:$0xf] %vm3674, %v3185
    %3699 = vst.msk [vmem:[%s3 + $0x60] sm:$0xf] %vm3674, %v3186
    %3700 = vst.msk [vmem:[%s3 + $0x64] sm:$0xf] %vm3674, %v3187
    %3701 = vst.msk [vmem:[%s3 + $0x68] sm:$0xf] %vm3674, %v3188
    %3702 = vst.msk [vmem:[%s3 + $0x6c] sm:$0xf] %vm3674, %v3189
    %3703 = vst.msk [vmem:[%s3 + $0x70] sm:$0xf] %vm3674, %v3190
    %3704 = vst.msk [vmem:[%s3 + $0x74] sm:$0xf] %vm3674, %v3191
    %3705 = vst.msk [vmem:[%s3 + $0x78] sm:$0xf] %vm3674, %v3192
    %3706 = vst.msk [vmem:[%s3 + $0x7c] sm:$0xf] %vm3674, %v3193
    %3707 = vst.msk [vmem:[%s3 + $0x80] sm:$0xf] %vm3674, %v3194
    %3708 = vst.msk [vmem:[%s3 + $0x84] sm:$0xf] %vm3674, %v3195
    %3709 = vst.msk [vmem:[%s3 + $0x88] sm:$0xf] %vm3674, %v3196
    %3710 = vst.msk [vmem:[%s3 + $0x8c] sm:$0xf] %vm3674, %v3197
    %3711 = vst.msk [vmem:[%s3 + $0x90] sm:$0xf] %vm3674, %v3198
    %3712 = vst.msk [vmem:[%s3 + $0x94] sm:$0xf] %vm3674, %v3199
    %3713 = vst.msk [vmem:[%s3 + $0x98] sm:$0xf] %vm3674, %v3200
    %3714 = vst.msk [vmem:[%s3 + $0x9c] sm:$0xf] %vm3674, %v3201
    %3715 = vst.msk [vmem:[%s3 + $0xa0] sm:$0xf] %vm3674, %v3202
    %3716 = vst.msk [vmem:[%s3 + $0xa4] sm:$0xf] %vm3674, %v3203
    %3717 = vst.msk [vmem:[%s3 + $0xa8] sm:$0xf] %vm3674, %v3204
    %3718 = vst.msk [vmem:[%s3 + $0xac] sm:$0xf] %vm3674, %v3205
    %3719 = vst.msk [vmem:[%s3 + $0xb0] sm:$0xf] %vm3674, %v3206
    %3720 = vst.msk [vmem:[%s3 + $0xb4] sm:$0xf] %vm3674, %v3207
    %3721 = vst.msk [vmem:[%s3 + $0xb8] sm:$0xf] %vm3674, %v3208
    %3722 = vst.msk [vmem:[%s3 + $0xbc] sm:$0xf] %vm3674, %v3209
    %3723 = vst.msk [vmem:[%s3 + $0xc0] sm:$0xf] %vm3674, %v3210
    %3724 = vst.msk [vmem:[%s3 + $0xc4] sm:$0xf] %vm3674, %v3211
    %3725 = vst.msk [vmem:[%s3 + $0xc8] sm:$0xf] %vm3674, %v3212
    %3726 = vst.msk [vmem:[%s3 + $0xcc] sm:$0xf] %vm3674, %v3213
    %3727 = vst.msk [vmem:[%s3 + $0xd0] sm:$0xf] %vm3674, %v3214
    %3728 = vst.msk [vmem:[%s3 + $0xd4] sm:$0xf] %vm3674, %v3215
    %3729 = vst.msk [vmem:[%s3 + $0xd8] sm:$0xf] %vm3674, %v3216
    %3730 = vst.msk [vmem:[%s3 + $0xdc] sm:$0xf] %vm3674, %v3217
    %3731 = vst.msk [vmem:[%s3 + $0xe0] sm:$0xf] %vm3674, %v3218
    %3732 = vst.msk [vmem:[%s3 + $0xe4] sm:$0xf] %vm3674, %v3219
    %3733 = vst.msk [vmem:[%s3 + $0xe8] sm:$0xf] %vm3674, %v3220
    %3734 = vst.msk [vmem:[%s3 + $0xec] sm:$0xf] %vm3674, %v3221
    %3735 = vst.msk [vmem:[%s3 + $0xf0] sm:$0xf] %vm3674, %v3222
    %3736 = vst.msk [vmem:[%s3 + $0xf4] sm:$0xf] %vm3674, %v3223
    %3737 = vst.msk [vmem:[%s3 + $0xf8] sm:$0xf] %vm3674, %v3224
    %3738 = vst.msk [vmem:[%s3 + $0xfc] sm:$0xf] %vm3674, %v3225
    %3739 = vst.msk [vmem:[%s3 + $0x100] sm:$0xf] %vm3674, %v3226
    %3740 = vst.msk [vmem:[%s3 + $0x104] sm:$0xf] %vm3674, %v3227
    %3741 = vst.msk [vmem:[%s3 + $0x108] sm:$0xf] %vm3674, %v3228
    %3742 = vst.msk [vmem:[%s3 + $0x10c] sm:$0xf] %vm3674, %v3229
    %3743 = vst.msk [vmem:[%s3 + $0x110] sm:$0xf] %vm3674, %v3230
    %3744 = vst.msk [vmem:[%s3 + $0x114] sm:$0xf] %vm3674, %v3231
    %3745 = vst.msk [vmem:[%s3 + $0x118] sm:$0xf] %vm3674, %v3232
    %3746 = vst.msk [vmem:[%s3 + $0x11c] sm:$0xf] %vm3674, %v3233
    %3747 = vst.msk [vmem:[%s3 + $0x120] sm:$0xf] %vm3674, %v3234
    %3748 = vst.msk [vmem:[%s3 + $0x124] sm:$0xf] %vm3674, %v3235
    %3749 = vst.msk [vmem:[%s3 + $0x128] sm:$0xf] %vm3674, %v3236
    %3750 = vst.msk [vmem:[%s3 + $0x12c] sm:$0xf] %vm3674, %v3237
    %3751 = vst.msk [vmem:[%s3 + $0x130] sm:$0xf] %vm3674, %v3238
    %3752 = vst.msk [vmem:[%s3 + $0x134] sm:$0xf] %vm3674, %v3239
    %3753 = vst.msk [vmem:[%s3 + $0x138] sm:$0xf] %vm3674, %v3240
    %3754 = vst.msk [vmem:[%s3 + $0x13c] sm:$0xf] %vm3674, %v3241
    %3755 = vst.msk [vmem:[%s3 + $0x140] sm:$0xf] %vm3674, %v3242
    %3756 = vst.msk [vmem:[%s3 + $0x144] sm:$0xf] %vm3674, %v3243
    %3757 = vst.msk [vmem:[%s3 + $0x148] sm:$0xf] %vm3674, %v3244
    %3758 = vst.msk [vmem:[%s3 + $0x14c] sm:$0xf] %vm3674, %v3245
    %3759 = vst.msk [vmem:[%s3 + $0x150] sm:$0xf] %vm3674, %v3246
    %3760 = vst.msk [vmem:[%s3 + $0x154] sm:$0xf] %vm3674, %v3247
    %3761 = vst.msk [vmem:[%s3 + $0x158] sm:$0xf] %vm3674, %v3248
    %3762 = vst.msk [vmem:[%s3 + $0x15c] sm:$0xf] %vm3674, %v3249
    %3763 = vst.msk [vmem:[%s3 + $0x160] sm:$0xf] %vm3674, %v3250
    %3764 = vst.msk [vmem:[%s3 + $0x164] sm:$0xf] %vm3674, %v3251
    %3765 = vst.msk [vmem:[%s3 + $0x168] sm:$0xf] %vm3674, %v3252
    %3766 = vst.msk [vmem:[%s3 + $0x16c] sm:$0xf] %vm3674, %v3253
    %3767 = vst.msk [vmem:[%s3 + $0x170] sm:$0xf] %vm3674, %v3254
    %3768 = vst.msk [vmem:[%s3 + $0x174] sm:$0xf] %vm3674, %v3255
    %3769 = vst.msk [vmem:[%s3 + $0x178] sm:$0xf] %vm3674, %v3256
    %3770 = vst.msk [vmem:[%s3 + $0x17c] sm:$0xf] %vm3674, %v3257
    %3771 = vst.msk [vmem:[%s3 + $0x180] sm:$0xf] %vm3674, %v3258
    %3772 = vst.msk [vmem:[%s3 + $0x184] sm:$0xf] %vm3674, %v3259
    %3773 = vst.msk [vmem:[%s3 + $0x188] sm:$0xf] %vm3674, %v3260
    %3774 = vst.msk [vmem:[%s3 + $0x18c] sm:$0xf] %vm3674, %v3261
    %3775 = vst.msk [vmem:[%s3 + $0x190] sm:$0xf] %vm3674, %v3262
    %3776 = vst.msk [vmem:[%s3 + $0x194] sm:$0xf] %vm3674, %v3263
    %3777 = vst.msk [vmem:[%s3 + $0x198] sm:$0xf] %vm3674, %v3264
    %3778 = vst.msk [vmem:[%s3 + $0x19c] sm:$0xf] %vm3674, %v3265
    %3779 = vst.msk [vmem:[%s3 + $0x1a0] sm:$0xf] %vm3674, %v3266
    %3780 = vst.msk [vmem:[%s3 + $0x1a4] sm:$0xf] %vm3674, %v3267
    %3781 = vst.msk [vmem:[%s3 + $0x1a8] sm:$0xf] %vm3674, %v3268
    %3782 = vst.msk [vmem:[%s3 + $0x1ac] sm:$0xf] %vm3674, %v3269
    %3783 = vst.msk [vmem:[%s3 + $0x1b0] sm:$0xf] %vm3674, %v3270
    %3784 = vst.msk [vmem:[%s3 + $0x1b4] sm:$0xf] %vm3674, %v3271
    %3785 = vst.msk [vmem:[%s3 + $0x1b8] sm:$0xf] %vm3674, %v3272
    %3786 = vst.msk [vmem:[%s3 + $0x1bc] sm:$0xf] %vm3674, %v3273
    %3787 = vst.msk [vmem:[%s3 + $0x1c0] sm:$0xf] %vm3674, %v3274
    %3788 = vst.msk [vmem:[%s3 + $0x1c4] sm:$0xf] %vm3674, %v3275
    %3789 = vst.msk [vmem:[%s3 + $0x1c8] sm:$0xf] %vm3674, %v3276
    %3790 = vst.msk [vmem:[%s3 + $0x1cc] sm:$0xf] %vm3674, %v3277
    %3791 = vst.msk [vmem:[%s3 + $0x1d0] sm:$0xf] %vm3674, %v3278
    %3792 = vst.msk [vmem:[%s3 + $0x1d4] sm:$0xf] %vm3674, %v3279
    %3793 = vst.msk [vmem:[%s3 + $0x1d8] sm:$0xf] %vm3674, %v3280
    %3794 = vst.msk [vmem:[%s3 + $0x1dc] sm:$0xf] %vm3674, %v3281
    %3795 = vst.msk [vmem:[%s3 + $0x1e0] sm:$0xf] %vm3674, %v3282
    %3796 = vst.msk [vmem:[%s3 + $0x1e4] sm:$0xf] %vm3674, %v3283
    %3797 = vst.msk [vmem:[%s3 + $0x1e8] sm:$0xf] %vm3674, %v3284
    %3798 = vst.msk [vmem:[%s3 + $0x1ec] sm:$0xf] %vm3674, %v3285
    %3799 = vst.msk [vmem:[%s3 + $0x1f0] sm:$0xf] %vm3674, %v3286
    %3800 = vst.msk [vmem:[%s3 + $0x1f4] sm:$0xf] %vm3674, %v3287
    %3801 = vst.msk [vmem:[%s3 + $0x1f8] sm:$0xf] %vm3674, %v3288
    %3802 = vst.msk [vmem:[%s3 + $0x1fc] sm:$0xf] %vm3674, %v3289
    %3803 = vst.msk [vmem:[%s3 + $0x200] sm:$0xf] %vm3674, %v3290
    %3804 = vst.msk [vmem:[%s3 + $0x204] sm:$0xf] %vm3674, %v3291
    %3805 = vst.msk [vmem:[%s3 + $0x208] sm:$0xf] %vm3674, %v3292
    %3806 = vst.msk [vmem:[%s3 + $0x20c] sm:$0xf] %vm3674, %v3293
    %3807 = vst.msk [vmem:[%s3 + $0x210] sm:$0xf] %vm3674, %v3294
    %3808 = vst.msk [vmem:[%s3 + $0x214] sm:$0xf] %vm3674, %v3295
    %3809 = vst.msk [vmem:[%s3 + $0x218] sm:$0xf] %vm3674, %v3296
    %3810 = vst.msk [vmem:[%s3 + $0x21c] sm:$0xf] %vm3674, %v3297
    %3811 = vst.msk [vmem:[%s3 + $0x220] sm:$0xf] %vm3674, %v3298
    %3812 = vst.msk [vmem:[%s3 + $0x224] sm:$0xf] %vm3674, %v3299
    %3813 = vst.msk [vmem:[%s3 + $0x228] sm:$0xf] %vm3674, %v3300
    %3814 = vst.msk [vmem:[%s3 + $0x22c] sm:$0xf] %vm3674, %v3301
    %3815 = vst.msk [vmem:[%s3 + $0x230] sm:$0xf] %vm3674, %v3302
    %3816 = vst.msk [vmem:[%s3 + $0x234] sm:$0xf] %vm3674, %v3303
    %3817 = vst.msk [vmem:[%s3 + $0x238] sm:$0xf] %vm3674, %v3304
    %3818 = vst.msk [vmem:[%s3 + $0x23c] sm:$0xf] %vm3674, %v3305
    %3819 = vst.msk [vmem:[%s3 + $0x240] sm:$0xf] %vm3674, %v3306
    %3820 = vst.msk [vmem:[%s3 + $0x244] sm:$0xf] %vm3674, %v3307
    %3821 = vst.msk [vmem:[%s3 + $0x248] sm:$0xf] %vm3674, %v3308
    %3822 = vst.msk [vmem:[%s3 + $0x24c] sm:$0xf] %vm3674, %v3309
    %3823 = vst.msk [vmem:[%s3 + $0x250] sm:$0xf] %vm3674, %v3310
    %3824 = vst.msk [vmem:[%s3 + $0x254] sm:$0xf] %vm3674, %v3311
    %3825 = vst.msk [vmem:[%s3 + $0x258] sm:$0xf] %vm3674, %v3312
    %3826 = vst.msk [vmem:[%s3 + $0x25c] sm:$0xf] %vm3674, %v3313
    %3827 = vst.msk [vmem:[%s3 + $0x260] sm:$0xf] %vm3674, %v3314
    %3828 = vst.msk [vmem:[%s3 + $0x264] sm:$0xf] %vm3674, %v3315
    %3829 = vst.msk [vmem:[%s3 + $0x268] sm:$0xf] %vm3674, %v3316
    %3830 = vst.msk [vmem:[%s3 + $0x26c] sm:$0xf] %vm3674, %v3317
    %3831 = vst.msk [vmem:[%s3 + $0x270] sm:$0xf] %vm3674, %v3318
    %3832 = vst.msk [vmem:[%s3 + $0x274] sm:$0xf] %vm3674, %v3319
    %3833 = vst.msk [vmem:[%s3 + $0x278] sm:$0xf] %vm3674, %v3320
    %3834 = vst.msk [vmem:[%s3 + $0x27c] sm:$0xf] %vm3674, %v3321
    %3835 = vst.msk [vmem:[%s3 + $0x280] sm:$0xf] %vm3674, %v3322
    %3836 = vst.msk [vmem:[%s3 + $0x284] sm:$0xf] %vm3674, %v3323
    %3837 = vst.msk [vmem:[%s3 + $0x288] sm:$0xf] %vm3674, %v3324
    %3838 = vst.msk [vmem:[%s3 + $0x28c] sm:$0xf] %vm3674, %v3325
    %3839 = vst.msk [vmem:[%s3 + $0x290] sm:$0xf] %vm3674, %v3326
    %3840 = vst.msk [vmem:[%s3 + $0x294] sm:$0xf] %vm3674, %v3327
    %3841 = vst.msk [vmem:[%s3 + $0x298] sm:$0xf] %vm3674, %v3328
    %3842 = vst.msk [vmem:[%s3 + $0x29c] sm:$0xf] %vm3674, %v3329
    %3843 = vst.msk [vmem:[%s3 + $0x2a0] sm:$0xf] %vm3674, %v3330
    %3844 = vst.msk [vmem:[%s3 + $0x2a4] sm:$0xf] %vm3674, %v3331
    %3845 = vst.msk [vmem:[%s3 + $0x2a8] sm:$0xf] %vm3674, %v3332
    %3846 = vst.msk [vmem:[%s3 + $0x2ac] sm:$0xf] %vm3674, %v3333
    %3847 = vst.msk [vmem:[%s3 + $0x2b0] sm:$0xf] %vm3674, %v3334
    %3848 = vst.msk [vmem:[%s3 + $0x2b4] sm:$0xf] %vm3674, %v3335
    %3849 = vst.msk [vmem:[%s3 + $0x2b8] sm:$0xf] %vm3674, %v3336
    %3850 = vst.msk [vmem:[%s3 + $0x2bc] sm:$0xf] %vm3674, %v3337
    %3851 = vst.msk [vmem:[%s3 + $0x2c0] sm:$0xf] %vm3674, %v3338
    %3852 = vst.msk [vmem:[%s3 + $0x2c4] sm:$0xf] %vm3674, %v3339
    %3853 = vst.msk [vmem:[%s3 + $0x2c8] sm:$0xf] %vm3674, %v3340
    %3854 = vst.msk [vmem:[%s3 + $0x2cc] sm:$0xf] %vm3674, %v3341
    %3855 = vst.msk [vmem:[%s3 + $0x2d0] sm:$0xf] %vm3674, %v3342
    %3856 = vst.msk [vmem:[%s3 + $0x2d4] sm:$0xf] %vm3674, %v3343
    %3857 = vst.msk [vmem:[%s3 + $0x2d8] sm:$0xf] %vm3674, %v3344
    %3858 = vst.msk [vmem:[%s3 + $0x2dc] sm:$0xf] %vm3674, %v3345
    %3859 = vst.msk [vmem:[%s3 + $0x2e0] sm:$0xf] %vm3674, %v3346
    %3860 = vst.msk [vmem:[%s3 + $0x2e4] sm:$0xf] %vm3674, %v3347
    %3861 = vst.msk [vmem:[%s3 + $0x2e8] sm:$0xf] %vm3674, %v3348
    %3862 = vst.msk [vmem:[%s3 + $0x2ec] sm:$0xf] %vm3674, %v3349
    %3863 = vst.msk [vmem:[%s3 + $0x2f0] sm:$0xf] %vm3674, %v3350
    %3864 = vst.msk [vmem:[%s3 + $0x2f4] sm:$0xf] %vm3674, %v3351
    %3865 = vst.msk [vmem:[%s3 + $0x2f8] sm:$0xf] %vm3674, %v3352
    %3866 = vst.msk [vmem:[%s3 + $0x2fc] sm:$0xf] %vm3674, %v3353
    %3867 = vst.msk [vmem:[%s3 + $0x300] sm:$0xf] %vm3674, %v3354
    %3868 = vst.msk [vmem:[%s3 + $0x304] sm:$0xf] %vm3674, %v3355
    %3869 = vst.msk [vmem:[%s3 + $0x308] sm:$0xf] %vm3674, %v3356
    %3870 = vst.msk [vmem:[%s3 + $0x30c] sm:$0xf] %vm3674, %v3357
    %3871 = vst.msk [vmem:[%s3 + $0x310] sm:$0xf] %vm3674, %v3358
    %3872 = vst.msk [vmem:[%s3 + $0x314] sm:$0xf] %vm3674, %v3359
    %3873 = vst.msk [vmem:[%s3 + $0x318] sm:$0xf] %vm3674, %v3360
    %3874 = vst.msk [vmem:[%s3 + $0x31c] sm:$0xf] %vm3674, %v3361
    %3875 = vst.msk [vmem:[%s3 + $0x320] sm:$0xf] %vm3674, %v3362
    %3876 = vst.msk [vmem:[%s3 + $0x324] sm:$0xf] %vm3674, %v3363
    %3877 = vst.msk [vmem:[%s3 + $0x328] sm:$0xf] %vm3674, %v3364
    %3878 = vst.msk [vmem:[%s3 + $0x32c] sm:$0xf] %vm3674, %v3365
    %3879 = vst.msk [vmem:[%s3 + $0x330] sm:$0xf] %vm3674, %v3366
    %3880 = vst.msk [vmem:[%s3 + $0x334] sm:$0xf] %vm3674, %v3367
    %3881 = vst.msk [vmem:[%s3 + $0x338] sm:$0xf] %vm3674, %v3368
    %3882 = vst.msk [vmem:[%s3 + $0x33c] sm:$0xf] %vm3674, %v3369
    %3883 = vst.msk [vmem:[%s3 + $0x340] sm:$0xf] %vm3674, %v3370
    %3884 = vst.msk [vmem:[%s3 + $0x344] sm:$0xf] %vm3674, %v3371
    %3885 = vst.msk [vmem:[%s3 + $0x348] sm:$0xf] %vm3674, %v3372
    %3886 = vst.msk [vmem:[%s3 + $0x34c] sm:$0xf] %vm3674, %v3373
    %3887 = vst.msk [vmem:[%s3 + $0x350] sm:$0xf] %vm3674, %v3374
    %3888 = vst.msk [vmem:[%s3 + $0x354] sm:$0xf] %vm3674, %v3375
    %3889 = vst.msk [vmem:[%s3 + $0x358] sm:$0xf] %vm3674, %v3376
    %3890 = vst.msk [vmem:[%s3 + $0x35c] sm:$0xf] %vm3674, %v3377
    %3891 = vst.msk [vmem:[%s3 + $0x360] sm:$0xf] %vm3674, %v3378
    %3892 = vst.msk [vmem:[%s3 + $0x364] sm:$0xf] %vm3674, %v3379
    %3893 = vst.msk [vmem:[%s3 + $0x368] sm:$0xf] %vm3674, %v3380
    %3894 = vst.msk [vmem:[%s3 + $0x36c] sm:$0xf] %vm3674, %v3381
    %3895 = vst.msk [vmem:[%s3 + $0x370] sm:$0xf] %vm3674, %v3382
    %3896 = vst.msk [vmem:[%s3 + $0x374] sm:$0xf] %vm3674, %v3383
    %3897 = vst.msk [vmem:[%s3 + $0x378] sm:$0xf] %vm3674, %v3384
    %3898 = vst.msk [vmem:[%s3 + $0x37c] sm:$0xf] %vm3674, %v3385
    %3899 = vst.msk [vmem:[%s3 + $0x380] sm:$0xf] %vm3674, %v3386
    %3900 = vst.msk [vmem:[%s3 + $0x384] sm:$0xf] %vm3674, %v3387
    %3901 = vst.msk [vmem:[%s3 + $0x388] sm:$0xf] %vm3674, %v3388
    %3902 = vst.msk [vmem:[%s3 + $0x38c] sm:$0xf] %vm3674, %v3389
    %3903 = vst.msk [vmem:[%s3 + $0x390] sm:$0xf] %vm3674, %v3390
    %3904 = vst.msk [vmem:[%s3 + $0x394] sm:$0xf] %vm3674, %v3391
    %3905 = vst.msk [vmem:[%s3 + $0x398] sm:$0xf] %vm3674, %v3392
    %3906 = vst.msk [vmem:[%s3 + $0x39c] sm:$0xf] %vm3674, %v3393
    %3907 = vst.msk [vmem:[%s3 + $0x3a0] sm:$0xf] %vm3674, %v3394
    %3908 = vst.msk [vmem:[%s3 + $0x3a4] sm:$0xf] %vm3674, %v3395
    %3909 = vst.msk [vmem:[%s3 + $0x3a8] sm:$0xf] %vm3674, %v3396
    %3910 = vst.msk [vmem:[%s3 + $0x3ac] sm:$0xf] %vm3674, %v3397
    %3911 = vst.msk [vmem:[%s3 + $0x3b0] sm:$0xf] %vm3674, %v3398
    %3912 = vst.msk [vmem:[%s3 + $0x3b4] sm:$0xf] %vm3674, %v3399
    %3913 = vst.msk [vmem:[%s3 + $0x3b8] sm:$0xf] %vm3674, %v3400
    %3914 = vst.msk [vmem:[%s3 + $0x3bc] sm:$0xf] %vm3674, %v3401
    %3915 = vst.msk [vmem:[%s3 + $0x3c0] sm:$0xf] %vm3674, %v3402
    %3916 = vst.msk [vmem:[%s3 + $0x3c4] sm:$0xf] %vm3674, %v3403
    %3917 = vst.msk [vmem:[%s3 + $0x3c8] sm:$0xf] %vm3674, %v3404
    %3918 = vst.msk [vmem:[%s3 + $0x3cc] sm:$0xf] %vm3674, %v3405
    %3919 = vst.msk [vmem:[%s3 + $0x3d0] sm:$0xf] %vm3674, %v3406
    %3920 = vst.msk [vmem:[%s3 + $0x3d4] sm:$0xf] %vm3674, %v3407
    %3921 = vst.msk [vmem:[%s3 + $0x3d8] sm:$0xf] %vm3674, %v3408
    %3922 = vst.msk [vmem:[%s3 + $0x3dc] sm:$0xf] %vm3674, %v3409
    %3923 = vst.msk [vmem:[%s3 + $0x3e0] sm:$0xf] %vm3674, %v3410
    %3924 = vst.msk [vmem:[%s3 + $0x3e4] sm:$0xf] %vm3674, %v3411
    %3925 = vst.msk [vmem:[%s3 + $0x3e8] sm:$0xf] %vm3674, %v3412
    %3926 = vst.msk [vmem:[%s3 + $0x3ec] sm:$0xf] %vm3674, %v3413
    %3927 = vst.msk [vmem:[%s3 + $0x3f0] sm:$0xf] %vm3674, %v3414
    %3928 = vst.msk [vmem:[%s3 + $0x3f4] sm:$0xf] %vm3674, %v3415
    %3929 = vst.msk [vmem:[%s3 + $0x3f8] sm:$0xf] %vm3674, %v3416
    %3930 = vst.msk [vmem:[%s3 + $0x3fc] sm:$0xf] %vm3674, %v3417
    // Predicated region
    $region22: #{encoder_forward.4} parent=1 // pred_check
      _
    $region23: #{encoder_forward.4} parent=1 // pred_check_branch
      %3932 = sbr.rel (0) target = $region25
    $region24: #{encoder_forward.4} parent=1 // pred_region
      _
    $region25: #{encoder_forward.4} parent=1 // pred_fallthru
      _
    // Predicated region
    $region26: #{encoder_forward.4} parent=1 // pred_check
      _
    $region27: #{encoder_forward.4} parent=1 // pred_check_branch
      %3934 = sbr.rel (0) target = $region29
    $region28: #{encoder_forward.4} parent=1 // pred_region
      _
    $region29: #{encoder_forward.4} parent=1 // pred_fallthru
      _
    %3935 = vsyncpa [#allocation3], 1
    %3936 = vsyncpa [#allocation5], 1

// kernel: encoder_forward.5
$region0: #{encoder_forward.5}
  #allocation0 [shape = 'u32[]', space=smem, size = 0x4, offset = 0x4, fixed_abs, tag = 'smem constant byte address 0x4 - core index']
  #allocation1 [shape = 'u32[144,128]{1,0:T(1,128)}', space=vmem, size = 0x12000, scoped, tag = 'internal scratch']
  %s0 = inlined_call_operand.vmem [shape: bf16[2,17,17,128], index: 0, kind: input, shape index: {}]
  %s1 = inlined_call_operand.vmem [shape: bf16[4,128,64], index: 1, kind: input, shape index: {}]
  %s2 = inlined_call_operand.vmem [shape: f32[1,64], index: 2, kind: input, shape index: {}]
  %s3 = inlined_call_operand.vmem [shape: bf16[2,256,64], index: 3, kind: output, shape index: {}]
  %s4 = sld [smem:[#allocation0]]
  $region45: #{encoder_forward.5} parent=0
    _
  %s6 = ssub.s32 1, %s4
  %s7 = scalar_select 0, %s6, %s4
  loop: start=0, step=1, limit=4
  $region2: #{encoder_forward.5} parent=0 // loop_pre_header
    _
  $region3: #{encoder_forward.5} parent=0 // loop_header
    %s9 = sphi 0, %s13
    %p10 = scmp.ge.s32.totalorder %s9, 4
    %s19 = sphi 0, %s21
    %s22 = sphi 0, %s19
    %s23 = sphi 0, %s22
    %s39 = sphi 0, %s23
    %s43 = sphi 0, %s43
    %s45 = sphi 0, %s43
    %s46 = sphi 0, %s45
    %s60 = sphi 0, %s46
    %s64 = sphi 0, %s64
    %s66 = sphi 0, %s64
    %s67 = sphi 0, %s66
    %s81 = sphi 0, %s67
    %s87 = sphi 0, %s89
    %s90 = sphi 0, %s87
    %s91 = sphi 0, %s90
    %s107 = sphi 0, %s91
  $region4: #{encoder_forward.5} parent=0 // loop_header_branch
    %12 = sbr.rel (%p10) target = $region8
  $region5: #{encoder_forward.5} parent=0 // loop_body
    %s14 = ssub.s32 %s9, 1
    %s15 = ssub.s32 %s9, 2
    %s16 = sadd.s32 %s9, 1
    %s17 = ssub.s32 %s9, %s16
    %p18 = scmp.eq.s32.totalorder %s17, 0
    %s20 = sadd.s32 %s19, 1
    %s21 = scalar_select %p18, %s19, %s20
    %p24 = pneg %p18
    %p25 = scmp.eq.s32.totalorder %s9, 1
    %p26 = por %p24, %p25
    %p27 = scmp.ne.s32.totalorder %s19, %s22
    %p28 = scmp.eq.s32.totalorder %s9, 0
    %p29 = por %p27, %p28
    %p30 = scmp.ne.s32.totalorder %s19, %s22
    %p31 = scmp.eq.s32.totalorder %s14, 1
    %p32 = por %p30, %p31
    %p33 = scmp.ne.s32.totalorder %s22, %s23
    %p34 = scmp.eq.s32.totalorder %s14, 0
    %p35 = por %p33, %p34
    %p36 = scmp.ne.s32.totalorder %s22, %s23
    %p37 = scmp.eq.s32.totalorder %s15, 1
    %p38 = por %p36, %p37
    %p40 = scmp.ne.s32.totalorder %s23, %s39
    %p41 = scmp.eq.s32.totalorder %s15, 0
    %p42 = por %p40, %p41
    %s44 = sadd.s32 %s43, 1
    %p47 = scmp.eq.s32.totalorder %s9, 1
    %p48 = scmp.ne.s32.totalorder %s43, %s45
    %p49 = scmp.eq.s32.totalorder %s9, 0
    %p50 = por %p48, %p49
    %p51 = scmp.ne.s32.totalorder %s43, %s45
    %p52 = scmp.eq.s32.totalorder %s14, 1
    %p53 = por %p51, %p52
    %p54 = scmp.ne.s32.totalorder %s45, %s46
    %p55 = scmp.eq.s32.totalorder %s14, 0
    %p56 = por %p54, %p55
    %p57 = scmp.ne.s32.totalorder %s45, %s46
    %p58 = scmp.eq.s32.totalorder %s15, 1
    %p59 = por %p57, %p58
    %p61 = scmp.ne.s32.totalorder %s46, %s60
    %p62 = scmp.eq.s32.totalorder %s15, 0
    %p63 = por %p61, %p62
    %s65 = sadd.s32 %s64, 1
    %p68 = scmp.eq.s32.totalorder %s9, 1
    %p69 = scmp.ne.s32.totalorder %s64, %s66
    %p70 = scmp.eq.s32.totalorder %s9, 0
    %p71 = por %p69, %p70
    %p72 = scmp.ne.s32.totalorder %s64, %s66
    %p73 = scmp.eq.s32.totalorder %s14, 1
    %p74 = por %p72, %p73
    %p75 = scmp.ne.s32.totalorder %s66, %s67
    %p76 = scmp.eq.s32.totalorder %s14, 0
    %p77 = por %p75, %p76
    %p78 = scmp.ne.s32.totalorder %s66, %s67
    %p79 = scmp.eq.s32.totalorder %s15, 1
    %p80 = por %p78, %p79
    %p82 = scmp.ne.s32.totalorder %s67, %s81
    %p83 = scmp.eq.s32.totalorder %s15, 0
    %p84 = por %p82, %p83
    %s85 = ssub.s32 %s9, %s16
    %p86 = scmp.eq.s32.totalorder %s85, 0
    %s88 = sadd.s32 %s87, 1
    %s89 = scalar_select %p86, %s87, %s88
    %p92 = pneg %p86
    %p93 = scmp.eq.s32.totalorder %s9, 1
    %p94 = por %p92, %p93
    %p95 = scmp.ne.s32.totalorder %s87, %s90
    %p96 = scmp.eq.s32.totalorder %s9, 0
    %p97 = por %p95, %p96
    %p98 = scmp.ne.s32.totalorder %s87, %s90
    %p99 = scmp.eq.s32.totalorder %s14, 1
    %p100 = por %p98, %p99
    %p101 = scmp.ne.s32.totalorder %s90, %s91
    %p102 = scmp.eq.s32.totalorder %s14, 0
    %p103 = por %p101, %p102
    %p104 = scmp.ne.s32.totalorder %s90, %s91
    %p105 = scmp.eq.s32.totalorder %s15, 1
    %p106 = por %p104, %p105
    %p108 = scmp.ne.s32.totalorder %s91, %s107
    %p109 = scmp.eq.s32.totalorder %s15, 0
    %p110 = por %p108, %p109
    %p111 = scmp.le.s32.totalorder 1, %s9
    %p112 = scmp.lt.s32.totalorder %s9, 3
    %p113 = pnand %p111, %p112
    %p114 = pneg %p113
    // Predicated region
    $region9: #{encoder_forward.5} parent=5 // pred_check
      _
    $region10: #{encoder_forward.5} parent=5 // pred_check_branch
      %116 = sbr.rel (%p113) target = $region12
    $region11: #{encoder_forward.5} parent=5 // pred_region
      %s117 = ssub.s32 %s9, 1
      // Predicated region
      $region13: #{encoder_forward.5} parent=11 // pred_check
        %p118 = pneg %p56
      $region14: #{encoder_forward.5} parent=11 // pred_check_branch
        %120 = sbr.rel (%p118) target = $region16
      $region15: #{encoder_forward.5} parent=11 // pred_region
        _
      $region16: #{encoder_forward.5} parent=11 // pred_fallthru
        _
      // Predicated region
      $region17: #{encoder_forward.5} parent=11 // pred_check
        %p121 = pneg %p77
      $region18: #{encoder_forward.5} parent=11 // pred_check_branch
        %123 = sbr.rel (%p121) target = $region20
      $region19: #{encoder_forward.5} parent=11 // pred_region
        _
      $region20: #{encoder_forward.5} parent=11 // pred_fallthru
        _
    $region12: #{encoder_forward.5} parent=5 // pred_fallthru
      _
    %p124 = scmp.lt.s32.totalorder %s9, 2
    // Predicated region
    $region21: #{encoder_forward.5} parent=5 // pred_check
      %p125 = pneg %p124
    $region22: #{encoder_forward.5} parent=5 // pred_check_branch
      %127 = sbr.rel (%p125) target = $region24
    $region23: #{encoder_forward.5} parent=5 // pred_region
      // Predicated region
      $region25: #{encoder_forward.5} parent=23 // pred_check
        %p128 = pneg %p29
      $region26: #{encoder_forward.5} parent=23 // pred_check_branch
        %130 = sbr.rel (%p128) target = $region28
      $region27: #{encoder_forward.5} parent=23 // pred_region
        %p131 = scmp.lt.s32.totalorder %s9, 1
        %s132 = scalar_select %p131, %s9, 1
        %s133 = smul.addr %s132, 51
        %s134 = smul.addr %s133, 4
        %s135 = scalar_lea.vmem %s0, %s134
      $region28: #{encoder_forward.5} parent=23 // pred_fallthru
        _
    $region24: #{encoder_forward.5} parent=5 // pred_fallthru
      _
    %p136 = scmp.le.s32.totalorder 1, %s9
    %p137 = scmp.lt.s32.totalorder %s9, 3
    %p138 = pnand %p136, %p137
    %p139 = pneg %p138
    // Predicated region
    $region29: #{encoder_forward.5} parent=5 // pred_check
      _
    $region30: #{encoder_forward.5} parent=5 // pred_check_branch
      %141 = sbr.rel (%p138) target = $region32
    $region31: #{encoder_forward.5} parent=5 // pred_region
      %s142 = ssub.s32 %s9, 1
      %p143 = scmp.lt.s32.totalorder %s14, 1
      %s144 = scalar_select %p143, %s14, 1
      %s145 = smul.addr %s144, 51
      %s146 = smul.addr %s145, 4
      %s147 = scalar_lea.vmem %s0, %s146
      %p148 = pneg %p35
      %p149 = pneg %p32
      %p150 = pneg %p56
      %p151 = pneg %p53
      %p152 = pneg %p77
      %p153 = pneg %p74
      %p154 = pneg %p103
      %p155 = pneg %p100
      %p156 = scmp.lt.s32.totalorder %s14, 1
      %s157 = scalar_select %p156, %s14, 1
      %s158 = smul.addr %s157, 32
      %s159 = smul.addr %s158, 4
      %s160 = scalar_lea.vmem %s3, %s159
      %p161 = scmp.lt.s32.totalorder %s14, 1
      %s162 = scalar_select %p161, %s14, 1
      %s163 = smul.addr %s162, 51
      %s164 = smul.addr %s163, 4
      %s165 = scalar_lea.vmem %s0, %s164
      %p166 = scmp.lt.s32.totalorder %s14, 1
      %s167 = scalar_select %p166, %s14, 1
      %s168 = smul.addr %s167, 32
      %s169 = smul.addr %s168, 4
      %s170 = scalar_lea.vmem %s3, %s169
      %v172 = vld [vmem:[%s165] sm:$0xf]
      %v173 = vld [vmem:[%s165 + $0x4] sm:$0xf]
      %v174 = vld [vmem:[%s165 + $0x8] sm:$0x1]
      %v175 = vld [vmem:[%s165 + $0xc] sm:$0xf]
      %v176 = vld [vmem:[%s165 + $0x10] sm:$0xf]
      %v177 = vld [vmem:[%s165 + $0x14] sm:$0x1]
      %v178 = vld [vmem:[%s165 + $0x18] sm:$0xf]
      %v179 = vld [vmem:[%s165 + $0x1c] sm:$0xf]
      %v180 = vld [vmem:[%s165 + $0x20] sm:$0x1]
      %v181 = vld [vmem:[%s165 + $0x24] sm:$0xf]
      %v182 = vld [vmem:[%s165 + $0x28] sm:$0xf]
      %v183 = vld [vmem:[%s165 + $0x2c] sm:$0x1]
      %v184 = vld [vmem:[%s165 + $0x30] sm:$0xf]
      %v185 = vld [vmem:[%s165 + $0x34] sm:$0xf]
      %v186 = vld [vmem:[%s165 + $0x38] sm:$0x1]
      %v187 = vld [vmem:[%s165 + $0x3c] sm:$0xf]
      %v188 = vld [vmem:[%s165 + $0x40] sm:$0xf]
      %v189 = vld [vmem:[%s165 + $0x44] sm:$0x1]
      %v190 = vld [vmem:[%s165 + $0x48] sm:$0xf]
      %v191 = vld [vmem:[%s165 + $0x4c] sm:$0xf]
      %v192 = vld [vmem:[%s165 + $0x50] sm:$0x1]
      %v193 = vld [vmem:[%s165 + $0x54] sm:$0xf]
      %v194 = vld [vmem:[%s165 + $0x58] sm:$0xf]
      %v195 = vld [vmem:[%s165 + $0x5c] sm:$0x1]
      %v196 = vld [vmem:[%s165 + $0x60] sm:$0xf]
      %v197 = vld [vmem:[%s165 + $0x64] sm:$0xf]
      %v198 = vld [vmem:[%s165 + $0x68] sm:$0x1]
      %v199 = vld [vmem:[%s165 + $0x6c] sm:$0xf]
      %v200 = vld [vmem:[%s165 + $0x70] sm:$0xf]
      %v201 = vld [vmem:[%s165 + $0x74] sm:$0x1]
      %v202 = vld [vmem:[%s165 + $0x78] sm:$0xf]
      %v203 = vld [vmem:[%s165 + $0x7c] sm:$0xf]
      %v204 = vld [vmem:[%s165 + $0x80] sm:$0x1]
      %v205 = vld [vmem:[%s165 + $0x84] sm:$0xf]
      %v206 = vld [vmem:[%s165 + $0x88] sm:$0xf]
      %v207 = vld [vmem:[%s165 + $0x8c] sm:$0x1]
      %v208 = vld [vmem:[%s165 + $0x90] sm:$0xf]
      %v209 = vld [vmem:[%s165 + $0x94] sm:$0xf]
      %v210 = vld [vmem:[%s165 + $0x98] sm:$0x1]
      %v211 = vld [vmem:[%s165 + $0x9c] sm:$0xf]
      %v212 = vld [vmem:[%s165 + $0xa0] sm:$0xf]
      %v213 = vld [vmem:[%s165 + $0xa4] sm:$0x1]
      %v214 = vld [vmem:[%s165 + $0xa8] sm:$0xf]
      %v215 = vld [vmem:[%s165 + $0xac] sm:$0xf]
      %v216 = vld [vmem:[%s165 + $0xb0] sm:$0x1]
      %v217 = vld [vmem:[%s165 + $0xb4] sm:$0xf]
      %v218 = vld [vmem:[%s165 + $0xb8] sm:$0xf]
      %v219 = vld [vmem:[%s165 + $0xbc] sm:$0x1]
      %v220 = vld [vmem:[%s165 + $0xc0] sm:$0xf]
      %v221 = vld [vmem:[%s165 + $0xc4] sm:$0xf]
      %v222 = vld [vmem:[%s165 + $0xc8] sm:$0x1]
      %v223 = vld [vmem:[%s1] sm:$0xf]
      %v224 = vld [vmem:[%s1 + $0x4] sm:$0xf]
      %v225 = vld [vmem:[%s1 + $0x8] sm:$0xf]
      %v226 = vld [vmem:[%s1 + $0xc] sm:$0xf]
      %v227 = vld [vmem:[%s1 + $0x10] sm:$0xf]
      %v228 = vld [vmem:[%s1 + $0x14] sm:$0xf]
      %v229 = vld [vmem:[%s1 + $0x18] sm:$0xf]
      %v230 = vld [vmem:[%s1 + $0x1c] sm:$0xf]
      %v231 = vld [vmem:[%s1 + $0x20] sm:$0xf]
      %v232 = vld [vmem:[%s1 + $0x24] sm:$0xf]
      %v233 = vld [vmem:[%s1 + $0x28] sm:$0xf]
      %v234 = vld [vmem:[%s1 + $0x2c] sm:$0xf]
      %v235 = vld [vmem:[%s1 + $0x30] sm:$0xf]
      %v236 = vld [vmem:[%s1 + $0x34] sm:$0xf]
      %v237 = vld [vmem:[%s1 + $0x38] sm:$0xf]
      %v238 = vld [vmem:[%s1 + $0x3c] sm:$0xf]
      %vm239 = vsmask.f32 3328
      %vm240 = vsmask.f32 7440
      %vm241 = vmor %vm239, %vm240
      %v243 = vshrl.u32 %v172, 16
      %v245 = vrot.slane %v243, 4
      %v246 = vshll.u32 %v172, 16
      %v248 = vrot.slane %v246, 5
      %v249 = vor.u32 %v245, %v248
      %v250 = vrot.slane %v249, 4
      %v252 = vshll.u32 %v173, 16
      %v254 = vrot.slane %v252, 5
      %v255 = vsel %vm241, %v250, %v254
      %v256 = vshrl.u32 %v173, 16
      %v258 = vrot.slane %v256, 4
      %v259 = vor.u32 %v258, %v254
      %v260 = vrot.slane %v259, 4
      %v262 = vshll.u32 %v174, 16
      %v264 = vrot.slane %v262, 5
      %v265 = vsel %vm241, %v260, %v264
      %v267 = vshrl.u32 %v175, 16
      %v269 = vrot.slane %v267, 4
      %v270 = vshll.u32 %v175, 16
      %v272 = vrot.slane %v270, 5
      %v273 = vor.u32 %v269, %v272
      %v274 = vrot.slane %v273, 4
      %v276 = vshll.u32 %v176, 16
      %v278 = vrot.slane %v276, 5
      %v279 = vsel %vm241, %v274, %v278
      %v280 = vshrl.u32 %v176, 16
      %v282 = vrot.slane %v280, 4
      %v283 = vor.u32 %v282, %v278
      %v284 = vrot.slane %v283, 4
      %v286 = vshll.u32 %v177, 16
      %v288 = vrot.slane %v286, 5
      %v289 = vsel %vm241, %v284, %v288
      %v291 = vshrl.u32 %v178, 16
      %v293 = vrot.slane %v291, 4
      %v294 = vshll.u32 %v178, 16
      %v296 = vrot.slane %v294, 5
      %v297 = vor.u32 %v293, %v296
      %v298 = vrot.slane %v297, 4
      %v300 = vshll.u32 %v179, 16
      %v302 = vrot.slane %v300, 5
      %v303 = vsel %vm241, %v298, %v302
      %v304 = vshrl.u32 %v179, 16
      %v306 = vrot.slane %v304, 4
      %v307 = vor.u32 %v306, %v302
      %v308 = vrot.slane %v307, 4
      %v310 = vshll.u32 %v180, 16
      %v312 = vrot.slane %v310, 5
      %v313 = vsel %vm241, %v308, %v312
      %v315 = vshrl.u32 %v181, 16
      %v317 = vrot.slane %v315, 4
      %v318 = vshll.u32 %v181, 16
      %v320 = vrot.slane %v318, 5
      %v321 = vor.u32 %v317, %v320
      %v322 = vrot.slane %v321, 4
      %v324 = vshll.u32 %v182, 16
      %v326 = vrot.slane %v324, 5
      %v327 = vsel %vm241, %v322, %v326
      %v328 = vshrl.u32 %v182, 16
      %v330 = vrot.slane %v328, 4
      %v331 = vor.u32 %v330, %v326
      %v332 = vrot.slane %v331, 4
      %v334 = vshll.u32 %v183, 16
      %v336 = vrot.slane %v334, 5
      %v337 = vsel %vm241, %v332, %v336
      %v339 = vshrl.u32 %v184, 16
      %v341 = vrot.slane %v339, 4
      %v342 = vshll.u32 %v184, 16
      %v344 = vrot.slane %v342, 5
      %v345 = vor.u32 %v341, %v344
      %v346 = vrot.slane %v345, 4
      %v348 = vshll.u32 %v185, 16
      %v350 = vrot.slane %v348, 5
      %v351 = vsel %vm241, %v346, %v350
      %v352 = vshrl.u32 %v185, 16
      %v354 = vrot.slane %v352, 4
      %v355 = vor.u32 %v354, %v350
      %v356 = vrot.slane %v355, 4
      %v358 = vshll.u32 %v186, 16
      %v360 = vrot.slane %v358, 5
      %v361 = vsel %vm241, %v356, %v360
      %v363 = vshrl.u32 %v187, 16
      %v365 = vrot.slane %v363, 4
      %v366 = vshll.u32 %v187, 16
      %v368 = vrot.slane %v366, 5
      %v369 = vor.u32 %v365, %v368
      %v370 = vrot.slane %v369, 4
      %v372 = vshll.u32 %v188, 16
      %v374 = vrot.slane %v372, 5
      %v375 = vsel %vm241, %v370, %v374
      %v376 = vshrl.u32 %v188, 16
      %v378 = vrot.slane %v376, 4
      %v379 = vor.u32 %v378, %v374
      %v380 = vrot.slane %v379, 4
      %v382 = vshll.u32 %v189, 16
      %v384 = vrot.slane %v382, 5
      %v385 = vsel %vm241, %v380, %v384
      %v387 = vshrl.u32 %v190, 16
      %v389 = vrot.slane %v387, 4
      %v390 = vshll.u32 %v190, 16
      %v392 = vrot.slane %v390, 5
      %v393 = vor.u32 %v389, %v392
      %v394 = vrot.slane %v393, 4
      %v396 = vshll.u32 %v191, 16
      %v398 = vrot.slane %v396, 5
      %v399 = vsel %vm241, %v394, %v398
      %v400 = vshrl.u32 %v191, 16
      %v402 = vrot.slane %v400, 4
      %v403 = vor.u32 %v402, %v398
      %v404 = vrot.slane %v403, 4
      %v406 = vshll.u32 %v192, 16
      %v408 = vrot.slane %v406, 5
      %v409 = vsel %vm241, %v404, %v408
      %v411 = vshrl.u32 %v193, 16
      %v413 = vrot.slane %v411, 4
      %v414 = vshll.u32 %v193, 16
      %v416 = vrot.slane %v414, 5
      %v417 = vor.u32 %v413, %v416
      %v418 = vrot.slane %v417, 4
      %v420 = vshll.u32 %v194, 16
      %v422 = vrot.slane %v420, 5
      %v423 = vsel %vm241, %v418, %v422
      %v424 = vshrl.u32 %v194, 16
      %v426 = vrot.slane %v424, 4
      %v427 = vor.u32 %v426, %v422
      %v428 = vrot.slane %v427, 4
      %v430 = vshll.u32 %v195, 16
      %v432 = vrot.slane %v430, 5
      %v433 = vsel %vm241, %v428, %v432
      %v435 = vshrl.u32 %v196, 16
      %v437 = vrot.slane %v435, 4
      %v438 = vshll.u32 %v196, 16
      %v440 = vrot.slane %v438, 5
      %v441 = vor.u32 %v437, %v440
      %v442 = vrot.slane %v441, 4
      %v444 = vshll.u32 %v197, 16
      %v446 = vrot.slane %v444, 5
      %v447 = vsel %vm241, %v442, %v446
      %v448 = vshrl.u32 %v197, 16
      %v450 = vrot.slane %v448, 4
      %v451 = vor.u32 %v450, %v446
      %v452 = vrot.slane %v451, 4
      %v454 = vshll.u32 %v198, 16
      %v456 = vrot.slane %v454, 5
      %v457 = vsel %vm241, %v452, %v456
      %v459 = vshrl.u32 %v199, 16
      %v461 = vrot.slane %v459, 4
      %v462 = vshll.u32 %v199, 16
      %v464 = vrot.slane %v462, 5
      %v465 = vor.u32 %v461, %v464
      %v466 = vrot.slane %v465, 4
      %v468 = vshll.u32 %v200, 16
      %v470 = vrot.slane %v468, 5
      %v471 = vsel %vm241, %v466, %v470
      %v472 = vshrl.u32 %v200, 16
      %v474 = vrot.slane %v472, 4
      %v475 = vor.u32 %v474, %v470
      %v476 = vrot.slane %v475, 4
      %v478 = vshll.u32 %v201, 16
      %v480 = vrot.slane %v478, 5
      %v481 = vsel %vm241, %v476, %v480
      %v483 = vshrl.u32 %v202, 16
      %v485 = vrot.slane %v483, 4
      %v486 = vshll.u32 %v202, 16
      %v488 = vrot.slane %v486, 5
      %v489 = vor.u32 %v485, %v488
      %v490 = vrot.slane %v489, 4
      %v492 = vshll.u32 %v203, 16
      %v494 = vrot.slane %v492, 5
      %v495 = vsel %vm241, %v490, %v494
      %v496 = vshrl.u32 %v203, 16
      %v498 = vrot.slane %v496, 4
      %v499 = vor.u32 %v498, %v494
      %v500 = vrot.slane %v499, 4
      %v502 = vshll.u32 %v204, 16
      %v504 = vrot.slane %v502, 5
      %v505 = vsel %vm241, %v500, %v504
      %v507 = vshrl.u32 %v205, 16
      %v509 = vrot.slane %v507, 4
      %v510 = vshll.u32 %v205, 16
      %v512 = vrot.slane %v510, 5
      %v513 = vor.u32 %v509, %v512
      %v514 = vrot.slane %v513, 4
      %v516 = vshll.u32 %v206, 16
      %v518 = vrot.slane %v516, 5
      %v519 = vsel %vm241, %v514, %v518
      %v520 = vshrl.u32 %v206, 16
      %v522 = vrot.slane %v520, 4
      %v523 = vor.u32 %v522, %v518
      %v524 = vrot.slane %v523, 4
      %v526 = vshll.u32 %v207, 16
      %v528 = vrot.slane %v526, 5
      %v529 = vsel %vm241, %v524, %v528
      %v531 = vshrl.u32 %v208, 16
      %v533 = vrot.slane %v531, 4
      %v534 = vshll.u32 %v208, 16
      %v536 = vrot.slane %v534, 5
      %v537 = vor.u32 %v533, %v536
      %v538 = vrot.slane %v537, 4
      %v540 = vshll.u32 %v209, 16
      %v542 = vrot.slane %v540, 5
      %v543 = vsel %vm241, %v538, %v542
      %v544 = vshrl.u32 %v209, 16
      %v546 = vrot.slane %v544, 4
      %v547 = vor.u32 %v546, %v542
      %v548 = vrot.slane %v547, 4
      %v550 = vshll.u32 %v210, 16
      %v552 = vrot.slane %v550, 5
      %v553 = vsel %vm241, %v548, %v552
      %v555 = vshrl.u32 %v211, 16
      %v557 = vrot.slane %v555, 4
      %v558 = vshll.u32 %v211, 16
      %v560 = vrot.slane %v558, 5
      %v561 = vor.u32 %v557, %v560
      %v562 = vrot.slane %v561, 4
      %v564 = vshll.u32 %v212, 16
      %v566 = vrot.slane %v564, 5
      %v567 = vsel %vm241, %v562, %v566
      %v568 = vshrl.u32 %v212, 16
      %v570 = vrot.slane %v568, 4
      %v571 = vor.u32 %v570, %v566
      %v572 = vrot.slane %v571, 4
      %v574 = vshll.u32 %v213, 16
      %v576 = vrot.slane %v574, 5
      %v577 = vsel %vm241, %v572, %v576
      %v579 = vshrl.u32 %v214, 16
      %v581 = vrot.slane %v579, 4
      %v582 = vshll.u32 %v214, 16
      %v584 = vrot.slane %v582, 5
      %v585 = vor.u32 %v581, %v584
      %v586 = vrot.slane %v585, 4
      %v588 = vshll.u32 %v215, 16
      %v590 = vrot.slane %v588, 5
      %v591 = vsel %vm241, %v586, %v590
      %v592 = vshrl.u32 %v215, 16
      %v594 = vrot.slane %v592, 4
      %v595 = vor.u32 %v594, %v590
      %v596 = vrot.slane %v595, 4
      %v598 = vshll.u32 %v216, 16
      %v600 = vrot.slane %v598, 5
      %v601 = vsel %vm241, %v596, %v600
      %v603 = vshrl.u32 %v217, 16
      %v605 = vrot.slane %v603, 4
      %v606 = vshll.u32 %v217, 16
      %v608 = vrot.slane %v606, 5
      %v609 = vor.u32 %v605, %v608
      %v610 = vrot.slane %v609, 4
      %v612 = vshll.u32 %v218, 16
      %v614 = vrot.slane %v612, 5
      %v615 = vsel %vm241, %v610, %v614
      %v616 = vshrl.u32 %v218, 16
      %v618 = vrot.slane %v616, 4
      %v619 = vor.u32 %v618, %v614
      %v620 = vrot.slane %v619, 4
      %v622 = vshll.u32 %v219, 16
      %v624 = vrot.slane %v622, 5
      %v625 = vsel %vm241, %v620, %v624
      %s626 = scalar_lea.vmem %s1, 64
      %v627 = vld [vmem:[%s626] sm:$0xf]
      %v628 = vld [vmem:[%s626 + $0x4] sm:$0xf]
      %v629 = vld [vmem:[%s626 + $0x8] sm:$0xf]
      %v630 = vld [vmem:[%s626 + $0xc] sm:$0xf]
      %v631 = vld [vmem:[%s626 + $0x10] sm:$0xf]
      %v632 = vld [vmem:[%s626 + $0x14] sm:$0xf]
      %v633 = vld [vmem:[%s626 + $0x18] sm:$0xf]
      %v634 = vld [vmem:[%s626 + $0x1c] sm:$0xf]
      %v635 = vld [vmem:[%s626 + $0x20] sm:$0xf]
      %v636 = vld [vmem:[%s626 + $0x24] sm:$0xf]
      %v637 = vld [vmem:[%s626 + $0x28] sm:$0xf]
      %v638 = vld [vmem:[%s626 + $0x2c] sm:$0xf]
      %v639 = vld [vmem:[%s626 + $0x30] sm:$0xf]
      %v640 = vld [vmem:[%s626 + $0x34] sm:$0xf]
      %v641 = vld [vmem:[%s626 + $0x38] sm:$0xf]
      %v642 = vld [vmem:[%s626 + $0x3c] sm:$0xf]
      %v643 = vunpack.c.l.b16 %v255
      %v644 = vunpack.c.l.b16 %v265
      %v645 = vunpack.c.l.b16 %v279
      %v646 = vunpack.c.l.b16 %v289
      %v647 = vunpack.c.l.b16 %v303
      %v648 = vunpack.c.l.b16 %v313
      %v649 = vunpack.c.l.b16 %v327
      %v650 = vunpack.c.l.b16 %v337
      %v651 = vunpack.c.l.b16 %v351
      %v652 = vunpack.c.l.b16 %v361
      %v653 = vunpack.c.l.b16 %v375
      %v654 = vunpack.c.l.b16 %v385
      %v655 = vunpack.c.l.b16 %v399
      %v656 = vunpack.c.l.b16 %v409
      %v657 = vunpack.c.l.b16 %v423
      %v658 = vunpack.c.l.b16 %v433
      %v659 = vunpack.c.l.b16 %v447
      %v660 = vunpack.c.l.b16 %v457
      %v661 = vunpack.c.l.b16 %v471
      %v662 = vunpack.c.l.b16 %v481
      %v663 = vunpack.c.l.b16 %v495
      %v664 = vunpack.c.l.b16 %v505
      %v665 = vunpack.c.l.b16 %v519
      %v666 = vunpack.c.l.b16 %v529
      %v667 = vunpack.c.l.b16 %v543
      %v668 = vunpack.c.l.b16 %v553
      %v669 = vunpack.c.l.b16 %v567
      %v670 = vunpack.c.l.b16 %v577
      %v671 = vunpack.c.l.b16 %v591
      %v672 = vunpack.c.l.b16 %v601
      %v673 = vunpack.c.l.b16 %v615
      %v674 = vunpack.c.l.b16 %v625
      %v675 = vpack.c.b16 %v644, %v643
      %v676 = vpack.c.b16 %v646, %v645
      %v677 = vpack.c.b16 %v648, %v647
      %v678 = vpack.c.b16 %v650, %v649
      %v679 = vpack.c.b16 %v652, %v651
      %v680 = vpack.c.b16 %v654, %v653
      %v681 = vpack.c.b16 %v656, %v655
      %v682 = vpack.c.b16 %v658, %v657
      %v683 = vpack.c.b16 %v660, %v659
      %v684 = vpack.c.b16 %v662, %v661
      %v685 = vpack.c.b16 %v664, %v663
      %v686 = vpack.c.b16 %v666, %v665
      %v687 = vpack.c.b16 %v668, %v667
      %v688 = vpack.c.b16 %v670, %v669
      %v689 = vpack.c.b16 %v672, %v671
      %v690 = vpack.c.b16 %v674, %v673
      %v723 = vunpack.c.l.b16 %v627
      %v724 = vunpack.c.l.b16 %v628
      %v725 = vunpack.c.l.b16 %v629
      %v726 = vunpack.c.l.b16 %v630
      %v727 = vunpack.c.l.b16 %v631
      %v728 = vunpack.c.l.b16 %v632
      %v729 = vunpack.c.l.b16 %v633
      %v730 = vunpack.c.l.b16 %v634
      %v731 = vunpack.c.l.b16 %v635
      %v732 = vunpack.c.l.b16 %v636
      %v733 = vunpack.c.l.b16 %v637
      %v734 = vunpack.c.l.b16 %v638
      %v735 = vunpack.c.l.b16 %v639
      %v736 = vunpack.c.l.b16 %v640
      %v737 = vunpack.c.l.b16 %v641
      %v738 = vunpack.c.l.b16 %v642
      %v739 = vpack.c.b16 %v724, %v723
      %v740 = vpack.c.b16 %v726, %v725
      %v741 = vpack.c.b16 %v728, %v727
      %v742 = vpack.c.b16 %v730, %v729
      %v743 = vpack.c.b16 %v732, %v731
      %v744 = vpack.c.b16 %v734, %v733
      %v745 = vpack.c.b16 %v736, %v735
      %v746 = vpack.c.b16 %v738, %v737
      %755 = vmatprep.subr.bf16.mxu0 0
      %756 = vmatpush1.bf16.msra.mxu0 %v739
      %757 = vmatprep.subr.bf16.mxu0 0
      %758 = vmatpush1.bf16.msra.mxu0 %v740
      %759 = vmatprep.subr.bf16.mxu0 0
      %760 = vmatpush1.bf16.msra.mxu0 %v741
      %761 = vmatprep.subr.bf16.mxu0 0
      %762 = vmatpush1.bf16.msra.mxu0 %v742
      %763 = vmatprep.subr.bf16.mxu0 0
      %764 = vmatpush1.bf16.msra.mxu0 %v743
      %765 = vmatprep.subr.bf16.mxu0 0
      %766 = vmatpush1.bf16.msra.mxu0 %v744
      %767 = vmatprep.subr.bf16.mxu0 0
      %768 = vmatpush1.bf16.msra.mxu0 %v745
      %769 = vmatprep.subr.bf16.mxu0 0
      %770 = vmatpush1.bf16.msra.mxu0 %v746
      %771 = vmatprep.subr.bf16.mxu0 0
      %772 = vmatpush1.bf16.msra.mxu0 0
      %773 = vmatprep.subr.bf16.mxu0 0
      %774 = vmatpush1.bf16.msra.mxu0 0
      %775 = vmatprep.subr.bf16.mxu0 0
      %776 = vmatpush1.bf16.msra.mxu0 0
      %777 = vmatprep.subr.bf16.mxu0 0
      %778 = vmatpush1.bf16.msra.mxu0 0
      %779 = vmatprep.subr.bf16.mxu0 0
      %780 = vmatpush1.bf16.msra.mxu0 0
      %781 = vmatprep.subr.bf16.mxu0 0
      %782 = vmatpush1.bf16.msra.mxu0 0
      %783 = vmatprep.subr.bf16.mxu0 0
      %784 = vmatpush1.bf16.msra.mxu0 0
      %785 = vmatprep.subr.bf16.mxu0 0
      %786 = vmatpush1.bf16.msra.mxu0 0
      %787 = vmatprep.mubr.bf16.mxu0 0
      %788 = vmatmul.mubr.bf16.gmra.mrb[0].mxu0 %v675
      %v789 = vpop.f32.mrb[0].mxu0
      %v790 = vadd.f32 0.0, %v789
      %v791 = vpop.f32.mrb[0].mxu0
      %v792 = vpop.f32.mrb[0].mxu0
      %v793 = vadd.f32 0.0, %v792
      %v794 = vpop.f32.mrb[0].mxu0
      %795 = vmatprep.mubr.bf16.mxu0 0
      %796 = vmatmul.mubr.bf16.gmra.mrb[0].mxu0 %v676
      %v797 = vpop.f32.mrb[0].mxu0
      %v798 = vadd.f32 0.0, %v797
      %v799 = vpop.f32.mrb[0].mxu0
      %v800 = vpop.f32.mrb[0].mxu0
      %v801 = vadd.f32 0.0, %v800
      %v802 = vpop.f32.mrb[0].mxu0
      %803 = vmatprep.mubr.bf16.mxu0 0
      %804 = vmatmul.mubr.bf16.gmra.mrb[0].mxu0 %v677
      %v805 = vpop.f32.mrb[0].mxu0
      %v806 = vadd.f32 0.0, %v805
      %v807 = vpop.f32.mrb[0].mxu0
      %v808 = vpop.f32.mrb[0].mxu0
      %v809 = vadd.f32 0.0, %v808
      %v810 = vpop.f32.mrb[0].mxu0
      %811 = vmatprep.mubr.bf16.mxu0 0
      %812 = vmatmul.mubr.bf16.gmra.mrb[0].mxu0 %v678
      %v813 = vpop.f32.mrb[0].mxu0
      %v814 = vadd.f32 0.0, %v813
      %v815 = vpop.f32.mrb[0].mxu0
      %v816 = vpop.f32.mrb[0].mxu0
      %v817 = vadd.f32 0.0, %v816
      %v818 = vpop.f32.mrb[0].mxu0
      %819 = vmatprep.mubr.bf16.mxu0 0
      %820 = vmatmul.mubr.bf16.gmra.mrb[0].mxu0 %v679
      %v821 = vpop.f32.mrb[0].mxu0
      %v822 = vadd.f32 0.0, %v821
      %v823 = vpop.f32.mrb[0].mxu0
      %v824 = vpop.f32.mrb[0].mxu0
      %v825 = vadd.f32 0.0, %v824
      %v826 = vpop.f32.mrb[0].mxu0
      %827 = vmatprep.mubr.bf16.mxu0 0
      %828 = vmatmul.mubr.bf16.gmra.mrb[0].mxu0 %v680
      %v829 = vpop.f32.mrb[0].mxu0
      %v830 = vadd.f32 0.0, %v829
      %v831 = vpop.f32.mrb[0].mxu0
      %v832 = vpop.f32.mrb[0].mxu0
      %v833 = vadd.f32 0.0, %v832
      %v834 = vpop.f32.mrb[0].mxu0
      %835 = vmatprep.mubr.bf16.mxu0 0
      %836 = vmatmul.mubr.bf16.gmra.mrb[0].mxu0 %v681
      %v837 = vpop.f32.mrb[0].mxu0
      %v838 = vadd.f32 0.0, %v837
      %v839 = vpop.f32.mrb[0].mxu0
      %v840 = vpop.f32.mrb[0].mxu0
      %v841 = vadd.f32 0.0, %v840
      %v842 = vpop.f32.mrb[0].mxu0
      %843 = vmatprep.mubr.bf16.mxu0 0
      %844 = vmatmul.mubr.bf16.gmra.mrb[0].mxu0 %v682
      %v845 = vpop.f32.mrb[0].mxu0
      %v846 = vadd.f32 0.0, %v845
      %v847 = vpop.f32.mrb[0].mxu0
      %v848 = vpop.f32.mrb[0].mxu0
      %v849 = vadd.f32 0.0, %v848
      %v850 = vpop.f32.mrb[0].mxu0
      %851 = vmatprep.mubr.bf16.mxu0 0
      %852 = vmatmul.mubr.bf16.gmra.mrb[0].mxu0 %v683
      %v853 = vpop.f32.mrb[0].mxu0
      %v854 = vadd.f32 0.0, %v853
      %v855 = vpop.f32.mrb[0].mxu0
      %v856 = vpop.f32.mrb[0].mxu0
      %v857 = vadd.f32 0.0, %v856
      %v858 = vpop.f32.mrb[0].mxu0
      %859 = vmatprep.mubr.bf16.mxu0 0
      %860 = vmatmul.mubr.bf16.gmra.mrb[0].mxu0 %v684
      %v861 = vpop.f32.mrb[0].mxu0
      %v862 = vadd.f32 0.0, %v861
      %v863 = vpop.f32.mrb[0].mxu0
      %v864 = vpop.f32.mrb[0].mxu0
      %v865 = vadd.f32 0.0, %v864
      %v866 = vpop.f32.mrb[0].mxu0
      %867 = vmatprep.mubr.bf16.mxu0 0
      %868 = vmatmul.mubr.bf16.gmra.mrb[0].mxu0 %v685
      %v869 = vpop.f32.mrb[0].mxu0
      %v870 = vadd.f32 0.0, %v869
      %v871 = vpop.f32.mrb[0].mxu0
      %v872 = vpop.f32.mrb[0].mxu0
      %v873 = vadd.f32 0.0, %v872
      %v874 = vpop.f32.mrb[0].mxu0
      %875 = vmatprep.mubr.bf16.mxu0 0
      %876 = vmatmul.mubr.bf16.gmra.mrb[0].mxu0 %v686
      %v877 = vpop.f32.mrb[0].mxu0
      %v878 = vadd.f32 0.0, %v877
      %v879 = vpop.f32.mrb[0].mxu0
      %v880 = vpop.f32.mrb[0].mxu0
      %v881 = vadd.f32 0.0, %v880
      %v882 = vpop.f32.mrb[0].mxu0
      %883 = vmatprep.mubr.bf16.mxu0 0
      %884 = vmatmul.mubr.bf16.gmra.mrb[0].mxu0 %v687
      %v885 = vpop.f32.mrb[0].mxu0
      %v886 = vadd.f32 0.0, %v885
      %v887 = vpop.f32.mrb[0].mxu0
      %v888 = vpop.f32.mrb[0].mxu0
      %v889 = vadd.f32 0.0, %v888
      %v890 = vpop.f32.mrb[0].mxu0
      %891 = vmatprep.mubr.bf16.mxu0 0
      %892 = vmatmul.mubr.bf16.gmra.mrb[0].mxu0 %v688
      %v893 = vpop.f32.mrb[0].mxu0
      %v894 = vadd.f32 0.0, %v893
      %v895 = vpop.f32.mrb[0].mxu0
      %v896 = vpop.f32.mrb[0].mxu0
      %v897 = vadd.f32 0.0, %v896
      %v898 = vpop.f32.mrb[0].mxu0
      %899 = vmatprep.mubr.bf16.mxu0 0
      %900 = vmatmul.mubr.bf16.gmra.mrb[0].mxu0 %v689
      %v901 = vpop.f32.mrb[0].mxu0
      %v902 = vadd.f32 0.0, %v901
      %v903 = vpop.f32.mrb[0].mxu0
      %v904 = vpop.f32.mrb[0].mxu0
      %v905 = vadd.f32 0.0, %v904
      %v906 = vpop.f32.mrb[0].mxu0
      %907 = vmatprep.mubr.bf16.mxu0 0
      %908 = vmatmul.mubr.bf16.gmra.mrb[0].mxu0 %v690
      %v909 = vpop.f32.mrb[0].mxu0
      %v910 = vadd.f32 0.0, %v909
      %v911 = vpop.f32.mrb[0].mxu0
      %v912 = vpop.f32.mrb[0].mxu0
      %v913 = vadd.f32 0.0, %v912
      %v914 = vpop.f32.mrb[0].mxu0
      %915 = vdwg.mxu0
      %v948 = vunpack.c.l.b16 %v172
      %v949 = vunpack.c.l.b16 %v173
      %v950 = vunpack.c.l.b16 %v175
      %v951 = vunpack.c.l.b16 %v176
      %v952 = vunpack.c.l.b16 %v178
      %v953 = vunpack.c.l.b16 %v179
      %v954 = vunpack.c.l.b16 %v181
      %v955 = vunpack.c.l.b16 %v182
      %v956 = vunpack.c.l.b16 %v184
      %v957 = vunpack.c.l.b16 %v185
      %v958 = vunpack.c.l.b16 %v187
      %v959 = vunpack.c.l.b16 %v188
      %v960 = vunpack.c.l.b16 %v190
      %v961 = vunpack.c.l.b16 %v191
      %v962 = vunpack.c.l.b16 %v193
      %v963 = vunpack.c.l.b16 %v194
      %v964 = vunpack.c.l.b16 %v196
      %v965 = vunpack.c.l.b16 %v197
      %v966 = vunpack.c.l.b16 %v199
      %v967 = vunpack.c.l.b16 %v200
      %v968 = vunpack.c.l.b16 %v202
      %v969 = vunpack.c.l.b16 %v203
      %v970 = vunpack.c.l.b16 %v205
      %v971 = vunpack.c.l.b16 %v206
      %v972 = vunpack.c.l.b16 %v208
      %v973 = vunpack.c.l.b16 %v209
      %v974 = vunpack.c.l.b16 %v211
      %v975 = vunpack.c.l.b16 %v212
      %v976 = vunpack.c.l.b16 %v214
      %v977 = vunpack.c.l.b16 %v215
      %v978 = vunpack.c.l.b16 %v217
      %v979 = vunpack.c.l.b16 %v218
      %v980 = vpack.c.b16 %v949, %v948
      %v981 = vpack.c.b16 %v951, %v950
      %v982 = vpack.c.b16 %v953, %v952
      %v983 = vpack.c.b16 %v955, %v954
      %v984 = vpack.c.b16 %v957, %v956
      %v985 = vpack.c.b16 %v959, %v958
      %v986 = vpack.c.b16 %v961, %v960
      %v987 = vpack.c.b16 %v963, %v962
      %v988 = vpack.c.b16 %v965, %v964
      %v989 = vpack.c.b16 %v967, %v966
      %v990 = vpack.c.b16 %v969, %v968
      %v991 = vpack.c.b16 %v971, %v970
      %v992 = vpack.c.b16 %v973, %v972
      %v993 = vpack.c.b16 %v975, %v974
      %v994 = vpack.c.b16 %v977, %v976
      %v995 = vpack.c.b16 %v979, %v978
      %v1028 = vunpack.c.l.b16 %v223
      %v1029 = vunpack.c.l.b16 %v224
      %v1030 = vunpack.c.l.b16 %v225
      %v1031 = vunpack.c.l.b16 %v226
      %v1032 = vunpack.c.l.b16 %v227
      %v1033 = vunpack.c.l.b16 %v228
      %v1034 = vunpack.c.l.b16 %v229
      %v1035 = vunpack.c.l.b16 %v230
      %v1036 = vunpack.c.l.b16 %v231
      %v1037 = vunpack.c.l.b16 %v232
      %v1038 = vunpack.c.l.b16 %v233
      %v1039 = vunpack.c.l.b16 %v234
      %v1040 = vunpack.c.l.b16 %v235
      %v1041 = vunpack.c.l.b16 %v236
      %v1042 = vunpack.c.l.b16 %v237
      %v1043 = vunpack.c.l.b16 %v238
      %v1044 = vpack.c.b16 %v1029, %v1028
      %v1045 = vpack.c.b16 %v1031, %v1030
      %v1046 = vpack.c.b16 %v1033, %v1032
      %v1047 = vpack.c.b16 %v1035, %v1034
      %v1048 = vpack.c.b16 %v1037, %v1036
      %v1049 = vpack.c.b16 %v1039, %v1038
      %v1050 = vpack.c.b16 %v1041, %v1040
      %v1051 = vpack.c.b16 %v1043, %v1042
      %1060 = vmatprep.subr.bf16.mxu0 0
      %1061 = vmatpush1.bf16.msra.mxu0 %v1044
      %1062 = vmatprep.subr.bf16.mxu0 0
      %1063 = vmatpush1.bf16.msra.mxu0 %v1045
      %1064 = vmatprep.subr.bf16.mxu0 0
      %1065 = vmatpush1.bf16.msra.mxu0 %v1046
      %1066 = vmatprep.subr.bf16.mxu0 0
      %1067 = vmatpush1.bf16.msra.mxu0 %v1047
      %1068 = vmatprep.subr.bf16.mxu0 0
      %1069 = vmatpush1.bf16.msra.mxu0 %v1048
      %1070 = vmatprep.subr.bf16.mxu0 0
      %1071 = vmatpush1.bf16.msra.mxu0 %v1049
      %1072 = vmatprep.subr.bf16.mxu0 0
      %1073 = vmatpush1.bf16.msra.mxu0 %v1050
      %1074 = vmatprep.subr.bf16.mxu0 0
      %1075 = vmatpush1.bf16.msra.mxu0 %v1051
      %1076 = vmatprep.subr.bf16.mxu0 0
      %1077 = vmatpush1.bf16.msra.mxu0 0
      %1078 = vmatprep.subr.bf16.mxu0 0
      %1079 = vmatpush1.bf16.msra.mxu0 0
      %1080 = vmatprep.subr.bf16.mxu0 0
      %1081 = vmatpush1.bf16.msra.mxu0 0
      %1082 = vmatprep.subr.bf16.mxu0 0
      %1083 = vmatpush1.bf16.msra.mxu0 0
      %1084 = vmatprep.subr.bf16.mxu0 0
      %1085 = vmatpush1.bf16.msra.mxu0 0
      %1086 = vmatprep.subr.bf16.mxu0 0
      %1087 = vmatpush1.bf16.msra.mxu0 0
      %1088 = vmatprep.subr.bf16.mxu0 0
      %1089 = vmatpush1.bf16.msra.mxu0 0
      %1090 = vmatprep.subr.bf16.mxu0 0
      %1091 = vmatpush1.bf16.msra.mxu0 0
      %1092 = vmatprep.mubr.bf16.mxu0 0
      %1093 = vmatmul.mubr.bf16.gmra.mrb[0].mxu0 %v980
      %v1094 = vpop.f32.mrb[0].mxu0
      %v1095 = vadd.f32 %v790, %v1094
      %v1096 = vpop.f32.mrb[0].mxu0
      %v1097 = vpop.f32.mrb[0].mxu0
      %v1098 = vadd.f32 %v793, %v1097
      %v1099 = vpop.f32.mrb[0].mxu0
      %1100 = vmatprep.mubr.bf16.mxu0 0
      %1101 = vmatmul.mubr.bf16.gmra.mrb[0].mxu0 %v981
      %v1102 = vpop.f32.mrb[0].mxu0
      %v1103 = vadd.f32 %v798, %v1102
      %v1104 = vpop.f32.mrb[0].mxu0
      %v1105 = vpop.f32.mrb[0].mxu0
      %v1106 = vadd.f32 %v801, %v1105
      %v1107 = vpop.f32.mrb[0].mxu0
      %1108 = vmatprep.mubr.bf16.mxu0 0
      %1109 = vmatmul.mubr.bf16.gmra.mrb[0].mxu0 %v982
      %v1110 = vpop.f32.mrb[0].mxu0
      %v1111 = vadd.f32 %v806, %v1110
      %v1112 = vpop.f32.mrb[0].mxu0
      %v1113 = vpop.f32.mrb[0].mxu0
      %v1114 = vadd.f32 %v809, %v1113
      %v1115 = vpop.f32.mrb[0].mxu0
      %1116 = vmatprep.mubr.bf16.mxu0 0
      %1117 = vmatmul.mubr.bf16.gmra.mrb[0].mxu0 %v983
      %v1118 = vpop.f32.mrb[0].mxu0
      %v1119 = vadd.f32 %v814, %v1118
      %v1120 = vpop.f32.mrb[0].mxu0
      %v1121 = vpop.f32.mrb[0].mxu0
      %v1122 = vadd.f32 %v817, %v1121
      %v1123 = vpop.f32.mrb[0].mxu0
      %1124 = vmatprep.mubr.bf16.mxu0 0
      %1125 = vmatmul.mubr.bf16.gmra.mrb[0].mxu0 %v984
      %v1126 = vpop.f32.mrb[0].mxu0
      %v1127 = vadd.f32 %v822, %v1126
      %v1128 = vpop.f32.mrb[0].mxu0
      %v1129 = vpop.f32.mrb[0].mxu0
      %v1130 = vadd.f32 %v825, %v1129
      %v1131 = vpop.f32.mrb[0].mxu0
      %1132 = vmatprep.mubr.bf16.mxu0 0
      %1133 = vmatmul.mubr.bf16.gmra.mrb[0].mxu0 %v985
      %v1134 = vpop.f32.mrb[0].mxu0
      %v1135 = vadd.f32 %v830, %v1134
      %v1136 = vpop.f32.mrb[0].mxu0
      %v1137 = vpop.f32.mrb[0].mxu0
      %v1138 = vadd.f32 %v833, %v1137
      %v1139 = vpop.f32.mrb[0].mxu0
      %1140 = vmatprep.mubr.bf16.mxu0 0
      %1141 = vmatmul.mubr.bf16.gmra.mrb[0].mxu0 %v986
      %v1142 = vpop.f32.mrb[0].mxu0
      %v1143 = vadd.f32 %v838, %v1142
      %v1144 = vpop.f32.mrb[0].mxu0
      %v1145 = vpop.f32.mrb[0].mxu0
      %v1146 = vadd.f32 %v841, %v1145
      %v1147 = vpop.f32.mrb[0].mxu0
      %1148 = vmatprep.mubr.bf16.mxu0 0
      %1149 = vmatmul.mubr.bf16.gmra.mrb[0].mxu0 %v987
      %v1150 = vpop.f32.mrb[0].mxu0
      %v1151 = vadd.f32 %v846, %v1150
      %v1152 = vpop.f32.mrb[0].mxu0
      %v1153 = vpop.f32.mrb[0].mxu0
      %v1154 = vadd.f32 %v849, %v1153
      %v1155 = vpop.f32.mrb[0].mxu0
      %1156 = vmatprep.mubr.bf16.mxu0 0
      %1157 = vmatmul.mubr.bf16.gmra.mrb[0].mxu0 %v988
      %v1158 = vpop.f32.mrb[0].mxu0
      %v1159 = vadd.f32 %v854, %v1158
      %v1160 = vpop.f32.mrb[0].mxu0
      %v1161 = vpop.f32.mrb[0].mxu0
      %v1162 = vadd.f32 %v857, %v1161
      %v1163 = vpop.f32.mrb[0].mxu0
      %1164 = vmatprep.mubr.bf16.mxu0 0
      %1165 = vmatmul.mubr.bf16.gmra.mrb[0].mxu0 %v989
      %v1166 = vpop.f32.mrb[0].mxu0
      %v1167 = vadd.f32 %v862, %v1166
      %v1168 = vpop.f32.mrb[0].mxu0
      %v1169 = vpop.f32.mrb[0].mxu0
      %v1170 = vadd.f32 %v865, %v1169
      %v1171 = vpop.f32.mrb[0].mxu0
      %1172 = vmatprep.mubr.bf16.mxu0 0
      %1173 = vmatmul.mubr.bf16.gmra.mrb[0].mxu0 %v990
      %v1174 = vpop.f32.mrb[0].mxu0
      %v1175 = vadd.f32 %v870, %v1174
      %v1176 = vpop.f32.mrb[0].mxu0
      %v1177 = vpop.f32.mrb[0].mxu0
      %v1178 = vadd.f32 %v873, %v1177
      %v1179 = vpop.f32.mrb[0].mxu0
      %1180 = vmatprep.mubr.bf16.mxu0 0
      %1181 = vmatmul.mubr.bf16.gmra.mrb[0].mxu0 %v991
      %v1182 = vpop.f32.mrb[0].mxu0
      %v1183 = vadd.f32 %v878, %v1182
      %v1184 = vpop.f32.mrb[0].mxu0
      %v1185 = vpop.f32.mrb[0].mxu0
      %v1186 = vadd.f32 %v881, %v1185
      %v1187 = vpop.f32.mrb[0].mxu0
      %1188 = vmatprep.mubr.bf16.mxu0 0
      %1189 = vmatmul.mubr.bf16.gmra.mrb[0].mxu0 %v992
      %v1190 = vpop.f32.mrb[0].mxu0
      %v1191 = vadd.f32 %v886, %v1190
      %v1192 = vpop.f32.mrb[0].mxu0
      %v1193 = vpop.f32.mrb[0].mxu0
      %v1194 = vadd.f32 %v889, %v1193
      %v1195 = vpop.f32.mrb[0].mxu0
      %1196 = vmatprep.mubr.bf16.mxu0 0
      %1197 = vmatmul.mubr.bf16.gmra.mrb[0].mxu0 %v993
      %v1198 = vpop.f32.mrb[0].mxu0
      %v1199 = vadd.f32 %v894, %v1198
      %v1200 = vpop.f32.mrb[0].mxu0
      %v1201 = vpop.f32.mrb[0].mxu0
      %v1202 = vadd.f32 %v897, %v1201
      %v1203 = vpop.f32.mrb[0].mxu0
      %1204 = vmatprep.mubr.bf16.mxu0 0
      %1205 = vmatmul.mubr.bf16.gmra.mrb[0].mxu0 %v994
      %v1206 = vpop.f32.mrb[0].mxu0
      %v1207 = vadd.f32 %v902, %v1206
      %v1208 = vpop.f32.mrb[0].mxu0
      %v1209 = vpop.f32.mrb[0].mxu0
      %v1210 = vadd.f32 %v905, %v1209
      %v1211 = vpop.f32.mrb[0].mxu0
      %1212 = vmatprep.mubr.bf16.mxu0 0
      %1213 = vmatmul.mubr.bf16.gmra.mrb[0].mxu0 %v995
      %v1214 = vpop.f32.mrb[0].mxu0
      %v1215 = vadd.f32 %v910, %v1214
      %v1216 = vpop.f32.mrb[0].mxu0
      %v1217 = vpop.f32.mrb[0].mxu0
      %v1218 = vadd.f32 %v913, %v1217
      %v1219 = vpop.f32.mrb[0].mxu0
      %1220 = vdwg.mxu0
      %s1221 = scalar_lea.vmem %s1, 128
      %v1222 = vld [vmem:[%s1221] sm:$0xf]
      %v1223 = vld [vmem:[%s1221 + $0x4] sm:$0xf]
      %v1224 = vld [vmem:[%s1221 + $0x8] sm:$0xf]
      %v1225 = vld [vmem:[%s1221 + $0xc] sm:$0xf]
      %v1226 = vld [vmem:[%s1221 + $0x10] sm:$0xf]
      %v1227 = vld [vmem:[%s1221 + $0x14] sm:$0xf]
      %v1228 = vld [vmem:[%s1221 + $0x18] sm:$0xf]
      %v1229 = vld [vmem:[%s1221 + $0x1c] sm:$0xf]
      %v1230 = vld [vmem:[%s1221 + $0x20] sm:$0xf]
      %v1231 = vld [vmem:[%s1221 + $0x24] sm:$0xf]
      %v1232 = vld [vmem:[%s1221 + $0x28] sm:$0xf]
      %v1233 = vld [vmem:[%s1221 + $0x2c] sm:$0xf]
      %v1234 = vld [vmem:[%s1221 + $0x30] sm:$0xf]
      %v1235 = vld [vmem:[%s1221 + $0x34] sm:$0xf]
      %v1236 = vld [vmem:[%s1221 + $0x38] sm:$0xf]
      %v1237 = vld [vmem:[%s1221 + $0x3c] sm:$0xf]
      %v1240 = vunpack.c.l.b16 %v220
      %v1241 = vunpack.c.l.b16 %v221
      %v1242 = vpack.c.b16 %v1241, %v1240
      %v1260 = vunpack.c.l.b16 %v1222
      %v1261 = vunpack.c.l.b16 %v1223
      %v1262 = vunpack.c.l.b16 %v1224
      %v1263 = vunpack.c.l.b16 %v1225
      %v1264 = vunpack.c.l.b16 %v1226
      %v1265 = vunpack.c.l.b16 %v1227
      %v1266 = vunpack.c.l.b16 %v1228
      %v1267 = vunpack.c.l.b16 %v1229
      %v1268 = vunpack.c.l.b16 %v1230
      %v1269 = vunpack.c.l.b16 %v1231
      %v1270 = vunpack.c.l.b16 %v1232
      %v1271 = vunpack.c.l.b16 %v1233
      %v1272 = vunpack.c.l.b16 %v1234
      %v1273 = vunpack.c.l.b16 %v1235
      %v1274 = vunpack.c.l.b16 %v1236
      %v1275 = vunpack.c.l.b16 %v1237
      %v1276 = vpack.c.b16 %v1261, %v1260
      %v1277 = vpack.c.b16 %v1263, %v1262
      %v1278 = vpack.c.b16 %v1265, %v1264
      %v1279 = vpack.c.b16 %v1267, %v1266
      %v1280 = vpack.c.b16 %v1269, %v1268
      %v1281 = vpack.c.b16 %v1271, %v1270
      %v1282 = vpack.c.b16 %v1273, %v1272
      %v1283 = vpack.c.b16 %v1275, %v1274
      %1292 = vmatprep.subr.bf16.mxu0 0
      %1293 = vmatpush1.bf16.msra.mxu0 %v1276
      %1294 = vmatprep.subr.bf16.mxu0 0
      %1295 = vmatpush1.bf16.msra.mxu0 %v1277
      %1296 = vmatprep.subr.bf16.mxu0 0
      %1297 = vmatpush1.bf16.msra.mxu0 %v1278
      %1298 = vmatprep.subr.bf16.mxu0 0
      %1299 = vmatpush1.bf16.msra.mxu0 %v1279
      %1300 = vmatprep.subr.bf16.mxu0 0
      %1301 = vmatpush1.bf16.msra.mxu0 %v1280
      %1302 = vmatprep.subr.bf16.mxu0 0
      %1303 = vmatpush1.bf16.msra.mxu0 %v1281
      %1304 = vmatprep.subr.bf16.mxu0 0
      %1305 = vmatpush1.bf16.msra.mxu0 %v1282
      %1306 = vmatprep.subr.bf16.mxu0 0
      %1307 = vmatpush1.bf16.msra.mxu0 %v1283
      %1308 = vmatprep.subr.bf16.mxu0 0
      %1309 = vmatpush1.bf16.msra.mxu0 0
      %1310 = vmatprep.subr.bf16.mxu0 0
      %1311 = vmatpush1.bf16.msra.mxu0 0
      %1312 = vmatprep.subr.bf16.mxu0 0
      %1313 = vmatpush1.bf16.msra.mxu0 0
      %1314 = vmatprep.subr.bf16.mxu0 0
      %1315 = vmatpush1.bf16.msra.mxu0 0
      %1316 = vmatprep.subr.bf16.mxu0 0
      %1317 = vmatpush1.bf16.msra.mxu0 0
      %1318 = vmatprep.subr.bf16.mxu0 0
      %1319 = vmatpush1.bf16.msra.mxu0 0
      %1320 = vmatprep.subr.bf16.mxu0 0
      %1321 = vmatpush1.bf16.msra.mxu0 0
      %1322 = vmatprep.subr.bf16.mxu0 0
      %1323 = vmatpush1.bf16.msra.mxu0 0
      %1324 = vmatprep.mubr.bf16.mxu0 0
      %1325 = vmatmul.mubr.bf16.gmra.mrb[0].mxu0 %v981
      %v1326 = vpop.f32.mrb[0].mxu0
      %v1327 = vadd.f32 0.0, %v1326
      %v1328 = vpop.f32.mrb[0].mxu0
      %v1329 = vpop.f32.mrb[0].mxu0
      %v1330 = vadd.f32 0.0, %v1329
      %v1331 = vpop.f32.mrb[0].mxu0
      %1332 = vmatprep.mubr.bf16.mxu0 0
      %1333 = vmatmul.mubr.bf16.gmra.mrb[0].mxu0 %v982
      %v1334 = vpop.f32.mrb[0].mxu0
      %v1335 = vadd.f32 0.0, %v1334
      %v1336 = vpop.f32.mrb[0].mxu0
      %v1337 = vpop.f32.mrb[0].mxu0
      %v1338 = vadd.f32 0.0, %v1337
      %v1339 = vpop.f32.mrb[0].mxu0
      %1340 = vmatprep.mubr.bf16.mxu0 0
      %1341 = vmatmul.mubr.bf16.gmra.mrb[0].mxu0 %v983
      %v1342 = vpop.f32.mrb[0].mxu0
      %v1343 = vadd.f32 0.0, %v1342
      %v1344 = vpop.f32.mrb[0].mxu0
      %v1345 = vpop.f32.mrb[0].mxu0
      %v1346 = vadd.f32 0.0, %v1345
      %v1347 = vpop.f32.mrb[0].mxu0
      %1348 = vmatprep.mubr.bf16.mxu0 0
      %1349 = vmatmul.mubr.bf16.gmra.mrb[0].mxu0 %v984
      %v1350 = vpop.f32.mrb[0].mxu0
      %v1351 = vadd.f32 0.0, %v1350
      %v1352 = vpop.f32.mrb[0].mxu0
      %v1353 = vpop.f32.mrb[0].mxu0
      %v1354 = vadd.f32 0.0, %v1353
      %v1355 = vpop.f32.mrb[0].mxu0
      %1356 = vmatprep.mubr.bf16.mxu0 0
      %1357 = vmatmul.mubr.bf16.gmra.mrb[0].mxu0 %v985
      %v1358 = vpop.f32.mrb[0].mxu0
      %v1359 = vadd.f32 0.0, %v1358
      %v1360 = vpop.f32.mrb[0].mxu0
      %v1361 = vpop.f32.mrb[0].mxu0
      %v1362 = vadd.f32 0.0, %v1361
      %v1363 = vpop.f32.mrb[0].mxu0
      %1364 = vmatprep.mubr.bf16.mxu0 0
      %1365 = vmatmul.mubr.bf16.gmra.mrb[0].mxu0 %v986
      %v1366 = vpop.f32.mrb[0].mxu0
      %v1367 = vadd.f32 0.0, %v1366
      %v1368 = vpop.f32.mrb[0].mxu0
      %v1369 = vpop.f32.mrb[0].mxu0
      %v1370 = vadd.f32 0.0, %v1369
      %v1371 = vpop.f32.mrb[0].mxu0
      %1372 = vmatprep.mubr.bf16.mxu0 0
      %1373 = vmatmul.mubr.bf16.gmra.mrb[0].mxu0 %v987
      %v1374 = vpop.f32.mrb[0].mxu0
      %v1375 = vadd.f32 0.0, %v1374
      %v1376 = vpop.f32.mrb[0].mxu0
      %v1377 = vpop.f32.mrb[0].mxu0
      %v1378 = vadd.f32 0.0, %v1377
      %v1379 = vpop.f32.mrb[0].mxu0
      %1380 = vmatprep.mubr.bf16.mxu0 0
      %1381 = vmatmul.mubr.bf16.gmra.mrb[0].mxu0 %v988
      %v1382 = vpop.f32.mrb[0].mxu0
      %v1383 = vadd.f32 0.0, %v1382
      %v1384 = vpop.f32.mrb[0].mxu0
      %v1385 = vpop.f32.mrb[0].mxu0
      %v1386 = vadd.f32 0.0, %v1385
      %v1387 = vpop.f32.mrb[0].mxu0
      %1388 = vmatprep.mubr.bf16.mxu0 0
      %1389 = vmatmul.mubr.bf16.gmra.mrb[0].mxu0 %v989
      %v1390 = vpop.f32.mrb[0].mxu0
      %v1391 = vadd.f32 0.0, %v1390
      %v1392 = vpop.f32.mrb[0].mxu0
      %v1393 = vpop.f32.mrb[0].mxu0
      %v1394 = vadd.f32 0.0, %v1393
      %v1395 = vpop.f32.mrb[0].mxu0
      %1396 = vmatprep.mubr.bf16.mxu0 0
      %1397 = vmatmul.mubr.bf16.gmra.mrb[0].mxu0 %v990
      %v1398 = vpop.f32.mrb[0].mxu0
      %v1399 = vadd.f32 0.0, %v1398
      %v1400 = vpop.f32.mrb[0].mxu0
      %v1401 = vpop.f32.mrb[0].mxu0
      %v1402 = vadd.f32 0.0, %v1401
      %v1403 = vpop.f32.mrb[0].mxu0
      %1404 = vmatprep.mubr.bf16.mxu0 0
      %1405 = vmatmul.mubr.bf16.gmra.mrb[0].mxu0 %v991
      %v1406 = vpop.f32.mrb[0].mxu0
      %v1407 = vadd.f32 0.0, %v1406
      %v1408 = vpop.f32.mrb[0].mxu0
      %v1409 = vpop.f32.mrb[0].mxu0
      %v1410 = vadd.f32 0.0, %v1409
      %v1411 = vpop.f32.mrb[0].mxu0
      %1412 = vmatprep.mubr.bf16.mxu0 0
      %1413 = vmatmul.mubr.bf16.gmra.mrb[0].mxu0 %v992
      %v1414 = vpop.f32.mrb[0].mxu0
      %v1415 = vadd.f32 0.0, %v1414
      %v1416 = vpop.f32.mrb[0].mxu0
      %v1417 = vpop.f32.mrb[0].mxu0
      %v1418 = vadd.f32 0.0, %v1417
      %v1419 = vpop.f32.mrb[0].mxu0
      %1420 = vmatprep.mubr.bf16.mxu0 0
      %1421 = vmatmul.mubr.bf16.gmra.mrb[0].mxu0 %v993
      %v1422 = vpop.f32.mrb[0].mxu0
      %v1423 = vadd.f32 0.0, %v1422
      %v1424 = vpop.f32.mrb[0].mxu0
      %v1425 = vpop.f32.mrb[0].mxu0
      %v1426 = vadd.f32 0.0, %v1425
      %v1427 = vpop.f32.mrb[0].mxu0
      %1428 = vmatprep.mubr.bf16.mxu0 0
      %1429 = vmatmul.mubr.bf16.gmra.mrb[0].mxu0 %v994
      %v1430 = vpop.f32.mrb[0].mxu0
      %v1431 = vadd.f32 0.0, %v1430
      %v1432 = vpop.f32.mrb[0].mxu0
      %v1433 = vpop.f32.mrb[0].mxu0
      %v1434 = vadd.f32 0.0, %v1433
      %v1435 = vpop.f32.mrb[0].mxu0
      %1436 = vmatprep.mubr.bf16.mxu0 0
      %1437 = vmatmul.mubr.bf16.gmra.mrb[0].mxu0 %v995
      %v1438 = vpop.f32.mrb[0].mxu0
      %v1439 = vadd.f32 0.0, %v1438
      %v1440 = vpop.f32.mrb[0].mxu0
      %v1441 = vpop.f32.mrb[0].mxu0
      %v1442 = vadd.f32 0.0, %v1441
      %v1443 = vpop.f32.mrb[0].mxu0
      %1444 = vmatprep.mubr.bf16.mxu0 0
      %1445 = vmatmul.mubr.bf16.gmra.mrb[0].mxu0 %v1242
      %v1446 = vpop.f32.mrb[0].mxu0
      %v1447 = vadd.f32 0.0, %v1446
      %v1448 = vpop.f32.mrb[0].mxu0
      %v1449 = vpop.f32.mrb[0].mxu0
      %v1450 = vadd.f32 0.0, %v1449
      %v1451 = vpop.f32.mrb[0].mxu0
      %1452 = vdwg.mxu0
      %v1453 = vadd.f32 %v1095, %v1327
      %v1454 = vadd.f32 %v1098, %v1330
      %v1455 = vadd.f32 %v1103, %v1335
      %v1456 = vadd.f32 %v1106, %v1338
      %v1457 = vadd.f32 %v1111, %v1343
      %v1458 = vadd.f32 %v1114, %v1346
      %v1459 = vadd.f32 %v1119, %v1351
      %v1460 = vadd.f32 %v1122, %v1354
      %v1461 = vadd.f32 %v1127, %v1359
      %v1462 = vadd.f32 %v1130, %v1362
      %v1463 = vadd.f32 %v1135, %v1367
      %v1464 = vadd.f32 %v1138, %v1370
      %v1465 = vadd.f32 %v1143, %v1375
      %v1466 = vadd.f32 %v1146, %v1378
      %v1467 = vadd.f32 %v1151, %v1383
      %v1468 = vadd.f32 %v1154, %v1386
      %v1469 = vadd.f32 %v1159, %v1391
      %v1470 = vadd.f32 %v1162, %v1394
      %v1471 = vadd.f32 %v1167, %v1399
      %v1472 = vadd.f32 %v1170, %v1402
      %v1473 = vadd.f32 %v1175, %v1407
      %v1474 = vadd.f32 %v1178, %v1410
      %v1475 = vadd.f32 %v1183, %v1415
      %v1476 = vadd.f32 %v1186, %v1418
      %v1477 = vadd.f32 %v1191, %v1423
      %v1478 = vadd.f32 %v1194, %v1426
      %v1479 = vadd.f32 %v1199, %v1431
      %v1480 = vadd.f32 %v1202, %v1434
      %v1481 = vadd.f32 %v1207, %v1439
      %v1482 = vadd.f32 %v1210, %v1442
      %v1483 = vadd.f32 %v1215, %v1447
      %v1484 = vadd.f32 %v1218, %v1450
      %v1486 = vshrl.u32 %v220, 16
      %v1488 = vrot.slane %v1486, 4
      %v1489 = vshll.u32 %v220, 16
      %v1491 = vrot.slane %v1489, 5
      %v1492 = vor.u32 %v1488, %v1491
      %v1493 = vrot.slane %v1492, 4
      %v1495 = vshll.u32 %v221, 16
      %v1497 = vrot.slane %v1495, 5
      %v1498 = vsel %vm241, %v1493, %v1497
      %v1499 = vshrl.u32 %v221, 16
      %v1501 = vrot.slane %v1499, 4
      %v1502 = vor.u32 %v1501, %v1497
      %v1503 = vrot.slane %v1502, 4
      %v1505 = vshll.u32 %v222, 16
      %v1507 = vrot.slane %v1505, 5
      %v1508 = vsel %vm241, %v1503, %v1507
      %s1509 = scalar_lea.vmem %s1, 192
      %v1510 = vld [vmem:[%s1509] sm:$0xf]
      %v1511 = vld [vmem:[%s1509 + $0x4] sm:$0xf]
      %v1512 = vld [vmem:[%s1509 + $0x8] sm:$0xf]
      %v1513 = vld [vmem:[%s1509 + $0xc] sm:$0xf]
      %v1514 = vld [vmem:[%s1509 + $0x10] sm:$0xf]
      %v1515 = vld [vmem:[%s1509 + $0x14] sm:$0xf]
      %v1516 = vld [vmem:[%s1509 + $0x18] sm:$0xf]
      %v1517 = vld [vmem:[%s1509 + $0x1c] sm:$0xf]
      %v1518 = vld [vmem:[%s1509 + $0x20] sm:$0xf]
      %v1519 = vld [vmem:[%s1509 + $0x24] sm:$0xf]
      %v1520 = vld [vmem:[%s1509 + $0x28] sm:$0xf]
      %v1521 = vld [vmem:[%s1509 + $0x2c] sm:$0xf]
      %v1522 = vld [vmem:[%s1509 + $0x30] sm:$0xf]
      %v1523 = vld [vmem:[%s1509 + $0x34] sm:$0xf]
      %v1524 = vld [vmem:[%s1509 + $0x38] sm:$0xf]
      %v1525 = vld [vmem:[%s1509 + $0x3c] sm:$0xf]
      %v1526 = vunpack.c.l.b16 %v1498
      %v1527 = vunpack.c.l.b16 %v1508
      %v1528 = vpack.c.b16 %v1527, %v1526
      %v1546 = vunpack.c.l.b16 %v1510
      %v1547 = vunpack.c.l.b16 %v1511
      %v1548 = vunpack.c.l.b16 %v1512
      %v1549 = vunpack.c.l.b16 %v1513
      %v1550 = vunpack.c.l.b16 %v1514
      %v1551 = vunpack.c.l.b16 %v1515
      %v1552 = vunpack.c.l.b16 %v1516
      %v1553 = vunpack.c.l.b16 %v1517
      %v1554 = vunpack.c.l.b16 %v1518
      %v1555 = vunpack.c.l.b16 %v1519
      %v1556 = vunpack.c.l.b16 %v1520
      %v1557 = vunpack.c.l.b16 %v1521
      %v1558 = vunpack.c.l.b16 %v1522
      %v1559 = vunpack.c.l.b16 %v1523
      %v1560 = vunpack.c.l.b16 %v1524
      %v1561 = vunpack.c.l.b16 %v1525
      %v1562 = vpack.c.b16 %v1547, %v1546
      %v1563 = vpack.c.b16 %v1549, %v1548
      %v1564 = vpack.c.b16 %v1551, %v1550
      %v1565 = vpack.c.b16 %v1553, %v1552
      %v1566 = vpack.c.b16 %v1555, %v1554
      %v1567 = vpack.c.b16 %v1557, %v1556
      %v1568 = vpack.c.b16 %v1559, %v1558
      %v1569 = vpack.c.b16 %v1561, %v1560
      %1578 = vmatprep.subr.bf16.mxu0 0
      %1579 = vmatpush1.bf16.msra.mxu0 %v1562
      %1580 = vmatprep.subr.bf16.mxu0 0
      %1581 = vmatpush1.bf16.msra.mxu0 %v1563
      %1582 = vmatprep.subr.bf16.mxu0 0
      %1583 = vmatpush1.bf16.msra.mxu0 %v1564
      %1584 = vmatprep.subr.bf16.mxu0 0
      %1585 = vmatpush1.bf16.msra.mxu0 %v1565
      %1586 = vmatprep.subr.bf16.mxu0 0
      %1587 = vmatpush1.bf16.msra.mxu0 %v1566
      %1588 = vmatprep.subr.bf16.mxu0 0
      %1589 = vmatpush1.bf16.msra.mxu0 %v1567
      %1590 = vmatprep.subr.bf16.mxu0 0
      %1591 = vmatpush1.bf16.msra.mxu0 %v1568
      %1592 = vmatprep.subr.bf16.mxu0 0
      %1593 = vmatpush1.bf16.msra.mxu0 %v1569
      %1594 = vmatprep.subr.bf16.mxu0 0
      %1595 = vmatpush1.bf16.msra.mxu0 0
      %1596 = vmatprep.subr.bf16.mxu0 0
      %1597 = vmatpush1.bf16.msra.mxu0 0
      %1598 = vmatprep.subr.bf16.mxu0 0
      %1599 = vmatpush1.bf16.msra.mxu0 0
      %1600 = vmatprep.subr.bf16.mxu0 0
      %1601 = vmatpush1.bf16.msra.mxu0 0
      %1602 = vmatprep.subr.bf16.mxu0 0
      %1603 = vmatpush1.bf16.msra.mxu0 0
      %1604 = vmatprep.subr.bf16.mxu0 0
      %1605 = vmatpush1.bf16.msra.mxu0 0
      %1606 = vmatprep.subr.bf16.mxu0 0
      %1607 = vmatpush1.bf16.msra.mxu0 0
      %1608 = vmatprep.subr.bf16.mxu0 0
      %1609 = vmatpush1.bf16.msra.mxu0 0
      %1610 = vmatprep.mubr.bf16.mxu0 0
      %1611 = vmatmul.mubr.bf16.gmra.mrb[0].mxu0 %v676
      %v1612 = vpop.f32.mrb[0].mxu0
      %v1613 = vadd.f32 0.0, %v1612
      %v1614 = vpop.f32.mrb[0].mxu0
      %v1615 = vpop.f32.mrb[0].mxu0
      %v1616 = vadd.f32 0.0, %v1615
      %v1617 = vpop.f32.mrb[0].mxu0
      %1618 = vmatprep.mubr.bf16.mxu0 0
      %1619 = vmatmul.mubr.bf16.gmra.mrb[0].mxu0 %v677
      %v1620 = vpop.f32.mrb[0].mxu0
      %v1621 = vadd.f32 0.0, %v1620
      %v1622 = vpop.f32.mrb[0].mxu0
      %v1623 = vpop.f32.mrb[0].mxu0
      %v1624 = vadd.f32 0.0, %v1623
      %v1625 = vpop.f32.mrb[0].mxu0
      %1626 = vmatprep.mubr.bf16.mxu0 0
      %1627 = vmatmul.mubr.bf16.gmra.mrb[0].mxu0 %v678
      %v1628 = vpop.f32.mrb[0].mxu0
      %v1629 = vadd.f32 0.0, %v1628
      %v1630 = vpop.f32.mrb[0].mxu0
      %v1631 = vpop.f32.mrb[0].mxu0
      %v1632 = vadd.f32 0.0, %v1631
      %v1633 = vpop.f32.mrb[0].mxu0
      %1634 = vmatprep.mubr.bf16.mxu0 0
      %1635 = vmatmul.mubr.bf16.gmra.mrb[0].mxu0 %v679
      %v1636 = vpop.f32.mrb[0].mxu0
      %v1637 = vadd.f32 0.0, %v1636
      %v1638 = vpop.f32.mrb[0].mxu0
      %v1639 = vpop.f32.mrb[0].mxu0
      %v1640 = vadd.f32 0.0, %v1639
      %v1641 = vpop.f32.mrb[0].mxu0
      %1642 = vmatprep.mubr.bf16.mxu0 0
      %1643 = vmatmul.mubr.bf16.gmra.mrb[0].mxu0 %v680
      %v1644 = vpop.f32.mrb[0].mxu0
      %v1645 = vadd.f32 0.0, %v1644
      %v1646 = vpop.f32.mrb[0].mxu0
      %v1647 = vpop.f32.mrb[0].mxu0
      %v1648 = vadd.f32 0.0, %v1647
      %v1649 = vpop.f32.mrb[0].mxu0
      %1650 = vmatprep.mubr.bf16.mxu0 0
      %1651 = vmatmul.mubr.bf16.gmra.mrb[0].mxu0 %v681
      %v1652 = vpop.f32.mrb[0].mxu0
      %v1653 = vadd.f32 0.0, %v1652
      %v1654 = vpop.f32.mrb[0].mxu0
      %v1655 = vpop.f32.mrb[0].mxu0
      %v1656 = vadd.f32 0.0, %v1655
      %v1657 = vpop.f32.mrb[0].mxu0
      %1658 = vmatprep.mubr.bf16.mxu0 0
      %1659 = vmatmul.mubr.bf16.gmra.mrb[0].mxu0 %v682
      %v1660 = vpop.f32.mrb[0].mxu0
      %v1661 = vadd.f32 0.0, %v1660
      %v1662 = vpop.f32.mrb[0].mxu0
      %v1663 = vpop.f32.mrb[0].mxu0
      %v1664 = vadd.f32 0.0, %v1663
      %v1665 = vpop.f32.mrb[0].mxu0
      %1666 = vmatprep.mubr.bf16.mxu0 0
      %1667 = vmatmul.mubr.bf16.gmra.mrb[0].mxu0 %v683
      %v1668 = vpop.f32.mrb[0].mxu0
      %v1669 = vadd.f32 0.0, %v1668
      %v1670 = vpop.f32.mrb[0].mxu0
      %v1671 = vpop.f32.mrb[0].mxu0
      %v1672 = vadd.f32 0.0, %v1671
      %v1673 = vpop.f32.mrb[0].mxu0
      %1674 = vmatprep.mubr.bf16.mxu0 0
      %1675 = vmatmul.mubr.bf16.gmra.mrb[0].mxu0 %v684
      %v1676 = vpop.f32.mrb[0].mxu0
      %v1677 = vadd.f32 0.0, %v1676
      %v1678 = vpop.f32.mrb[0].mxu0
      %v1679 = vpop.f32.mrb[0].mxu0
      %v1680 = vadd.f32 0.0, %v1679
      %v1681 = vpop.f32.mrb[0].mxu0
      %1682 = vmatprep.mubr.bf16.mxu0 0
      %1683 = vmatmul.mubr.bf16.gmra.mrb[0].mxu0 %v685
      %v1684 = vpop.f32.mrb[0].mxu0
      %v1685 = vadd.f32 0.0, %v1684
      %v1686 = vpop.f32.mrb[0].mxu0
      %v1687 = vpop.f32.mrb[0].mxu0
      %v1688 = vadd.f32 0.0, %v1687
      %v1689 = vpop.f32.mrb[0].mxu0
      %1690 = vmatprep.mubr.bf16.mxu0 0
      %1691 = vmatmul.mubr.bf16.gmra.mrb[0].mxu0 %v686
      %v1692 = vpop.f32.mrb[0].mxu0
      %v1693 = vadd.f32 0.0, %v1692
      %v1694 = vpop.f32.mrb[0].mxu0
      %v1695 = vpop.f32.mrb[0].mxu0
      %v1696 = vadd.f32 0.0, %v1695
      %v1697 = vpop.f32.mrb[0].mxu0
      %1698 = vmatprep.mubr.bf16.mxu0 0
      %1699 = vmatmul.mubr.bf16.gmra.mrb[0].mxu0 %v687
      %v1700 = vpop.f32.mrb[0].mxu0
      %v1701 = vadd.f32 0.0, %v1700
      %v1702 = vpop.f32.mrb[0].mxu0
      %v1703 = vpop.f32.mrb[0].mxu0
      %v1704 = vadd.f32 0.0, %v1703
      %v1705 = vpop.f32.mrb[0].mxu0
      %1706 = vmatprep.mubr.bf16.mxu0 0
      %1707 = vmatmul.mubr.bf16.gmra.mrb[0].mxu0 %v688
      %v1708 = vpop.f32.mrb[0].mxu0
      %v1709 = vadd.f32 0.0, %v1708
      %v1710 = vpop.f32.mrb[0].mxu0
      %v1711 = vpop.f32.mrb[0].mxu0
      %v1712 = vadd.f32 0.0, %v1711
      %v1713 = vpop.f32.mrb[0].mxu0
      %1714 = vmatprep.mubr.bf16.mxu0 0
      %1715 = vmatmul.mubr.bf16.gmra.mrb[0].mxu0 %v689
      %v1716 = vpop.f32.mrb[0].mxu0
      %v1717 = vadd.f32 0.0, %v1716
      %v1718 = vpop.f32.mrb[0].mxu0
      %v1719 = vpop.f32.mrb[0].mxu0
      %v1720 = vadd.f32 0.0, %v1719
      %v1721 = vpop.f32.mrb[0].mxu0
      %1722 = vmatprep.mubr.bf16.mxu0 0
      %1723 = vmatmul.mubr.bf16.gmra.mrb[0].mxu0 %v690
      %v1724 = vpop.f32.mrb[0].mxu0
      %v1725 = vadd.f32 0.0, %v1724
      %v1726 = vpop.f32.mrb[0].mxu0
      %v1727 = vpop.f32.mrb[0].mxu0
      %v1728 = vadd.f32 0.0, %v1727
      %v1729 = vpop.f32.mrb[0].mxu0
      %1730 = vmatprep.mubr.bf16.mxu0 0
      %1731 = vmatmul.mubr.bf16.gmra.mrb[0].mxu0 %v1528
      %v1732 = vpop.f32.mrb[0].mxu0
      %v1733 = vadd.f32 0.0, %v1732
      %v1734 = vpop.f32.mrb[0].mxu0
      %v1735 = vpop.f32.mrb[0].mxu0
      %v1736 = vadd.f32 0.0, %v1735
      %v1737 = vpop.f32.mrb[0].mxu0
      %1738 = vdwg.mxu0
      %v1739 = vadd.f32 %v1453, %v1613
      %v1740 = vadd.f32 %v1454, %v1616
      %v1741 = vadd.f32 %v1455, %v1621
      %v1742 = vadd.f32 %v1456, %v1624
      %v1743 = vadd.f32 %v1457, %v1629
      %v1744 = vadd.f32 %v1458, %v1632
      %v1745 = vadd.f32 %v1459, %v1637
      %v1746 = vadd.f32 %v1460, %v1640
      %v1747 = vadd.f32 %v1461, %v1645
      %v1748 = vadd.f32 %v1462, %v1648
      %v1749 = vadd.f32 %v1463, %v1653
      %v1750 = vadd.f32 %v1464, %v1656
      %v1751 = vadd.f32 %v1465, %v1661
      %v1752 = vadd.f32 %v1466, %v1664
      %v1753 = vadd.f32 %v1467, %v1669
      %v1754 = vadd.f32 %v1468, %v1672
      %v1755 = vadd.f32 %v1469, %v1677
      %v1756 = vadd.f32 %v1470, %v1680
      %v1757 = vadd.f32 %v1471, %v1685
      %v1758 = vadd.f32 %v1472, %v1688
      %v1759 = vadd.f32 %v1473, %v1693
      %v1760 = vadd.f32 %v1474, %v1696
      %v1761 = vadd.f32 %v1475, %v1701
      %v1762 = vadd.f32 %v1476, %v1704
      %v1763 = vadd.f32 %v1477, %v1709
      %v1764 = vadd.f32 %v1478, %v1712
      %v1765 = vadd.f32 %v1479, %v1717
      %v1766 = vadd.f32 %v1480, %v1720
      %v1767 = vadd.f32 %v1481, %v1725
      %v1768 = vadd.f32 %v1482, %v1728
      %v1769 = vadd.f32 %v1483, %v1733
      %v1770 = vadd.f32 %v1484, %v1736
      %v1771 = vld [vmem:[%s2] sm:$0x1]
      %v1773 = vlaneseq
      %v1774 = vshrl.u32 %v1773, 7
      %v1775 = vsub.s32 0, %v1774
      %v1776 = vrot.slane %v1771, %v1775
      %v1778 = vadd.f32 %v1739, %v1776
      %v1779 = vadd.f32 %v1740, %v1776
      %v1780 = vadd.f32 %v1741, %v1776
      %v1781 = vadd.f32 %v1742, %v1776
      %v1782 = vadd.f32 %v1743, %v1776
      %v1783 = vadd.f32 %v1744, %v1776
      %v1784 = vadd.f32 %v1745, %v1776
      %v1785 = vadd.f32 %v1746, %v1776
      %v1786 = vadd.f32 %v1747, %v1776
      %v1787 = vadd.f32 %v1748, %v1776
      %v1788 = vadd.f32 %v1749, %v1776
      %v1789 = vadd.f32 %v1750, %v1776
      %v1790 = vadd.f32 %v1751, %v1776
      %v1791 = vadd.f32 %v1752, %v1776
      %v1792 = vadd.f32 %v1753, %v1776
      %v1793 = vadd.f32 %v1754, %v1776
      %v1794 = vadd.f32 %v1755, %v1776
      %v1795 = vadd.f32 %v1756, %v1776
      %v1796 = vadd.f32 %v1757, %v1776
      %v1797 = vadd.f32 %v1758, %v1776
      %v1798 = vadd.f32 %v1759, %v1776
      %v1799 = vadd.f32 %v1760, %v1776
      %v1800 = vadd.f32 %v1761, %v1776
      %v1801 = vadd.f32 %v1762, %v1776
      %v1802 = vadd.f32 %v1763, %v1776
      %v1803 = vadd.f32 %v1764, %v1776
      %v1804 = vadd.f32 %v1765, %v1776
      %v1805 = vadd.f32 %v1766, %v1776
      %v1806 = vadd.f32 %v1767, %v1776
      %v1807 = vadd.f32 %v1768, %v1776
      %v1808 = vadd.f32 %v1769, %v1776
      %v1809 = vadd.f32 %v1770, %v1776
      %v1810 = vmax.f32 %v1778, 0.0
      %v1811 = vmax.f32 %v1779, 0.0
      %v1812 = vmax.f32 %v1780, 0.0
      %v1813 = vmax.f32 %v1781, 0.0
      %v1814 = vmax.f32 %v1782, 0.0
      %v1815 = vmax.f32 %v1783, 0.0
      %v1816 = vmax.f32 %v1784, 0.0
      %v1817 = vmax.f32 %v1785, 0.0
      %v1818 = vmax.f32 %v1786, 0.0
      %v1819 = vmax.f32 %v1787, 0.0
      %v1820 = vmax.f32 %v1788, 0.0
      %v1821 = vmax.f32 %v1789, 0.0
      %v1822 = vmax.f32 %v1790, 0.0
      %v1823 = vmax.f32 %v1791, 0.0
      %v1824 = vmax.f32 %v1792, 0.0
      %v1825 = vmax.f32 %v1793, 0.0
      %v1826 = vmax.f32 %v1794, 0.0
      %v1827 = vmax.f32 %v1795, 0.0
      %v1828 = vmax.f32 %v1796, 0.0
      %v1829 = vmax.f32 %v1797, 0.0
      %v1830 = vmax.f32 %v1798, 0.0
      %v1831 = vmax.f32 %v1799, 0.0
      %v1832 = vmax.f32 %v1800, 0.0
      %v1833 = vmax.f32 %v1801, 0.0
      %v1834 = vmax.f32 %v1802, 0.0
      %v1835 = vmax.f32 %v1803, 0.0
      %v1836 = vmax.f32 %v1804, 0.0
      %v1837 = vmax.f32 %v1805, 0.0
      %v1838 = vmax.f32 %v1806, 0.0
      %v1839 = vmax.f32 %v1807, 0.0
      %v1840 = vmax.f32 %v1808, 0.0
      %v1841 = vmax.f32 %v1809, 0.0
      %v1842 = vpack.c.bf16 %v1811, %v1810
      %v1843 = vpack.c.bf16 %v1813, %v1812
      %v1844 = vpack.c.bf16 %v1815, %v1814
      %v1845 = vpack.c.bf16 %v1817, %v1816
      %v1846 = vpack.c.bf16 %v1819, %v1818
      %v1847 = vpack.c.bf16 %v1821, %v1820
      %v1848 = vpack.c.bf16 %v1823, %v1822
      %v1849 = vpack.c.bf16 %v1825, %v1824
      %v1850 = vpack.c.bf16 %v1827, %v1826
      %v1851 = vpack.c.bf16 %v1829, %v1828
      %v1852 = vpack.c.bf16 %v1831, %v1830
      %v1853 = vpack.c.bf16 %v1833, %v1832
      %v1854 = vpack.c.bf16 %v1835, %v1834
      %v1855 = vpack.c.bf16 %v1837, %v1836
      %v1856 = vpack.c.bf16 %v1839, %v1838
      %v1857 = vpack.c.bf16 %v1841, %v1840
      %v1874 = vunpack.c.l.b16 %v1842
      %v1875 = vunpack.c.h.b16 %v1842
      %v1876 = vunpack.c.l.b16 %v1843
      %v1877 = vunpack.c.h.b16 %v1843
      %v1878 = vunpack.c.l.b16 %v1844
      %v1879 = vunpack.c.h.b16 %v1844
      %v1880 = vunpack.c.l.b16 %v1845
      %v1881 = vunpack.c.h.b16 %v1845
      %v1882 = vunpack.c.l.b16 %v1846
      %v1883 = vunpack.c.h.b16 %v1846
      %v1884 = vunpack.c.l.b16 %v1847
      %v1885 = vunpack.c.h.b16 %v1847
      %v1886 = vunpack.c.l.b16 %v1848
      %v1887 = vunpack.c.h.b16 %v1848
      %v1888 = vunpack.c.l.b16 %v1849
      %v1889 = vunpack.c.h.b16 %v1849
      %v1890 = vunpack.c.l.b16 %v1850
      %v1891 = vunpack.c.h.b16 %v1850
      %v1892 = vunpack.c.l.b16 %v1851
      %v1893 = vunpack.c.h.b16 %v1851
      %v1894 = vunpack.c.l.b16 %v1852
      %v1895 = vunpack.c.h.b16 %v1852
      %v1896 = vunpack.c.l.b16 %v1853
      %v1897 = vunpack.c.h.b16 %v1853
      %v1898 = vunpack.c.l.b16 %v1854
      %v1899 = vunpack.c.h.b16 %v1854
      %v1900 = vunpack.c.l.b16 %v1855
      %v1901 = vunpack.c.h.b16 %v1855
      %v1902 = vunpack.c.l.b16 %v1856
      %v1903 = vunpack.c.h.b16 %v1856
      %v1904 = vunpack.c.l.b16 %v1857
      %v1905 = vunpack.c.h.b16 %v1857
      %v1906 = vpack.c.b16 %v1874, %v1874
      %v1907 = vpack.c.b16 %v1875, %v1875
      %v1908 = vpack.c.b16 %v1876, %v1876
      %v1909 = vpack.c.b16 %v1877, %v1877
      %v1910 = vpack.c.b16 %v1878, %v1878
      %v1911 = vpack.c.b16 %v1879, %v1879
      %v1912 = vpack.c.b16 %v1880, %v1880
      %v1913 = vpack.c.b16 %v1881, %v1881
      %v1914 = vpack.c.b16 %v1882, %v1882
      %v1915 = vpack.c.b16 %v1883, %v1883
      %v1916 = vpack.c.b16 %v1884, %v1884
      %v1917 = vpack.c.b16 %v1885, %v1885
      %v1918 = vpack.c.b16 %v1886, %v1886
      %v1919 = vpack.c.b16 %v1887, %v1887
      %v1920 = vpack.c.b16 %v1888, %v1888
      %v1921 = vpack.c.b16 %v1889, %v1889
      %v1922 = vpack.c.b16 %v1890, %v1890
      %v1923 = vpack.c.b16 %v1891, %v1891
      %v1924 = vpack.c.b16 %v1892, %v1892
      %v1925 = vpack.c.b16 %v1893, %v1893
      %v1926 = vpack.c.b16 %v1894, %v1894
      %v1927 = vpack.c.b16 %v1895, %v1895
      %v1928 = vpack.c.b16 %v1896, %v1896
      %v1929 = vpack.c.b16 %v1897, %v1897
      %v1930 = vpack.c.b16 %v1898, %v1898
      %v1931 = vpack.c.b16 %v1899, %v1899
      %v1932 = vpack.c.b16 %v1900, %v1900
      %v1933 = vpack.c.b16 %v1901, %v1901
      %v1934 = vpack.c.b16 %v1902, %v1902
      %v1935 = vpack.c.b16 %v1903, %v1903
      %v1936 = vpack.c.b16 %v1904, %v1904
      %v1937 = vpack.c.b16 %v1905, %v1905
      %vm1970 = vcmask 519168
      %1971 = vst.msk [vmem:[%s170] sm:$0xf] %vm1970, %v1906
      %1972 = vst.msk [vmem:[%s170 + $0x4] sm:$0xf] %vm1970, %v1907
      %1973 = vst.msk [vmem:[%s170 + $0x8] sm:$0xf] %vm1970, %v1908
      %1974 = vst.msk [vmem:[%s170 + $0xc] sm:$0xf] %vm1970, %v1909
      %1975 = vst.msk [vmem:[%s170 + $0x10] sm:$0xf] %vm1970, %v1910
      %1976 = vst.msk [vmem:[%s170 + $0x14] sm:$0xf] %vm1970, %v1911
      %1977 = vst.msk [vmem:[%s170 + $0x18] sm:$0xf] %vm1970, %v1912
      %1978 = vst.msk [vmem:[%s170 + $0x1c] sm:$0xf] %vm1970, %v1913
      %1979 = vst.msk [vmem:[%s170 + $0x20] sm:$0xf] %vm1970, %v1914
      %1980 = vst.msk [vmem:[%s170 + $0x24] sm:$0xf] %vm1970, %v1915
      %1981 = vst.msk [vmem:[%s170 + $0x28] sm:$0xf] %vm1970, %v1916
      %1982 = vst.msk [vmem:[%s170 + $0x2c] sm:$0xf] %vm1970, %v1917
      %1983 = vst.msk [vmem:[%s170 + $0x30] sm:$0xf] %vm1970, %v1918
      %1984 = vst.msk [vmem:[%s170 + $0x34] sm:$0xf] %vm1970, %v1919
      %1985 = vst.msk [vmem:[%s170 + $0x38] sm:$0xf] %vm1970, %v1920
      %1986 = vst.msk [vmem:[%s170 + $0x3c] sm:$0xf] %vm1970, %v1921
      %1987 = vst.msk [vmem:[%s170 + $0x40] sm:$0xf] %vm1970, %v1922
      %1988 = vst.msk [vmem:[%s170 + $0x44] sm:$0xf] %vm1970, %v1923
      %1989 = vst.msk [vmem:[%s170 + $0x48] sm:$0xf] %vm1970, %v1924
      %1990 = vst.msk [vmem:[%s170 + $0x4c] sm:$0xf] %vm1970, %v1925
      %1991 = vst.msk [vmem:[%s170 + $0x50] sm:$0xf] %vm1970, %v1926
      %1992 = vst.msk [vmem:[%s170 + $0x54] sm:$0xf] %vm1970, %v1927
      %1993 = vst.msk [vmem:[%s170 + $0x58] sm:$0xf] %vm1970, %v1928
      %1994 = vst.msk [vmem:[%s170 + $0x5c] sm:$0xf] %vm1970, %v1929
      %1995 = vst.msk [vmem:[%s170 + $0x60] sm:$0xf] %vm1970, %v1930
      %1996 = vst.msk [vmem:[%s170 + $0x64] sm:$0xf] %vm1970, %v1931
      %1997 = vst.msk [vmem:[%s170 + $0x68] sm:$0xf] %vm1970, %v1932
      %1998 = vst.msk [vmem:[%s170 + $0x6c] sm:$0xf] %vm1970, %v1933
      %1999 = vst.msk [vmem:[%s170 + $0x70] sm:$0xf] %vm1970, %v1934
      %2000 = vst.msk [vmem:[%s170 + $0x74] sm:$0xf] %vm1970, %v1935
      %2001 = vst.msk [vmem:[%s170 + $0x78] sm:$0xf] %vm1970, %v1936
      %2002 = vst.msk [vmem:[%s170 + $0x7c] sm:$0xf] %vm1970, %v1937
      %p2003 = scmp.lt.s32.totalorder %s14, 1
      %s2004 = scalar_select %p2003, %s14, 1
      %s2005 = smul.addr %s2004, 32
      %s2006 = smul.addr %s2005, 4
      %s2007 = scalar_lea.vmem %s3, %s2006
      // Predicated region
      $region33: #{encoder_forward.5} parent=31 // pred_check
        %p2008 = pneg %p100
      $region34: #{encoder_forward.5} parent=31 // pred_check_branch
        %2010 = sbr.rel (%p2008) target = $region36
      $region35: #{encoder_forward.5} parent=31 // pred_region
        _
      $region36: #{encoder_forward.5} parent=31 // pred_fallthru
        _
    $region32: #{encoder_forward.5} parent=5 // pred_fallthru
      _
    %p2011 = scmp.le.s32.totalorder 2, %s9
    // Predicated region
    $region37: #{encoder_forward.5} parent=5 // pred_check
      %p2012 = pneg %p2011
    $region38: #{encoder_forward.5} parent=5 // pred_check_branch
      %2014 = sbr.rel (%p2012) target = $region40
    $region39: #{encoder_forward.5} parent=5 // pred_region
      %s2015 = ssub.s32 %s9, 2
      // Predicated region
      $region41: #{encoder_forward.5} parent=39 // pred_check
        %p2016 = pneg %p106
      $region42: #{encoder_forward.5} parent=39 // pred_check_branch
        %2018 = sbr.rel (%p2016) target = $region44
      $region43: #{encoder_forward.5} parent=39 // pred_region
        %p2019 = scmp.lt.s32.totalorder %s15, 1
        %s2020 = scalar_select %p2019, %s15, 1
        %s2021 = smul.addr %s2020, 32
        %s2022 = smul.addr %s2021, 4
        %s2023 = scalar_lea.vmem %s3, %s2022
      $region44: #{encoder_forward.5} parent=39 // pred_fallthru
        _
    $region40: #{encoder_forward.5} parent=5 // pred_fallthru
      _
  $region6: #{encoder_forward.5} parent=0 // loop_footer
    %s13 = sadd.s32 1, %s9
  $region7: #{encoder_forward.5} parent=0 // loop_footer_branch
    %8 = sbr.rel target = $region3
  $region8: #{encoder_forward.5} parent=0 // loop_exit
    _

// kernel: encoder_forward.6
$region0: #{encoder_forward.6}
  #allocation0 [shape = 'u32[]', space=smem, size = 0x4, offset = 0x4, fixed_abs, tag = 'smem constant byte address 0x4 - core index']
  #allocation1 [shape = 'u32[144,128]{1,0:T(1,128)}', space=vmem, size = 0x12000, scoped, tag = 'internal scratch']
  %s0 = inlined_call_operand.vmem [shape: bf16[2,9,9,256], index: 0, kind: input, shape index: {}]
  %s1 = inlined_call_operand.vmem [shape: bf16[4,256,128], index: 1, kind: input, shape index: {}]
  %s2 = inlined_call_operand.vmem [shape: f32[1,128], index: 2, kind: input, shape index: {}]
  %s3 = inlined_call_operand.vmem [shape: bf16[2,64,128], index: 3, kind: output, shape index: {}]
  %s4 = sld [smem:[#allocation0]]
  $region45: #{encoder_forward.6} parent=0
    _
  %s6 = ssub.s32 1, %s4
  %s7 = scalar_select 0, %s6, %s4
  loop: start=0, step=1, limit=4
  $region2: #{encoder_forward.6} parent=0 // loop_pre_header
    _
  $region3: #{encoder_forward.6} parent=0 // loop_header
    %s9 = sphi 0, %s13
    %p10 = scmp.ge.s32.totalorder %s9, 4
    %s19 = sphi 0, %s21
    %s22 = sphi 0, %s19
    %s23 = sphi 0, %s22
    %s39 = sphi 0, %s23
    %s43 = sphi 0, %s43
    %s45 = sphi 0, %s43
    %s46 = sphi 0, %s45
    %s60 = sphi 0, %s46
    %s64 = sphi 0, %s64
    %s66 = sphi 0, %s64
    %s67 = sphi 0, %s66
    %s81 = sphi 0, %s67
    %s87 = sphi 0, %s89
    %s90 = sphi 0, %s87
    %s91 = sphi 0, %s90
    %s107 = sphi 0, %s91
  $region4: #{encoder_forward.6} parent=0 // loop_header_branch
    %12 = sbr.rel (%p10) target = $region8
  $region5: #{encoder_forward.6} parent=0 // loop_body
    %s14 = ssub.s32 %s9, 1
    %s15 = ssub.s32 %s9, 2
    %s16 = sadd.s32 %s9, 1
    %s17 = ssub.s32 %s9, %s16
    %p18 = scmp.eq.s32.totalorder %s17, 0
    %s20 = sadd.s32 %s19, 1
    %s21 = scalar_select %p18, %s19, %s20
    %p24 = pneg %p18
    %p25 = scmp.eq.s32.totalorder %s9, 1
    %p26 = por %p24, %p25
    %p27 = scmp.ne.s32.totalorder %s19, %s22
    %p28 = scmp.eq.s32.totalorder %s9, 0
    %p29 = por %p27, %p28
    %p30 = scmp.ne.s32.totalorder %s19, %s22
    %p31 = scmp.eq.s32.totalorder %s14, 1
    %p32 = por %p30, %p31
    %p33 = scmp.ne.s32.totalorder %s22, %s23
    %p34 = scmp.eq.s32.totalorder %s14, 0
    %p35 = por %p33, %p34
    %p36 = scmp.ne.s32.totalorder %s22, %s23
    %p37 = scmp.eq.s32.totalorder %s15, 1
    %p38 = por %p36, %p37
    %p40 = scmp.ne.s32.totalorder %s23, %s39
    %p41 = scmp.eq.s32.totalorder %s15, 0
    %p42 = por %p40, %p41
    %s44 = sadd.s32 %s43, 1
    %p47 = scmp.eq.s32.totalorder %s9, 1
    %p48 = scmp.ne.s32.totalorder %s43, %s45
    %p49 = scmp.eq.s32.totalorder %s9, 0
    %p50 = por %p48, %p49
    %p51 = scmp.ne.s32.totalorder %s43, %s45
    %p52 = scmp.eq.s32.totalorder %s14, 1
    %p53 = por %p51, %p52
    %p54 = scmp.ne.s32.totalorder %s45, %s46
    %p55 = scmp.eq.s32.totalorder %s14, 0
    %p56 = por %p54, %p55
    %p57 = scmp.ne.s32.totalorder %s45, %s46
    %p58 = scmp.eq.s32.totalorder %s15, 1
    %p59 = por %p57, %p58
    %p61 = scmp.ne.s32.totalorder %s46, %s60
    %p62 = scmp.eq.s32.totalorder %s15, 0
    %p63 = por %p61, %p62
    %s65 = sadd.s32 %s64, 1
    %p68 = scmp.eq.s32.totalorder %s9, 1
    %p69 = scmp.ne.s32.totalorder %s64, %s66
    %p70 = scmp.eq.s32.totalorder %s9, 0
    %p71 = por %p69, %p70
    %p72 = scmp.ne.s32.totalorder %s64, %s66
    %p73 = scmp.eq.s32.totalorder %s14, 1
    %p74 = por %p72, %p73
    %p75 = scmp.ne.s32.totalorder %s66, %s67
    %p76 = scmp.eq.s32.totalorder %s14, 0
    %p77 = por %p75, %p76
    %p78 = scmp.ne.s32.totalorder %s66, %s67
    %p79 = scmp.eq.s32.totalorder %s15, 1
    %p80 = por %p78, %p79
    %p82 = scmp.ne.s32.totalorder %s67, %s81
    %p83 = scmp.eq.s32.totalorder %s15, 0
    %p84 = por %p82, %p83
    %s85 = ssub.s32 %s9, %s16
    %p86 = scmp.eq.s32.totalorder %s85, 0
    %s88 = sadd.s32 %s87, 1
    %s89 = scalar_select %p86, %s87, %s88
    %p92 = pneg %p86
    %p93 = scmp.eq.s32.totalorder %s9, 1
    %p94 = por %p92, %p93
    %p95 = scmp.ne.s32.totalorder %s87, %s90
    %p96 = scmp.eq.s32.totalorder %s9, 0
    %p97 = por %p95, %p96
    %p98 = scmp.ne.s32.totalorder %s87, %s90
    %p99 = scmp.eq.s32.totalorder %s14, 1
    %p100 = por %p98, %p99
    %p101 = scmp.ne.s32.totalorder %s90, %s91
    %p102 = scmp.eq.s32.totalorder %s14, 0
    %p103 = por %p101, %p102
    %p104 = scmp.ne.s32.totalorder %s90, %s91
    %p105 = scmp.eq.s32.totalorder %s15, 1
    %p106 = por %p104, %p105
    %p108 = scmp.ne.s32.totalorder %s91, %s107
    %p109 = scmp.eq.s32.totalorder %s15, 0
    %p110 = por %p108, %p109
    %p111 = scmp.le.s32.totalorder 1, %s9
    %p112 = scmp.lt.s32.totalorder %s9, 3
    %p113 = pnand %p111, %p112
    %p114 = pneg %p113
    // Predicated region
    $region9: #{encoder_forward.6} parent=5 // pred_check
      _
    $region10: #{encoder_forward.6} parent=5 // pred_check_branch
      %116 = sbr.rel (%p113) target = $region12
    $region11: #{encoder_forward.6} parent=5 // pred_region
      %s117 = ssub.s32 %s9, 1
      // Predicated region
      $region13: #{encoder_forward.6} parent=11 // pred_check
        %p118 = pneg %p56
      $region14: #{encoder_forward.6} parent=11 // pred_check_branch
        %120 = sbr.rel (%p118) target = $region16
      $region15: #{encoder_forward.6} parent=11 // pred_region
        _
      $region16: #{encoder_forward.6} parent=11 // pred_fallthru
        _
      // Predicated region
      $region17: #{encoder_forward.6} parent=11 // pred_check
        %p121 = pneg %p77
      $region18: #{encoder_forward.6} parent=11 // pred_check_branch
        %123 = sbr.rel (%p121) target = $region20
      $region19: #{encoder_forward.6} parent=11 // pred_region
        _
      $region20: #{encoder_forward.6} parent=11 // pred_fallthru
        _
    $region12: #{encoder_forward.6} parent=5 // pred_fallthru
      _
    %p124 = scmp.lt.s32.totalorder %s9, 2
    // Predicated region
    $region21: #{encoder_forward.6} parent=5 // pred_check
      %p125 = pneg %p124
    $region22: #{encoder_forward.6} parent=5 // pred_check_branch
      %127 = sbr.rel (%p125) target = $region24
    $region23: #{encoder_forward.6} parent=5 // pred_region
      // Predicated region
      $region25: #{encoder_forward.6} parent=23 // pred_check
        %p128 = pneg %p29
      $region26: #{encoder_forward.6} parent=23 // pred_check_branch
        %130 = sbr.rel (%p128) target = $region28
      $region27: #{encoder_forward.6} parent=23 // pred_region
        %p131 = scmp.lt.s32.totalorder %s9, 1
        %s132 = scalar_select %p131, %s9, 1
        %s133 = smul.addr %s132, 36
        %s134 = smul.addr %s133, 4
        %s135 = scalar_lea.vmem %s0, %s134
      $region28: #{encoder_forward.6} parent=23 // pred_fallthru
        _
    $region24: #{encoder_forward.6} parent=5 // pred_fallthru
      _
    %p136 = scmp.le.s32.totalorder 1, %s9
    %p137 = scmp.lt.s32.totalorder %s9, 3
    %p138 = pnand %p136, %p137
    %p139 = pneg %p138
    // Predicated region
    $region29: #{encoder_forward.6} parent=5 // pred_check
      _
    $region30: #{encoder_forward.6} parent=5 // pred_check_branch
      %141 = sbr.rel (%p138) target = $region32
    $region31: #{encoder_forward.6} parent=5 // pred_region
      %s142 = ssub.s32 %s9, 1
      %p143 = scmp.lt.s32.totalorder %s14, 1
      %s144 = scalar_select %p143, %s14, 1
      %s145 = smul.addr %s144, 36
      %s146 = smul.addr %s145, 4
      %s147 = scalar_lea.vmem %s0, %s146
      %p148 = pneg %p35
      %p149 = pneg %p32
      %p150 = pneg %p56
      %p151 = pneg %p53
      %p152 = pneg %p77
      %p153 = pneg %p74
      %p154 = pneg %p103
      %p155 = pneg %p100
      %p156 = scmp.lt.s32.totalorder %s14, 1
      %s157 = scalar_select %p156, %s14, 1
      %s158 = smul.addr %s157, 8
      %s159 = smul.addr %s158, 4
      %s160 = scalar_lea.vmem %s3, %s159
      %p161 = scmp.lt.s32.totalorder %s14, 1
      %s162 = scalar_select %p161, %s14, 1
      %s163 = smul.addr %s162, 36
      %s164 = smul.addr %s163, 4
      %s165 = scalar_lea.vmem %s0, %s164
      %p166 = scmp.lt.s32.totalorder %s14, 1
      %s167 = scalar_select %p166, %s14, 1
      %s168 = smul.addr %s167, 8
      %s169 = smul.addr %s168, 4
      %s170 = scalar_lea.vmem %s3, %s169
      %v172 = vld [vmem:[%s165] sm:$0xff]
      %v173 = vld [vmem:[%s165 + $0x8] sm:$0x11]
      %v174 = vld [vmem:[%s165 + $0x10] sm:$0xff]
      %v175 = vld [vmem:[%s165 + $0x18] sm:$0x11]
      %v176 = vld [vmem:[%s165 + $0x20] sm:$0xff]
      %v177 = vld [vmem:[%s165 + $0x28] sm:$0x11]
      %v178 = vld [vmem:[%s165 + $0x30] sm:$0xff]
      %v179 = vld [vmem:[%s165 + $0x38] sm:$0x11]
      %v180 = vld [vmem:[%s165 + $0x40] sm:$0xff]
      %v181 = vld [vmem:[%s165 + $0x48] sm:$0x11]
      %v182 = vld [vmem:[%s165 + $0x50] sm:$0xff]
      %v183 = vld [vmem:[%s165 + $0x58] sm:$0x11]
      %v184 = vld [vmem:[%s165 + $0x60] sm:$0xff]
      %v185 = vld [vmem:[%s165 + $0x68] sm:$0x11]
      %v186 = vld [vmem:[%s165 + $0x70] sm:$0xff]
      %v187 = vld [vmem:[%s165 + $0x78] sm:$0x11]
      %v188 = vld [vmem:[%s165 + $0x80] sm:$0xff]
      %v189 = vld [vmem:[%s165 + $0x88] sm:$0x11]
      %v190 = vld [vmem:[%s1] sm:$0xf]
      %v191 = vld [vmem:[%s1 + $0x4] sm:$0xf]
      %v192 = vld [vmem:[%s1 + $0x8] sm:$0xf]
      %v193 = vld [vmem:[%s1 + $0xc] sm:$0xf]
      %v194 = vld [vmem:[%s1 + $0x10] sm:$0xf]
      %v195 = vld [vmem:[%s1 + $0x14] sm:$0xf]
      %v196 = vld [vmem:[%s1 + $0x18] sm:$0xf]
      %v197 = vld [vmem:[%s1 + $0x1c] sm:$0xf]
      %v198 = vld [vmem:[%s1 + $0x20] sm:$0xf]
      %v199 = vld [vmem:[%s1 + $0x24] sm:$0xf]
      %v200 = vld [vmem:[%s1 + $0x28] sm:$0xf]
      %v201 = vld [vmem:[%s1 + $0x2c] sm:$0xf]
      %v202 = vld [vmem:[%s1 + $0x30] sm:$0xf]
      %v203 = vld [vmem:[%s1 + $0x34] sm:$0xf]
      %v204 = vld [vmem:[%s1 + $0x38] sm:$0xf]
      %v205 = vld [vmem:[%s1 + $0x3c] sm:$0xf]
      %v206 = vld [vmem:[%s1 + $0x40] sm:$0xf]
      %v207 = vld [vmem:[%s1 + $0x44] sm:$0xf]
      %v208 = vld [vmem:[%s1 + $0x48] sm:$0xf]
      %v209 = vld [vmem:[%s1 + $0x4c] sm:$0xf]
      %v210 = vld [vmem:[%s1 + $0x50] sm:$0xf]
      %v211 = vld [vmem:[%s1 + $0x54] sm:$0xf]
      %v212 = vld [vmem:[%s1 + $0x58] sm:$0xf]
      %v213 = vld [vmem:[%s1 + $0x5c] sm:$0xf]
      %v214 = vld [vmem:[%s1 + $0x60] sm:$0xf]
      %v215 = vld [vmem:[%s1 + $0x64] sm:$0xf]
      %v216 = vld [vmem:[%s1 + $0x68] sm:$0xf]
      %v217 = vld [vmem:[%s1 + $0x6c] sm:$0xf]
      %v218 = vld [vmem:[%s1 + $0x70] sm:$0xf]
      %v219 = vld [vmem:[%s1 + $0x74] sm:$0xf]
      %v220 = vld [vmem:[%s1 + $0x78] sm:$0xf]
      %v221 = vld [vmem:[%s1 + $0x7c] sm:$0xf]
      %vm222 = vsmask.f32 3328
      %vm223 = vsmask.f32 7440
      %vm224 = vmor %vm222, %vm223
      %v226 = vshrl.u32 %v172, 16
      %v228 = vrot.slane %v226, 4
      %v229 = vshll.u32 %v172, 16
      %v231 = vrot.slane %v229, 5
      %v232 = vor.u32 %v228, %v231
      %v233 = vrot.slane %v232, 4
      %v235 = vshll.u32 %v173, 16
      %v237 = vrot.slane %v235, 5
      %v238 = vsel %vm224, %v233, %v237
      %v240 = vshrl.u32 %v174, 16
      %v242 = vrot.slane %v240, 4
      %v243 = vshll.u32 %v174, 16
      %v245 = vrot.slane %v243, 5
      %v246 = vor.u32 %v242, %v245
      %v247 = vrot.slane %v246, 4
      %v249 = vshll.u32 %v175, 16
      %v251 = vrot.slane %v249, 5
      %v252 = vsel %vm224, %v247, %v251
      %v254 = vshrl.u32 %v176, 16
      %v256 = vrot.slane %v254, 4
      %v257 = vshll.u32 %v176, 16
      %v259 = vrot.slane %v257, 5
      %v260 = vor.u32 %v256, %v259
      %v261 = vrot.slane %v260, 4
      %v263 = vshll.u32 %v177, 16
      %v265 = vrot.slane %v263, 5
      %v266 = vsel %vm224, %v261, %v265
      %v268 = vshrl.u32 %v178, 16
      %v270 = vrot.slane %v268, 4
      %v271 = vshll.u32 %v178, 16
      %v273 = vrot.slane %v271, 5
      %v274 = vor.u32 %v270, %v273
      %v275 = vrot.slane %v274, 4
      %v277 = vshll.u32 %v179, 16
      %v279 = vrot.slane %v277, 5
      %v280 = vsel %vm224, %v275, %v279
      %v282 = vshrl.u32 %v180, 16
      %v284 = vrot.slane %v282, 4
      %v285 = vshll.u32 %v180, 16
      %v287 = vrot.slane %v285, 5
      %v288 = vor.u32 %v284, %v287
      %v289 = vrot.slane %v288, 4
      %v291 = vshll.u32 %v181, 16
      %v293 = vrot.slane %v291, 5
      %v294 = vsel %vm224, %v289, %v293
      %v296 = vshrl.u32 %v182, 16
      %v298 = vrot.slane %v296, 4
      %v299 = vshll.u32 %v182, 16
      %v301 = vrot.slane %v299, 5
      %v302 = vor.u32 %v298, %v301
      %v303 = vrot.slane %v302, 4
      %v305 = vshll.u32 %v183, 16
      %v307 = vrot.slane %v305, 5
      %v308 = vsel %vm224, %v303, %v307
      %v310 = vshrl.u32 %v184, 16
      %v312 = vrot.slane %v310, 4
      %v313 = vshll.u32 %v184, 16
      %v315 = vrot.slane %v313, 5
      %v316 = vor.u32 %v312, %v315
      %v317 = vrot.slane %v316, 4
      %v319 = vshll.u32 %v185, 16
      %v321 = vrot.slane %v319, 5
      %v322 = vsel %vm224, %v317, %v321
      %v324 = vshrl.u32 %v186, 16
      %v326 = vrot.slane %v324, 4
      %v327 = vshll.u32 %v186, 16
      %v329 = vrot.slane %v327, 5
      %v330 = vor.u32 %v326, %v329
      %v331 = vrot.slane %v330, 4
      %v333 = vshll.u32 %v187, 16
      %v335 = vrot.slane %v333, 5
      %v336 = vsel %vm224, %v331, %v335
      %s337 = scalar_lea.vmem %s1, 128
      %v338 = vld [vmem:[%s337] sm:$0xf]
      %v339 = vld [vmem:[%s337 + $0x4] sm:$0xf]
      %v340 = vld [vmem:[%s337 + $0x8] sm:$0xf]
      %v341 = vld [vmem:[%s337 + $0xc] sm:$0xf]
      %v342 = vld [vmem:[%s337 + $0x10] sm:$0xf]
      %v343 = vld [vmem:[%s337 + $0x14] sm:$0xf]
      %v344 = vld [vmem:[%s337 + $0x18] sm:$0xf]
      %v345 = vld [vmem:[%s337 + $0x1c] sm:$0xf]
      %v346 = vld [vmem:[%s337 + $0x20] sm:$0xf]
      %v347 = vld [vmem:[%s337 + $0x24] sm:$0xf]
      %v348 = vld [vmem:[%s337 + $0x28] sm:$0xf]
      %v349 = vld [vmem:[%s337 + $0x2c] sm:$0xf]
      %v350 = vld [vmem:[%s337 + $0x30] sm:$0xf]
      %v351 = vld [vmem:[%s337 + $0x34] sm:$0xf]
      %v352 = vld [vmem:[%s337 + $0x38] sm:$0xf]
      %v353 = vld [vmem:[%s337 + $0x3c] sm:$0xf]
      %v354 = vld [vmem:[%s337 + $0x40] sm:$0xf]
      %v355 = vld [vmem:[%s337 + $0x44] sm:$0xf]
      %v356 = vld [vmem:[%s337 + $0x48] sm:$0xf]
      %v357 = vld [vmem:[%s337 + $0x4c] sm:$0xf]
      %v358 = vld [vmem:[%s337 + $0x50] sm:$0xf]
      %v359 = vld [vmem:[%s337 + $0x54] sm:$0xf]
      %v360 = vld [vmem:[%s337 + $0x58] sm:$0xf]
      %v361 = vld [vmem:[%s337 + $0x5c] sm:$0xf]
      %v362 = vld [vmem:[%s337 + $0x60] sm:$0xf]
      %v363 = vld [vmem:[%s337 + $0x64] sm:$0xf]
      %v364 = vld [vmem:[%s337 + $0x68] sm:$0xf]
      %v365 = vld [vmem:[%s337 + $0x6c] sm:$0xf]
      %v366 = vld [vmem:[%s337 + $0x70] sm:$0xf]
      %v367 = vld [vmem:[%s337 + $0x74] sm:$0xf]
      %v368 = vld [vmem:[%s337 + $0x78] sm:$0xf]
      %v369 = vld [vmem:[%s337 + $0x7c] sm:$0xf]
      %v370 = vunpack.c.l.b16 %v238
      %v371 = vunpack.c.h.b16 %v238
      %v372 = vunpack.c.l.b16 %v252
      %v373 = vunpack.c.h.b16 %v252
      %v374 = vunpack.c.l.b16 %v266
      %v375 = vunpack.c.h.b16 %v266
      %v376 = vunpack.c.l.b16 %v280
      %v377 = vunpack.c.h.b16 %v280
      %v378 = vunpack.c.l.b16 %v294
      %v379 = vunpack.c.h.b16 %v294
      %v380 = vunpack.c.l.b16 %v308
      %v381 = vunpack.c.h.b16 %v308
      %v382 = vunpack.c.l.b16 %v322
      %v383 = vunpack.c.h.b16 %v322
      %v384 = vunpack.c.l.b16 %v336
      %v385 = vunpack.c.h.b16 %v336
      %v386 = vpack.c.b16 %v372, %v370
      %v387 = vpack.c.b16 %v373, %v371
      %v388 = vpack.c.b16 %v376, %v374
      %v389 = vpack.c.b16 %v377, %v375
      %v390 = vpack.c.b16 %v380, %v378
      %v391 = vpack.c.b16 %v381, %v379
      %v392 = vpack.c.b16 %v384, %v382
      %v393 = vpack.c.b16 %v385, %v383
      %v434 = vunpack.c.l.b16 %v338
      %v435 = vunpack.c.l.b16 %v339
      %v436 = vunpack.c.l.b16 %v340
      %v437 = vunpack.c.l.b16 %v341
      %v438 = vunpack.c.l.b16 %v342
      %v439 = vunpack.c.l.b16 %v343
      %v440 = vunpack.c.l.b16 %v344
      %v441 = vunpack.c.l.b16 %v345
      %v442 = vunpack.c.l.b16 %v346
      %v443 = vunpack.c.l.b16 %v347
      %v444 = vunpack.c.l.b16 %v348
      %v445 = vunpack.c.l.b16 %v349
      %v446 = vunpack.c.l.b16 %v350
      %v447 = vunpack.c.l.b16 %v351
      %v448 = vunpack.c.l.b16 %v352
      %v449 = vunpack.c.l.b16 %v353
      %v450 = vunpack.c.l.b16 %v354
      %v451 = vunpack.c.l.b16 %v355
      %v452 = vunpack.c.l.b16 %v356
      %v453 = vunpack.c.l.b16 %v357
      %v454 = vunpack.c.l.b16 %v358
      %v455 = vunpack.c.l.b16 %v359
      %v456 = vunpack.c.l.b16 %v360
      %v457 = vunpack.c.l.b16 %v361
      %v458 = vunpack.c.l.b16 %v362
      %v459 = vunpack.c.l.b16 %v363
      %v460 = vunpack.c.l.b16 %v364
      %v461 = vunpack.c.l.b16 %v365
      %v462 = vunpack.c.l.b16 %v366
      %v463 = vunpack.c.l.b16 %v367
      %v464 = vunpack.c.l.b16 %v368
      %v465 = vunpack.c.l.b16 %v369
      %v466 = vpack.c.b16 %v435, %v434
      %v467 = vpack.c.b16 %v437, %v436
      %v468 = vpack.c.b16 %v439, %v438
      %v469 = vpack.c.b16 %v441, %v440
      %v470 = vpack.c.b16 %v443, %v442
      %v471 = vpack.c.b16 %v445, %v444
      %v472 = vpack.c.b16 %v447, %v446
      %v473 = vpack.c.b16 %v449, %v448
      %v474 = vpack.c.b16 %v451, %v450
      %v475 = vpack.c.b16 %v453, %v452
      %v476 = vpack.c.b16 %v455, %v454
      %v477 = vpack.c.b16 %v457, %v456
      %v478 = vpack.c.b16 %v459, %v458
      %v479 = vpack.c.b16 %v461, %v460
      %v480 = vpack.c.b16 %v463, %v462
      %v481 = vpack.c.b16 %v465, %v464
      %498 = vmatprep.subr.bf16.mxu0 0
      %499 = vmatpush1.bf16.msra.mxu0 %v466
      %500 = vmatprep.subr.bf16.mxu0 0
      %501 = vmatpush1.bf16.msra.mxu0 %v467
      %502 = vmatprep.subr.bf16.mxu0 0
      %503 = vmatpush1.bf16.msra.mxu0 %v468
      %504 = vmatprep.subr.bf16.mxu0 0
      %505 = vmatpush1.bf16.msra.mxu0 %v469
      %506 = vmatprep.subr.bf16.mxu0 0
      %507 = vmatpush1.bf16.msra.mxu0 %v470
      %508 = vmatprep.subr.bf16.mxu0 0
      %509 = vmatpush1.bf16.msra.mxu0 %v471
      %510 = vmatprep.subr.bf16.mxu0 0
      %511 = vmatpush1.bf16.msra.mxu0 %v472
      %512 = vmatprep.subr.bf16.mxu0 0
      %513 = vmatpush1.bf16.msra.mxu0 %v473
      %514 = vmatprep.subr.bf16.mxu0 0
      %515 = vmatpush1.bf16.msra.mxu0 %v474
      %516 = vmatprep.subr.bf16.mxu0 0
      %517 = vmatpush1.bf16.msra.mxu0 %v475
      %518 = vmatprep.subr.bf16.mxu0 0
      %519 = vmatpush1.bf16.msra.mxu0 %v476
      %520 = vmatprep.subr.bf16.mxu0 0
      %521 = vmatpush1.bf16.msra.mxu0 %v477
      %522 = vmatprep.subr.bf16.mxu0 0
      %523 = vmatpush1.bf16.msra.mxu0 %v478
      %524 = vmatprep.subr.bf16.mxu0 0
      %525 = vmatpush1.bf16.msra.mxu0 %v479
      %526 = vmatprep.subr.bf16.mxu0 0
      %527 = vmatpush1.bf16.msra.mxu0 %v480
      %528 = vmatprep.subr.bf16.mxu0 0
      %529 = vmatpush1.bf16.msra.mxu0 %v481
      %530 = vmatprep.mubr.bf16.mxu0 %v387
      %531 = vmatmul.mubr.bf16.gmra.mrb[0].mxu0 %v386
      %v532 = vpop.f32.mrb[0].mxu0
      %v533 = vadd.f32 0.0, %v532
      %v534 = vpop.f32.mrb[0].mxu0
      %v535 = vpop.f32.mrb[0].mxu0
      %v536 = vadd.f32 0.0, %v535
      %v537 = vpop.f32.mrb[0].mxu0
      %538 = vmatprep.mubr.bf16.mxu0 %v389
      %539 = vmatmul.mubr.bf16.gmra.mrb[0].mxu0 %v388
      %v540 = vpop.f32.mrb[0].mxu0
      %v541 = vadd.f32 0.0, %v540
      %v542 = vpop.f32.mrb[0].mxu0
      %v543 = vpop.f32.mrb[0].mxu0
      %v544 = vadd.f32 0.0, %v543
      %v545 = vpop.f32.mrb[0].mxu0
      %546 = vmatprep.mubr.bf16.mxu0 %v391
      %547 = vmatmul.mubr.bf16.gmra.mrb[0].mxu0 %v390
      %v548 = vpop.f32.mrb[0].mxu0
      %v549 = vadd.f32 0.0, %v548
      %v550 = vpop.f32.mrb[0].mxu0
      %v551 = vpop.f32.mrb[0].mxu0
      %v552 = vadd.f32 0.0, %v551
      %v553 = vpop.f32.mrb[0].mxu0
      %554 = vmatprep.mubr.bf16.mxu0 %v393
      %555 = vmatmul.mubr.bf16.gmra.mrb[0].mxu0 %v392
      %v556 = vpop.f32.mrb[0].mxu0
      %v557 = vadd.f32 0.0, %v556
      %v558 = vpop.f32.mrb[0].mxu0
      %v559 = vpop.f32.mrb[0].mxu0
      %v560 = vadd.f32 0.0, %v559
      %v561 = vpop.f32.mrb[0].mxu0
      %562 = vdwg.mxu0
      %v571 = vunpack.c.l.b16 %v172
      %v572 = vunpack.c.h.b16 %v172
      %v573 = vunpack.c.l.b16 %v174
      %v574 = vunpack.c.h.b16 %v174
      %v575 = vunpack.c.l.b16 %v176
      %v576 = vunpack.c.h.b16 %v176
      %v577 = vunpack.c.l.b16 %v178
      %v578 = vunpack.c.h.b16 %v178
      %v579 = vunpack.c.l.b16 %v180
      %v580 = vunpack.c.h.b16 %v180
      %v581 = vunpack.c.l.b16 %v182
      %v582 = vunpack.c.h.b16 %v182
      %v583 = vunpack.c.l.b16 %v184
      %v584 = vunpack.c.h.b16 %v184
      %v585 = vunpack.c.l.b16 %v186
      %v586 = vunpack.c.h.b16 %v186
      %v587 = vpack.c.b16 %v573, %v571
      %v588 = vpack.c.b16 %v574, %v572
      %v589 = vpack.c.b16 %v577, %v575
      %v590 = vpack.c.b16 %v578, %v576
      %v591 = vpack.c.b16 %v581, %v579
      %v592 = vpack.c.b16 %v582, %v580
      %v593 = vpack.c.b16 %v585, %v583
      %v594 = vpack.c.b16 %v586, %v584
      %v635 = vunpack.c.l.b16 %v190
      %v636 = vunpack.c.l.b16 %v191
      %v637 = vunpack.c.l.b16 %v192
      %v638 = vunpack.c.l.b16 %v193
      %v639 = vunpack.c.l.b16 %v194
      %v640 = vunpack.c.l.b16 %v195
      %v641 = vunpack.c.l.b16 %v196
      %v642 = vunpack.c.l.b16 %v197
      %v643 = vunpack.c.l.b16 %v198
      %v644 = vunpack.c.l.b16 %v199
      %v645 = vunpack.c.l.b16 %v200
      %v646 = vunpack.c.l.b16 %v201
      %v647 = vunpack.c.l.b16 %v202
      %v648 = vunpack.c.l.b16 %v203
      %v649 = vunpack.c.l.b16 %v204
      %v650 = vunpack.c.l.b16 %v205
      %v651 = vunpack.c.l.b16 %v206
      %v652 = vunpack.c.l.b16 %v207
      %v653 = vunpack.c.l.b16 %v208
      %v654 = vunpack.c.l.b16 %v209
      %v655 = vunpack.c.l.b16 %v210
      %v656 = vunpack.c.l.b16 %v211
      %v657 = vunpack.c.l.b16 %v212
      %v658 = vunpack.c.l.b16 %v213
      %v659 = vunpack.c.l.b16 %v214
      %v660 = vunpack.c.l.b16 %v215
      %v661 = vunpack.c.l.b16 %v216
      %v662 = vunpack.c.l.b16 %v217
      %v663 = vunpack.c.l.b16 %v218
      %v664 = vunpack.c.l.b16 %v219
      %v665 = vunpack.c.l.b16 %v220
      %v666 = vunpack.c.l.b16 %v221
      %v667 = vpack.c.b16 %v636, %v635
      %v668 = vpack.c.b16 %v638, %v637
      %v669 = vpack.c.b16 %v640, %v639
      %v670 = vpack.c.b16 %v642, %v641
      %v671 = vpack.c.b16 %v644, %v643
      %v672 = vpack.c.b16 %v646, %v645
      %v673 = vpack.c.b16 %v648, %v647
      %v674 = vpack.c.b16 %v650, %v649
      %v675 = vpack.c.b16 %v652, %v651
      %v676 = vpack.c.b16 %v654, %v653
      %v677 = vpack.c.b16 %v656, %v655
      %v678 = vpack.c.b16 %v658, %v657
      %v679 = vpack.c.b16 %v660, %v659
      %v680 = vpack.c.b16 %v662, %v661
      %v681 = vpack.c.b16 %v664, %v663
      %v682 = vpack.c.b16 %v666, %v665
      %699 = vmatprep.subr.bf16.mxu0 0
      %700 = vmatpush1.bf16.msra.mxu0 %v667
      %701 = vmatprep.subr.bf16.mxu0 0
      %702 = vmatpush1.bf16.msra.mxu0 %v668
      %703 = vmatprep.subr.bf16.mxu0 0
      %704 = vmatpush1.bf16.msra.mxu0 %v669
      %705 = vmatprep.subr.bf16.mxu0 0
      %706 = vmatpush1.bf16.msra.mxu0 %v670
      %707 = vmatprep.subr.bf16.mxu0 0
      %708 = vmatpush1.bf16.msra.mxu0 %v671
      %709 = vmatprep.subr.bf16.mxu0 0
      %710 = vmatpush1.bf16.msra.mxu0 %v672
      %711 = vmatprep.subr.bf16.mxu0 0
      %712 = vmatpush1.bf16.msra.mxu0 %v673
      %713 = vmatprep.subr.bf16.mxu0 0
      %714 = vmatpush1.bf16.msra.mxu0 %v674
      %715 = vmatprep.subr.bf16.mxu0 0
      %716 = vmatpush1.bf16.msra.mxu0 %v675
      %717 = vmatprep.subr.bf16.mxu0 0
      %718 = vmatpush1.bf16.msra.mxu0 %v676
      %719 = vmatprep.subr.bf16.mxu0 0
      %720 = vmatpush1.bf16.msra.mxu0 %v677
      %721 = vmatprep.subr.bf16.mxu0 0
      %722 = vmatpush1.bf16.msra.mxu0 %v678
      %723 = vmatprep.subr.bf16.mxu0 0
      %724 = vmatpush1.bf16.msra.mxu0 %v679
      %725 = vmatprep.subr.bf16.mxu0 0
      %726 = vmatpush1.bf16.msra.mxu0 %v680
      %727 = vmatprep.subr.bf16.mxu0 0
      %728 = vmatpush1.bf16.msra.mxu0 %v681
      %729 = vmatprep.subr.bf16.mxu0 0
      %730 = vmatpush1.bf16.msra.mxu0 %v682
      %731 = vmatprep.mubr.bf16.mxu0 %v588
      %732 = vmatmul.mubr.bf16.gmra.mrb[0].mxu0 %v587
      %v733 = vpop.f32.mrb[0].mxu0
      %v734 = vadd.f32 %v533, %v733
      %v735 = vpop.f32.mrb[0].mxu0
      %v736 = vpop.f32.mrb[0].mxu0
      %v737 = vadd.f32 %v536, %v736
      %v738 = vpop.f32.mrb[0].mxu0
      %739 = vmatprep.mubr.bf16.mxu0 %v590
      %740 = vmatmul.mubr.bf16.gmra.mrb[0].mxu0 %v589
      %v741 = vpop.f32.mrb[0].mxu0
      %v742 = vadd.f32 %v541, %v741
      %v743 = vpop.f32.mrb[0].mxu0
      %v744 = vpop.f32.mrb[0].mxu0
      %v745 = vadd.f32 %v544, %v744
      %v746 = vpop.f32.mrb[0].mxu0
      %747 = vmatprep.mubr.bf16.mxu0 %v592
      %748 = vmatmul.mubr.bf16.gmra.mrb[0].mxu0 %v591
      %v749 = vpop.f32.mrb[0].mxu0
      %v750 = vadd.f32 %v549, %v749
      %v751 = vpop.f32.mrb[0].mxu0
      %v752 = vpop.f32.mrb[0].mxu0
      %v753 = vadd.f32 %v552, %v752
      %v754 = vpop.f32.mrb[0].mxu0
      %755 = vmatprep.mubr.bf16.mxu0 %v594
      %756 = vmatmul.mubr.bf16.gmra.mrb[0].mxu0 %v593
      %v757 = vpop.f32.mrb[0].mxu0
      %v758 = vadd.f32 %v557, %v757
      %v759 = vpop.f32.mrb[0].mxu0
      %v760 = vpop.f32.mrb[0].mxu0
      %v761 = vadd.f32 %v560, %v760
      %v762 = vpop.f32.mrb[0].mxu0
      %763 = vdwg.mxu0
      %s764 = scalar_lea.vmem %s1, 256
      %v765 = vld [vmem:[%s764] sm:$0xf]
      %v766 = vld [vmem:[%s764 + $0x4] sm:$0xf]
      %v767 = vld [vmem:[%s764 + $0x8] sm:$0xf]
      %v768 = vld [vmem:[%s764 + $0xc] sm:$0xf]
      %v769 = vld [vmem:[%s764 + $0x10] sm:$0xf]
      %v770 = vld [vmem:[%s764 + $0x14] sm:$0xf]
      %v771 = vld [vmem:[%s764 + $0x18] sm:$0xf]
      %v772 = vld [vmem:[%s764 + $0x1c] sm:$0xf]
      %v773 = vld [vmem:[%s764 + $0x20] sm:$0xf]
      %v774 = vld [vmem:[%s764 + $0x24] sm:$0xf]
      %v775 = vld [vmem:[%s764 + $0x28] sm:$0xf]
      %v776 = vld [vmem:[%s764 + $0x2c] sm:$0xf]
      %v777 = vld [vmem:[%s764 + $0x30] sm:$0xf]
      %v778 = vld [vmem:[%s764 + $0x34] sm:$0xf]
      %v779 = vld [vmem:[%s764 + $0x38] sm:$0xf]
      %v780 = vld [vmem:[%s764 + $0x3c] sm:$0xf]
      %v781 = vld [vmem:[%s764 + $0x40] sm:$0xf]
      %v782 = vld [vmem:[%s764 + $0x44] sm:$0xf]
      %v783 = vld [vmem:[%s764 + $0x48] sm:$0xf]
      %v784 = vld [vmem:[%s764 + $0x4c] sm:$0xf]
      %v785 = vld [vmem:[%s764 + $0x50] sm:$0xf]
      %v786 = vld [vmem:[%s764 + $0x54] sm:$0xf]
      %v787 = vld [vmem:[%s764 + $0x58] sm:$0xf]
      %v788 = vld [vmem:[%s764 + $0x5c] sm:$0xf]
      %v789 = vld [vmem:[%s764 + $0x60] sm:$0xf]
      %v790 = vld [vmem:[%s764 + $0x64] sm:$0xf]
      %v791 = vld [vmem:[%s764 + $0x68] sm:$0xf]
      %v792 = vld [vmem:[%s764 + $0x6c] sm:$0xf]
      %v793 = vld [vmem:[%s764 + $0x70] sm:$0xf]
      %v794 = vld [vmem:[%s764 + $0x74] sm:$0xf]
      %v795 = vld [vmem:[%s764 + $0x78] sm:$0xf]
      %v796 = vld [vmem:[%s764 + $0x7c] sm:$0xf]
      %v798 = vunpack.c.l.b16 %v188
      %v799 = vunpack.c.h.b16 %v188
      %v800 = vpack.c.b16 %v575, %v573
      %v801 = vpack.c.b16 %v576, %v574
      %v802 = vpack.c.b16 %v579, %v577
      %v803 = vpack.c.b16 %v580, %v578
      %v804 = vpack.c.b16 %v583, %v581
      %v805 = vpack.c.b16 %v584, %v582
      %v806 = vpack.c.b16 %v798, %v585
      %v807 = vpack.c.b16 %v799, %v586
      %v848 = vunpack.c.l.b16 %v765
      %v849 = vunpack.c.l.b16 %v766
      %v850 = vunpack.c.l.b16 %v767
      %v851 = vunpack.c.l.b16 %v768
      %v852 = vunpack.c.l.b16 %v769
      %v853 = vunpack.c.l.b16 %v770
      %v854 = vunpack.c.l.b16 %v771
      %v855 = vunpack.c.l.b16 %v772
      %v856 = vunpack.c.l.b16 %v773
      %v857 = vunpack.c.l.b16 %v774
      %v858 = vunpack.c.l.b16 %v775
      %v859 = vunpack.c.l.b16 %v776
      %v860 = vunpack.c.l.b16 %v777
      %v861 = vunpack.c.l.b16 %v778
      %v862 = vunpack.c.l.b16 %v779
      %v863 = vunpack.c.l.b16 %v780
      %v864 = vunpack.c.l.b16 %v781
      %v865 = vunpack.c.l.b16 %v782
      %v866 = vunpack.c.l.b16 %v783
      %v867 = vunpack.c.l.b16 %v784
      %v868 = vunpack.c.l.b16 %v785
      %v869 = vunpack.c.l.b16 %v786
      %v870 = vunpack.c.l.b16 %v787
      %v871 = vunpack.c.l.b16 %v788
      %v872 = vunpack.c.l.b16 %v789
      %v873 = vunpack.c.l.b16 %v790
      %v874 = vunpack.c.l.b16 %v791
      %v875 = vunpack.c.l.b16 %v792
      %v876 = vunpack.c.l.b16 %v793
      %v877 = vunpack.c.l.b16 %v794
      %v878 = vunpack.c.l.b16 %v795
      %v879 = vunpack.c.l.b16 %v796
      %v880 = vpack.c.b16 %v849, %v848
      %v881 = vpack.c.b16 %v851, %v850
      %v882 = vpack.c.b16 %v853, %v852
      %v883 = vpack.c.b16 %v855, %v854
      %v884 = vpack.c.b16 %v857, %v856
      %v885 = vpack.c.b16 %v859, %v858
      %v886 = vpack.c.b16 %v861, %v860
      %v887 = vpack.c.b16 %v863, %v862
      %v888 = vpack.c.b16 %v865, %v864
      %v889 = vpack.c.b16 %v867, %v866
      %v890 = vpack.c.b16 %v869, %v868
      %v891 = vpack.c.b16 %v871, %v870
      %v892 = vpack.c.b16 %v873, %v872
      %v893 = vpack.c.b16 %v875, %v874
      %v894 = vpack.c.b16 %v877, %v876
      %v895 = vpack.c.b16 %v879, %v878
      %912 = vmatprep.subr.bf16.mxu0 0
      %913 = vmatpush1.bf16.msra.mxu0 %v880
      %914 = vmatprep.subr.bf16.mxu0 0
      %915 = vmatpush1.bf16.msra.mxu0 %v881
      %916 = vmatprep.subr.bf16.mxu0 0
      %917 = vmatpush1.bf16.msra.mxu0 %v882
      %918 = vmatprep.subr.bf16.mxu0 0
      %919 = vmatpush1.bf16.msra.mxu0 %v883
      %920 = vmatprep.subr.bf16.mxu0 0
      %921 = vmatpush1.bf16.msra.mxu0 %v884
      %922 = vmatprep.subr.bf16.mxu0 0
      %923 = vmatpush1.bf16.msra.mxu0 %v885
      %924 = vmatprep.subr.bf16.mxu0 0
      %925 = vmatpush1.bf16.msra.mxu0 %v886
      %926 = vmatprep.subr.bf16.mxu0 0
      %927 = vmatpush1.bf16.msra.mxu0 %v887
      %928 = vmatprep.subr.bf16.mxu0 0
      %929 = vmatpush1.bf16.msra.mxu0 %v888
      %930 = vmatprep.subr.bf16.mxu0 0
      %931 = vmatpush1.bf16.msra.mxu0 %v889
      %932 = vmatprep.subr.bf16.mxu0 0
      %933 = vmatpush1.bf16.msra.mxu0 %v890
      %934 = vmatprep.subr.bf16.mxu0 0
      %935 = vmatpush1.bf16.msra.mxu0 %v891
      %936 = vmatprep.subr.bf16.mxu0 0
      %937 = vmatpush1.bf16.msra.mxu0 %v892
      %938 = vmatprep.subr.bf16.mxu0 0
      %939 = vmatpush1.bf16.msra.mxu0 %v893
      %940 = vmatprep.subr.bf16.mxu0 0
      %941 = vmatpush1.bf16.msra.mxu0 %v894
      %942 = vmatprep.subr.bf16.mxu0 0
      %943 = vmatpush1.bf16.msra.mxu0 %v895
      %944 = vmatprep.mubr.bf16.mxu0 %v801
      %945 = vmatmul.mubr.bf16.gmra.mrb[0].mxu0 %v800
      %v946 = vpop.f32.mrb[0].mxu0
      %v947 = vadd.f32 0.0, %v946
      %v948 = vpop.f32.mrb[0].mxu0
      %v949 = vpop.f32.mrb[0].mxu0
      %v950 = vadd.f32 0.0, %v949
      %v951 = vpop.f32.mrb[0].mxu0
      %952 = vmatprep.mubr.bf16.mxu0 %v803
      %953 = vmatmul.mubr.bf16.gmra.mrb[0].mxu0 %v802
      %v954 = vpop.f32.mrb[0].mxu0
      %v955 = vadd.f32 0.0, %v954
      %v956 = vpop.f32.mrb[0].mxu0
      %v957 = vpop.f32.mrb[0].mxu0
      %v958 = vadd.f32 0.0, %v957
      %v959 = vpop.f32.mrb[0].mxu0
      %960 = vmatprep.mubr.bf16.mxu0 %v805
      %961 = vmatmul.mubr.bf16.gmra.mrb[0].mxu0 %v804
      %v962 = vpop.f32.mrb[0].mxu0
      %v963 = vadd.f32 0.0, %v962
      %v964 = vpop.f32.mrb[0].mxu0
      %v965 = vpop.f32.mrb[0].mxu0
      %v966 = vadd.f32 0.0, %v965
      %v967 = vpop.f32.mrb[0].mxu0
      %968 = vmatprep.mubr.bf16.mxu0 %v807
      %969 = vmatmul.mubr.bf16.gmra.mrb[0].mxu0 %v806
      %v970 = vpop.f32.mrb[0].mxu0
      %v971 = vadd.f32 0.0, %v970
      %v972 = vpop.f32.mrb[0].mxu0
      %v973 = vpop.f32.mrb[0].mxu0
      %v974 = vadd.f32 0.0, %v973
      %v975 = vpop.f32.mrb[0].mxu0
      %976 = vdwg.mxu0
      %v977 = vadd.f32 %v734, %v947
      %v978 = vadd.f32 %v737, %v950
      %v979 = vadd.f32 %v742, %v955
      %v980 = vadd.f32 %v745, %v958
      %v981 = vadd.f32 %v750, %v963
      %v982 = vadd.f32 %v753, %v966
      %v983 = vadd.f32 %v758, %v971
      %v984 = vadd.f32 %v761, %v974
      %v986 = vshrl.u32 %v188, 16
      %v988 = vrot.slane %v986, 4
      %v989 = vshll.u32 %v188, 16
      %v991 = vrot.slane %v989, 5
      %v992 = vor.u32 %v988, %v991
      %v993 = vrot.slane %v992, 4
      %v995 = vshll.u32 %v189, 16
      %v997 = vrot.slane %v995, 5
      %v998 = vsel %vm224, %v993, %v997
      %s999 = scalar_lea.vmem %s1, 384
      %v1000 = vld [vmem:[%s999] sm:$0xf]
      %v1001 = vld [vmem:[%s999 + $0x4] sm:$0xf]
      %v1002 = vld [vmem:[%s999 + $0x8] sm:$0xf]
      %v1003 = vld [vmem:[%s999 + $0xc] sm:$0xf]
      %v1004 = vld [vmem:[%s999 + $0x10] sm:$0xf]
      %v1005 = vld [vmem:[%s999 + $0x14] sm:$0xf]
      %v1006 = vld [vmem:[%s999 + $0x18] sm:$0xf]
      %v1007 = vld [vmem:[%s999 + $0x1c] sm:$0xf]
      %v1008 = vld [vmem:[%s999 + $0x20] sm:$0xf]
      %v1009 = vld [vmem:[%s999 + $0x24] sm:$0xf]
      %v1010 = vld [vmem:[%s999 + $0x28] sm:$0xf]
      %v1011 = vld [vmem:[%s999 + $0x2c] sm:$0xf]
      %v1012 = vld [vmem:[%s999 + $0x30] sm:$0xf]
      %v1013 = vld [vmem:[%s999 + $0x34] sm:$0xf]
      %v1014 = vld [vmem:[%s999 + $0x38] sm:$0xf]
      %v1015 = vld [vmem:[%s999 + $0x3c] sm:$0xf]
      %v1016 = vld [vmem:[%s999 + $0x40] sm:$0xf]
      %v1017 = vld [vmem:[%s999 + $0x44] sm:$0xf]
      %v1018 = vld [vmem:[%s999 + $0x48] sm:$0xf]
      %v1019 = vld [vmem:[%s999 + $0x4c] sm:$0xf]
      %v1020 = vld [vmem:[%s999 + $0x50] sm:$0xf]
      %v1021 = vld [vmem:[%s999 + $0x54] sm:$0xf]
      %v1022 = vld [vmem:[%s999 + $0x58] sm:$0xf]
      %v1023 = vld [vmem:[%s999 + $0x5c] sm:$0xf]
      %v1024 = vld [vmem:[%s999 + $0x60] sm:$0xf]
      %v1025 = vld [vmem:[%s999 + $0x64] sm:$0xf]
      %v1026 = vld [vmem:[%s999 + $0x68] sm:$0xf]
      %v1027 = vld [vmem:[%s999 + $0x6c] sm:$0xf]
      %v1028 = vld [vmem:[%s999 + $0x70] sm:$0xf]
      %v1029 = vld [vmem:[%s999 + $0x74] sm:$0xf]
      %v1030 = vld [vmem:[%s999 + $0x78] sm:$0xf]
      %v1031 = vld [vmem:[%s999 + $0x7c] sm:$0xf]
      %v1032 = vunpack.c.l.b16 %v998
      %v1033 = vunpack.c.h.b16 %v998
      %v1034 = vpack.c.b16 %v374, %v372
      %v1035 = vpack.c.b16 %v375, %v373
      %v1036 = vpack.c.b16 %v378, %v376
      %v1037 = vpack.c.b16 %v379, %v377
      %v1038 = vpack.c.b16 %v382, %v380
      %v1039 = vpack.c.b16 %v383, %v381
      %v1040 = vpack.c.b16 %v1032, %v384
      %v1041 = vpack.c.b16 %v1033, %v385
      %v1082 = vunpack.c.l.b16 %v1000
      %v1083 = vunpack.c.l.b16 %v1001
      %v1084 = vunpack.c.l.b16 %v1002
      %v1085 = vunpack.c.l.b16 %v1003
      %v1086 = vunpack.c.l.b16 %v1004
      %v1087 = vunpack.c.l.b16 %v1005
      %v1088 = vunpack.c.l.b16 %v1006
      %v1089 = vunpack.c.l.b16 %v1007
      %v1090 = vunpack.c.l.b16 %v1008
      %v1091 = vunpack.c.l.b16 %v1009
      %v1092 = vunpack.c.l.b16 %v1010
      %v1093 = vunpack.c.l.b16 %v1011
      %v1094 = vunpack.c.l.b16 %v1012
      %v1095 = vunpack.c.l.b16 %v1013
      %v1096 = vunpack.c.l.b16 %v1014
      %v1097 = vunpack.c.l.b16 %v1015
      %v1098 = vunpack.c.l.b16 %v1016
      %v1099 = vunpack.c.l.b16 %v1017
      %v1100 = vunpack.c.l.b16 %v1018
      %v1101 = vunpack.c.l.b16 %v1019
      %v1102 = vunpack.c.l.b16 %v1020
      %v1103 = vunpack.c.l.b16 %v1021
      %v1104 = vunpack.c.l.b16 %v1022
      %v1105 = vunpack.c.l.b16 %v1023
      %v1106 = vunpack.c.l.b16 %v1024
      %v1107 = vunpack.c.l.b16 %v1025
      %v1108 = vunpack.c.l.b16 %v1026
      %v1109 = vunpack.c.l.b16 %v1027
      %v1110 = vunpack.c.l.b16 %v1028
      %v1111 = vunpack.c.l.b16 %v1029
      %v1112 = vunpack.c.l.b16 %v1030
      %v1113 = vunpack.c.l.b16 %v1031
      %v1114 = vpack.c.b16 %v1083, %v1082
      %v1115 = vpack.c.b16 %v1085, %v1084
      %v1116 = vpack.c.b16 %v1087, %v1086
      %v1117 = vpack.c.b16 %v1089, %v1088
      %v1118 = vpack.c.b16 %v1091, %v1090
      %v1119 = vpack.c.b16 %v1093, %v1092
      %v1120 = vpack.c.b16 %v1095, %v1094
      %v1121 = vpack.c.b16 %v1097, %v1096
      %v1122 = vpack.c.b16 %v1099, %v1098
      %v1123 = vpack.c.b16 %v1101, %v1100
      %v1124 = vpack.c.b16 %v1103, %v1102
      %v1125 = vpack.c.b16 %v1105, %v1104
      %v1126 = vpack.c.b16 %v1107, %v1106
      %v1127 = vpack.c.b16 %v1109, %v1108
      %v1128 = vpack.c.b16 %v1111, %v1110
      %v1129 = vpack.c.b16 %v1113, %v1112
      %1146 = vmatprep.subr.bf16.mxu0 0
      %1147 = vmatpush1.bf16.msra.mxu0 %v1114
      %1148 = vmatprep.subr.bf16.mxu0 0
      %1149 = vmatpush1.bf16.msra.mxu0 %v1115
      %1150 = vmatprep.subr.bf16.mxu0 0
      %1151 = vmatpush1.bf16.msra.mxu0 %v1116
      %1152 = vmatprep.subr.bf16.mxu0 0
      %1153 = vmatpush1.bf16.msra.mxu0 %v1117
      %1154 = vmatprep.subr.bf16.mxu0 0
      %1155 = vmatpush1.bf16.msra.mxu0 %v1118
      %1156 = vmatprep.subr.bf16.mxu0 0
      %1157 = vmatpush1.bf16.msra.mxu0 %v1119
      %1158 = vmatprep.subr.bf16.mxu0 0
      %1159 = vmatpush1.bf16.msra.mxu0 %v1120
      %1160 = vmatprep.subr.bf16.mxu0 0
      %1161 = vmatpush1.bf16.msra.mxu0 %v1121
      %1162 = vmatprep.subr.bf16.mxu0 0
      %1163 = vmatpush1.bf16.msra.mxu0 %v1122
      %1164 = vmatprep.subr.bf16.mxu0 0
      %1165 = vmatpush1.bf16.msra.mxu0 %v1123
      %1166 = vmatprep.subr.bf16.mxu0 0
      %1167 = vmatpush1.bf16.msra.mxu0 %v1124
      %1168 = vmatprep.subr.bf16.mxu0 0
      %1169 = vmatpush1.bf16.msra.mxu0 %v1125
      %1170 = vmatprep.subr.bf16.mxu0 0
      %1171 = vmatpush1.bf16.msra.mxu0 %v1126
      %1172 = vmatprep.subr.bf16.mxu0 0
      %1173 = vmatpush1.bf16.msra.mxu0 %v1127
      %1174 = vmatprep.subr.bf16.mxu0 0
      %1175 = vmatpush1.bf16.msra.mxu0 %v1128
      %1176 = vmatprep.subr.bf16.mxu0 0
      %1177 = vmatpush1.bf16.msra.mxu0 %v1129
      %1178 = vmatprep.mubr.bf16.mxu0 %v1035
      %1179 = vmatmul.mubr.bf16.gmra.mrb[0].mxu0 %v1034
      %v1180 = vpop.f32.mrb[0].mxu0
      %v1181 = vadd.f32 0.0, %v1180
      %v1182 = vpop.f32.mrb[0].mxu0
      %v1183 = vpop.f32.mrb[0].mxu0
      %v1184 = vadd.f32 0.0, %v1183
      %v1185 = vpop.f32.mrb[0].mxu0
      %1186 = vmatprep.mubr.bf16.mxu0 %v1037
      %1187 = vmatmul.mubr.bf16.gmra.mrb[0].mxu0 %v1036
      %v1188 = vpop.f32.mrb[0].mxu0
      %v1189 = vadd.f32 0.0, %v1188
      %v1190 = vpop.f32.mrb[0].mxu0
      %v1191 = vpop.f32.mrb[0].mxu0
      %v1192 = vadd.f32 0.0, %v1191
      %v1193 = vpop.f32.mrb[0].mxu0
      %1194 = vmatprep.mubr.bf16.mxu0 %v1039
      %1195 = vmatmul.mubr.bf16.gmra.mrb[0].mxu0 %v1038
      %v1196 = vpop.f32.mrb[0].mxu0
      %v1197 = vadd.f32 0.0, %v1196
      %v1198 = vpop.f32.mrb[0].mxu0
      %v1199 = vpop.f32.mrb[0].mxu0
      %v1200 = vadd.f32 0.0, %v1199
      %v1201 = vpop.f32.mrb[0].mxu0
      %1202 = vmatprep.mubr.bf16.mxu0 %v1041
      %1203 = vmatmul.mubr.bf16.gmra.mrb[0].mxu0 %v1040
      %v1204 = vpop.f32.mrb[0].mxu0
      %v1205 = vadd.f32 0.0, %v1204
      %v1206 = vpop.f32.mrb[0].mxu0
      %v1207 = vpop.f32.mrb[0].mxu0
      %v1208 = vadd.f32 0.0, %v1207
      %v1209 = vpop.f32.mrb[0].mxu0
      %1210 = vdwg.mxu0
      %v1211 = vadd.f32 %v977, %v1181
      %v1212 = vadd.f32 %v978, %v1184
      %v1213 = vadd.f32 %v979, %v1189
      %v1214 = vadd.f32 %v980, %v1192
      %v1215 = vadd.f32 %v981, %v1197
      %v1216 = vadd.f32 %v982, %v1200
      %v1217 = vadd.f32 %v983, %v1205
      %v1218 = vadd.f32 %v984, %v1208
      %v1219 = vld [vmem:[%s2] sm:$0x1]
      %v1221 = vlaneseq
      %v1222 = vshrl.u32 %v1221, 7
      %v1223 = vsub.s32 0, %v1222
      %v1224 = vrot.slane %v1219, %v1223
      %v1226 = vadd.f32 %v1211, %v1224
      %v1227 = vadd.f32 %v1212, %v1224
      %v1228 = vadd.f32 %v1213, %v1224
      %v1229 = vadd.f32 %v1214, %v1224
      %v1230 = vadd.f32 %v1215, %v1224
      %v1231 = vadd.f32 %v1216, %v1224
      %v1232 = vadd.f32 %v1217, %v1224
      %v1233 = vadd.f32 %v1218, %v1224
      %v1234 = vmax.f32 %v1226, 0.0
      %v1235 = vmax.f32 %v1227, 0.0
      %v1236 = vmax.f32 %v1228, 0.0
      %v1237 = vmax.f32 %v1229, 0.0
      %v1238 = vmax.f32 %v1230, 0.0
      %v1239 = vmax.f32 %v1231, 0.0
      %v1240 = vmax.f32 %v1232, 0.0
      %v1241 = vmax.f32 %v1233, 0.0
      %v1242 = vpack.c.bf16 %v1235, %v1234
      %v1243 = vpack.c.bf16 %v1237, %v1236
      %v1244 = vpack.c.bf16 %v1239, %v1238
      %v1245 = vpack.c.bf16 %v1241, %v1240
      %v1250 = vunpack.c.l.b16 %v1242
      %v1251 = vunpack.c.h.b16 %v1242
      %v1252 = vunpack.c.l.b16 %v1243
      %v1253 = vunpack.c.h.b16 %v1243
      %v1254 = vunpack.c.l.b16 %v1244
      %v1255 = vunpack.c.h.b16 %v1244
      %v1256 = vunpack.c.l.b16 %v1245
      %v1257 = vunpack.c.h.b16 %v1245
      %v1258 = vpack.c.b16 %v1250, %v1250
      %v1259 = vpack.c.b16 %v1251, %v1251
      %v1260 = vpack.c.b16 %v1252, %v1252
      %v1261 = vpack.c.b16 %v1253, %v1253
      %v1262 = vpack.c.b16 %v1254, %v1254
      %v1263 = vpack.c.b16 %v1255, %v1255
      %v1264 = vpack.c.b16 %v1256, %v1256
      %v1265 = vpack.c.b16 %v1257, %v1257
      %1274 = vst [vmem:[%s170] sm:$0xf] %v1258
      %1275 = vst [vmem:[%s170 + $0x4] sm:$0xf] %v1259
      %1276 = vst [vmem:[%s170 + $0x8] sm:$0xf] %v1260
      %1277 = vst [vmem:[%s170 + $0xc] sm:$0xf] %v1261
      %1278 = vst [vmem:[%s170 + $0x10] sm:$0xf] %v1262
      %1279 = vst [vmem:[%s170 + $0x14] sm:$0xf] %v1263
      %1280 = vst [vmem:[%s170 + $0x18] sm:$0xf] %v1264
      %1281 = vst [vmem:[%s170 + $0x1c] sm:$0xf] %v1265
      %p1282 = scmp.lt.s32.totalorder %s14, 1
      %s1283 = scalar_select %p1282, %s14, 1
      %s1284 = smul.addr %s1283, 8
      %s1285 = smul.addr %s1284, 4
      %s1286 = scalar_lea.vmem %s3, %s1285
      // Predicated region
      $region33: #{encoder_forward.6} parent=31 // pred_check
        %p1287 = pneg %p100
      $region34: #{encoder_forward.6} parent=31 // pred_check_branch
        %1289 = sbr.rel (%p1287) target = $region36
      $region35: #{encoder_forward.6} parent=31 // pred_region
        _
      $region36: #{encoder_forward.6} parent=31 // pred_fallthru
        _
    $region32: #{encoder_forward.6} parent=5 // pred_fallthru
      _
    %p1290 = scmp.le.s32.totalorder 2, %s9
    // Predicated region
    $region37: #{encoder_forward.6} parent=5 // pred_check
      %p1291 = pneg %p1290
    $region38: #{encoder_forward.6} parent=5 // pred_check_branch
      %1293 = sbr.rel (%p1291) target = $region40
    $region39: #{encoder_forward.6} parent=5 // pred_region
      %s1294 = ssub.s32 %s9, 2
      // Predicated region
      $region41: #{encoder_forward.6} parent=39 // pred_check
        %p1295 = pneg %p106
      $region42: #{encoder_forward.6} parent=39 // pred_check_branch
        %1297 = sbr.rel (%p1295) target = $region44
      $region43: #{encoder_forward.6} parent=39 // pred_region
        %p1298 = scmp.lt.s32.totalorder %s15, 1
        %s1299 = scalar_select %p1298, %s15, 1
        %s1300 = smul.addr %s1299, 8
        %s1301 = smul.addr %s1300, 4
        %s1302 = scalar_lea.vmem %s3, %s1301
      $region44: #{encoder_forward.6} parent=39 // pred_fallthru
        _
    $region40: #{encoder_forward.6} parent=5 // pred_fallthru
      _
  $region6: #{encoder_forward.6} parent=0 // loop_footer
    %s13 = sadd.s32 1, %s9
  $region7: #{encoder_forward.6} parent=0 // loop_footer_branch
    %8 = sbr.rel target = $region3
  $region8: #{encoder_forward.6} parent=0 // loop_exit
    _

// kernel: encoder_forward.7
$region0: #{encoder_forward.7}
  #allocation0 [shape = 'u32[]', space=smem, size = 0x4, offset = 0x4, fixed_abs, tag = 'smem constant byte address 0x4 - core index']
  #allocation1 [shape = 'u32[144,128]{1,0:T(1,128)}', space=vmem, size = 0x12000, scoped, tag = 'internal scratch']
  %s0 = inlined_call_operand.vmem [shape: bf16[2,8192], index: 0, kind: input, shape index: {}]
  %s1 = inlined_call_operand.vmem [shape: bf16[8192,128], index: 1, kind: input, shape index: {}]
  %s2 = inlined_call_operand.vmem [shape: f32[1,128], index: 2, kind: input, shape index: {}]
  %s3 = inlined_call_operand.vmem [shape: f32[2,2,128], index: 3, kind: output, shape index: {}]
  %s4 = sld [smem:[#allocation0]]
  $region45: #{encoder_forward.7} parent=0
    _
  %s6 = ssub.s32 1, %s4
  %s7 = scalar_select 0, %s6, %s4
  loop: start=0, step=1, limit=4
  $region2: #{encoder_forward.7} parent=0 // loop_pre_header
    _
  $region3: #{encoder_forward.7} parent=0 // loop_header
    %s9 = sphi 0, %s13
    %p10 = scmp.ge.s32.totalorder %s9, 4
    %s19 = sphi 0, %s21
    %s22 = sphi 0, %s19
    %s23 = sphi 0, %s22
    %s39 = sphi 0, %s23
    %s45 = sphi 0, %s47
    %s48 = sphi 0, %s45
    %s49 = sphi 0, %s48
    %s65 = sphi 0, %s49
    %s69 = sphi 0, %s69
    %s71 = sphi 0, %s69
    %s72 = sphi 0, %s71
    %s86 = sphi 0, %s72
    %s92 = sphi 0, %s94
    %s95 = sphi 0, %s92
    %s96 = sphi 0, %s95
    %s112 = sphi 0, %s96
  $region4: #{encoder_forward.7} parent=0 // loop_header_branch
    %12 = sbr.rel (%p10) target = $region8
  $region5: #{encoder_forward.7} parent=0 // loop_body
    %s14 = ssub.s32 %s9, 1
    %s15 = ssub.s32 %s9, 2
    %s16 = sadd.s32 %s9, 1
    %s17 = ssub.s32 %s9, %s16
    %p18 = scmp.eq.s32.totalorder %s17, 0
    %s20 = sadd.s32 %s19, 1
    %s21 = scalar_select %p18, %s19, %s20
    %p24 = pneg %p18
    %p25 = scmp.eq.s32.totalorder %s9, 1
    %p26 = por %p24, %p25
    %p27 = scmp.ne.s32.totalorder %s19, %s22
    %p28 = scmp.eq.s32.totalorder %s9, 0
    %p29 = por %p27, %p28
    %p30 = scmp.ne.s32.totalorder %s19, %s22
    %p31 = scmp.eq.s32.totalorder %s14, 1
    %p32 = por %p30, %p31
    %p33 = scmp.ne.s32.totalorder %s22, %s23
    %p34 = scmp.eq.s32.totalorder %s14, 0
    %p35 = por %p33, %p34
    %p36 = scmp.ne.s32.totalorder %s22, %s23
    %p37 = scmp.eq.s32.totalorder %s15, 1
    %p38 = por %p36, %p37
    %p40 = scmp.ne.s32.totalorder %s23, %s39
    %p41 = scmp.eq.s32.totalorder %s15, 0
    %p42 = por %p40, %p41
    %s43 = ssub.s32 %s9, %s16
    %p44 = scmp.eq.s32.totalorder %s43, 0
    %s46 = sadd.s32 %s45, 1
    %s47 = scalar_select %p44, %s45, %s46
    %p50 = pneg %p44
    %p51 = scmp.eq.s32.totalorder %s9, 1
    %p52 = por %p50, %p51
    %p53 = scmp.ne.s32.totalorder %s45, %s48
    %p54 = scmp.eq.s32.totalorder %s9, 0
    %p55 = por %p53, %p54
    %p56 = scmp.ne.s32.totalorder %s45, %s48
    %p57 = scmp.eq.s32.totalorder %s14, 1
    %p58 = por %p56, %p57
    %p59 = scmp.ne.s32.totalorder %s48, %s49
    %p60 = scmp.eq.s32.totalorder %s14, 0
    %p61 = por %p59, %p60
    %p62 = scmp.ne.s32.totalorder %s48, %s49
    %p63 = scmp.eq.s32.totalorder %s15, 1
    %p64 = por %p62, %p63
    %p66 = scmp.ne.s32.totalorder %s49, %s65
    %p67 = scmp.eq.s32.totalorder %s15, 0
    %p68 = por %p66, %p67
    %s70 = sadd.s32 %s69, 1
    %p73 = scmp.eq.s32.totalorder %s9, 1
    %p74 = scmp.ne.s32.totalorder %s69, %s71
    %p75 = scmp.eq.s32.totalorder %s9, 0
    %p76 = por %p74, %p75
    %p77 = scmp.ne.s32.totalorder %s69, %s71
    %p78 = scmp.eq.s32.totalorder %s14, 1
    %p79 = por %p77, %p78
    %p80 = scmp.ne.s32.totalorder %s71, %s72
    %p81 = scmp.eq.s32.totalorder %s14, 0
    %p82 = por %p80, %p81
    %p83 = scmp.ne.s32.totalorder %s71, %s72
    %p84 = scmp.eq.s32.totalorder %s15, 1
    %p85 = por %p83, %p84
    %p87 = scmp.ne.s32.totalorder %s72, %s86
    %p88 = scmp.eq.s32.totalorder %s15, 0
    %p89 = por %p87, %p88
    %s90 = ssub.s32 %s9, %s16
    %p91 = scmp.eq.s32.totalorder %s90, 0
    %s93 = sadd.s32 %s92, 1
    %s94 = scalar_select %p91, %s92, %s93
    %p97 = pneg %p91
    %p98 = scmp.eq.s32.totalorder %s9, 1
    %p99 = por %p97, %p98
    %p100 = scmp.ne.s32.totalorder %s92, %s95
    %p101 = scmp.eq.s32.totalorder %s9, 0
    %p102 = por %p100, %p101
    %p103 = scmp.ne.s32.totalorder %s92, %s95
    %p104 = scmp.eq.s32.totalorder %s14, 1
    %p105 = por %p103, %p104
    %p106 = scmp.ne.s32.totalorder %s95, %s96
    %p107 = scmp.eq.s32.totalorder %s14, 0
    %p108 = por %p106, %p107
    %p109 = scmp.ne.s32.totalorder %s95, %s96
    %p110 = scmp.eq.s32.totalorder %s15, 1
    %p111 = por %p109, %p110
    %p113 = scmp.ne.s32.totalorder %s96, %s112
    %p114 = scmp.eq.s32.totalorder %s15, 0
    %p115 = por %p113, %p114
    %p116 = scmp.le.s32.totalorder 1, %s9
    %p117 = scmp.lt.s32.totalorder %s9, 3
    %p118 = pnand %p116, %p117
    %p119 = pneg %p118
    // Predicated region
    $region9: #{encoder_forward.7} parent=5 // pred_check
      _
    $region10: #{encoder_forward.7} parent=5 // pred_check_branch
      %121 = sbr.rel (%p118) target = $region12
    $region11: #{encoder_forward.7} parent=5 // pred_region
      %s122 = ssub.s32 %s9, 1
      // Predicated region
      $region13: #{encoder_forward.7} parent=11 // pred_check
        %p123 = pneg %p82
      $region14: #{encoder_forward.7} parent=11 // pred_check_branch
        %125 = sbr.rel (%p123) target = $region16
      $region15: #{encoder_forward.7} parent=11 // pred_region
        _
      $region16: #{encoder_forward.7} parent=11 // pred_fallthru
        _
    $region12: #{encoder_forward.7} parent=5 // pred_fallthru
      _
    %p126 = scmp.lt.s32.totalorder %s9, 2
    // Predicated region
    $region17: #{encoder_forward.7} parent=5 // pred_check
      %p127 = pneg %p126
    $region18: #{encoder_forward.7} parent=5 // pred_check_branch
      %129 = sbr.rel (%p127) target = $region20
    $region19: #{encoder_forward.7} parent=5 // pred_region
      // Predicated region
      $region21: #{encoder_forward.7} parent=19 // pred_check
        %p130 = pneg %p29
      $region22: #{encoder_forward.7} parent=19 // pred_check_branch
        %132 = sbr.rel (%p130) target = $region24
      $region23: #{encoder_forward.7} parent=19 // pred_region
        %s133 = smul.u32 32, %s9
        %p134 = scmp.lt.s32.totalorder %s133, 63
        %s135 = scalar_select %p134, %s133, 63
        %s136 = scalar_lea.vmem %s0, %s135
        %s137 = smul.u32 32, %s9
      $region24: #{encoder_forward.7} parent=19 // pred_fallthru
        _
      // Predicated region
      $region25: #{encoder_forward.7} parent=19 // pred_check
        %p138 = pneg %p55
      $region26: #{encoder_forward.7} parent=19 // pred_check_branch
        %140 = sbr.rel (%p138) target = $region28
      $region27: #{encoder_forward.7} parent=19 // pred_region
        %s141 = smul.u32 512, %s9
        %p142 = scmp.lt.s32.totalorder %s141, 1023
        %s143 = scalar_select %p142, %s141, 1023
        %s144 = smul.addr %s143, 4
        %s145 = scalar_lea.vmem %s1, %s144
        %s146 = smul.u32 512, %s9
      $region28: #{encoder_forward.7} parent=19 // pred_fallthru
        _
    $region20: #{encoder_forward.7} parent=5 // pred_fallthru
      _
    %p147 = scmp.le.s32.totalorder 1, %s9
    %p148 = scmp.lt.s32.totalorder %s9, 3
    %p149 = pnand %p147, %p148
    %p150 = pneg %p149
    // Predicated region
    $region29: #{encoder_forward.7} parent=5 // pred_check
      _
    $region30: #{encoder_forward.7} parent=5 // pred_check_branch
      %152 = sbr.rel (%p149) target = $region32
    $region31: #{encoder_forward.7} parent=5 // pred_region
      %s153 = ssub.s32 %s9, 1
      %s154 = smul.u32 32, %s14
      %p155 = scmp.lt.s32.totalorder %s154, 63
      %s156 = scalar_select %p155, %s154, 63
      %s157 = scalar_lea.vmem %s0, %s156
      %p158 = pneg %p35
      %p159 = pneg %p32
      %s160 = smul.u32 512, %s14
      %p161 = scmp.lt.s32.totalorder %s160, 1023
      %s162 = scalar_select %p161, %s160, 1023
      %s163 = smul.addr %s162, 4
      %s164 = scalar_lea.vmem %s1, %s163
      %p165 = pneg %p61
      %p166 = pneg %p58
      %p167 = pneg %p82
      %p168 = pneg %p79
      %p169 = pneg %p108
      %p170 = pneg %p105
      %p171 = scmp.lt.s32.totalorder %s14, 1
      %s172 = scalar_select %p171, %s14, 1
      %s173 = smul.addr %s172, 2
      %s174 = scalar_lea.vmem %s3, %s173
      %s175 = smul.u32 32, %s14
      %p176 = scmp.lt.s32.totalorder %s175, 63
      %s177 = scalar_select %p176, %s175, 63
      %s178 = scalar_lea.vmem %s0, %s177
      %s179 = smul.u32 32, %s14
      %s180 = smul.u32 512, %s14
      %p181 = scmp.lt.s32.totalorder %s180, 1023
      %s182 = scalar_select %p181, %s180, 1023
      %s183 = smul.addr %s182, 4
      %s184 = scalar_lea.vmem %s1, %s183
      %s185 = smul.u32 512, %s14
      %p186 = scmp.lt.s32.totalorder %s14, 1
      %s187 = scalar_select %p186, %s14, 1
      %s188 = smul.addr %s187, 2
      %s189 = scalar_lea.vmem %s3, %s188
      %v191 = vld [vmem:[%s178] sm:$0xff]
      %v192 = vld [vmem:[%s178 + $0x8] sm:$0xff]
      %v193 = vld [vmem:[%s178 + $0x10] sm:$0xff]
      %v194 = vld [vmem:[%s178 + $0x18] sm:$0xff]
      %v195 = vld [vmem:[%s184] sm:$0xf]
      %v196 = vld [vmem:[%s184 + $0x4] sm:$0xf]
      %v197 = vld [vmem:[%s184 + $0x8] sm:$0xf]
      %v198 = vld [vmem:[%s184 + $0xc] sm:$0xf]
      %v199 = vld [vmem:[%s184 + $0x10] sm:$0xf]
      %v200 = vld [vmem:[%s184 + $0x14] sm:$0xf]
      %v201 = vld [vmem:[%s184 + $0x18] sm:$0xf]
      %v202 = vld [vmem:[%s184 + $0x1c] sm:$0xf]
      %v203 = vld [vmem:[%s184 + $0x20] sm:$0xf]
      %v204 = vld [vmem:[%s184 + $0x24] sm:$0xf]
      %v205 = vld [vmem:[%s184 + $0x28] sm:$0xf]
      %v206 = vld [vmem:[%s184 + $0x2c] sm:$0xf]
      %v207 = vld [vmem:[%s184 + $0x30] sm:$0xf]
      %v208 = vld [vmem:[%s184 + $0x34] sm:$0xf]
      %v209 = vld [vmem:[%s184 + $0x38] sm:$0xf]
      %v210 = vld [vmem:[%s184 + $0x3c] sm:$0xf]
      %v211 = vld [vmem:[%s184 + $0x40] sm:$0xf]
      %v212 = vld [vmem:[%s184 + $0x44] sm:$0xf]
      %v213 = vld [vmem:[%s184 + $0x48] sm:$0xf]
      %v214 = vld [vmem:[%s184 + $0x4c] sm:$0xf]
      %v215 = vld [vmem:[%s184 + $0x50] sm:$0xf]
      %v216 = vld [vmem:[%s184 + $0x54] sm:$0xf]
      %v217 = vld [vmem:[%s184 + $0x58] sm:$0xf]
      %v218 = vld [vmem:[%s184 + $0x5c] sm:$0xf]
      %v219 = vld [vmem:[%s184 + $0x60] sm:$0xf]
      %v220 = vld [vmem:[%s184 + $0x64] sm:$0xf]
      %v221 = vld [vmem:[%s184 + $0x68] sm:$0xf]
      %v222 = vld [vmem:[%s184 + $0x6c] sm:$0xf]
      %v223 = vld [vmem:[%s184 + $0x70] sm:$0xf]
      %v224 = vld [vmem:[%s184 + $0x74] sm:$0xf]
      %v225 = vld [vmem:[%s184 + $0x78] sm:$0xf]
      %v226 = vld [vmem:[%s184 + $0x7c] sm:$0xf]
      %v227 = vld [vmem:[%s184 + $0x80] sm:$0xf]
      %v228 = vld [vmem:[%s184 + $0x84] sm:$0xf]
      %v229 = vld [vmem:[%s184 + $0x88] sm:$0xf]
      %v230 = vld [vmem:[%s184 + $0x8c] sm:$0xf]
      %v231 = vld [vmem:[%s184 + $0x90] sm:$0xf]
      %v232 = vld [vmem:[%s184 + $0x94] sm:$0xf]
      %v233 = vld [vmem:[%s184 + $0x98] sm:$0xf]
      %v234 = vld [vmem:[%s184 + $0x9c] sm:$0xf]
      %v235 = vld [vmem:[%s184 + $0xa0] sm:$0xf]
      %v236 = vld [vmem:[%s184 + $0xa4] sm:$0xf]
      %v237 = vld [vmem:[%s184 + $0xa8] sm:$0xf]
      %v238 = vld [vmem:[%s184 + $0xac] sm:$0xf]
      %v239 = vld [vmem:[%s184 + $0xb0] sm:$0xf]
      %v240 = vld [vmem:[%s184 + $0xb4] sm:$0xf]
      %v241 = vld [vmem:[%s184 + $0xb8] sm:$0xf]
      %v242 = vld [vmem:[%s184 + $0xbc] sm:$0xf]
      %v243 = vld [vmem:[%s184 + $0xc0] sm:$0xf]
      %v244 = vld [vmem:[%s184 + $0xc4] sm:$0xf]
      %v245 = vld [vmem:[%s184 + $0xc8] sm:$0xf]
      %v246 = vld [vmem:[%s184 + $0xcc] sm:$0xf]
      %v247 = vld [vmem:[%s184 + $0xd0] sm:$0xf]
      %v248 = vld [vmem:[%s184 + $0xd4] sm:$0xf]
      %v249 = vld [vmem:[%s184 + $0xd8] sm:$0xf]
      %v250 = vld [vmem:[%s184 + $0xdc] sm:$0xf]
      %v251 = vld [vmem:[%s184 + $0xe0] sm:$0xf]
      %v252 = vld [vmem:[%s184 + $0xe4] sm:$0xf]
      %v253 = vld [vmem:[%s184 + $0xe8] sm:$0xf]
      %v254 = vld [vmem:[%s184 + $0xec] sm:$0xf]
      %v255 = vld [vmem:[%s184 + $0xf0] sm:$0xf]
      %v256 = vld [vmem:[%s184 + $0xf4] sm:$0xf]
      %v257 = vld [vmem:[%s184 + $0xf8] sm:$0xf]
      %v258 = vld [vmem:[%s184 + $0xfc] sm:$0xf]
      %v259 = vld [vmem:[%s184 + $0x100] sm:$0xf]
      %v260 = vld [vmem:[%s184 + $0x104] sm:$0xf]
      %v261 = vld [vmem:[%s184 + $0x108] sm:$0xf]
      %v262 = vld [vmem:[%s184 + $0x10c] sm:$0xf]
      %v263 = vld [vmem:[%s184 + $0x110] sm:$0xf]
      %v264 = vld [vmem:[%s184 + $0x114] sm:$0xf]
      %v265 = vld [vmem:[%s184 + $0x118] sm:$0xf]
      %v266 = vld [vmem:[%s184 + $0x11c] sm:$0xf]
      %v267 = vld [vmem:[%s184 + $0x120] sm:$0xf]
      %v268 = vld [vmem:[%s184 + $0x124] sm:$0xf]
      %v269 = vld [vmem:[%s184 + $0x128] sm:$0xf]
      %v270 = vld [vmem:[%s184 + $0x12c] sm:$0xf]
      %v271 = vld [vmem:[%s184 + $0x130] sm:$0xf]
      %v272 = vld [vmem:[%s184 + $0x134] sm:$0xf]
      %v273 = vld [vmem:[%s184 + $0x138] sm:$0xf]
      %v274 = vld [vmem:[%s184 + $0x13c] sm:$0xf]
      %v275 = vld [vmem:[%s184 + $0x140] sm:$0xf]
      %v276 = vld [vmem:[%s184 + $0x144] sm:$0xf]
      %v277 = vld [vmem:[%s184 + $0x148] sm:$0xf]
      %v278 = vld [vmem:[%s184 + $0x14c] sm:$0xf]
      %v279 = vld [vmem:[%s184 + $0x150] sm:$0xf]
      %v280 = vld [vmem:[%s184 + $0x154] sm:$0xf]
      %v281 = vld [vmem:[%s184 + $0x158] sm:$0xf]
      %v282 = vld [vmem:[%s184 + $0x15c] sm:$0xf]
      %v283 = vld [vmem:[%s184 + $0x160] sm:$0xf]
      %v284 = vld [vmem:[%s184 + $0x164] sm:$0xf]
      %v285 = vld [vmem:[%s184 + $0x168] sm:$0xf]
      %v286 = vld [vmem:[%s184 + $0x16c] sm:$0xf]
      %v287 = vld [vmem:[%s184 + $0x170] sm:$0xf]
      %v288 = vld [vmem:[%s184 + $0x174] sm:$0xf]
      %v289 = vld [vmem:[%s184 + $0x178] sm:$0xf]
      %v290 = vld [vmem:[%s184 + $0x17c] sm:$0xf]
      %v291 = vld [vmem:[%s184 + $0x180] sm:$0xf]
      %v292 = vld [vmem:[%s184 + $0x184] sm:$0xf]
      %v293 = vld [vmem:[%s184 + $0x188] sm:$0xf]
      %v294 = vld [vmem:[%s184 + $0x18c] sm:$0xf]
      %v295 = vld [vmem:[%s184 + $0x190] sm:$0xf]
      %v296 = vld [vmem:[%s184 + $0x194] sm:$0xf]
      %v297 = vld [vmem:[%s184 + $0x198] sm:$0xf]
      %v298 = vld [vmem:[%s184 + $0x19c] sm:$0xf]
      %v299 = vld [vmem:[%s184 + $0x1a0] sm:$0xf]
      %v300 = vld [vmem:[%s184 + $0x1a4] sm:$0xf]
      %v301 = vld [vmem:[%s184 + $0x1a8] sm:$0xf]
      %v302 = vld [vmem:[%s184 + $0x1ac] sm:$0xf]
      %v303 = vld [vmem:[%s184 + $0x1b0] sm:$0xf]
      %v304 = vld [vmem:[%s184 + $0x1b4] sm:$0xf]
      %v305 = vld [vmem:[%s184 + $0x1b8] sm:$0xf]
      %v306 = vld [vmem:[%s184 + $0x1bc] sm:$0xf]
      %v307 = vld [vmem:[%s184 + $0x1c0] sm:$0xf]
      %v308 = vld [vmem:[%s184 + $0x1c4] sm:$0xf]
      %v309 = vld [vmem:[%s184 + $0x1c8] sm:$0xf]
      %v310 = vld [vmem:[%s184 + $0x1cc] sm:$0xf]
      %v311 = vld [vmem:[%s184 + $0x1d0] sm:$0xf]
      %v312 = vld [vmem:[%s184 + $0x1d4] sm:$0xf]
      %v313 = vld [vmem:[%s184 + $0x1d8] sm:$0xf]
      %v314 = vld [vmem:[%s184 + $0x1dc] sm:$0xf]
      %v315 = vld [vmem:[%s184 + $0x1e0] sm:$0xf]
      %v316 = vld [vmem:[%s184 + $0x1e4] sm:$0xf]
      %v317 = vld [vmem:[%s184 + $0x1e8] sm:$0xf]
      %v318 = vld [vmem:[%s184 + $0x1ec] sm:$0xf]
      %v319 = vld [vmem:[%s184 + $0x1f0] sm:$0xf]
      %v320 = vld [vmem:[%s184 + $0x1f4] sm:$0xf]
      %v321 = vld [vmem:[%s184 + $0x1f8] sm:$0xf]
      %v322 = vld [vmem:[%s184 + $0x1fc] sm:$0xf]
      %v323 = vld [vmem:[%s184 + $0x200] sm:$0xf]
      %v324 = vld [vmem:[%s184 + $0x204] sm:$0xf]
      %v325 = vld [vmem:[%s184 + $0x208] sm:$0xf]
      %v326 = vld [vmem:[%s184 + $0x20c] sm:$0xf]
      %v327 = vld [vmem:[%s184 + $0x210] sm:$0xf]
      %v328 = vld [vmem:[%s184 + $0x214] sm:$0xf]
      %v329 = vld [vmem:[%s184 + $0x218] sm:$0xf]
      %v330 = vld [vmem:[%s184 + $0x21c] sm:$0xf]
      %v331 = vld [vmem:[%s184 + $0x220] sm:$0xf]
      %v332 = vld [vmem:[%s184 + $0x224] sm:$0xf]
      %v333 = vld [vmem:[%s184 + $0x228] sm:$0xf]
      %v334 = vld [vmem:[%s184 + $0x22c] sm:$0xf]
      %v335 = vld [vmem:[%s184 + $0x230] sm:$0xf]
      %v336 = vld [vmem:[%s184 + $0x234] sm:$0xf]
      %v337 = vld [vmem:[%s184 + $0x238] sm:$0xf]
      %v338 = vld [vmem:[%s184 + $0x23c] sm:$0xf]
      %v339 = vld [vmem:[%s184 + $0x240] sm:$0xf]
      %v340 = vld [vmem:[%s184 + $0x244] sm:$0xf]
      %v341 = vld [vmem:[%s184 + $0x248] sm:$0xf]
      %v342 = vld [vmem:[%s184 + $0x24c] sm:$0xf]
      %v343 = vld [vmem:[%s184 + $0x250] sm:$0xf]
      %v344 = vld [vmem:[%s184 + $0x254] sm:$0xf]
      %v345 = vld [vmem:[%s184 + $0x258] sm:$0xf]
      %v346 = vld [vmem:[%s184 + $0x25c] sm:$0xf]
      %v347 = vld [vmem:[%s184 + $0x260] sm:$0xf]
      %v348 = vld [vmem:[%s184 + $0x264] sm:$0xf]
      %v349 = vld [vmem:[%s184 + $0x268] sm:$0xf]
      %v350 = vld [vmem:[%s184 + $0x26c] sm:$0xf]
      %v351 = vld [vmem:[%s184 + $0x270] sm:$0xf]
      %v352 = vld [vmem:[%s184 + $0x274] sm:$0xf]
      %v353 = vld [vmem:[%s184 + $0x278] sm:$0xf]
      %v354 = vld [vmem:[%s184 + $0x27c] sm:$0xf]
      %v355 = vld [vmem:[%s184 + $0x280] sm:$0xf]
      %v356 = vld [vmem:[%s184 + $0x284] sm:$0xf]
      %v357 = vld [vmem:[%s184 + $0x288] sm:$0xf]
      %v358 = vld [vmem:[%s184 + $0x28c] sm:$0xf]
      %v359 = vld [vmem:[%s184 + $0x290] sm:$0xf]
      %v360 = vld [vmem:[%s184 + $0x294] sm:$0xf]
      %v361 = vld [vmem:[%s184 + $0x298] sm:$0xf]
      %v362 = vld [vmem:[%s184 + $0x29c] sm:$0xf]
      %v363 = vld [vmem:[%s184 + $0x2a0] sm:$0xf]
      %v364 = vld [vmem:[%s184 + $0x2a4] sm:$0xf]
      %v365 = vld [vmem:[%s184 + $0x2a8] sm:$0xf]
      %v366 = vld [vmem:[%s184 + $0x2ac] sm:$0xf]
      %v367 = vld [vmem:[%s184 + $0x2b0] sm:$0xf]
      %v368 = vld [vmem:[%s184 + $0x2b4] sm:$0xf]
      %v369 = vld [vmem:[%s184 + $0x2b8] sm:$0xf]
      %v370 = vld [vmem:[%s184 + $0x2bc] sm:$0xf]
      %v371 = vld [vmem:[%s184 + $0x2c0] sm:$0xf]
      %v372 = vld [vmem:[%s184 + $0x2c4] sm:$0xf]
      %v373 = vld [vmem:[%s184 + $0x2c8] sm:$0xf]
      %v374 = vld [vmem:[%s184 + $0x2cc] sm:$0xf]
      %v375 = vld [vmem:[%s184 + $0x2d0] sm:$0xf]
      %v376 = vld [vmem:[%s184 + $0x2d4] sm:$0xf]
      %v377 = vld [vmem:[%s184 + $0x2d8] sm:$0xf]
      %v378 = vld [vmem:[%s184 + $0x2dc] sm:$0xf]
      %v379 = vld [vmem:[%s184 + $0x2e0] sm:$0xf]
      %v380 = vld [vmem:[%s184 + $0x2e4] sm:$0xf]
      %v381 = vld [vmem:[%s184 + $0x2e8] sm:$0xf]
      %v382 = vld [vmem:[%s184 + $0x2ec] sm:$0xf]
      %v383 = vld [vmem:[%s184 + $0x2f0] sm:$0xf]
      %v384 = vld [vmem:[%s184 + $0x2f4] sm:$0xf]
      %v385 = vld [vmem:[%s184 + $0x2f8] sm:$0xf]
      %v386 = vld [vmem:[%s184 + $0x2fc] sm:$0xf]
      %v387 = vld [vmem:[%s184 + $0x300] sm:$0xf]
      %v388 = vld [vmem:[%s184 + $0x304] sm:$0xf]
      %v389 = vld [vmem:[%s184 + $0x308] sm:$0xf]
      %v390 = vld [vmem:[%s184 + $0x30c] sm:$0xf]
      %v391 = vld [vmem:[%s184 + $0x310] sm:$0xf]
      %v392 = vld [vmem:[%s184 + $0x314] sm:$0xf]
      %v393 = vld [vmem:[%s184 + $0x318] sm:$0xf]
      %v394 = vld [vmem:[%s184 + $0x31c] sm:$0xf]
      %v395 = vld [vmem:[%s184 + $0x320] sm:$0xf]
      %v396 = vld [vmem:[%s184 + $0x324] sm:$0xf]
      %v397 = vld [vmem:[%s184 + $0x328] sm:$0xf]
      %v398 = vld [vmem:[%s184 + $0x32c] sm:$0xf]
      %v399 = vld [vmem:[%s184 + $0x330] sm:$0xf]
      %v400 = vld [vmem:[%s184 + $0x334] sm:$0xf]
      %v401 = vld [vmem:[%s184 + $0x338] sm:$0xf]
      %v402 = vld [vmem:[%s184 + $0x33c] sm:$0xf]
      %v403 = vld [vmem:[%s184 + $0x340] sm:$0xf]
      %v404 = vld [vmem:[%s184 + $0x344] sm:$0xf]
      %v405 = vld [vmem:[%s184 + $0x348] sm:$0xf]
      %v406 = vld [vmem:[%s184 + $0x34c] sm:$0xf]
      %v407 = vld [vmem:[%s184 + $0x350] sm:$0xf]
      %v408 = vld [vmem:[%s184 + $0x354] sm:$0xf]
      %v409 = vld [vmem:[%s184 + $0x358] sm:$0xf]
      %v410 = vld [vmem:[%s184 + $0x35c] sm:$0xf]
      %v411 = vld [vmem:[%s184 + $0x360] sm:$0xf]
      %v412 = vld [vmem:[%s184 + $0x364] sm:$0xf]
      %v413 = vld [vmem:[%s184 + $0x368] sm:$0xf]
      %v414 = vld [vmem:[%s184 + $0x36c] sm:$0xf]
      %v415 = vld [vmem:[%s184 + $0x370] sm:$0xf]
      %v416 = vld [vmem:[%s184 + $0x374] sm:$0xf]
      %v417 = vld [vmem:[%s184 + $0x378] sm:$0xf]
      %v418 = vld [vmem:[%s184 + $0x37c] sm:$0xf]
      %v419 = vld [vmem:[%s184 + $0x380] sm:$0xf]
      %v420 = vld [vmem:[%s184 + $0x384] sm:$0xf]
      %v421 = vld [vmem:[%s184 + $0x388] sm:$0xf]
      %v422 = vld [vmem:[%s184 + $0x38c] sm:$0xf]
      %v423 = vld [vmem:[%s184 + $0x390] sm:$0xf]
      %v424 = vld [vmem:[%s184 + $0x394] sm:$0xf]
      %v425 = vld [vmem:[%s184 + $0x398] sm:$0xf]
      %v426 = vld [vmem:[%s184 + $0x39c] sm:$0xf]
      %v427 = vld [vmem:[%s184 + $0x3a0] sm:$0xf]
      %v428 = vld [vmem:[%s184 + $0x3a4] sm:$0xf]
      %v429 = vld [vmem:[%s184 + $0x3a8] sm:$0xf]
      %v430 = vld [vmem:[%s184 + $0x3ac] sm:$0xf]
      %v431 = vld [vmem:[%s184 + $0x3b0] sm:$0xf]
      %v432 = vld [vmem:[%s184 + $0x3b4] sm:$0xf]
      %v433 = vld [vmem:[%s184 + $0x3b8] sm:$0xf]
      %v434 = vld [vmem:[%s184 + $0x3bc] sm:$0xf]
      %v435 = vld [vmem:[%s184 + $0x3c0] sm:$0xf]
      %v436 = vld [vmem:[%s184 + $0x3c4] sm:$0xf]
      %v437 = vld [vmem:[%s184 + $0x3c8] sm:$0xf]
      %v438 = vld [vmem:[%s184 + $0x3cc] sm:$0xf]
      %v439 = vld [vmem:[%s184 + $0x3d0] sm:$0xf]
      %v440 = vld [vmem:[%s184 + $0x3d4] sm:$0xf]
      %v441 = vld [vmem:[%s184 + $0x3d8] sm:$0xf]
      %v442 = vld [vmem:[%s184 + $0x3dc] sm:$0xf]
      %v443 = vld [vmem:[%s184 + $0x3e0] sm:$0xf]
      %v444 = vld [vmem:[%s184 + $0x3e4] sm:$0xf]
      %v445 = vld [vmem:[%s184 + $0x3e8] sm:$0xf]
      %v446 = vld [vmem:[%s184 + $0x3ec] sm:$0xf]
      %v447 = vld [vmem:[%s184 + $0x3f0] sm:$0xf]
      %v448 = vld [vmem:[%s184 + $0x3f4] sm:$0xf]
      %v449 = vld [vmem:[%s184 + $0x3f8] sm:$0xf]
      %v450 = vld [vmem:[%s184 + $0x3fc] sm:$0xf]
      %v451 = vld [vmem:[%s184 + $0x400] sm:$0xf]
      %v452 = vld [vmem:[%s184 + $0x404] sm:$0xf]
      %v453 = vld [vmem:[%s184 + $0x408] sm:$0xf]
      %v454 = vld [vmem:[%s184 + $0x40c] sm:$0xf]
      %v455 = vld [vmem:[%s184 + $0x410] sm:$0xf]
      %v456 = vld [vmem:[%s184 + $0x414] sm:$0xf]
      %v457 = vld [vmem:[%s184 + $0x418] sm:$0xf]
      %v458 = vld [vmem:[%s184 + $0x41c] sm:$0xf]
      %v459 = vld [vmem:[%s184 + $0x420] sm:$0xf]
      %v460 = vld [vmem:[%s184 + $0x424] sm:$0xf]
      %v461 = vld [vmem:[%s184 + $0x428] sm:$0xf]
      %v462 = vld [vmem:[%s184 + $0x42c] sm:$0xf]
      %v463 = vld [vmem:[%s184 + $0x430] sm:$0xf]
      %v464 = vld [vmem:[%s184 + $0x434] sm:$0xf]
      %v465 = vld [vmem:[%s184 + $0x438] sm:$0xf]
      %v466 = vld [vmem:[%s184 + $0x43c] sm:$0xf]
      %v467 = vld [vmem:[%s184 + $0x440] sm:$0xf]
      %v468 = vld [vmem:[%s184 + $0x444] sm:$0xf]
      %v469 = vld [vmem:[%s184 + $0x448] sm:$0xf]
      %v470 = vld [vmem:[%s184 + $0x44c] sm:$0xf]
      %v471 = vld [vmem:[%s184 + $0x450] sm:$0xf]
      %v472 = vld [vmem:[%s184 + $0x454] sm:$0xf]
      %v473 = vld [vmem:[%s184 + $0x458] sm:$0xf]
      %v474 = vld [vmem:[%s184 + $0x45c] sm:$0xf]
      %v475 = vld [vmem:[%s184 + $0x460] sm:$0xf]
      %v476 = vld [vmem:[%s184 + $0x464] sm:$0xf]
      %v477 = vld [vmem:[%s184 + $0x468] sm:$0xf]
      %v478 = vld [vmem:[%s184 + $0x46c] sm:$0xf]
      %v479 = vld [vmem:[%s184 + $0x470] sm:$0xf]
      %v480 = vld [vmem:[%s184 + $0x474] sm:$0xf]
      %v481 = vld [vmem:[%s184 + $0x478] sm:$0xf]
      %v482 = vld [vmem:[%s184 + $0x47c] sm:$0xf]
      %v483 = vld [vmem:[%s184 + $0x480] sm:$0xf]
      %v484 = vld [vmem:[%s184 + $0x484] sm:$0xf]
      %v485 = vld [vmem:[%s184 + $0x488] sm:$0xf]
      %v486 = vld [vmem:[%s184 + $0x48c] sm:$0xf]
      %v487 = vld [vmem:[%s184 + $0x490] sm:$0xf]
      %v488 = vld [vmem:[%s184 + $0x494] sm:$0xf]
      %v489 = vld [vmem:[%s184 + $0x498] sm:$0xf]
      %v490 = vld [vmem:[%s184 + $0x49c] sm:$0xf]
      %v491 = vld [vmem:[%s184 + $0x4a0] sm:$0xf]
      %v492 = vld [vmem:[%s184 + $0x4a4] sm:$0xf]
      %v493 = vld [vmem:[%s184 + $0x4a8] sm:$0xf]
      %v494 = vld [vmem:[%s184 + $0x4ac] sm:$0xf]
      %v495 = vld [vmem:[%s184 + $0x4b0] sm:$0xf]
      %v496 = vld [vmem:[%s184 + $0x4b4] sm:$0xf]
      %v497 = vld [vmem:[%s184 + $0x4b8] sm:$0xf]
      %v498 = vld [vmem:[%s184 + $0x4bc] sm:$0xf]
      %v499 = vld [vmem:[%s184 + $0x4c0] sm:$0xf]
      %v500 = vld [vmem:[%s184 + $0x4c4] sm:$0xf]
      %v501 = vld [vmem:[%s184 + $0x4c8] sm:$0xf]
      %v502 = vld [vmem:[%s184 + $0x4cc] sm:$0xf]
      %v503 = vld [vmem:[%s184 + $0x4d0] sm:$0xf]
      %v504 = vld [vmem:[%s184 + $0x4d4] sm:$0xf]
      %v505 = vld [vmem:[%s184 + $0x4d8] sm:$0xf]
      %v506 = vld [vmem:[%s184 + $0x4dc] sm:$0xf]
      %v507 = vld [vmem:[%s184 + $0x4e0] sm:$0xf]
      %v508 = vld [vmem:[%s184 + $0x4e4] sm:$0xf]
      %v509 = vld [vmem:[%s184 + $0x4e8] sm:$0xf]
      %v510 = vld [vmem:[%s184 + $0x4ec] sm:$0xf]
      %v511 = vld [vmem:[%s184 + $0x4f0] sm:$0xf]
      %v512 = vld [vmem:[%s184 + $0x4f4] sm:$0xf]
      %v513 = vld [vmem:[%s184 + $0x4f8] sm:$0xf]
      %v514 = vld [vmem:[%s184 + $0x4fc] sm:$0xf]
      %v515 = vld [vmem:[%s184 + $0x500] sm:$0xf]
      %v516 = vld [vmem:[%s184 + $0x504] sm:$0xf]
      %v517 = vld [vmem:[%s184 + $0x508] sm:$0xf]
      %v518 = vld [vmem:[%s184 + $0x50c] sm:$0xf]
      %v519 = vld [vmem:[%s184 + $0x510] sm:$0xf]
      %v520 = vld [vmem:[%s184 + $0x514] sm:$0xf]
      %v521 = vld [vmem:[%s184 + $0x518] sm:$0xf]
      %v522 = vld [vmem:[%s184 + $0x51c] sm:$0xf]
      %v523 = vld [vmem:[%s184 + $0x520] sm:$0xf]
      %v524 = vld [vmem:[%s184 + $0x524] sm:$0xf]
      %v525 = vld [vmem:[%s184 + $0x528] sm:$0xf]
      %v526 = vld [vmem:[%s184 + $0x52c] sm:$0xf]
      %v527 = vld [vmem:[%s184 + $0x530] sm:$0xf]
      %v528 = vld [vmem:[%s184 + $0x534] sm:$0xf]
      %v529 = vld [vmem:[%s184 + $0x538] sm:$0xf]
      %v530 = vld [vmem:[%s184 + $0x53c] sm:$0xf]
      %v531 = vld [vmem:[%s184 + $0x540] sm:$0xf]
      %v532 = vld [vmem:[%s184 + $0x544] sm:$0xf]
      %v533 = vld [vmem:[%s184 + $0x548] sm:$0xf]
      %v534 = vld [vmem:[%s184 + $0x54c] sm:$0xf]
      %v535 = vld [vmem:[%s184 + $0x550] sm:$0xf]
      %v536 = vld [vmem:[%s184 + $0x554] sm:$0xf]
      %v537 = vld [vmem:[%s184 + $0x558] sm:$0xf]
      %v538 = vld [vmem:[%s184 + $0x55c] sm:$0xf]
      %v539 = vld [vmem:[%s184 + $0x560] sm:$0xf]
      %v540 = vld [vmem:[%s184 + $0x564] sm:$0xf]
      %v541 = vld [vmem:[%s184 + $0x568] sm:$0xf]
      %v542 = vld [vmem:[%s184 + $0x56c] sm:$0xf]
      %v543 = vld [vmem:[%s184 + $0x570] sm:$0xf]
      %v544 = vld [vmem:[%s184 + $0x574] sm:$0xf]
      %v545 = vld [vmem:[%s184 + $0x578] sm:$0xf]
      %v546 = vld [vmem:[%s184 + $0x57c] sm:$0xf]
      %v547 = vld [vmem:[%s184 + $0x580] sm:$0xf]
      %v548 = vld [vmem:[%s184 + $0x584] sm:$0xf]
      %v549 = vld [vmem:[%s184 + $0x588] sm:$0xf]
      %v550 = vld [vmem:[%s184 + $0x58c] sm:$0xf]
      %v551 = vld [vmem:[%s184 + $0x590] sm:$0xf]
      %v552 = vld [vmem:[%s184 + $0x594] sm:$0xf]
      %v553 = vld [vmem:[%s184 + $0x598] sm:$0xf]
      %v554 = vld [vmem:[%s184 + $0x59c] sm:$0xf]
      %v555 = vld [vmem:[%s184 + $0x5a0] sm:$0xf]
      %v556 = vld [vmem:[%s184 + $0x5a4] sm:$0xf]
      %v557 = vld [vmem:[%s184 + $0x5a8] sm:$0xf]
      %v558 = vld [vmem:[%s184 + $0x5ac] sm:$0xf]
      %v559 = vld [vmem:[%s184 + $0x5b0] sm:$0xf]
      %v560 = vld [vmem:[%s184 + $0x5b4] sm:$0xf]
      %v561 = vld [vmem:[%s184 + $0x5b8] sm:$0xf]
      %v562 = vld [vmem:[%s184 + $0x5bc] sm:$0xf]
      %v563 = vld [vmem:[%s184 + $0x5c0] sm:$0xf]
      %v564 = vld [vmem:[%s184 + $0x5c4] sm:$0xf]
      %v565 = vld [vmem:[%s184 + $0x5c8] sm:$0xf]
      %v566 = vld [vmem:[%s184 + $0x5cc] sm:$0xf]
      %v567 = vld [vmem:[%s184 + $0x5d0] sm:$0xf]
      %v568 = vld [vmem:[%s184 + $0x5d4] sm:$0xf]
      %v569 = vld [vmem:[%s184 + $0x5d8] sm:$0xf]
      %v570 = vld [vmem:[%s184 + $0x5dc] sm:$0xf]
      %v571 = vld [vmem:[%s184 + $0x5e0] sm:$0xf]
      %v572 = vld [vmem:[%s184 + $0x5e4] sm:$0xf]
      %v573 = vld [vmem:[%s184 + $0x5e8] sm:$0xf]
      %v574 = vld [vmem:[%s184 + $0x5ec] sm:$0xf]
      %v575 = vld [vmem:[%s184 + $0x5f0] sm:$0xf]
      %v576 = vld [vmem:[%s184 + $0x5f4] sm:$0xf]
      %v577 = vld [vmem:[%s184 + $0x5f8] sm:$0xf]
      %v578 = vld [vmem:[%s184 + $0x5fc] sm:$0xf]
      %v579 = vld [vmem:[%s184 + $0x600] sm:$0xf]
      %v580 = vld [vmem:[%s184 + $0x604] sm:$0xf]
      %v581 = vld [vmem:[%s184 + $0x608] sm:$0xf]
      %v582 = vld [vmem:[%s184 + $0x60c] sm:$0xf]
      %v583 = vld [vmem:[%s184 + $0x610] sm:$0xf]
      %v584 = vld [vmem:[%s184 + $0x614] sm:$0xf]
      %v585 = vld [vmem:[%s184 + $0x618] sm:$0xf]
      %v586 = vld [vmem:[%s184 + $0x61c] sm:$0xf]
      %v587 = vld [vmem:[%s184 + $0x620] sm:$0xf]
      %v588 = vld [vmem:[%s184 + $0x624] sm:$0xf]
      %v589 = vld [vmem:[%s184 + $0x628] sm:$0xf]
      %v590 = vld [vmem:[%s184 + $0x62c] sm:$0xf]
      %v591 = vld [vmem:[%s184 + $0x630] sm:$0xf]
      %v592 = vld [vmem:[%s184 + $0x634] sm:$0xf]
      %v593 = vld [vmem:[%s184 + $0x638] sm:$0xf]
      %v594 = vld [vmem:[%s184 + $0x63c] sm:$0xf]
      %v595 = vld [vmem:[%s184 + $0x640] sm:$0xf]
      %v596 = vld [vmem:[%s184 + $0x644] sm:$0xf]
      %v597 = vld [vmem:[%s184 + $0x648] sm:$0xf]
      %v598 = vld [vmem:[%s184 + $0x64c] sm:$0xf]
      %v599 = vld [vmem:[%s184 + $0x650] sm:$0xf]
      %v600 = vld [vmem:[%s184 + $0x654] sm:$0xf]
      %v601 = vld [vmem:[%s184 + $0x658] sm:$0xf]
      %v602 = vld [vmem:[%s184 + $0x65c] sm:$0xf]
      %v603 = vld [vmem:[%s184 + $0x660] sm:$0xf]
      %v604 = vld [vmem:[%s184 + $0x664] sm:$0xf]
      %v605 = vld [vmem:[%s184 + $0x668] sm:$0xf]
      %v606 = vld [vmem:[%s184 + $0x66c] sm:$0xf]
      %v607 = vld [vmem:[%s184 + $0x670] sm:$0xf]
      %v608 = vld [vmem:[%s184 + $0x674] sm:$0xf]
      %v609 = vld [vmem:[%s184 + $0x678] sm:$0xf]
      %v610 = vld [vmem:[%s184 + $0x67c] sm:$0xf]
      %v611 = vld [vmem:[%s184 + $0x680] sm:$0xf]
      %v612 = vld [vmem:[%s184 + $0x684] sm:$0xf]
      %v613 = vld [vmem:[%s184 + $0x688] sm:$0xf]
      %v614 = vld [vmem:[%s184 + $0x68c] sm:$0xf]
      %v615 = vld [vmem:[%s184 + $0x690] sm:$0xf]
      %v616 = vld [vmem:[%s184 + $0x694] sm:$0xf]
      %v617 = vld [vmem:[%s184 + $0x698] sm:$0xf]
      %v618 = vld [vmem:[%s184 + $0x69c] sm:$0xf]
      %v619 = vld [vmem:[%s184 + $0x6a0] sm:$0xf]
      %v620 = vld [vmem:[%s184 + $0x6a4] sm:$0xf]
      %v621 = vld [vmem:[%s184 + $0x6a8] sm:$0xf]
      %v622 = vld [vmem:[%s184 + $0x6ac] sm:$0xf]
      %v623 = vld [vmem:[%s184 + $0x6b0] sm:$0xf]
      %v624 = vld [vmem:[%s184 + $0x6b4] sm:$0xf]
      %v625 = vld [vmem:[%s184 + $0x6b8] sm:$0xf]
      %v626 = vld [vmem:[%s184 + $0x6bc] sm:$0xf]
      %v627 = vld [vmem:[%s184 + $0x6c0] sm:$0xf]
      %v628 = vld [vmem:[%s184 + $0x6c4] sm:$0xf]
      %v629 = vld [vmem:[%s184 + $0x6c8] sm:$0xf]
      %v630 = vld [vmem:[%s184 + $0x6cc] sm:$0xf]
      %v631 = vld [vmem:[%s184 + $0x6d0] sm:$0xf]
      %v632 = vld [vmem:[%s184 + $0x6d4] sm:$0xf]
      %v633 = vld [vmem:[%s184 + $0x6d8] sm:$0xf]
      %v634 = vld [vmem:[%s184 + $0x6dc] sm:$0xf]
      %v635 = vld [vmem:[%s184 + $0x6e0] sm:$0xf]
      %v636 = vld [vmem:[%s184 + $0x6e4] sm:$0xf]
      %v637 = vld [vmem:[%s184 + $0x6e8] sm:$0xf]
      %v638 = vld [vmem:[%s184 + $0x6ec] sm:$0xf]
      %v639 = vld [vmem:[%s184 + $0x6f0] sm:$0xf]
      %v640 = vld [vmem:[%s184 + $0x6f4] sm:$0xf]
      %v641 = vld [vmem:[%s184 + $0x6f8] sm:$0xf]
      %v642 = vld [vmem:[%s184 + $0x6fc] sm:$0xf]
      %v643 = vld [vmem:[%s184 + $0x700] sm:$0xf]
      %v644 = vld [vmem:[%s184 + $0x704] sm:$0xf]
      %v645 = vld [vmem:[%s184 + $0x708] sm:$0xf]
      %v646 = vld [vmem:[%s184 + $0x70c] sm:$0xf]
      %v647 = vld [vmem:[%s184 + $0x710] sm:$0xf]
      %v648 = vld [vmem:[%s184 + $0x714] sm:$0xf]
      %v649 = vld [vmem:[%s184 + $0x718] sm:$0xf]
      %v650 = vld [vmem:[%s184 + $0x71c] sm:$0xf]
      %v651 = vld [vmem:[%s184 + $0x720] sm:$0xf]
      %v652 = vld [vmem:[%s184 + $0x724] sm:$0xf]
      %v653 = vld [vmem:[%s184 + $0x728] sm:$0xf]
      %v654 = vld [vmem:[%s184 + $0x72c] sm:$0xf]
      %v655 = vld [vmem:[%s184 + $0x730] sm:$0xf]
      %v656 = vld [vmem:[%s184 + $0x734] sm:$0xf]
      %v657 = vld [vmem:[%s184 + $0x738] sm:$0xf]
      %v658 = vld [vmem:[%s184 + $0x73c] sm:$0xf]
      %v659 = vld [vmem:[%s184 + $0x740] sm:$0xf]
      %v660 = vld [vmem:[%s184 + $0x744] sm:$0xf]
      %v661 = vld [vmem:[%s184 + $0x748] sm:$0xf]
      %v662 = vld [vmem:[%s184 + $0x74c] sm:$0xf]
      %v663 = vld [vmem:[%s184 + $0x750] sm:$0xf]
      %v664 = vld [vmem:[%s184 + $0x754] sm:$0xf]
      %v665 = vld [vmem:[%s184 + $0x758] sm:$0xf]
      %v666 = vld [vmem:[%s184 + $0x75c] sm:$0xf]
      %v667 = vld [vmem:[%s184 + $0x760] sm:$0xf]
      %v668 = vld [vmem:[%s184 + $0x764] sm:$0xf]
      %v669 = vld [vmem:[%s184 + $0x768] sm:$0xf]
      %v670 = vld [vmem:[%s184 + $0x76c] sm:$0xf]
      %v671 = vld [vmem:[%s184 + $0x770] sm:$0xf]
      %v672 = vld [vmem:[%s184 + $0x774] sm:$0xf]
      %v673 = vld [vmem:[%s184 + $0x778] sm:$0xf]
      %v674 = vld [vmem:[%s184 + $0x77c] sm:$0xf]
      %v675 = vld [vmem:[%s184 + $0x780] sm:$0xf]
      %v676 = vld [vmem:[%s184 + $0x784] sm:$0xf]
      %v677 = vld [vmem:[%s184 + $0x788] sm:$0xf]
      %v678 = vld [vmem:[%s184 + $0x78c] sm:$0xf]
      %v679 = vld [vmem:[%s184 + $0x790] sm:$0xf]
      %v680 = vld [vmem:[%s184 + $0x794] sm:$0xf]
      %v681 = vld [vmem:[%s184 + $0x798] sm:$0xf]
      %v682 = vld [vmem:[%s184 + $0x79c] sm:$0xf]
      %v683 = vld [vmem:[%s184 + $0x7a0] sm:$0xf]
      %v684 = vld [vmem:[%s184 + $0x7a4] sm:$0xf]
      %v685 = vld [vmem:[%s184 + $0x7a8] sm:$0xf]
      %v686 = vld [vmem:[%s184 + $0x7ac] sm:$0xf]
      %v687 = vld [vmem:[%s184 + $0x7b0] sm:$0xf]
      %v688 = vld [vmem:[%s184 + $0x7b4] sm:$0xf]
      %v689 = vld [vmem:[%s184 + $0x7b8] sm:$0xf]
      %v690 = vld [vmem:[%s184 + $0x7bc] sm:$0xf]
      %v691 = vld [vmem:[%s184 + $0x7c0] sm:$0xf]
      %v692 = vld [vmem:[%s184 + $0x7c4] sm:$0xf]
      %v693 = vld [vmem:[%s184 + $0x7c8] sm:$0xf]
      %v694 = vld [vmem:[%s184 + $0x7cc] sm:$0xf]
      %v695 = vld [vmem:[%s184 + $0x7d0] sm:$0xf]
      %v696 = vld [vmem:[%s184 + $0x7d4] sm:$0xf]
      %v697 = vld [vmem:[%s184 + $0x7d8] sm:$0xf]
      %v698 = vld [vmem:[%s184 + $0x7dc] sm:$0xf]
      %v699 = vld [vmem:[%s184 + $0x7e0] sm:$0xf]
      %v700 = vld [vmem:[%s184 + $0x7e4] sm:$0xf]
      %v701 = vld [vmem:[%s184 + $0x7e8] sm:$0xf]
      %v702 = vld [vmem:[%s184 + $0x7ec] sm:$0xf]
      %v703 = vld [vmem:[%s184 + $0x7f0] sm:$0xf]
      %v704 = vld [vmem:[%s184 + $0x7f4] sm:$0xf]
      %v705 = vld [vmem:[%s184 + $0x7f8] sm:$0xf]
      %v706 = vld [vmem:[%s184 + $0x7fc] sm:$0xf]
      %v711 = vcombine.high %v191, %v191
      %v713 = vunpack.c.l.s4 1966171168
      %v714 = vunpack.c.0.s8 %v713
      %v715 = vlaneseq
      %v716 = vshrl.u32 %v715, 7
      %v717 = vsub.s32 %v714, %v716
      %v718 = vrot.slane %v191, %v717
      %v720 = vunpack.c.l.s4 1966171168
      %v721 = vunpack.c.0.s8 %v720
      %v722 = vlaneseq
      %v723 = vshrl.u32 %v722, 7
      %v724 = vsub.s32 %v721, %v723
      %v725 = vrot.slane %v711, %v724
      %v726 = vcombine.high %v718, %v718
      %v727 = vcombine.high %v725, %v725
      %v729 = vunpack.c.l.s4 1966171168
      %v730 = vunpack.c.0.s8 %v729
      %v731 = vlaneseq
      %v732 = vshrl.u32 %v731, 7
      %v733 = vsub.s32 %v730, %v732
      %v734 = vrot.slane %v718, %v733
      %v736 = vunpack.c.l.s4 1966171168
      %v737 = vunpack.c.0.s8 %v736
      %v738 = vlaneseq
      %v739 = vshrl.u32 %v738, 7
      %v740 = vsub.s32 %v737, %v739
      %v741 = vrot.slane %v725, %v740
      %v743 = vunpack.c.l.s4 1966171168
      %v744 = vunpack.c.0.s8 %v743
      %v745 = vlaneseq
      %v746 = vshrl.u32 %v745, 7
      %v747 = vsub.s32 %v744, %v746
      %v748 = vrot.slane %v726, %v747
      %v750 = vunpack.c.l.s4 1966171168
      %v751 = vunpack.c.0.s8 %v750
      %v752 = vlaneseq
      %v753 = vshrl.u32 %v752, 7
      %v754 = vsub.s32 %v751, %v753
      %v755 = vrot.slane %v727, %v754
      %v756 = vcombine.high %v734, %v734
      %v757 = vcombine.high %v741, %v741
      %v758 = vcombine.high %v748, %v748
      %v759 = vcombine.high %v755, %v755
      %v760 = vcombine.high %v192, %v192
      %v762 = vunpack.c.l.s4 1966171168
      %v763 = vunpack.c.0.s8 %v762
      %v764 = vlaneseq
      %v765 = vshrl.u32 %v764, 7
      %v766 = vsub.s32 %v763, %v765
      %v767 = vrot.slane %v192, %v766
      %v769 = vunpack.c.l.s4 1966171168
      %v770 = vunpack.c.0.s8 %v769
      %v771 = vlaneseq
      %v772 = vshrl.u32 %v771, 7
      %v773 = vsub.s32 %v770, %v772
      %v774 = vrot.slane %v760, %v773
      %v775 = vcombine.high %v767, %v767
      %v776 = vcombine.high %v774, %v774
      %v778 = vunpack.c.l.s4 1966171168
      %v779 = vunpack.c.0.s8 %v778
      %v780 = vlaneseq
      %v781 = vshrl.u32 %v780, 7
      %v782 = vsub.s32 %v779, %v781
      %v783 = vrot.slane %v767, %v782
      %v785 = vunpack.c.l.s4 1966171168
      %v786 = vunpack.c.0.s8 %v785
      %v787 = vlaneseq
      %v788 = vshrl.u32 %v787, 7
      %v789 = vsub.s32 %v786, %v788
      %v790 = vrot.slane %v774, %v789
      %v792 = vunpack.c.l.s4 1966171168
      %v793 = vunpack.c.0.s8 %v792
      %v794 = vlaneseq
      %v795 = vshrl.u32 %v794, 7
      %v796 = vsub.s32 %v793, %v795
      %v797 = vrot.slane %v775, %v796
      %v799 = vunpack.c.l.s4 1966171168
      %v800 = vunpack.c.0.s8 %v799
      %v801 = vlaneseq
      %v802 = vshrl.u32 %v801, 7
      %v803 = vsub.s32 %v800, %v802
      %v804 = vrot.slane %v776, %v803
      %v805 = vcombine.high %v783, %v783
      %v806 = vcombine.high %v790, %v790
      %v807 = vcombine.high %v797, %v797
      %v808 = vcombine.high %v804, %v804
      %v809 = vcombine.high %v193, %v193
      %v811 = vunpack.c.l.s4 1966171168
      %v812 = vunpack.c.0.s8 %v811
      %v813 = vlaneseq
      %v814 = vshrl.u32 %v813, 7
      %v815 = vsub.s32 %v812, %v814
      %v816 = vrot.slane %v193, %v815
      %v818 = vunpack.c.l.s4 1966171168
      %v819 = vunpack.c.0.s8 %v818
      %v820 = vlaneseq
      %v821 = vshrl.u32 %v820, 7
      %v822 = vsub.s32 %v819, %v821
      %v823 = vrot.slane %v809, %v822
      %v824 = vcombine.high %v816, %v816
      %v825 = vcombine.high %v823, %v823
      %v827 = vunpack.c.l.s4 1966171168
      %v828 = vunpack.c.0.s8 %v827
      %v829 = vlaneseq
      %v830 = vshrl.u32 %v829, 7
      %v831 = vsub.s32 %v828, %v830
      %v832 = vrot.slane %v816, %v831
      %v834 = vunpack.c.l.s4 1966171168
      %v835 = vunpack.c.0.s8 %v834
      %v836 = vlaneseq
      %v837 = vshrl.u32 %v836, 7
      %v838 = vsub.s32 %v835, %v837
      %v839 = vrot.slane %v823, %v838
      %v841 = vunpack.c.l.s4 1966171168
      %v842 = vunpack.c.0.s8 %v841
      %v843 = vlaneseq
      %v844 = vshrl.u32 %v843, 7
      %v845 = vsub.s32 %v842, %v844
      %v846 = vrot.slane %v824, %v845
      %v848 = vunpack.c.l.s4 1966171168
      %v849 = vunpack.c.0.s8 %v848
      %v850 = vlaneseq
      %v851 = vshrl.u32 %v850, 7
      %v852 = vsub.s32 %v849, %v851
      %v853 = vrot.slane %v825, %v852
      %v854 = vcombine.high %v832, %v832
      %v855 = vcombine.high %v839, %v839
      %v856 = vcombine.high %v846, %v846
      %v857 = vcombine.high %v853, %v853
      %v858 = vcombine.high %v194, %v194
      %v860 = vunpack.c.l.s4 1966171168
      %v861 = vunpack.c.0.s8 %v860
      %v862 = vlaneseq
      %v863 = vshrl.u32 %v862, 7
      %v864 = vsub.s32 %v861, %v863
      %v865 = vrot.slane %v194, %v864
      %v867 = vunpack.c.l.s4 1966171168
      %v868 = vunpack.c.0.s8 %v867
      %v869 = vlaneseq
      %v870 = vshrl.u32 %v869, 7
      %v871 = vsub.s32 %v868, %v870
      %v872 = vrot.slane %v858, %v871
      %v873 = vcombine.high %v865, %v865
      %v874 = vcombine.high %v872, %v872
      %v876 = vunpack.c.l.s4 1966171168
      %v877 = vunpack.c.0.s8 %v876
      %v878 = vlaneseq
      %v879 = vshrl.u32 %v878, 7
      %v880 = vsub.s32 %v877, %v879
      %v881 = vrot.slane %v865, %v880
      %v883 = vunpack.c.l.s4 1966171168
      %v884 = vunpack.c.0.s8 %v883
      %v885 = vlaneseq
      %v886 = vshrl.u32 %v885, 7
      %v887 = vsub.s32 %v884, %v886
      %v888 = vrot.slane %v872, %v887
      %v890 = vunpack.c.l.s4 1966171168
      %v891 = vunpack.c.0.s8 %v890
      %v892 = vlaneseq
      %v893 = vshrl.u32 %v892, 7
      %v894 = vsub.s32 %v891, %v893
      %v895 = vrot.slane %v873, %v894
      %v897 = vunpack.c.l.s4 1966171168
      %v898 = vunpack.c.0.s8 %v897
      %v899 = vlaneseq
      %v900 = vshrl.u32 %v899, 7
      %v901 = vsub.s32 %v898, %v900
      %v902 = vrot.slane %v874, %v901
      %v903 = vcombine.high %v881, %v881
      %v904 = vcombine.high %v888, %v888
      %v905 = vcombine.high %v895, %v895
      %v906 = vcombine.high %v902, %v902
      %v1451 = vunpack.c.l.b16 %v195
      %v1452 = vunpack.c.l.b16 %v196
      %v1453 = vunpack.c.l.b16 %v197
      %v1454 = vunpack.c.l.b16 %v198
      %v1455 = vunpack.c.l.b16 %v199
      %v1456 = vunpack.c.l.b16 %v200
      %v1457 = vunpack.c.l.b16 %v201
      %v1458 = vunpack.c.l.b16 %v202
      %v1459 = vunpack.c.l.b16 %v203
      %v1460 = vunpack.c.l.b16 %v204
      %v1461 = vunpack.c.l.b16 %v205
      %v1462 = vunpack.c.l.b16 %v206
      %v1463 = vunpack.c.l.b16 %v207
      %v1464 = vunpack.c.l.b16 %v208
      %v1465 = vunpack.c.l.b16 %v209
      %v1466 = vunpack.c.l.b16 %v210
      %v1467 = vunpack.c.l.b16 %v211
      %v1468 = vunpack.c.l.b16 %v212
      %v1469 = vunpack.c.l.b16 %v213
      %v1470 = vunpack.c.l.b16 %v214
      %v1471 = vunpack.c.l.b16 %v215
      %v1472 = vunpack.c.l.b16 %v216
      %v1473 = vunpack.c.l.b16 %v217
      %v1474 = vunpack.c.l.b16 %v218
      %v1475 = vunpack.c.l.b16 %v219
      %v1476 = vunpack.c.l.b16 %v220
      %v1477 = vunpack.c.l.b16 %v221
      %v1478 = vunpack.c.l.b16 %v222
      %v1479 = vunpack.c.l.b16 %v223
      %v1480 = vunpack.c.l.b16 %v224
      %v1481 = vunpack.c.l.b16 %v225
      %v1482 = vunpack.c.l.b16 %v226
      %v1483 = vunpack.c.l.b16 %v227
      %v1484 = vunpack.c.l.b16 %v228
      %v1485 = vunpack.c.l.b16 %v229
      %v1486 = vunpack.c.l.b16 %v230
      %v1487 = vunpack.c.l.b16 %v231
      %v1488 = vunpack.c.l.b16 %v232
      %v1489 = vunpack.c.l.b16 %v233
      %v1490 = vunpack.c.l.b16 %v234
      %v1491 = vunpack.c.l.b16 %v235
      %v1492 = vunpack.c.l.b16 %v236
      %v1493 = vunpack.c.l.b16 %v237
      %v1494 = vunpack.c.l.b16 %v238
      %v1495 = vunpack.c.l.b16 %v239
      %v1496 = vunpack.c.l.b16 %v240
      %v1497 = vunpack.c.l.b16 %v241
      %v1498 = vunpack.c.l.b16 %v242
      %v1499 = vunpack.c.l.b16 %v243
      %v1500 = vunpack.c.l.b16 %v244
      %v1501 = vunpack.c.l.b16 %v245
      %v1502 = vunpack.c.l.b16 %v246
      %v1503 = vunpack.c.l.b16 %v247
      %v1504 = vunpack.c.l.b16 %v248
      %v1505 = vunpack.c.l.b16 %v249
      %v1506 = vunpack.c.l.b16 %v250
      %v1507 = vunpack.c.l.b16 %v251
      %v1508 = vunpack.c.l.b16 %v252
      %v1509 = vunpack.c.l.b16 %v253
      %v1510 = vunpack.c.l.b16 %v254
      %v1511 = vunpack.c.l.b16 %v255
      %v1512 = vunpack.c.l.b16 %v256
      %v1513 = vunpack.c.l.b16 %v257
      %v1514 = vunpack.c.l.b16 %v258
      %v1515 = vunpack.c.l.b16 %v259
      %v1516 = vunpack.c.l.b16 %v260
      %v1517 = vunpack.c.l.b16 %v261
      %v1518 = vunpack.c.l.b16 %v262
      %v1519 = vunpack.c.l.b16 %v263
      %v1520 = vunpack.c.l.b16 %v264
      %v1521 = vunpack.c.l.b16 %v265
      %v1522 = vunpack.c.l.b16 %v266
      %v1523 = vunpack.c.l.b16 %v267
      %v1524 = vunpack.c.l.b16 %v268
      %v1525 = vunpack.c.l.b16 %v269
      %v1526 = vunpack.c.l.b16 %v270
      %v1527 = vunpack.c.l.b16 %v271
      %v1528 = vunpack.c.l.b16 %v272
      %v1529 = vunpack.c.l.b16 %v273
      %v1530 = vunpack.c.l.b16 %v274
      %v1531 = vunpack.c.l.b16 %v275
      %v1532 = vunpack.c.l.b16 %v276
      %v1533 = vunpack.c.l.b16 %v277
      %v1534 = vunpack.c.l.b16 %v278
      %v1535 = vunpack.c.l.b16 %v279
      %v1536 = vunpack.c.l.b16 %v280
      %v1537 = vunpack.c.l.b16 %v281
      %v1538 = vunpack.c.l.b16 %v282
      %v1539 = vunpack.c.l.b16 %v283
      %v1540 = vunpack.c.l.b16 %v284
      %v1541 = vunpack.c.l.b16 %v285
      %v1542 = vunpack.c.l.b16 %v286
      %v1543 = vunpack.c.l.b16 %v287
      %v1544 = vunpack.c.l.b16 %v288
      %v1545 = vunpack.c.l.b16 %v289
      %v1546 = vunpack.c.l.b16 %v290
      %v1547 = vunpack.c.l.b16 %v291
      %v1548 = vunpack.c.l.b16 %v292
      %v1549 = vunpack.c.l.b16 %v293
      %v1550 = vunpack.c.l.b16 %v294
      %v1551 = vunpack.c.l.b16 %v295
      %v1552 = vunpack.c.l.b16 %v296
      %v1553 = vunpack.c.l.b16 %v297
      %v1554 = vunpack.c.l.b16 %v298
      %v1555 = vunpack.c.l.b16 %v299
      %v1556 = vunpack.c.l.b16 %v300
      %v1557 = vunpack.c.l.b16 %v301
      %v1558 = vunpack.c.l.b16 %v302
      %v1559 = vunpack.c.l.b16 %v303
      %v1560 = vunpack.c.l.b16 %v304
      %v1561 = vunpack.c.l.b16 %v305
      %v1562 = vunpack.c.l.b16 %v306
      %v1563 = vunpack.c.l.b16 %v307
      %v1564 = vunpack.c.l.b16 %v308
      %v1565 = vunpack.c.l.b16 %v309
      %v1566 = vunpack.c.l.b16 %v310
      %v1567 = vunpack.c.l.b16 %v311
      %v1568 = vunpack.c.l.b16 %v312
      %v1569 = vunpack.c.l.b16 %v313
      %v1570 = vunpack.c.l.b16 %v314
      %v1571 = vunpack.c.l.b16 %v315
      %v1572 = vunpack.c.l.b16 %v316
      %v1573 = vunpack.c.l.b16 %v317
      %v1574 = vunpack.c.l.b16 %v318
      %v1575 = vunpack.c.l.b16 %v319
      %v1576 = vunpack.c.l.b16 %v320
      %v1577 = vunpack.c.l.b16 %v321
      %v1578 = vunpack.c.l.b16 %v322
      %v1579 = vunpack.c.l.b16 %v323
      %v1580 = vunpack.c.l.b16 %v324
      %v1581 = vunpack.c.l.b16 %v325
      %v1582 = vunpack.c.l.b16 %v326
      %v1583 = vunpack.c.l.b16 %v327
      %v1584 = vunpack.c.l.b16 %v328
      %v1585 = vunpack.c.l.b16 %v329
      %v1586 = vunpack.c.l.b16 %v330
      %v1587 = vunpack.c.l.b16 %v331
      %v1588 = vunpack.c.l.b16 %v332
      %v1589 = vunpack.c.l.b16 %v333
      %v1590 = vunpack.c.l.b16 %v334
      %v1591 = vunpack.c.l.b16 %v335
      %v1592 = vunpack.c.l.b16 %v336
      %v1593 = vunpack.c.l.b16 %v337
      %v1594 = vunpack.c.l.b16 %v338
      %v1595 = vunpack.c.l.b16 %v339
      %v1596 = vunpack.c.l.b16 %v340
      %v1597 = vunpack.c.l.b16 %v341
      %v1598 = vunpack.c.l.b16 %v342
      %v1599 = vunpack.c.l.b16 %v343
      %v1600 = vunpack.c.l.b16 %v344
      %v1601 = vunpack.c.l.b16 %v345
      %v1602 = vunpack.c.l.b16 %v346
      %v1603 = vunpack.c.l.b16 %v347
      %v1604 = vunpack.c.l.b16 %v348
      %v1605 = vunpack.c.l.b16 %v349
      %v1606 = vunpack.c.l.b16 %v350
      %v1607 = vunpack.c.l.b16 %v351
      %v1608 = vunpack.c.l.b16 %v352
      %v1609 = vunpack.c.l.b16 %v353
      %v1610 = vunpack.c.l.b16 %v354
      %v1611 = vunpack.c.l.b16 %v355
      %v1612 = vunpack.c.l.b16 %v356
      %v1613 = vunpack.c.l.b16 %v357
      %v1614 = vunpack.c.l.b16 %v358
      %v1615 = vunpack.c.l.b16 %v359
      %v1616 = vunpack.c.l.b16 %v360
      %v1617 = vunpack.c.l.b16 %v361
      %v1618 = vunpack.c.l.b16 %v362
      %v1619 = vunpack.c.l.b16 %v363
      %v1620 = vunpack.c.l.b16 %v364
      %v1621 = vunpack.c.l.b16 %v365
      %v1622 = vunpack.c.l.b16 %v366
      %v1623 = vunpack.c.l.b16 %v367
      %v1624 = vunpack.c.l.b16 %v368
      %v1625 = vunpack.c.l.b16 %v369
      %v1626 = vunpack.c.l.b16 %v370
      %v1627 = vunpack.c.l.b16 %v371
      %v1628 = vunpack.c.l.b16 %v372
      %v1629 = vunpack.c.l.b16 %v373
      %v1630 = vunpack.c.l.b16 %v374
      %v1631 = vunpack.c.l.b16 %v375
      %v1632 = vunpack.c.l.b16 %v376
      %v1633 = vunpack.c.l.b16 %v377
      %v1634 = vunpack.c.l.b16 %v378
      %v1635 = vunpack.c.l.b16 %v379
      %v1636 = vunpack.c.l.b16 %v380
      %v1637 = vunpack.c.l.b16 %v381
      %v1638 = vunpack.c.l.b16 %v382
      %v1639 = vunpack.c.l.b16 %v383
      %v1640 = vunpack.c.l.b16 %v384
      %v1641 = vunpack.c.l.b16 %v385
      %v1642 = vunpack.c.l.b16 %v386
      %v1643 = vunpack.c.l.b16 %v387
      %v1644 = vunpack.c.l.b16 %v388
      %v1645 = vunpack.c.l.b16 %v389
      %v1646 = vunpack.c.l.b16 %v390
      %v1647 = vunpack.c.l.b16 %v391
      %v1648 = vunpack.c.l.b16 %v392
      %v1649 = vunpack.c.l.b16 %v393
      %v1650 = vunpack.c.l.b16 %v394
      %v1651 = vunpack.c.l.b16 %v395
      %v1652 = vunpack.c.l.b16 %v396
      %v1653 = vunpack.c.l.b16 %v397
      %v1654 = vunpack.c.l.b16 %v398
      %v1655 = vunpack.c.l.b16 %v399
      %v1656 = vunpack.c.l.b16 %v400
      %v1657 = vunpack.c.l.b16 %v401
      %v1658 = vunpack.c.l.b16 %v402
      %v1659 = vunpack.c.l.b16 %v403
      %v1660 = vunpack.c.l.b16 %v404
      %v1661 = vunpack.c.l.b16 %v405
      %v1662 = vunpack.c.l.b16 %v406
      %v1663 = vunpack.c.l.b16 %v407
      %v1664 = vunpack.c.l.b16 %v408
      %v1665 = vunpack.c.l.b16 %v409
      %v1666 = vunpack.c.l.b16 %v410
      %v1667 = vunpack.c.l.b16 %v411
      %v1668 = vunpack.c.l.b16 %v412
      %v1669 = vunpack.c.l.b16 %v413
      %v1670 = vunpack.c.l.b16 %v414
      %v1671 = vunpack.c.l.b16 %v415
      %v1672 = vunpack.c.l.b16 %v416
      %v1673 = vunpack.c.l.b16 %v417
      %v1674 = vunpack.c.l.b16 %v418
      %v1675 = vunpack.c.l.b16 %v419
      %v1676 = vunpack.c.l.b16 %v420
      %v1677 = vunpack.c.l.b16 %v421
      %v1678 = vunpack.c.l.b16 %v422
      %v1679 = vunpack.c.l.b16 %v423
      %v1680 = vunpack.c.l.b16 %v424
      %v1681 = vunpack.c.l.b16 %v425
      %v1682 = vunpack.c.l.b16 %v426
      %v1683 = vunpack.c.l.b16 %v427
      %v1684 = vunpack.c.l.b16 %v428
      %v1685 = vunpack.c.l.b16 %v429
      %v1686 = vunpack.c.l.b16 %v430
      %v1687 = vunpack.c.l.b16 %v431
      %v1688 = vunpack.c.l.b16 %v432
      %v1689 = vunpack.c.l.b16 %v433
      %v1690 = vunpack.c.l.b16 %v434
      %v1691 = vunpack.c.l.b16 %v435
      %v1692 = vunpack.c.l.b16 %v436
      %v1693 = vunpack.c.l.b16 %v437
      %v1694 = vunpack.c.l.b16 %v438
      %v1695 = vunpack.c.l.b16 %v439
      %v1696 = vunpack.c.l.b16 %v440
      %v1697 = vunpack.c.l.b16 %v441
      %v1698 = vunpack.c.l.b16 %v442
      %v1699 = vunpack.c.l.b16 %v443
      %v1700 = vunpack.c.l.b16 %v444
      %v1701 = vunpack.c.l.b16 %v445
      %v1702 = vunpack.c.l.b16 %v446
      %v1703 = vunpack.c.l.b16 %v447
      %v1704 = vunpack.c.l.b16 %v448
      %v1705 = vunpack.c.l.b16 %v449
      %v1706 = vunpack.c.l.b16 %v450
      %v1707 = vunpack.c.l.b16 %v451
      %v1708 = vunpack.c.l.b16 %v452
      %v1709 = vunpack.c.l.b16 %v453
      %v1710 = vunpack.c.l.b16 %v454
      %v1711 = vunpack.c.l.b16 %v455
      %v1712 = vunpack.c.l.b16 %v456
      %v1713 = vunpack.c.l.b16 %v457
      %v1714 = vunpack.c.l.b16 %v458
      %v1715 = vunpack.c.l.b16 %v459
      %v1716 = vunpack.c.l.b16 %v460
      %v1717 = vunpack.c.l.b16 %v461
      %v1718 = vunpack.c.l.b16 %v462
      %v1719 = vunpack.c.l.b16 %v463
      %v1720 = vunpack.c.l.b16 %v464
      %v1721 = vunpack.c.l.b16 %v465
      %v1722 = vunpack.c.l.b16 %v466
      %v1723 = vunpack.c.l.b16 %v467
      %v1724 = vunpack.c.l.b16 %v468
      %v1725 = vunpack.c.l.b16 %v469
      %v1726 = vunpack.c.l.b16 %v470
      %v1727 = vunpack.c.l.b16 %v471
      %v1728 = vunpack.c.l.b16 %v472
      %v1729 = vunpack.c.l.b16 %v473
      %v1730 = vunpack.c.l.b16 %v474
      %v1731 = vunpack.c.l.b16 %v475
      %v1732 = vunpack.c.l.b16 %v476
      %v1733 = vunpack.c.l.b16 %v477
      %v1734 = vunpack.c.l.b16 %v478
      %v1735 = vunpack.c.l.b16 %v479
      %v1736 = vunpack.c.l.b16 %v480
      %v1737 = vunpack.c.l.b16 %v481
      %v1738 = vunpack.c.l.b16 %v482
      %v1739 = vunpack.c.l.b16 %v483
      %v1740 = vunpack.c.l.b16 %v484
      %v1741 = vunpack.c.l.b16 %v485
      %v1742 = vunpack.c.l.b16 %v486
      %v1743 = vunpack.c.l.b16 %v487
      %v1744 = vunpack.c.l.b16 %v488
      %v1745 = vunpack.c.l.b16 %v489
      %v1746 = vunpack.c.l.b16 %v490
      %v1747 = vunpack.c.l.b16 %v491
      %v1748 = vunpack.c.l.b16 %v492
      %v1749 = vunpack.c.l.b16 %v493
      %v1750 = vunpack.c.l.b16 %v494
      %v1751 = vunpack.c.l.b16 %v495
      %v1752 = vunpack.c.l.b16 %v496
      %v1753 = vunpack.c.l.b16 %v497
      %v1754 = vunpack.c.l.b16 %v498
      %v1755 = vunpack.c.l.b16 %v499
      %v1756 = vunpack.c.l.b16 %v500
      %v1757 = vunpack.c.l.b16 %v501
      %v1758 = vunpack.c.l.b16 %v502
      %v1759 = vunpack.c.l.b16 %v503
      %v1760 = vunpack.c.l.b16 %v504
      %v1761 = vunpack.c.l.b16 %v505
      %v1762 = vunpack.c.l.b16 %v506
      %v1763 = vunpack.c.l.b16 %v507
      %v1764 = vunpack.c.l.b16 %v508
      %v1765 = vunpack.c.l.b16 %v509
      %v1766 = vunpack.c.l.b16 %v510
      %v1767 = vunpack.c.l.b16 %v511
      %v1768 = vunpack.c.l.b16 %v512
      %v1769 = vunpack.c.l.b16 %v513
      %v1770 = vunpack.c.l.b16 %v514
      %v1771 = vunpack.c.l.b16 %v515
      %v1772 = vunpack.c.l.b16 %v516
      %v1773 = vunpack.c.l.b16 %v517
      %v1774 = vunpack.c.l.b16 %v518
      %v1775 = vunpack.c.l.b16 %v519
      %v1776 = vunpack.c.l.b16 %v520
      %v1777 = vunpack.c.l.b16 %v521
      %v1778 = vunpack.c.l.b16 %v522
      %v1779 = vunpack.c.l.b16 %v523
      %v1780 = vunpack.c.l.b16 %v524
      %v1781 = vunpack.c.l.b16 %v525
      %v1782 = vunpack.c.l.b16 %v526
      %v1783 = vunpack.c.l.b16 %v527
      %v1784 = vunpack.c.l.b16 %v528
      %v1785 = vunpack.c.l.b16 %v529
      %v1786 = vunpack.c.l.b16 %v530
      %v1787 = vunpack.c.l.b16 %v531
      %v1788 = vunpack.c.l.b16 %v532
      %v1789 = vunpack.c.l.b16 %v533
      %v1790 = vunpack.c.l.b16 %v534
      %v1791 = vunpack.c.l.b16 %v535
      %v1792 = vunpack.c.l.b16 %v536
      %v1793 = vunpack.c.l.b16 %v537
      %v1794 = vunpack.c.l.b16 %v538
      %v1795 = vunpack.c.l.b16 %v539
      %v1796 = vunpack.c.l.b16 %v540
      %v1797 = vunpack.c.l.b16 %v541
      %v1798 = vunpack.c.l.b16 %v542
      %v1799 = vunpack.c.l.b16 %v543
      %v1800 = vunpack.c.l.b16 %v544
      %v1801 = vunpack.c.l.b16 %v545
      %v1802 = vunpack.c.l.b16 %v546
      %v1803 = vunpack.c.l.b16 %v547
      %v1804 = vunpack.c.l.b16 %v548
      %v1805 = vunpack.c.l.b16 %v549
      %v1806 = vunpack.c.l.b16 %v550
      %v1807 = vunpack.c.l.b16 %v551
      %v1808 = vunpack.c.l.b16 %v552
      %v1809 = vunpack.c.l.b16 %v553
      %v1810 = vunpack.c.l.b16 %v554
      %v1811 = vunpack.c.l.b16 %v555
      %v1812 = vunpack.c.l.b16 %v556
      %v1813 = vunpack.c.l.b16 %v557
      %v1814 = vunpack.c.l.b16 %v558
      %v1815 = vunpack.c.l.b16 %v559
      %v1816 = vunpack.c.l.b16 %v560
      %v1817 = vunpack.c.l.b16 %v561
      %v1818 = vunpack.c.l.b16 %v562
      %v1819 = vunpack.c.l.b16 %v563
      %v1820 = vunpack.c.l.b16 %v564
      %v1821 = vunpack.c.l.b16 %v565
      %v1822 = vunpack.c.l.b16 %v566
      %v1823 = vunpack.c.l.b16 %v567
      %v1824 = vunpack.c.l.b16 %v568
      %v1825 = vunpack.c.l.b16 %v569
      %v1826 = vunpack.c.l.b16 %v570
      %v1827 = vunpack.c.l.b16 %v571
      %v1828 = vunpack.c.l.b16 %v572
      %v1829 = vunpack.c.l.b16 %v573
      %v1830 = vunpack.c.l.b16 %v574
      %v1831 = vunpack.c.l.b16 %v575
      %v1832 = vunpack.c.l.b16 %v576
      %v1833 = vunpack.c.l.b16 %v577
      %v1834 = vunpack.c.l.b16 %v578
      %v1835 = vunpack.c.l.b16 %v579
      %v1836 = vunpack.c.l.b16 %v580
      %v1837 = vunpack.c.l.b16 %v581
      %v1838 = vunpack.c.l.b16 %v582
      %v1839 = vunpack.c.l.b16 %v583
      %v1840 = vunpack.c.l.b16 %v584
      %v1841 = vunpack.c.l.b16 %v585
      %v1842 = vunpack.c.l.b16 %v586
      %v1843 = vunpack.c.l.b16 %v587
      %v1844 = vunpack.c.l.b16 %v588
      %v1845 = vunpack.c.l.b16 %v589
      %v1846 = vunpack.c.l.b16 %v590
      %v1847 = vunpack.c.l.b16 %v591
      %v1848 = vunpack.c.l.b16 %v592
      %v1849 = vunpack.c.l.b16 %v593
      %v1850 = vunpack.c.l.b16 %v594
      %v1851 = vunpack.c.l.b16 %v595
      %v1852 = vunpack.c.l.b16 %v596
      %v1853 = vunpack.c.l.b16 %v597
      %v1854 = vunpack.c.l.b16 %v598
      %v1855 = vunpack.c.l.b16 %v599
      %v1856 = vunpack.c.l.b16 %v600
      %v1857 = vunpack.c.l.b16 %v601
      %v1858 = vunpack.c.l.b16 %v602
      %v1859 = vunpack.c.l.b16 %v603
      %v1860 = vunpack.c.l.b16 %v604
      %v1861 = vunpack.c.l.b16 %v605
      %v1862 = vunpack.c.l.b16 %v606
      %v1863 = vunpack.c.l.b16 %v607
      %v1864 = vunpack.c.l.b16 %v608
      %v1865 = vunpack.c.l.b16 %v609
      %v1866 = vunpack.c.l.b16 %v610
      %v1867 = vunpack.c.l.b16 %v611
      %v1868 = vunpack.c.l.b16 %v612
      %v1869 = vunpack.c.l.b16 %v613
      %v1870 = vunpack.c.l.b16 %v614
      %v1871 = vunpack.c.l.b16 %v615
      %v1872 = vunpack.c.l.b16 %v616
      %v1873 = vunpack.c.l.b16 %v617
      %v1874 = vunpack.c.l.b16 %v618
      %v1875 = vunpack.c.l.b16 %v619
      %v1876 = vunpack.c.l.b16 %v620
      %v1877 = vunpack.c.l.b16 %v621
      %v1878 = vunpack.c.l.b16 %v622
      %v1879 = vunpack.c.l.b16 %v623
      %v1880 = vunpack.c.l.b16 %v624
      %v1881 = vunpack.c.l.b16 %v625
      %v1882 = vunpack.c.l.b16 %v626
      %v1883 = vunpack.c.l.b16 %v627
      %v1884 = vunpack.c.l.b16 %v628
      %v1885 = vunpack.c.l.b16 %v629
      %v1886 = vunpack.c.l.b16 %v630
      %v1887 = vunpack.c.l.b16 %v631
      %v1888 = vunpack.c.l.b16 %v632
      %v1889 = vunpack.c.l.b16 %v633
      %v1890 = vunpack.c.l.b16 %v634
      %v1891 = vunpack.c.l.b16 %v635
      %v1892 = vunpack.c.l.b16 %v636
      %v1893 = vunpack.c.l.b16 %v637
      %v1894 = vunpack.c.l.b16 %v638
      %v1895 = vunpack.c.l.b16 %v639
      %v1896 = vunpack.c.l.b16 %v640
      %v1897 = vunpack.c.l.b16 %v641
      %v1898 = vunpack.c.l.b16 %v642
      %v1899 = vunpack.c.l.b16 %v643
      %v1900 = vunpack.c.l.b16 %v644
      %v1901 = vunpack.c.l.b16 %v645
      %v1902 = vunpack.c.l.b16 %v646
      %v1903 = vunpack.c.l.b16 %v647
      %v1904 = vunpack.c.l.b16 %v648
      %v1905 = vunpack.c.l.b16 %v649
      %v1906 = vunpack.c.l.b16 %v650
      %v1907 = vunpack.c.l.b16 %v651
      %v1908 = vunpack.c.l.b16 %v652
      %v1909 = vunpack.c.l.b16 %v653
      %v1910 = vunpack.c.l.b16 %v654
      %v1911 = vunpack.c.l.b16 %v655
      %v1912 = vunpack.c.l.b16 %v656
      %v1913 = vunpack.c.l.b16 %v657
      %v1914 = vunpack.c.l.b16 %v658
      %v1915 = vunpack.c.l.b16 %v659
      %v1916 = vunpack.c.l.b16 %v660
      %v1917 = vunpack.c.l.b16 %v661
      %v1918 = vunpack.c.l.b16 %v662
      %v1919 = vunpack.c.l.b16 %v663
      %v1920 = vunpack.c.l.b16 %v664
      %v1921 = vunpack.c.l.b16 %v665
      %v1922 = vunpack.c.l.b16 %v666
      %v1923 = vunpack.c.l.b16 %v667
      %v1924 = vunpack.c.l.b16 %v668
      %v1925 = vunpack.c.l.b16 %v669
      %v1926 = vunpack.c.l.b16 %v670
      %v1927 = vunpack.c.l.b16 %v671
      %v1928 = vunpack.c.l.b16 %v672
      %v1929 = vunpack.c.l.b16 %v673
      %v1930 = vunpack.c.l.b16 %v674
      %v1931 = vunpack.c.l.b16 %v675
      %v1932 = vunpack.c.l.b16 %v676
      %v1933 = vunpack.c.l.b16 %v677
      %v1934 = vunpack.c.l.b16 %v678
      %v1935 = vunpack.c.l.b16 %v679
      %v1936 = vunpack.c.l.b16 %v680
      %v1937 = vunpack.c.l.b16 %v681
      %v1938 = vunpack.c.l.b16 %v682
      %v1939 = vunpack.c.l.b16 %v683
      %v1940 = vunpack.c.l.b16 %v684
      %v1941 = vunpack.c.l.b16 %v685
      %v1942 = vunpack.c.l.b16 %v686
      %v1943 = vunpack.c.l.b16 %v687
      %v1944 = vunpack.c.l.b16 %v688
      %v1945 = vunpack.c.l.b16 %v689
      %v1946 = vunpack.c.l.b16 %v690
      %v1947 = vunpack.c.l.b16 %v691
      %v1948 = vunpack.c.l.b16 %v692
      %v1949 = vunpack.c.l.b16 %v693
      %v1950 = vunpack.c.l.b16 %v694
      %v1951 = vunpack.c.l.b16 %v695
      %v1952 = vunpack.c.l.b16 %v696
      %v1953 = vunpack.c.l.b16 %v697
      %v1954 = vunpack.c.l.b16 %v698
      %v1955 = vunpack.c.l.b16 %v699
      %v1956 = vunpack.c.l.b16 %v700
      %v1957 = vunpack.c.l.b16 %v701
      %v1958 = vunpack.c.l.b16 %v702
      %v1959 = vunpack.c.l.b16 %v703
      %v1960 = vunpack.c.l.b16 %v704
      %v1961 = vunpack.c.l.b16 %v705
      %v1962 = vunpack.c.l.b16 %v706
      %v1963 = vpack.c.b16 %v1452, %v1451
      %v1964 = vpack.c.b16 %v1454, %v1453
      %v1965 = vpack.c.b16 %v1456, %v1455
      %v1966 = vpack.c.b16 %v1458, %v1457
      %v1967 = vpack.c.b16 %v1460, %v1459
      %v1968 = vpack.c.b16 %v1462, %v1461
      %v1969 = vpack.c.b16 %v1464, %v1463
      %v1970 = vpack.c.b16 %v1466, %v1465
      %v1971 = vpack.c.b16 %v1468, %v1467
      %v1972 = vpack.c.b16 %v1470, %v1469
      %v1973 = vpack.c.b16 %v1472, %v1471
      %v1974 = vpack.c.b16 %v1474, %v1473
      %v1975 = vpack.c.b16 %v1476, %v1475
      %v1976 = vpack.c.b16 %v1478, %v1477
      %v1977 = vpack.c.b16 %v1480, %v1479
      %v1978 = vpack.c.b16 %v1482, %v1481
      %v1979 = vpack.c.b16 %v1484, %v1483
      %v1980 = vpack.c.b16 %v1486, %v1485
      %v1981 = vpack.c.b16 %v1488, %v1487
      %v1982 = vpack.c.b16 %v1490, %v1489
      %v1983 = vpack.c.b16 %v1492, %v1491
      %v1984 = vpack.c.b16 %v1494, %v1493
      %v1985 = vpack.c.b16 %v1496, %v1495
      %v1986 = vpack.c.b16 %v1498, %v1497
      %v1987 = vpack.c.b16 %v1500, %v1499
      %v1988 = vpack.c.b16 %v1502, %v1501
      %v1989 = vpack.c.b16 %v1504, %v1503
      %v1990 = vpack.c.b16 %v1506, %v1505
      %v1991 = vpack.c.b16 %v1508, %v1507
      %v1992 = vpack.c.b16 %v1510, %v1509
      %v1993 = vpack.c.b16 %v1512, %v1511
      %v1994 = vpack.c.b16 %v1514, %v1513
      %v1995 = vpack.c.b16 %v1516, %v1515
      %v1996 = vpack.c.b16 %v1518, %v1517
      %v1997 = vpack.c.b16 %v1520, %v1519
      %v1998 = vpack.c.b16 %v1522, %v1521
      %v1999 = vpack.c.b16 %v1524, %v1523
      %v2000 = vpack.c.b16 %v1526, %v1525
      %v2001 = vpack.c.b16 %v1528, %v1527
      %v2002 = vpack.c.b16 %v1530, %v1529
      %v2003 = vpack.c.b16 %v1532, %v1531
      %v2004 = vpack.c.b16 %v1534, %v1533
      %v2005 = vpack.c.b16 %v1536, %v1535
      %v2006 = vpack.c.b16 %v1538, %v1537
      %v2007 = vpack.c.b16 %v1540, %v1539
      %v2008 = vpack.c.b16 %v1542, %v1541
      %v2009 = vpack.c.b16 %v1544, %v1543
      %v2010 = vpack.c.b16 %v1546, %v1545
      %v2011 = vpack.c.b16 %v1548, %v1547
      %v2012 = vpack.c.b16 %v1550, %v1549
      %v2013 = vpack.c.b16 %v1552, %v1551
      %v2014 = vpack.c.b16 %v1554, %v1553
      %v2015 = vpack.c.b16 %v1556, %v1555
      %v2016 = vpack.c.b16 %v1558, %v1557
      %v2017 = vpack.c.b16 %v1560, %v1559
      %v2018 = vpack.c.b16 %v1562, %v1561
      %v2019 = vpack.c.b16 %v1564, %v1563
      %v2020 = vpack.c.b16 %v1566, %v1565
      %v2021 = vpack.c.b16 %v1568, %v1567
      %v2022 = vpack.c.b16 %v1570, %v1569
      %v2023 = vpack.c.b16 %v1572, %v1571
      %v2024 = vpack.c.b16 %v1574, %v1573
      %v2025 = vpack.c.b16 %v1576, %v1575
      %v2026 = vpack.c.b16 %v1578, %v1577
      %v2027 = vpack.c.b16 %v1580, %v1579
      %v2028 = vpack.c.b16 %v1582, %v1581
      %v2029 = vpack.c.b16 %v1584, %v1583
      %v2030 = vpack.c.b16 %v1586, %v1585
      %v2031 = vpack.c.b16 %v1588, %v1587
      %v2032 = vpack.c.b16 %v1590, %v1589
      %v2033 = vpack.c.b16 %v1592, %v1591
      %v2034 = vpack.c.b16 %v1594, %v1593
      %v2035 = vpack.c.b16 %v1596, %v1595
      %v2036 = vpack.c.b16 %v1598, %v1597
      %v2037 = vpack.c.b16 %v1600, %v1599
      %v2038 = vpack.c.b16 %v1602, %v1601
      %v2039 = vpack.c.b16 %v1604, %v1603
      %v2040 = vpack.c.b16 %v1606, %v1605
      %v2041 = vpack.c.b16 %v1608, %v1607
      %v2042 = vpack.c.b16 %v1610, %v1609
      %v2043 = vpack.c.b16 %v1612, %v1611
      %v2044 = vpack.c.b16 %v1614, %v1613
      %v2045 = vpack.c.b16 %v1616, %v1615
      %v2046 = vpack.c.b16 %v1618, %v1617
      %v2047 = vpack.c.b16 %v1620, %v1619
      %v2048 = vpack.c.b16 %v1622, %v1621
      %v2049 = vpack.c.b16 %v1624, %v1623
      %v2050 = vpack.c.b16 %v1626, %v1625
      %v2051 = vpack.c.b16 %v1628, %v1627
      %v2052 = vpack.c.b16 %v1630, %v1629
      %v2053 = vpack.c.b16 %v1632, %v1631
      %v2054 = vpack.c.b16 %v1634, %v1633
      %v2055 = vpack.c.b16 %v1636, %v1635
      %v2056 = vpack.c.b16 %v1638, %v1637
      %v2057 = vpack.c.b16 %v1640, %v1639
      %v2058 = vpack.c.b16 %v1642, %v1641
      %v2059 = vpack.c.b16 %v1644, %v1643
      %v2060 = vpack.c.b16 %v1646, %v1645
      %v2061 = vpack.c.b16 %v1648, %v1647
      %v2062 = vpack.c.b16 %v1650, %v1649
      %v2063 = vpack.c.b16 %v1652, %v1651
      %v2064 = vpack.c.b16 %v1654, %v1653
      %v2065 = vpack.c.b16 %v1656, %v1655
      %v2066 = vpack.c.b16 %v1658, %v1657
      %v2067 = vpack.c.b16 %v1660, %v1659
      %v2068 = vpack.c.b16 %v1662, %v1661
      %v2069 = vpack.c.b16 %v1664, %v1663
      %v2070 = vpack.c.b16 %v1666, %v1665
      %v2071 = vpack.c.b16 %v1668, %v1667
      %v2072 = vpack.c.b16 %v1670, %v1669
      %v2073 = vpack.c.b16 %v1672, %v1671
      %v2074 = vpack.c.b16 %v1674, %v1673
      %v2075 = vpack.c.b16 %v1676, %v1675
      %v2076 = vpack.c.b16 %v1678, %v1677
      %v2077 = vpack.c.b16 %v1680, %v1679
      %v2078 = vpack.c.b16 %v1682, %v1681
      %v2079 = vpack.c.b16 %v1684, %v1683
      %v2080 = vpack.c.b16 %v1686, %v1685
      %v2081 = vpack.c.b16 %v1688, %v1687
      %v2082 = vpack.c.b16 %v1690, %v1689
      %v2083 = vpack.c.b16 %v1692, %v1691
      %v2084 = vpack.c.b16 %v1694, %v1693
      %v2085 = vpack.c.b16 %v1696, %v1695
      %v2086 = vpack.c.b16 %v1698, %v1697
      %v2087 = vpack.c.b16 %v1700, %v1699
      %v2088 = vpack.c.b16 %v1702, %v1701
      %v2089 = vpack.c.b16 %v1704, %v1703
      %v2090 = vpack.c.b16 %v1706, %v1705
      %v2091 = vpack.c.b16 %v1708, %v1707
      %v2092 = vpack.c.b16 %v1710, %v1709
      %v2093 = vpack.c.b16 %v1712, %v1711
      %v2094 = vpack.c.b16 %v1714, %v1713
      %v2095 = vpack.c.b16 %v1716, %v1715
      %v2096 = vpack.c.b16 %v1718, %v1717
      %v2097 = vpack.c.b16 %v1720, %v1719
      %v2098 = vpack.c.b16 %v1722, %v1721
      %v2099 = vpack.c.b16 %v1724, %v1723
      %v2100 = vpack.c.b16 %v1726, %v1725
      %v2101 = vpack.c.b16 %v1728, %v1727
      %v2102 = vpack.c.b16 %v1730, %v1729
      %v2103 = vpack.c.b16 %v1732, %v1731
      %v2104 = vpack.c.b16 %v1734, %v1733
      %v2105 = vpack.c.b16 %v1736, %v1735
      %v2106 = vpack.c.b16 %v1738, %v1737
      %v2107 = vpack.c.b16 %v1740, %v1739
      %v2108 = vpack.c.b16 %v1742, %v1741
      %v2109 = vpack.c.b16 %v1744, %v1743
      %v2110 = vpack.c.b16 %v1746, %v1745
      %v2111 = vpack.c.b16 %v1748, %v1747
      %v2112 = vpack.c.b16 %v1750, %v1749
      %v2113 = vpack.c.b16 %v1752, %v1751
      %v2114 = vpack.c.b16 %v1754, %v1753
      %v2115 = vpack.c.b16 %v1756, %v1755
      %v2116 = vpack.c.b16 %v1758, %v1757
      %v2117 = vpack.c.b16 %v1760, %v1759
      %v2118 = vpack.c.b16 %v1762, %v1761
      %v2119 = vpack.c.b16 %v1764, %v1763
      %v2120 = vpack.c.b16 %v1766, %v1765
      %v2121 = vpack.c.b16 %v1768, %v1767
      %v2122 = vpack.c.b16 %v1770, %v1769
      %v2123 = vpack.c.b16 %v1772, %v1771
      %v2124 = vpack.c.b16 %v1774, %v1773
      %v2125 = vpack.c.b16 %v1776, %v1775
      %v2126 = vpack.c.b16 %v1778, %v1777
      %v2127 = vpack.c.b16 %v1780, %v1779
      %v2128 = vpack.c.b16 %v1782, %v1781
      %v2129 = vpack.c.b16 %v1784, %v1783
      %v2130 = vpack.c.b16 %v1786, %v1785
      %v2131 = vpack.c.b16 %v1788, %v1787
      %v2132 = vpack.c.b16 %v1790, %v1789
      %v2133 = vpack.c.b16 %v1792, %v1791
      %v2134 = vpack.c.b16 %v1794, %v1793
      %v2135 = vpack.c.b16 %v1796, %v1795
      %v2136 = vpack.c.b16 %v1798, %v1797
      %v2137 = vpack.c.b16 %v1800, %v1799
      %v2138 = vpack.c.b16 %v1802, %v1801
      %v2139 = vpack.c.b16 %v1804, %v1803
      %v2140 = vpack.c.b16 %v1806, %v1805
      %v2141 = vpack.c.b16 %v1808, %v1807
      %v2142 = vpack.c.b16 %v1810, %v1809
      %v2143 = vpack.c.b16 %v1812, %v1811
      %v2144 = vpack.c.b16 %v1814, %v1813
      %v2145 = vpack.c.b16 %v1816, %v1815
      %v2146 = vpack.c.b16 %v1818, %v1817
      %v2147 = vpack.c.b16 %v1820, %v1819
      %v2148 = vpack.c.b16 %v1822, %v1821
      %v2149 = vpack.c.b16 %v1824, %v1823
      %v2150 = vpack.c.b16 %v1826, %v1825
      %v2151 = vpack.c.b16 %v1828, %v1827
      %v2152 = vpack.c.b16 %v1830, %v1829
      %v2153 = vpack.c.b16 %v1832, %v1831
      %v2154 = vpack.c.b16 %v1834, %v1833
      %v2155 = vpack.c.b16 %v1836, %v1835
      %v2156 = vpack.c.b16 %v1838, %v1837
      %v2157 = vpack.c.b16 %v1840, %v1839
      %v2158 = vpack.c.b16 %v1842, %v1841
      %v2159 = vpack.c.b16 %v1844, %v1843
      %v2160 = vpack.c.b16 %v1846, %v1845
      %v2161 = vpack.c.b16 %v1848, %v1847
      %v2162 = vpack.c.b16 %v1850, %v1849
      %v2163 = vpack.c.b16 %v1852, %v1851
      %v2164 = vpack.c.b16 %v1854, %v1853
      %v2165 = vpack.c.b16 %v1856, %v1855
      %v2166 = vpack.c.b16 %v1858, %v1857
      %v2167 = vpack.c.b16 %v1860, %v1859
      %v2168 = vpack.c.b16 %v1862, %v1861
      %v2169 = vpack.c.b16 %v1864, %v1863
      %v2170 = vpack.c.b16 %v1866, %v1865
      %v2171 = vpack.c.b16 %v1868, %v1867
      %v2172 = vpack.c.b16 %v1870, %v1869
      %v2173 = vpack.c.b16 %v1872, %v1871
      %v2174 = vpack.c.b16 %v1874, %v1873
      %v2175 = vpack.c.b16 %v1876, %v1875
      %v2176 = vpack.c.b16 %v1878, %v1877
      %v2177 = vpack.c.b16 %v1880, %v1879
      %v2178 = vpack.c.b16 %v1882, %v1881
      %v2179 = vpack.c.b16 %v1884, %v1883
      %v2180 = vpack.c.b16 %v1886, %v1885
      %v2181 = vpack.c.b16 %v1888, %v1887
      %v2182 = vpack.c.b16 %v1890, %v1889
      %v2183 = vpack.c.b16 %v1892, %v1891
      %v2184 = vpack.c.b16 %v1894, %v1893
      %v2185 = vpack.c.b16 %v1896, %v1895
      %v2186 = vpack.c.b16 %v1898, %v1897
      %v2187 = vpack.c.b16 %v1900, %v1899
      %v2188 = vpack.c.b16 %v1902, %v1901
      %v2189 = vpack.c.b16 %v1904, %v1903
      %v2190 = vpack.c.b16 %v1906, %v1905
      %v2191 = vpack.c.b16 %v1908, %v1907
      %v2192 = vpack.c.b16 %v1910, %v1909
      %v2193 = vpack.c.b16 %v1912, %v1911
      %v2194 = vpack.c.b16 %v1914, %v1913
      %v2195 = vpack.c.b16 %v1916, %v1915
      %v2196 = vpack.c.b16 %v1918, %v1917
      %v2197 = vpack.c.b16 %v1920, %v1919
      %v2198 = vpack.c.b16 %v1922, %v1921
      %v2199 = vpack.c.b16 %v1924, %v1923
      %v2200 = vpack.c.b16 %v1926, %v1925
      %v2201 = vpack.c.b16 %v1928, %v1927
      %v2202 = vpack.c.b16 %v1930, %v1929
      %v2203 = vpack.c.b16 %v1932, %v1931
      %v2204 = vpack.c.b16 %v1934, %v1933
      %v2205 = vpack.c.b16 %v1936, %v1935
      %v2206 = vpack.c.b16 %v1938, %v1937
      %v2207 = vpack.c.b16 %v1940, %v1939
      %v2208 = vpack.c.b16 %v1942, %v1941
      %v2209 = vpack.c.b16 %v1944, %v1943
      %v2210 = vpack.c.b16 %v1946, %v1945
      %v2211 = vpack.c.b16 %v1948, %v1947
      %v2212 = vpack.c.b16 %v1950, %v1949
      %v2213 = vpack.c.b16 %v1952, %v1951
      %v2214 = vpack.c.b16 %v1954, %v1953
      %v2215 = vpack.c.b16 %v1956, %v1955
      %v2216 = vpack.c.b16 %v1958, %v1957
      %v2217 = vpack.c.b16 %v1960, %v1959
      %v2218 = vpack.c.b16 %v1962, %v1961
      %2475 = vmatprep.subr.bf16.mxu0 0
      %2476 = vmatpush1.bf16.msra.mxu0 %v1963
      %2477 = vmatprep.subr.bf16.mxu0 0
      %2478 = vmatpush1.bf16.msra.mxu0 %v1964
      %2479 = vmatprep.subr.bf16.mxu0 0
      %2480 = vmatpush1.bf16.msra.mxu0 %v1965
      %2481 = vmatprep.subr.bf16.mxu0 0
      %2482 = vmatpush1.bf16.msra.mxu0 %v1966
      %2483 = vmatprep.subr.bf16.mxu0 0
      %2484 = vmatpush1.bf16.msra.mxu0 %v1967
      %2485 = vmatprep.subr.bf16.mxu0 0
      %2486 = vmatpush1.bf16.msra.mxu0 %v1968
      %2487 = vmatprep.subr.bf16.mxu0 0
      %2488 = vmatpush1.bf16.msra.mxu0 %v1969
      %2489 = vmatprep.subr.bf16.mxu0 0
      %2490 = vmatpush1.bf16.msra.mxu0 %v1970
      %2491 = vmatprep.subr.bf16.mxu0 0
      %2492 = vmatpush1.bf16.msra.mxu0 %v1971
      %2493 = vmatprep.subr.bf16.mxu0 0
      %2494 = vmatpush1.bf16.msra.mxu0 %v1972
      %2495 = vmatprep.subr.bf16.mxu0 0
      %2496 = vmatpush1.bf16.msra.mxu0 %v1973
      %2497 = vmatprep.subr.bf16.mxu0 0
      %2498 = vmatpush1.bf16.msra.mxu0 %v1974
      %2499 = vmatprep.subr.bf16.mxu0 0
      %2500 = vmatpush1.bf16.msra.mxu0 %v1975
      %2501 = vmatprep.subr.bf16.mxu0 0
      %2502 = vmatpush1.bf16.msra.mxu0 %v1976
      %2503 = vmatprep.subr.bf16.mxu0 0
      %2504 = vmatpush1.bf16.msra.mxu0 %v1977
      %2505 = vmatprep.subr.bf16.mxu0 0
      %2506 = vmatpush1.bf16.msra.mxu0 %v1978
      %2507 = vmatprep.mubr.bf16.mxu0 %v748
      %2508 = vmatmul.mubr.bf16.gmra.mrb[0].mxu0 %v734
      %v2509 = vpop.f32.mrb[0].mxu0
      %v2510 = vadd.f32 0.0, %v2509
      %v2511 = vpop.f32.mrb[0].mxu0
      %v2512 = vpop.f32.mrb[0].mxu0
      %v2513 = vpop.f32.mrb[0].mxu0
      %2514 = vdwg.mxu0
      %2515 = vmatprep.subr.bf16.mxu0 0
      %2516 = vmatpush1.bf16.msra.mxu0 %v1979
      %2517 = vmatprep.subr.bf16.mxu0 0
      %2518 = vmatpush1.bf16.msra.mxu0 %v1980
      %2519 = vmatprep.subr.bf16.mxu0 0
      %2520 = vmatpush1.bf16.msra.mxu0 %v1981
      %2521 = vmatprep.subr.bf16.mxu0 0
      %2522 = vmatpush1.bf16.msra.mxu0 %v1982
      %2523 = vmatprep.subr.bf16.mxu0 0
      %2524 = vmatpush1.bf16.msra.mxu0 %v1983
      %2525 = vmatprep.subr.bf16.mxu0 0
      %2526 = vmatpush1.bf16.msra.mxu0 %v1984
      %2527 = vmatprep.subr.bf16.mxu0 0
      %2528 = vmatpush1.bf16.msra.mxu0 %v1985
      %2529 = vmatprep.subr.bf16.mxu0 0
      %2530 = vmatpush1.bf16.msra.mxu0 %v1986
      %2531 = vmatprep.subr.bf16.mxu0 0
      %2532 = vmatpush1.bf16.msra.mxu0 %v1987
      %2533 = vmatprep.subr.bf16.mxu0 0
      %2534 = vmatpush1.bf16.msra.mxu0 %v1988
      %2535 = vmatprep.subr.bf16.mxu0 0
      %2536 = vmatpush1.bf16.msra.mxu0 %v1989
      %2537 = vmatprep.subr.bf16.mxu0 0
      %2538 = vmatpush1.bf16.msra.mxu0 %v1990
      %2539 = vmatprep.subr.bf16.mxu0 0
      %2540 = vmatpush1.bf16.msra.mxu0 %v1991
      %2541 = vmatprep.subr.bf16.mxu0 0
      %2542 = vmatpush1.bf16.msra.mxu0 %v1992
      %2543 = vmatprep.subr.bf16.mxu0 0
      %2544 = vmatpush1.bf16.msra.mxu0 %v1993
      %2545 = vmatprep.subr.bf16.mxu0 0
      %2546 = vmatpush1.bf16.msra.mxu0 %v1994
      %2547 = vmatprep.mubr.bf16.mxu0 %v758
      %2548 = vmatmul.mubr.bf16.gmra.mrb[0].mxu0 %v756
      %v2549 = vpop.f32.mrb[0].mxu0
      %v2550 = vadd.f32 %v2510, %v2549
      %v2551 = vpop.f32.mrb[0].mxu0
      %v2552 = vpop.f32.mrb[0].mxu0
      %v2553 = vpop.f32.mrb[0].mxu0
      %2554 = vdwg.mxu0
      %2555 = vmatprep.subr.bf16.mxu0 0
      %2556 = vmatpush1.bf16.msra.mxu0 %v1995
      %2557 = vmatprep.subr.bf16.mxu0 0
      %2558 = vmatpush1.bf16.msra.mxu0 %v1996
      %2559 = vmatprep.subr.bf16.mxu0 0
      %2560 = vmatpush1.bf16.msra.mxu0 %v1997
      %2561 = vmatprep.subr.bf16.mxu0 0
      %2562 = vmatpush1.bf16.msra.mxu0 %v1998
      %2563 = vmatprep.subr.bf16.mxu0 0
      %2564 = vmatpush1.bf16.msra.mxu0 %v1999
      %2565 = vmatprep.subr.bf16.mxu0 0
      %2566 = vmatpush1.bf16.msra.mxu0 %v2000
      %2567 = vmatprep.subr.bf16.mxu0 0
      %2568 = vmatpush1.bf16.msra.mxu0 %v2001
      %2569 = vmatprep.subr.bf16.mxu0 0
      %2570 = vmatpush1.bf16.msra.mxu0 %v2002
      %2571 = vmatprep.subr.bf16.mxu0 0
      %2572 = vmatpush1.bf16.msra.mxu0 %v2003
      %2573 = vmatprep.subr.bf16.mxu0 0
      %2574 = vmatpush1.bf16.msra.mxu0 %v2004
      %2575 = vmatprep.subr.bf16.mxu0 0
      %2576 = vmatpush1.bf16.msra.mxu0 %v2005
      %2577 = vmatprep.subr.bf16.mxu0 0
      %2578 = vmatpush1.bf16.msra.mxu0 %v2006
      %2579 = vmatprep.subr.bf16.mxu0 0
      %2580 = vmatpush1.bf16.msra.mxu0 %v2007
      %2581 = vmatprep.subr.bf16.mxu0 0
      %2582 = vmatpush1.bf16.msra.mxu0 %v2008
      %2583 = vmatprep.subr.bf16.mxu0 0
      %2584 = vmatpush1.bf16.msra.mxu0 %v2009
      %2585 = vmatprep.subr.bf16.mxu0 0
      %2586 = vmatpush1.bf16.msra.mxu0 %v2010
      %2587 = vmatprep.mubr.bf16.mxu0 %v755
      %2588 = vmatmul.mubr.bf16.gmra.mrb[0].mxu0 %v741
      %v2589 = vpop.f32.mrb[0].mxu0
      %v2590 = vadd.f32 %v2550, %v2589
      %v2591 = vpop.f32.mrb[0].mxu0
      %v2592 = vpop.f32.mrb[0].mxu0
      %v2593 = vpop.f32.mrb[0].mxu0
      %2594 = vdwg.mxu0
      %2595 = vmatprep.subr.bf16.mxu0 0
      %2596 = vmatpush1.bf16.msra.mxu0 %v2011
      %2597 = vmatprep.subr.bf16.mxu0 0
      %2598 = vmatpush1.bf16.msra.mxu0 %v2012
      %2599 = vmatprep.subr.bf16.mxu0 0
      %2600 = vmatpush1.bf16.msra.mxu0 %v2013
      %2601 = vmatprep.subr.bf16.mxu0 0
      %2602 = vmatpush1.bf16.msra.mxu0 %v2014
      %2603 = vmatprep.subr.bf16.mxu0 0
      %2604 = vmatpush1.bf16.msra.mxu0 %v2015
      %2605 = vmatprep.subr.bf16.mxu0 0
      %2606 = vmatpush1.bf16.msra.mxu0 %v2016
      %2607 = vmatprep.subr.bf16.mxu0 0
      %2608 = vmatpush1.bf16.msra.mxu0 %v2017
      %2609 = vmatprep.subr.bf16.mxu0 0
      %2610 = vmatpush1.bf16.msra.mxu0 %v2018
      %2611 = vmatprep.subr.bf16.mxu0 0
      %2612 = vmatpush1.bf16.msra.mxu0 %v2019
      %2613 = vmatprep.subr.bf16.mxu0 0
      %2614 = vmatpush1.bf16.msra.mxu0 %v2020
      %2615 = vmatprep.subr.bf16.mxu0 0
      %2616 = vmatpush1.bf16.msra.mxu0 %v2021
      %2617 = vmatprep.subr.bf16.mxu0 0
      %2618 = vmatpush1.bf16.msra.mxu0 %v2022
      %2619 = vmatprep.subr.bf16.mxu0 0
      %2620 = vmatpush1.bf16.msra.mxu0 %v2023
      %2621 = vmatprep.subr.bf16.mxu0 0
      %2622 = vmatpush1.bf16.msra.mxu0 %v2024
      %2623 = vmatprep.subr.bf16.mxu0 0
      %2624 = vmatpush1.bf16.msra.mxu0 %v2025
      %2625 = vmatprep.subr.bf16.mxu0 0
      %2626 = vmatpush1.bf16.msra.mxu0 %v2026
      %2627 = vmatprep.mubr.bf16.mxu0 %v759
      %2628 = vmatmul.mubr.bf16.gmra.mrb[0].mxu0 %v757
      %v2629 = vpop.f32.mrb[0].mxu0
      %v2630 = vadd.f32 %v2590, %v2629
      %v2631 = vpop.f32.mrb[0].mxu0
      %v2632 = vpop.f32.mrb[0].mxu0
      %v2633 = vpop.f32.mrb[0].mxu0
      %2634 = vdwg.mxu0
      %2635 = vmatprep.subr.bf16.mxu0 0
      %2636 = vmatpush1.bf16.msra.mxu0 %v2027
      %2637 = vmatprep.subr.bf16.mxu0 0
      %2638 = vmatpush1.bf16.msra.mxu0 %v2028
      %2639 = vmatprep.subr.bf16.mxu0 0
      %2640 = vmatpush1.bf16.msra.mxu0 %v2029
      %2641 = vmatprep.subr.bf16.mxu0 0
      %2642 = vmatpush1.bf16.msra.mxu0 %v2030
      %2643 = vmatprep.subr.bf16.mxu0 0
      %2644 = vmatpush1.bf16.msra.mxu0 %v2031
      %2645 = vmatprep.subr.bf16.mxu0 0
      %2646 = vmatpush1.bf16.msra.mxu0 %v2032
      %2647 = vmatprep.subr.bf16.mxu0 0
      %2648 = vmatpush1.bf16.msra.mxu0 %v2033
      %2649 = vmatprep.subr.bf16.mxu0 0
      %2650 = vmatpush1.bf16.msra.mxu0 %v2034
      %2651 = vmatprep.subr.bf16.mxu0 0
      %2652 = vmatpush1.bf16.msra.mxu0 %v2035
      %2653 = vmatprep.subr.bf16.mxu0 0
      %2654 = vmatpush1.bf16.msra.mxu0 %v2036
      %2655 = vmatprep.subr.bf16.mxu0 0
      %2656 = vmatpush1.bf16.msra.mxu0 %v2037
      %2657 = vmatprep.subr.bf16.mxu0 0
      %2658 = vmatpush1.bf16.msra.mxu0 %v2038
      %2659 = vmatprep.subr.bf16.mxu0 0
      %2660 = vmatpush1.bf16.msra.mxu0 %v2039
      %2661 = vmatprep.subr.bf16.mxu0 0
      %2662 = vmatpush1.bf16.msra.mxu0 %v2040
      %2663 = vmatprep.subr.bf16.mxu0 0
      %2664 = vmatpush1.bf16.msra.mxu0 %v2041
      %2665 = vmatprep.subr.bf16.mxu0 0
      %2666 = vmatpush1.bf16.msra.mxu0 %v2042
      %2667 = vmatprep.mubr.bf16.mxu0 %v797
      %2668 = vmatmul.mubr.bf16.gmra.mrb[0].mxu0 %v783
      %v2669 = vpop.f32.mrb[0].mxu0
      %v2670 = vadd.f32 %v2630, %v2669
      %v2671 = vpop.f32.mrb[0].mxu0
      %v2672 = vpop.f32.mrb[0].mxu0
      %v2673 = vpop.f32.mrb[0].mxu0
      %2674 = vdwg.mxu0
      %2675 = vmatprep.subr.bf16.mxu0 0
      %2676 = vmatpush1.bf16.msra.mxu0 %v2043
      %2677 = vmatprep.subr.bf16.mxu0 0
      %2678 = vmatpush1.bf16.msra.mxu0 %v2044
      %2679 = vmatprep.subr.bf16.mxu0 0
      %2680 = vmatpush1.bf16.msra.mxu0 %v2045
      %2681 = vmatprep.subr.bf16.mxu0 0
      %2682 = vmatpush1.bf16.msra.mxu0 %v2046
      %2683 = vmatprep.subr.bf16.mxu0 0
      %2684 = vmatpush1.bf16.msra.mxu0 %v2047
      %2685 = vmatprep.subr.bf16.mxu0 0
      %2686 = vmatpush1.bf16.msra.mxu0 %v2048
      %2687 = vmatprep.subr.bf16.mxu0 0
      %2688 = vmatpush1.bf16.msra.mxu0 %v2049
      %2689 = vmatprep.subr.bf16.mxu0 0
      %2690 = vmatpush1.bf16.msra.mxu0 %v2050
      %2691 = vmatprep.subr.bf16.mxu0 0
      %2692 = vmatpush1.bf16.msra.mxu0 %v2051
      %2693 = vmatprep.subr.bf16.mxu0 0
      %2694 = vmatpush1.bf16.msra.mxu0 %v2052
      %2695 = vmatprep.subr.bf16.mxu0 0
      %2696 = vmatpush1.bf16.msra.mxu0 %v2053
      %2697 = vmatprep.subr.bf16.mxu0 0
      %2698 = vmatpush1.bf16.msra.mxu0 %v2054
      %2699 = vmatprep.subr.bf16.mxu0 0
      %2700 = vmatpush1.bf16.msra.mxu0 %v2055
      %2701 = vmatprep.subr.bf16.mxu0 0
      %2702 = vmatpush1.bf16.msra.mxu0 %v2056
      %2703 = vmatprep.subr.bf16.mxu0 0
      %2704 = vmatpush1.bf16.msra.mxu0 %v2057
      %2705 = vmatprep.subr.bf16.mxu0 0
      %2706 = vmatpush1.bf16.msra.mxu0 %v2058
      %2707 = vmatprep.mubr.bf16.mxu0 %v807
      %2708 = vmatmul.mubr.bf16.gmra.mrb[0].mxu0 %v805
      %v2709 = vpop.f32.mrb[0].mxu0
      %v2710 = vadd.f32 %v2670, %v2709
      %v2711 = vpop.f32.mrb[0].mxu0
      %v2712 = vpop.f32.mrb[0].mxu0
      %v2713 = vpop.f32.mrb[0].mxu0
      %2714 = vdwg.mxu0
      %2715 = vmatprep.subr.bf16.mxu0 0
      %2716 = vmatpush1.bf16.msra.mxu0 %v2059
      %2717 = vmatprep.subr.bf16.mxu0 0
      %2718 = vmatpush1.bf16.msra.mxu0 %v2060
      %2719 = vmatprep.subr.bf16.mxu0 0
      %2720 = vmatpush1.bf16.msra.mxu0 %v2061
      %2721 = vmatprep.subr.bf16.mxu0 0
      %2722 = vmatpush1.bf16.msra.mxu0 %v2062
      %2723 = vmatprep.subr.bf16.mxu0 0
      %2724 = vmatpush1.bf16.msra.mxu0 %v2063
      %2725 = vmatprep.subr.bf16.mxu0 0
      %2726 = vmatpush1.bf16.msra.mxu0 %v2064
      %2727 = vmatprep.subr.bf16.mxu0 0
      %2728 = vmatpush1.bf16.msra.mxu0 %v2065
      %2729 = vmatprep.subr.bf16.mxu0 0
      %2730 = vmatpush1.bf16.msra.mxu0 %v2066
      %2731 = vmatprep.subr.bf16.mxu0 0
      %2732 = vmatpush1.bf16.msra.mxu0 %v2067
      %2733 = vmatprep.subr.bf16.mxu0 0
      %2734 = vmatpush1.bf16.msra.mxu0 %v2068
      %2735 = vmatprep.subr.bf16.mxu0 0
      %2736 = vmatpush1.bf16.msra.mxu0 %v2069
      %2737 = vmatprep.subr.bf16.mxu0 0
      %2738 = vmatpush1.bf16.msra.mxu0 %v2070
      %2739 = vmatprep.subr.bf16.mxu0 0
      %2740 = vmatpush1.bf16.msra.mxu0 %v2071
      %2741 = vmatprep.subr.bf16.mxu0 0
      %2742 = vmatpush1.bf16.msra.mxu0 %v2072
      %2743 = vmatprep.subr.bf16.mxu0 0
      %2744 = vmatpush1.bf16.msra.mxu0 %v2073
      %2745 = vmatprep.subr.bf16.mxu0 0
      %2746 = vmatpush1.bf16.msra.mxu0 %v2074
      %2747 = vmatprep.mubr.bf16.mxu0 %v804
      %2748 = vmatmul.mubr.bf16.gmra.mrb[0].mxu0 %v790
      %v2749 = vpop.f32.mrb[0].mxu0
      %v2750 = vadd.f32 %v2710, %v2749
      %v2751 = vpop.f32.mrb[0].mxu0
      %v2752 = vpop.f32.mrb[0].mxu0
      %v2753 = vpop.f32.mrb[0].mxu0
      %2754 = vdwg.mxu0
      %2755 = vmatprep.subr.bf16.mxu0 0
      %2756 = vmatpush1.bf16.msra.mxu0 %v2075
      %2757 = vmatprep.subr.bf16.mxu0 0
      %2758 = vmatpush1.bf16.msra.mxu0 %v2076
      %2759 = vmatprep.subr.bf16.mxu0 0
      %2760 = vmatpush1.bf16.msra.mxu0 %v2077
      %2761 = vmatprep.subr.bf16.mxu0 0
      %2762 = vmatpush1.bf16.msra.mxu0 %v2078
      %2763 = vmatprep.subr.bf16.mxu0 0
      %2764 = vmatpush1.bf16.msra.mxu0 %v2079
      %2765 = vmatprep.subr.bf16.mxu0 0
      %2766 = vmatpush1.bf16.msra.mxu0 %v2080
      %2767 = vmatprep.subr.bf16.mxu0 0
      %2768 = vmatpush1.bf16.msra.mxu0 %v2081
      %2769 = vmatprep.subr.bf16.mxu0 0
      %2770 = vmatpush1.bf16.msra.mxu0 %v2082
      %2771 = vmatprep.subr.bf16.mxu0 0
      %2772 = vmatpush1.bf16.msra.mxu0 %v2083
      %2773 = vmatprep.subr.bf16.mxu0 0
      %2774 = vmatpush1.bf16.msra.mxu0 %v2084
      %2775 = vmatprep.subr.bf16.mxu0 0
      %2776 = vmatpush1.bf16.msra.mxu0 %v2085
      %2777 = vmatprep.subr.bf16.mxu0 0
      %2778 = vmatpush1.bf16.msra.mxu0 %v2086
      %2779 = vmatprep.subr.bf16.mxu0 0
      %2780 = vmatpush1.bf16.msra.mxu0 %v2087
      %2781 = vmatprep.subr.bf16.mxu0 0
      %2782 = vmatpush1.bf16.msra.mxu0 %v2088
      %2783 = vmatprep.subr.bf16.mxu0 0
      %2784 = vmatpush1.bf16.msra.mxu0 %v2089
      %2785 = vmatprep.subr.bf16.mxu0 0
      %2786 = vmatpush1.bf16.msra.mxu0 %v2090
      %2787 = vmatprep.mubr.bf16.mxu0 %v808
      %2788 = vmatmul.mubr.bf16.gmra.mrb[0].mxu0 %v806
      %v2789 = vpop.f32.mrb[0].mxu0
      %v2790 = vadd.f32 %v2750, %v2789
      %v2791 = vpop.f32.mrb[0].mxu0
      %v2792 = vpop.f32.mrb[0].mxu0
      %v2793 = vpop.f32.mrb[0].mxu0
      %2794 = vdwg.mxu0
      %2795 = vmatprep.subr.bf16.mxu0 0
      %2796 = vmatpush1.bf16.msra.mxu0 %v2091
      %2797 = vmatprep.subr.bf16.mxu0 0
      %2798 = vmatpush1.bf16.msra.mxu0 %v2092
      %2799 = vmatprep.subr.bf16.mxu0 0
      %2800 = vmatpush1.bf16.msra.mxu0 %v2093
      %2801 = vmatprep.subr.bf16.mxu0 0
      %2802 = vmatpush1.bf16.msra.mxu0 %v2094
      %2803 = vmatprep.subr.bf16.mxu0 0
      %2804 = vmatpush1.bf16.msra.mxu0 %v2095
      %2805 = vmatprep.subr.bf16.mxu0 0
      %2806 = vmatpush1.bf16.msra.mxu0 %v2096
      %2807 = vmatprep.subr.bf16.mxu0 0
      %2808 = vmatpush1.bf16.msra.mxu0 %v2097
      %2809 = vmatprep.subr.bf16.mxu0 0
      %2810 = vmatpush1.bf16.msra.mxu0 %v2098
      %2811 = vmatprep.subr.bf16.mxu0 0
      %2812 = vmatpush1.bf16.msra.mxu0 %v2099
      %2813 = vmatprep.subr.bf16.mxu0 0
      %2814 = vmatpush1.bf16.msra.mxu0 %v2100
      %2815 = vmatprep.subr.bf16.mxu0 0
      %2816 = vmatpush1.bf16.msra.mxu0 %v2101
      %2817 = vmatprep.subr.bf16.mxu0 0
      %2818 = vmatpush1.bf16.msra.mxu0 %v2102
      %2819 = vmatprep.subr.bf16.mxu0 0
      %2820 = vmatpush1.bf16.msra.mxu0 %v2103
      %2821 = vmatprep.subr.bf16.mxu0 0
      %2822 = vmatpush1.bf16.msra.mxu0 %v2104
      %2823 = vmatprep.subr.bf16.mxu0 0
      %2824 = vmatpush1.bf16.msra.mxu0 %v2105
      %2825 = vmatprep.subr.bf16.mxu0 0
      %2826 = vmatpush1.bf16.msra.mxu0 %v2106
      %2827 = vmatprep.mubr.bf16.mxu0 %v846
      %2828 = vmatmul.mubr.bf16.gmra.mrb[0].mxu0 %v832
      %v2829 = vpop.f32.mrb[0].mxu0
      %v2830 = vadd.f32 %v2790, %v2829
      %v2831 = vpop.f32.mrb[0].mxu0
      %v2832 = vpop.f32.mrb[0].mxu0
      %v2833 = vpop.f32.mrb[0].mxu0
      %2834 = vdwg.mxu0
      %2835 = vmatprep.subr.bf16.mxu0 0
      %2836 = vmatpush1.bf16.msra.mxu0 %v2107
      %2837 = vmatprep.subr.bf16.mxu0 0
      %2838 = vmatpush1.bf16.msra.mxu0 %v2108
      %2839 = vmatprep.subr.bf16.mxu0 0
      %2840 = vmatpush1.bf16.msra.mxu0 %v2109
      %2841 = vmatprep.subr.bf16.mxu0 0
      %2842 = vmatpush1.bf16.msra.mxu0 %v2110
      %2843 = vmatprep.subr.bf16.mxu0 0
      %2844 = vmatpush1.bf16.msra.mxu0 %v2111
      %2845 = vmatprep.subr.bf16.mxu0 0
      %2846 = vmatpush1.bf16.msra.mxu0 %v2112
      %2847 = vmatprep.subr.bf16.mxu0 0
      %2848 = vmatpush1.bf16.msra.mxu0 %v2113
      %2849 = vmatprep.subr.bf16.mxu0 0
      %2850 = vmatpush1.bf16.msra.mxu0 %v2114
      %2851 = vmatprep.subr.bf16.mxu0 0
      %2852 = vmatpush1.bf16.msra.mxu0 %v2115
      %2853 = vmatprep.subr.bf16.mxu0 0
      %2854 = vmatpush1.bf16.msra.mxu0 %v2116
      %2855 = vmatprep.subr.bf16.mxu0 0
      %2856 = vmatpush1.bf16.msra.mxu0 %v2117
      %2857 = vmatprep.subr.bf16.mxu0 0
      %2858 = vmatpush1.bf16.msra.mxu0 %v2118
      %2859 = vmatprep.subr.bf16.mxu0 0
      %2860 = vmatpush1.bf16.msra.mxu0 %v2119
      %2861 = vmatprep.subr.bf16.mxu0 0
      %2862 = vmatpush1.bf16.msra.mxu0 %v2120
      %2863 = vmatprep.subr.bf16.mxu0 0
      %2864 = vmatpush1.bf16.msra.mxu0 %v2121
      %2865 = vmatprep.subr.bf16.mxu0 0
      %2866 = vmatpush1.bf16.msra.mxu0 %v2122
      %2867 = vmatprep.mubr.bf16.mxu0 %v856
      %2868 = vmatmul.mubr.bf16.gmra.mrb[0].mxu0 %v854
      %v2869 = vpop.f32.mrb[0].mxu0
      %v2870 = vadd.f32 %v2830, %v2869
      %v2871 = vpop.f32.mrb[0].mxu0
      %v2872 = vpop.f32.mrb[0].mxu0
      %v2873 = vpop.f32.mrb[0].mxu0
      %2874 = vdwg.mxu0
      %2875 = vmatprep.subr.bf16.mxu0 0
      %2876 = vmatpush1.bf16.msra.mxu0 %v2123
      %2877 = vmatprep.subr.bf16.mxu0 0
      %2878 = vmatpush1.bf16.msra.mxu0 %v2124
      %2879 = vmatprep.subr.bf16.mxu0 0
      %2880 = vmatpush1.bf16.msra.mxu0 %v2125
      %2881 = vmatprep.subr.bf16.mxu0 0
      %2882 = vmatpush1.bf16.msra.mxu0 %v2126
      %2883 = vmatprep.subr.bf16.mxu0 0
      %2884 = vmatpush1.bf16.msra.mxu0 %v2127
      %2885 = vmatprep.subr.bf16.mxu0 0
      %2886 = vmatpush1.bf16.msra.mxu0 %v2128
      %2887 = vmatprep.subr.bf16.mxu0 0
      %2888 = vmatpush1.bf16.msra.mxu0 %v2129
      %2889 = vmatprep.subr.bf16.mxu0 0
      %2890 = vmatpush1.bf16.msra.mxu0 %v2130
      %2891 = vmatprep.subr.bf16.mxu0 0
      %2892 = vmatpush1.bf16.msra.mxu0 %v2131
      %2893 = vmatprep.subr.bf16.mxu0 0
      %2894 = vmatpush1.bf16.msra.mxu0 %v2132
      %2895 = vmatprep.subr.bf16.mxu0 0
      %2896 = vmatpush1.bf16.msra.mxu0 %v2133
      %2897 = vmatprep.subr.bf16.mxu0 0
      %2898 = vmatpush1.bf16.msra.mxu0 %v2134
      %2899 = vmatprep.subr.bf16.mxu0 0
      %2900 = vmatpush1.bf16.msra.mxu0 %v2135
      %2901 = vmatprep.subr.bf16.mxu0 0
      %2902 = vmatpush1.bf16.msra.mxu0 %v2136
      %2903 = vmatprep.subr.bf16.mxu0 0
      %2904 = vmatpush1.bf16.msra.mxu0 %v2137
      %2905 = vmatprep.subr.bf16.mxu0 0
      %2906 = vmatpush1.bf16.msra.mxu0 %v2138
      %2907 = vmatprep.mubr.bf16.mxu0 %v853
      %2908 = vmatmul.mubr.bf16.gmra.mrb[0].mxu0 %v839
      %v2909 = vpop.f32.mrb[0].mxu0
      %v2910 = vadd.f32 %v2870, %v2909
      %v2911 = vpop.f32.mrb[0].mxu0
      %v2912 = vpop.f32.mrb[0].mxu0
      %v2913 = vpop.f32.mrb[0].mxu0
      %2914 = vdwg.mxu0
      %2915 = vmatprep.subr.bf16.mxu0 0
      %2916 = vmatpush1.bf16.msra.mxu0 %v2139
      %2917 = vmatprep.subr.bf16.mxu0 0
      %2918 = vmatpush1.bf16.msra.mxu0 %v2140
      %2919 = vmatprep.subr.bf16.mxu0 0
      %2920 = vmatpush1.bf16.msra.mxu0 %v2141
      %2921 = vmatprep.subr.bf16.mxu0 0
      %2922 = vmatpush1.bf16.msra.mxu0 %v2142
      %2923 = vmatprep.subr.bf16.mxu0 0
      %2924 = vmatpush1.bf16.msra.mxu0 %v2143
      %2925 = vmatprep.subr.bf16.mxu0 0
      %2926 = vmatpush1.bf16.msra.mxu0 %v2144
      %2927 = vmatprep.subr.bf16.mxu0 0
      %2928 = vmatpush1.bf16.msra.mxu0 %v2145
      %2929 = vmatprep.subr.bf16.mxu0 0
      %2930 = vmatpush1.bf16.msra.mxu0 %v2146
      %2931 = vmatprep.subr.bf16.mxu0 0
      %2932 = vmatpush1.bf16.msra.mxu0 %v2147
      %2933 = vmatprep.subr.bf16.mxu0 0
      %2934 = vmatpush1.bf16.msra.mxu0 %v2148
      %2935 = vmatprep.subr.bf16.mxu0 0
      %2936 = vmatpush1.bf16.msra.mxu0 %v2149
      %2937 = vmatprep.subr.bf16.mxu0 0
      %2938 = vmatpush1.bf16.msra.mxu0 %v2150
      %2939 = vmatprep.subr.bf16.mxu0 0
      %2940 = vmatpush1.bf16.msra.mxu0 %v2151
      %2941 = vmatprep.subr.bf16.mxu0 0
      %2942 = vmatpush1.bf16.msra.mxu0 %v2152
      %2943 = vmatprep.subr.bf16.mxu0 0
      %2944 = vmatpush1.bf16.msra.mxu0 %v2153
      %2945 = vmatprep.subr.bf16.mxu0 0
      %2946 = vmatpush1.bf16.msra.mxu0 %v2154
      %2947 = vmatprep.mubr.bf16.mxu0 %v857
      %2948 = vmatmul.mubr.bf16.gmra.mrb[0].mxu0 %v855
      %v2949 = vpop.f32.mrb[0].mxu0
      %v2950 = vadd.f32 %v2910, %v2949
      %v2951 = vpop.f32.mrb[0].mxu0
      %v2952 = vpop.f32.mrb[0].mxu0
      %v2953 = vpop.f32.mrb[0].mxu0
      %2954 = vdwg.mxu0
      %2955 = vmatprep.subr.bf16.mxu0 0
      %2956 = vmatpush1.bf16.msra.mxu0 %v2155
      %2957 = vmatprep.subr.bf16.mxu0 0
      %2958 = vmatpush1.bf16.msra.mxu0 %v2156
      %2959 = vmatprep.subr.bf16.mxu0 0
      %2960 = vmatpush1.bf16.msra.mxu0 %v2157
      %2961 = vmatprep.subr.bf16.mxu0 0
      %2962 = vmatpush1.bf16.msra.mxu0 %v2158
      %2963 = vmatprep.subr.bf16.mxu0 0
      %2964 = vmatpush1.bf16.msra.mxu0 %v2159
      %2965 = vmatprep.subr.bf16.mxu0 0
      %2966 = vmatpush1.bf16.msra.mxu0 %v2160
      %2967 = vmatprep.subr.bf16.mxu0 0
      %2968 = vmatpush1.bf16.msra.mxu0 %v2161
      %2969 = vmatprep.subr.bf16.mxu0 0
      %2970 = vmatpush1.bf16.msra.mxu0 %v2162
      %2971 = vmatprep.subr.bf16.mxu0 0
      %2972 = vmatpush1.bf16.msra.mxu0 %v2163
      %2973 = vmatprep.subr.bf16.mxu0 0
      %2974 = vmatpush1.bf16.msra.mxu0 %v2164
      %2975 = vmatprep.subr.bf16.mxu0 0
      %2976 = vmatpush1.bf16.msra.mxu0 %v2165
      %2977 = vmatprep.subr.bf16.mxu0 0
      %2978 = vmatpush1.bf16.msra.mxu0 %v2166
      %2979 = vmatprep.subr.bf16.mxu0 0
      %2980 = vmatpush1.bf16.msra.mxu0 %v2167
      %2981 = vmatprep.subr.bf16.mxu0 0
      %2982 = vmatpush1.bf16.msra.mxu0 %v2168
      %2983 = vmatprep.subr.bf16.mxu0 0
      %2984 = vmatpush1.bf16.msra.mxu0 %v2169
      %2985 = vmatprep.subr.bf16.mxu0 0
      %2986 = vmatpush1.bf16.msra.mxu0 %v2170
      %2987 = vmatprep.mubr.bf16.mxu0 %v895
      %2988 = vmatmul.mubr.bf16.gmra.mrb[0].mxu0 %v881
      %v2989 = vpop.f32.mrb[0].mxu0
      %v2990 = vadd.f32 %v2950, %v2989
      %v2991 = vpop.f32.mrb[0].mxu0
      %v2992 = vpop.f32.mrb[0].mxu0
      %v2993 = vpop.f32.mrb[0].mxu0
      %2994 = vdwg.mxu0
      %2995 = vmatprep.subr.bf16.mxu0 0
      %2996 = vmatpush1.bf16.msra.mxu0 %v2171
      %2997 = vmatprep.subr.bf16.mxu0 0
      %2998 = vmatpush1.bf16.msra.mxu0 %v2172
      %2999 = vmatprep.subr.bf16.mxu0 0
      %3000 = vmatpush1.bf16.msra.mxu0 %v2173
      %3001 = vmatprep.subr.bf16.mxu0 0
      %3002 = vmatpush1.bf16.msra.mxu0 %v2174
      %3003 = vmatprep.subr.bf16.mxu0 0
      %3004 = vmatpush1.bf16.msra.mxu0 %v2175
      %3005 = vmatprep.subr.bf16.mxu0 0
      %3006 = vmatpush1.bf16.msra.mxu0 %v2176
      %3007 = vmatprep.subr.bf16.mxu0 0
      %3008 = vmatpush1.bf16.msra.mxu0 %v2177
      %3009 = vmatprep.subr.bf16.mxu0 0
      %3010 = vmatpush1.bf16.msra.mxu0 %v2178
      %3011 = vmatprep.subr.bf16.mxu0 0
      %3012 = vmatpush1.bf16.msra.mxu0 %v2179
      %3013 = vmatprep.subr.bf16.mxu0 0
      %3014 = vmatpush1.bf16.msra.mxu0 %v2180
      %3015 = vmatprep.subr.bf16.mxu0 0
      %3016 = vmatpush1.bf16.msra.mxu0 %v2181
      %3017 = vmatprep.subr.bf16.mxu0 0
      %3018 = vmatpush1.bf16.msra.mxu0 %v2182
      %3019 = vmatprep.subr.bf16.mxu0 0
      %3020 = vmatpush1.bf16.msra.mxu0 %v2183
      %3021 = vmatprep.subr.bf16.mxu0 0
      %3022 = vmatpush1.bf16.msra.mxu0 %v2184
      %3023 = vmatprep.subr.bf16.mxu0 0
      %3024 = vmatpush1.bf16.msra.mxu0 %v2185
      %3025 = vmatprep.subr.bf16.mxu0 0
      %3026 = vmatpush1.bf16.msra.mxu0 %v2186
      %3027 = vmatprep.mubr.bf16.mxu0 %v905
      %3028 = vmatmul.mubr.bf16.gmra.mrb[0].mxu0 %v903
      %v3029 = vpop.f32.mrb[0].mxu0
      %v3030 = vadd.f32 %v2990, %v3029
      %v3031 = vpop.f32.mrb[0].mxu0
      %v3032 = vpop.f32.mrb[0].mxu0
      %v3033 = vpop.f32.mrb[0].mxu0
      %3034 = vdwg.mxu0
      %3035 = vmatprep.subr.bf16.mxu0 0
      %3036 = vmatpush1.bf16.msra.mxu0 %v2187
      %3037 = vmatprep.subr.bf16.mxu0 0
      %3038 = vmatpush1.bf16.msra.mxu0 %v2188
      %3039 = vmatprep.subr.bf16.mxu0 0
      %3040 = vmatpush1.bf16.msra.mxu0 %v2189
      %3041 = vmatprep.subr.bf16.mxu0 0
      %3042 = vmatpush1.bf16.msra.mxu0 %v2190
      %3043 = vmatprep.subr.bf16.mxu0 0
      %3044 = vmatpush1.bf16.msra.mxu0 %v2191
      %3045 = vmatprep.subr.bf16.mxu0 0
      %3046 = vmatpush1.bf16.msra.mxu0 %v2192
      %3047 = vmatprep.subr.bf16.mxu0 0
      %3048 = vmatpush1.bf16.msra.mxu0 %v2193
      %3049 = vmatprep.subr.bf16.mxu0 0
      %3050 = vmatpush1.bf16.msra.mxu0 %v2194
      %3051 = vmatprep.subr.bf16.mxu0 0
      %3052 = vmatpush1.bf16.msra.mxu0 %v2195
      %3053 = vmatprep.subr.bf16.mxu0 0
      %3054 = vmatpush1.bf16.msra.mxu0 %v2196
      %3055 = vmatprep.subr.bf16.mxu0 0
      %3056 = vmatpush1.bf16.msra.mxu0 %v2197
      %3057 = vmatprep.subr.bf16.mxu0 0
      %3058 = vmatpush1.bf16.msra.mxu0 %v2198
      %3059 = vmatprep.subr.bf16.mxu0 0
      %3060 = vmatpush1.bf16.msra.mxu0 %v2199
      %3061 = vmatprep.subr.bf16.mxu0 0
      %3062 = vmatpush1.bf16.msra.mxu0 %v2200
      %3063 = vmatprep.subr.bf16.mxu0 0
      %3064 = vmatpush1.bf16.msra.mxu0 %v2201
      %3065 = vmatprep.subr.bf16.mxu0 0
      %3066 = vmatpush1.bf16.msra.mxu0 %v2202
      %3067 = vmatprep.mubr.bf16.mxu0 %v902
      %3068 = vmatmul.mubr.bf16.gmra.mrb[0].mxu0 %v888
      %v3069 = vpop.f32.mrb[0].mxu0
      %v3070 = vadd.f32 %v3030, %v3069
      %v3071 = vpop.f32.mrb[0].mxu0
      %v3072 = vpop.f32.mrb[0].mxu0
      %v3073 = vpop.f32.mrb[0].mxu0
      %3074 = vdwg.mxu0
      %3075 = vmatprep.subr.bf16.mxu0 0
      %3076 = vmatpush1.bf16.msra.mxu0 %v2203
      %3077 = vmatprep.subr.bf16.mxu0 0
      %3078 = vmatpush1.bf16.msra.mxu0 %v2204
      %3079 = vmatprep.subr.bf16.mxu0 0
      %3080 = vmatpush1.bf16.msra.mxu0 %v2205
      %3081 = vmatprep.subr.bf16.mxu0 0
      %3082 = vmatpush1.bf16.msra.mxu0 %v2206
      %3083 = vmatprep.subr.bf16.mxu0 0
      %3084 = vmatpush1.bf16.msra.mxu0 %v2207
      %3085 = vmatprep.subr.bf16.mxu0 0
      %3086 = vmatpush1.bf16.msra.mxu0 %v2208
      %3087 = vmatprep.subr.bf16.mxu0 0
      %3088 = vmatpush1.bf16.msra.mxu0 %v2209
      %3089 = vmatprep.subr.bf16.mxu0 0
      %3090 = vmatpush1.bf16.msra.mxu0 %v2210
      %3091 = vmatprep.subr.bf16.mxu0 0
      %3092 = vmatpush1.bf16.msra.mxu0 %v2211
      %3093 = vmatprep.subr.bf16.mxu0 0
      %3094 = vmatpush1.bf16.msra.mxu0 %v2212
      %3095 = vmatprep.subr.bf16.mxu0 0
      %3096 = vmatpush1.bf16.msra.mxu0 %v2213
      %3097 = vmatprep.subr.bf16.mxu0 0
      %3098 = vmatpush1.bf16.msra.mxu0 %v2214
      %3099 = vmatprep.subr.bf16.mxu0 0
      %3100 = vmatpush1.bf16.msra.mxu0 %v2215
      %3101 = vmatprep.subr.bf16.mxu0 0
      %3102 = vmatpush1.bf16.msra.mxu0 %v2216
      %3103 = vmatprep.subr.bf16.mxu0 0
      %3104 = vmatpush1.bf16.msra.mxu0 %v2217
      %3105 = vmatprep.subr.bf16.mxu0 0
      %3106 = vmatpush1.bf16.msra.mxu0 %v2218
      %3107 = vmatprep.mubr.bf16.mxu0 %v906
      %3108 = vmatmul.mubr.bf16.gmra.mrb[0].mxu0 %v904
      %v3109 = vpop.f32.mrb[0].mxu0
      %v3110 = vadd.f32 %v3070, %v3109
      %v3111 = vpop.f32.mrb[0].mxu0
      %v3112 = vpop.f32.mrb[0].mxu0
      %v3113 = vpop.f32.mrb[0].mxu0
      %3114 = vdwg.mxu0
      %3115 = vst [vmem:[%s189] sm:$0x3] %v3110
      %p3116 = scmp.lt.s32.totalorder %s14, 1
      %s3117 = scalar_select %p3116, %s14, 1
      %s3118 = smul.addr %s3117, 2
      %s3119 = scalar_lea.vmem %s3, %s3118
      // Predicated region
      $region33: #{encoder_forward.7} parent=31 // pred_check
        %p3120 = pneg %p105
      $region34: #{encoder_forward.7} parent=31 // pred_check_branch
        %3122 = sbr.rel (%p3120) target = $region36
      $region35: #{encoder_forward.7} parent=31 // pred_region
        _
      $region36: #{encoder_forward.7} parent=31 // pred_fallthru
        _
    $region32: #{encoder_forward.7} parent=5 // pred_fallthru
      _
    %p3123 = scmp.le.s32.totalorder 2, %s9
    // Predicated region
    $region37: #{encoder_forward.7} parent=5 // pred_check
      %p3124 = pneg %p3123
    $region38: #{encoder_forward.7} parent=5 // pred_check_branch
      %3126 = sbr.rel (%p3124) target = $region40
    $region39: #{encoder_forward.7} parent=5 // pred_region
      %s3127 = ssub.s32 %s9, 2
      // Predicated region
      $region41: #{encoder_forward.7} parent=39 // pred_check
        %p3128 = pneg %p111
      $region42: #{encoder_forward.7} parent=39 // pred_check_branch
        %3130 = sbr.rel (%p3128) target = $region44
      $region43: #{encoder_forward.7} parent=39 // pred_region
        %p3131 = scmp.lt.s32.totalorder %s15, 1
        %s3132 = scalar_select %p3131, %s15, 1
        %s3133 = smul.addr %s3132, 2
        %s3134 = scalar_lea.vmem %s3, %s3133
      $region44: #{encoder_forward.7} parent=39 // pred_fallthru
        _
    $region40: #{encoder_forward.7} parent=5 // pred_fallthru
      _
  $region6: #{encoder_forward.7} parent=0 // loop_footer
    %s13 = sadd.s32 1, %s9
  $region7: #{encoder_forward.7} parent=0 // loop_footer_branch
    %8 = sbr.rel target = $region3
  $region8: #{encoder_forward.7} parent=0 // loop_exit
    _

</llo_original>
